<compile_context>
chip_gen: v6e
topology: v6e:2x2x1
jax: 0.10.0
libtpu: 0.0.40
codegen_flags: <defaults>
</compile_context>

<pallas_src>
import functools
import numpy as np

import jax
import jax.numpy as jnp
from jax.experimental import pallas as pl
from jax.experimental.pallas import tpu as pltpu


# -----------------------------------------------------------------------------
# Fused Pallas kernel: full message-passing forward (all steps) in VMEM
# -----------------------------------------------------------------------------
def fused_mpnn_kernel(nbr_e_ref, dst_e_ref, nbr_ba_ref, dst_ba_ref,
                      nbr_da_ref, dst_da_ref,
                      h0_ref, bond_ref, ba_ref, da_ref,
                      we_ref, be_ref, wba_ref, bba_ref, wda_ref, bda_ref,
                      t_ref, r_ref, wi_ref, wh_ref, bi_ref, bh_ref,
                      out_ref, *, steps):
    N, D = h0_ref.shape
    bf16 = jnp.bfloat16
    f32 = jnp.float32

    # -------------------- loop-invariant precompute (hoisted) ----------------
    T = t_ref[...]            # [D, D*D] bf16 one-hot: T[j, i*D+j] = 1
    R = r_ref[...]            # [D*D, D] bf16 one-hot: R[i*D+j, i] = 1

    def onehots(nbr_ref, dst_ref):
        E = nbr_ref.shape[0]
        lane_n = jax.lax.broadcasted_iota(jnp.int32, (E, N), 1)   # n at (e, n)
        sub_n = jax.lax.broadcasted_iota(jnp.int32, (N, E), 0)    # n at (n, e)
        # gather one-hot in [E, N] orientation (feeds MXU directly)
        gather_oh = jnp.where(nbr_ref[...] == lane_n, 1.0, 0.0).astype(bf16)
        # scatter one-hot built pre-transposed [N, E] (no XLU transpose later)
        scatter_ohT = jnp.where(dst_ref[...] == sub_n, 1.0, 0.0).astype(bf16)
        return gather_oh, scatter_ohT

    g_e, s_e = onehots(nbr_e_ref, dst_e_ref)
    g_ba, s_ba = onehots(nbr_ba_ref, dst_ba_ref)
    g_da, s_da = onehots(nbr_da_ref, dst_da_ref)

    # Compose "scatter of stage k" with "gather of stage k+1" once.
    # Entries are exactly 0 or 1 (each gather row has a single 1), so bf16 is
    # exact. Saves 2 matmuls per step and skips the intermediate [N,D] agg.
    comp_ba = jnp.dot(g_ba, s_e, preferred_element_type=f32).astype(bf16)   # [E_ba, E_b]
    comp_da = jnp.dot(g_da, s_ba, preferred_element_type=f32).astype(bf16)  # [E_da, E_ba]

    def edge_matrices(feat_ref, w_ref, b_ref):
        # per-edge flattened D x D matrices, [E, D*D]; loop-invariant
        return jnp.dot(feat_ref[...].astype(bf16), w_ref[...].astype(bf16),
                       preferred_element_type=f32) + b_ref[...]

    m_e = edge_matrices(bond_ref, we_ref, be_ref)
    m_ba = edge_matrices(ba_ref, wba_ref, bba_ref)
    m_da = edge_matrices(da_ref, wda_ref, bda_ref)

    wi = wi_ref[...].astype(bf16)   # [D, 3D]  (gates r|z|n concatenated)
    wh = wh_ref[...].astype(bf16)   # [D, 3D]
    bi = bi_ref[...]                # [1, 3D] f32
    bh = bh_ref[...]                # [1, 3D] f32

    def transform(nb, m):
        # per-edge (DxD) @ nb, as one-hot broadcast + elementwise + one-hot reduce
        nb_rep = jnp.dot(nb.astype(bf16), T, preferred_element_type=f32)    # [E, D*D]
        prod = (m * nb_rep).astype(bf16)                                    # [E, D*D]
        return jnp.dot(prod, R, preferred_element_type=f32)                 # [E, D]

    # -------------------- step loop (static, fully unrolled in-kernel) -------
    h = h0_ref[...]
    for _ in range(steps):
        # edge message: gather neighbor rows   [E_b,N] @ [N,D] -> [E_b,D]
        nb_e = jnp.dot(g_e, h.astype(bf16), preferred_element_type=f32)
        t_e = transform(nb_e, m_e)
        # bond-angle message: fused (scatter -> gather) via comp_ba
        nb_ba = jnp.dot(comp_ba, t_e.astype(bf16), preferred_element_type=f32)
        t_ba = transform(nb_ba, m_ba)
        # dihedral message: fused (scatter -> gather) via comp_da
        nb_da = jnp.dot(comp_da, t_ba.astype(bf16), preferred_element_type=f32)
        t_da = transform(nb_da, m_da)
        # final scatter-add onto atoms:        [N,E_da] @ [E_da,D] -> [N,D]
        agg = jnp.dot(s_da, t_da.astype(bf16), preferred_element_type=f32)

        # GRUCell (PyTorch semantics) with concatenated gate weights
        gi = jnp.dot(agg.astype(bf16), wi, preferred_element_type=f32) + bi
        gh = jnp.dot(h.astype(bf16), wh, preferred_element_type=f32) + bh
        r = jax.nn.sigmoid(gi[:, 0:D] + gh[:, 0:D])
        z = jax.nn.sigmoid(gi[:, D:2 * D] + gh[:, D:2 * D])
        n = jnp.tanh(gi[:, 2 * D:3 * D] + r * gh[:, 2 * D:3 * D])
        h = (1.0 - z) * n + z * h

    out_ref[...] = h


# -----------------------------------------------------------------------------
# Wrapper
# -----------------------------------------------------------------------------
_VMEM = pl.BlockSpec(memory_space=pltpu.MemorySpace.VMEM)


def _const_onehots(D):
    # T[j, i*D+j] = 1  (broadcast a length-D vector across the D row-blocks)
    # R[i*D+j, i] = 1  (reduce each row-block back to one output column)
    k = np.arange(D * D)
    T = (k[None, :] % D == np.arange(D)[:, None]).astype(np.float32)   # [D, D*D]
    R = (k[:, None] // D == np.arange(D)[None, :]).astype(np.float32)  # [D*D, D]
    return (jnp.asarray(T, dtype=jnp.bfloat16),
            jnp.asarray(R, dtype=jnp.bfloat16))


def mpnn_forward(params, atom, bond, pair, ba, pair_ba, da, pair_da,
                 *, units, steps):
    N, atom_dim = atom.shape
    pad = max(0, units - atom_dim)          # static python ints (no tracer bool)
    D = atom_dim + pad
    h0 = jnp.pad(atom, ((0, 0), (0, pad))) if pad > 0 else atom

    def split_idx(p):
        nbr = p[:, 1].reshape(-1, 1).astype(jnp.int32)   # [E,1] -> gather one-hot [E,N]
        dst = p[:, 0].reshape(1, -1).astype(jnp.int32)   # [1,E] -> scatter one-hot [N,E]
        return nbr, dst

    nbr_e, dst_e = split_idx(pair)
    nbr_ba, dst_ba = split_idx(pair_ba)
    nbr_da, dst_da = split_idx(pair_da)

    T, R = _const_onehots(D)

    We, be = params["edge"]
    Wba, bba = params["bond_angle"]
    Wda, bda = params["dihedral"]
    gp = params["gru"]
    Wi = jnp.concatenate([gp["wir"], gp["wiz"], gp["win"]], axis=1)   # [D, 3D]
    Wh = jnp.concatenate([gp["whr"], gp["whz"], gp["whn"]], axis=1)   # [D, 3D]
    bi = jnp.concatenate([gp["bir"], gp["biz"], gp["bin"]], axis=1)   # [1, 3D]
    bh = jnp.concatenate([gp["bhr"], gp["bhz"], gp["bhn"]], axis=1)   # [1, 3D]

    ins = [nbr_e, dst_e, nbr_ba, dst_ba, nbr_da, dst_da,
           h0, bond, ba, da, We, be, Wba, bba, Wda, bda,
           T, R, Wi, Wh, bi, bh]

    return pl.pallas_call(
        functools.partial(fused_mpnn_kernel, steps=steps),
        out_shape=jax.ShapeDtypeStruct((N, D), jnp.float32),
        in_specs=[_VMEM] * len(ins),
        out_specs=_VMEM,
        compiler_params=pltpu.CompilerParams(
            vmem_limit_bytes=32 * 1024 * 1024),   # safe on v5e/v6e/v7x; usage ~3 MiB
    )(*ins)


# -----------------------------------------------------------------------------
# Pure-JAX f32 reference (semantics of the PyTorch module)
# -----------------------------------------------------------------------------
def _ref_message(atom_f, feat, idx, W, b):
    D = atom_f.shape[1]
    m = (feat @ W + b.reshape(-1)).reshape(-1, D, D)
    nb = atom_f[idx[:, 1]]
    t = jnp.einsum("eij,ej->ei", m, nb)
    return jnp.zeros_like(atom_f).at[idx[:, 0]].add(t)


def _ref_gru(x, h, gp):
    r = jax.nn.sigmoid(x @ gp["wir"] + gp["bir"] + h @ gp["whr"] + gp["bhr"])
    z = jax.nn.sigmoid(x @ gp["wiz"] + gp["biz"] + h @ gp["whz"] + gp["bhz"])
    n = jnp.tanh(x @ gp["win"] + gp["bin"] + r * (h @ gp["whn"] + gp["bhn"]))
    return (1.0 - z) * n + z * h


def mpnn_forward_ref(params, atom, bond, pair, ba, pair_ba, da, pair_da,
                     *, units, steps):
    N, atom_dim = atom.shape
    pad = max(0, units - atom_dim)
    h = jnp.pad(atom, ((0, 0), (0, pad))) if pad > 0 else atom
    We, be = params["edge"]
    Wba, bba = params["bond_angle"]
    Wda, bda = params["dihedral"]
    gp = params["gru"]
    for _ in range(steps):
        agg = _ref_message(h, bond, pair, We, be)
        agg = _ref_message(agg, ba, pair_ba, Wba, bba)
        agg = _ref_message(agg, da, pair_da, Wda, bda)
        h = _ref_gru(agg, h, gp)
    return h


# -----------------------------------------------------------------------------
# Deterministic parameter init (mirrors the module's shapes; synthetic values)
# -----------------------------------------------------------------------------
def _xavier_uniform(key, shape):
    fan_out, fan_in = shape  # torch convention for 2-D tensors
    bound = (6.0 / (fan_in + fan_out)) ** 0.5
    return jax.random.uniform(key, shape, jnp.float32, -bound, bound)


def init_params(key, atom_dim, bond_dim, bond_angle_dim, dihedral_angle_dim,
                units):
    D = atom_dim + max(0, units - atom_dim)
    ks = jax.random.split(key, 12)

    def net(k, feat_dim):
        W = _xavier_uniform(k, (feat_dim, D * D))
        b = jnp.zeros((1, D * D), jnp.float32)
        return W, b

    bound = 1.0 / (D ** 0.5)

    def gru_w(k):
        return jax.random.uniform(k, (D, D), jnp.float32, -bound, bound)

    def gru_b(k):
        return jax.random.uniform(k, (1, D), jnp.float32, -bound, bound)

    gru = {
        "wir": gru_w(ks[3]), "wiz": gru_w(ks[4]), "win": gru_w(ks[5]),
        "whr": gru_w(ks[6]), "whz": gru_w(ks[7]), "whn": gru_w(ks[8]),
        "bir": gru_b(ks[9]), "biz": gru_b(ks[10]), "bin": gru_b(ks[11]),
        "bhr": gru_b(ks[9]) * 0.5, "bhz": gru_b(ks[10]) * 0.5,
        "bhn": gru_b(ks[11]) * 0.5,
    }
    return {
        "edge": net(ks[0], bond_dim),
        "bond_angle": net(ks[1], bond_angle_dim),
        "dihedral": net(ks[2], dihedral_angle_dim),
        "gru": gru,
    }


# -----------------------------------------------------------------------------
if __name__ == "__main__":
    atom_dim, bond_dim = 16, 8
    bond_angle_dim, dihedral_angle_dim = 6, 4
    units, steps = 32, 4
    N, E_b, E_ba, E_da = 16, 24, 16, 8

    key = jax.random.PRNGKey(0)
    ks = jax.random.split(key, 8)
    atom = jax.random.normal(ks[0], (N, atom_dim), jnp.float32)
    bond = jax.random.normal(ks[1], (E_b, bond_dim), jnp.float32)
    ba = jax.random.normal(ks[2], (E_ba, bond_angle_dim), jnp.float32)
    da = jax.random.normal(ks[3], (E_da, dihedral_angle_dim), jnp.float32)
    pair = jax.random.randint(ks[4], (E_b, 2), 0, N, jnp.int32)
    pair_ba = jax.random.randint(ks[5], (E_ba, 2), 0, N, jnp.int32)
    pair_da = jax.random.randint(ks[6], (E_da, 2), 0, N, jnp.int32)

    params = init_params(ks[7], atom_dim, bond_dim, bond_angle_dim,
                         dihedral_angle_dim, units)

    fwd = jax.jit(functools.partial(mpnn_forward, units=units, steps=steps))
    out = fwd(params, atom, bond, pair, ba, pair_ba, da, pair_da)
    out = jax.block_until_ready(out)

    ref = mpnn_forward_ref(params, atom, bond, pair, ba, pair_ba, da, pair_da,
                           units=units, steps=steps)
    np.testing.assert_allclose(np.asarray(out), np.asarray(ref),
                               rtol=5e-2, atol=5e-2)
    assert out.shape == (N, units)
    assert bool(jnp.all(jnp.isfinite(out)))
    print("KERNEL_OK")
</pallas_src>

<mosaic_0001>
module attributes {stable_mosaic.version = 11 : i64} {
  func.func @fused_mpnn_kernel(%arg0: memref<24x1xi32, #tpu.memory_space<vmem>>, %arg1: memref<1x24xi32, #tpu.memory_space<vmem>>, %arg2: memref<16x1xi32, #tpu.memory_space<vmem>>, %arg3: memref<1x16xi32, #tpu.memory_space<vmem>>, %arg4: memref<8x1xi32, #tpu.memory_space<vmem>>, %arg5: memref<1x8xi32, #tpu.memory_space<vmem>>, %arg6: memref<16x32xf32, #tpu.memory_space<vmem>>, %arg7: memref<24x8xf32, #tpu.memory_space<vmem>>, %arg8: memref<16x6xf32, #tpu.memory_space<vmem>>, %arg9: memref<8x4xf32, #tpu.memory_space<vmem>>, %arg10: memref<8x1024xf32, #tpu.memory_space<vmem>>, %arg11: memref<1x1024xf32, #tpu.memory_space<vmem>>, %arg12: memref<6x1024xf32, #tpu.memory_space<vmem>>, %arg13: memref<1x1024xf32, #tpu.memory_space<vmem>>, %arg14: memref<4x1024xf32, #tpu.memory_space<vmem>>, %arg15: memref<1x1024xf32, #tpu.memory_space<vmem>>, %arg16: memref<32x1024xbf16, #tpu.memory_space<vmem>>, %arg17: memref<1024x32xbf16, #tpu.memory_space<vmem>>, %arg18: memref<32x96xf32, #tpu.memory_space<vmem>>, %arg19: memref<32x96xf32, #tpu.memory_space<vmem>>, %arg20: memref<1x96xf32, #tpu.memory_space<vmem>>, %arg21: memref<1x96xf32, #tpu.memory_space<vmem>>, %arg22: memref<16x32xf32, #tpu.memory_space<vmem>>) attributes {dimension_semantics = [], scalar_prefetch = 0 : i64, scratch_operands = 0 : i64, tpu.core_type = #tpu.core_type<tc>} {
    %c0 = arith.constant 0 : index
    %c0_0 = arith.constant 0 : index
    %0 = vector.load %arg16[%c0, %c0_0] : memref<32x1024xbf16, #tpu.memory_space<vmem>>, vector<32x1024xbf16>
    %c0_1 = arith.constant 0 : index
    %c0_2 = arith.constant 0 : index
    %1 = vector.load %arg17[%c0_1, %c0_2] : memref<1024x32xbf16, #tpu.memory_space<vmem>>, vector<1024x32xbf16>
    %2 = tpu.iota {dimensions = array<i32: 1>} : vector<24x16xi32>
    %3 = tpu.iota {dimensions = array<i32: 0>} : vector<16x24xi32>
    %c0_3 = arith.constant 0 : index
    %c0_4 = arith.constant 0 : index
    %4 = vector.load %arg0[%c0_3, %c0_4] : memref<24x1xi32, #tpu.memory_space<vmem>>, vector<24x1xi32>
    %5 = vector.broadcast %4 : vector<24x1xi32> to vector<24x16xi32>
    %6 = arith.cmpi eq, %5, %2 : vector<24x16xi32>
    %cst = arith.constant 1.000000e+00 : f32
    %cst_5 = arith.constant 0.000000e+00 : f32
    %7 = vector.broadcast %cst : f32 to vector<24x16xf32>
    %8 = vector.broadcast %cst_5 : f32 to vector<24x16xf32>
    %9 = arith.select %6, %7, %8 : vector<24x16xi1>, vector<24x16xf32>
    %10 = arith.truncf %9 : vector<24x16xf32> to vector<24x16xbf16>
    %c0_6 = arith.constant 0 : index
    %c0_7 = arith.constant 0 : index
    %11 = vector.load %arg1[%c0_6, %c0_7] : memref<1x24xi32, #tpu.memory_space<vmem>>, vector<1x24xi32>
    %12 = vector.broadcast %11 : vector<1x24xi32> to vector<16x24xi32>
    %13 = arith.cmpi eq, %12, %3 : vector<16x24xi32>
    %cst_8 = arith.constant 1.000000e+00 : f32
    %cst_9 = arith.constant 0.000000e+00 : f32
    %14 = vector.broadcast %cst_8 : f32 to vector<16x24xf32>
    %15 = vector.broadcast %cst_9 : f32 to vector<16x24xf32>
    %16 = arith.select %13, %14, %15 : vector<16x24xi1>, vector<16x24xf32>
    %17 = arith.truncf %16 : vector<16x24xf32> to vector<16x24xbf16>
    %18 = tpu.iota {dimensions = array<i32: 1>} : vector<16x16xi32>
    %19 = tpu.iota {dimensions = array<i32: 0>} : vector<16x16xi32>
    %c0_10 = arith.constant 0 : index
    %c0_11 = arith.constant 0 : index
    %20 = vector.load %arg2[%c0_10, %c0_11] : memref<16x1xi32, #tpu.memory_space<vmem>>, vector<16x1xi32>
    %21 = vector.broadcast %20 : vector<16x1xi32> to vector<16x16xi32>
    %22 = arith.cmpi eq, %21, %18 : vector<16x16xi32>
    %cst_12 = arith.constant 1.000000e+00 : f32
    %cst_13 = arith.constant 0.000000e+00 : f32
    %23 = vector.broadcast %cst_12 : f32 to vector<16x16xf32>
    %24 = vector.broadcast %cst_13 : f32 to vector<16x16xf32>
    %25 = arith.select %22, %23, %24 : vector<16x16xi1>, vector<16x16xf32>
    %26 = arith.truncf %25 : vector<16x16xf32> to vector<16x16xbf16>
    %c0_14 = arith.constant 0 : index
    %c0_15 = arith.constant 0 : index
    %27 = vector.load %arg3[%c0_14, %c0_15] : memref<1x16xi32, #tpu.memory_space<vmem>>, vector<1x16xi32>
    %28 = vector.broadcast %27 : vector<1x16xi32> to vector<16x16xi32>
    %29 = arith.cmpi eq, %28, %19 : vector<16x16xi32>
    %cst_16 = arith.constant 1.000000e+00 : f32
    %cst_17 = arith.constant 0.000000e+00 : f32
    %30 = vector.broadcast %cst_16 : f32 to vector<16x16xf32>
    %31 = vector.broadcast %cst_17 : f32 to vector<16x16xf32>
    %32 = arith.select %29, %30, %31 : vector<16x16xi1>, vector<16x16xf32>
    %33 = arith.truncf %32 : vector<16x16xf32> to vector<16x16xbf16>
    %34 = tpu.iota {dimensions = array<i32: 1>} : vector<8x16xi32>
    %35 = tpu.iota {dimensions = array<i32: 0>} : vector<16x8xi32>
    %c0_18 = arith.constant 0 : index
    %c0_19 = arith.constant 0 : index
    %36 = vector.load %arg4[%c0_18, %c0_19] : memref<8x1xi32, #tpu.memory_space<vmem>>, vector<8x1xi32>
    %37 = vector.broadcast %36 : vector<8x1xi32> to vector<8x16xi32>
    %38 = arith.cmpi eq, %37, %34 : vector<8x16xi32>
    %cst_20 = arith.constant 1.000000e+00 : f32
    %cst_21 = arith.constant 0.000000e+00 : f32
    %39 = vector.broadcast %cst_20 : f32 to vector<8x16xf32>
    %40 = vector.broadcast %cst_21 : f32 to vector<8x16xf32>
    %41 = arith.select %38, %39, %40 : vector<8x16xi1>, vector<8x16xf32>
    %42 = arith.truncf %41 : vector<8x16xf32> to vector<8x16xbf16>
    %c0_22 = arith.constant 0 : index
    %c0_23 = arith.constant 0 : index
    %43 = vector.load %arg5[%c0_22, %c0_23] : memref<1x8xi32, #tpu.memory_space<vmem>>, vector<1x8xi32>
    %44 = vector.broadcast %43 : vector<1x8xi32> to vector<16x8xi32>
    %45 = arith.cmpi eq, %44, %35 : vector<16x8xi32>
    %cst_24 = arith.constant 1.000000e+00 : f32
    %cst_25 = arith.constant 0.000000e+00 : f32
    %46 = vector.broadcast %cst_24 : f32 to vector<16x8xf32>
    %47 = vector.broadcast %cst_25 : f32 to vector<16x8xf32>
    %48 = arith.select %45, %46, %47 : vector<16x8xi1>, vector<16x8xf32>
    %49 = arith.truncf %48 : vector<16x8xf32> to vector<16x8xbf16>
    %cst_26 = arith.constant dense<0.000000e+00> : vector<16x24xf32>
    %50 = tpu.matmul %26, %17, %cst_26 {dimension_numbers = #tpu.dot_dimension_numbers<[1], [0], [0], [1], [0, 0, 1, 1], [], []>} : vector<16x16xbf16>, vector<16x24xbf16>, vector<16x24xf32> -> vector<16x24xf32>
    %51 = arith.truncf %50 : vector<16x24xf32> to vector<16x24xbf16>
    %cst_27 = arith.constant dense<0.000000e+00> : vector<8x16xf32>
    %52 = tpu.matmul %42, %33, %cst_27 {dimension_numbers = #tpu.dot_dimension_numbers<[1], [0], [0], [1], [0, 0, 1, 1], [], []>} : vector<8x16xbf16>, vector<16x16xbf16>, vector<8x16xf32> -> vector<8x16xf32>
    %53 = arith.truncf %52 : vector<8x16xf32> to vector<8x16xbf16>
    %c0_28 = arith.constant 0 : index
    %c0_29 = arith.constant 0 : index
    %54 = vector.load %arg7[%c0_28, %c0_29] : memref<24x8xf32, #tpu.memory_space<vmem>>, vector<24x8xf32>
    %55 = arith.truncf %54 : vector<24x8xf32> to vector<24x8xbf16>
    %c0_30 = arith.constant 0 : index
    %c0_31 = arith.constant 0 : index
    %56 = vector.load %arg10[%c0_30, %c0_31] : memref<8x1024xf32, #tpu.memory_space<vmem>>, vector<8x1024xf32>
    %57 = arith.truncf %56 : vector<8x1024xf32> to vector<8x1024xbf16>
    %cst_32 = arith.constant dense<0.000000e+00> : vector<24x1024xf32>
    %58 = tpu.matmul %55, %57, %cst_32 {dimension_numbers = #tpu.dot_dimension_numbers<[1], [0], [0], [1], [0, 0, 1, 1], [], []>} : vector<24x8xbf16>, vector<8x1024xbf16>, vector<24x1024xf32> -> vector<24x1024xf32>
    %c0_33 = arith.constant 0 : index
    %c0_34 = arith.constant 0 : index
    %59 = vector.load %arg11[%c0_33, %c0_34] : memref<1x1024xf32, #tpu.memory_space<vmem>>, vector<1x1024xf32>
    %60 = vector.broadcast %59 : vector<1x1024xf32> to vector<24x1024xf32>
    %61 = arith.addf %58, %60 : vector<24x1024xf32>
    %c0_35 = arith.constant 0 : index
    %c0_36 = arith.constant 0 : index
    %62 = vector.load %arg8[%c0_35, %c0_36] : memref<16x6xf32, #tpu.memory_space<vmem>>, vector<16x6xf32>
    %63 = arith.truncf %62 : vector<16x6xf32> to vector<16x6xbf16>
    %c0_37 = arith.constant 0 : index
    %c0_38 = arith.constant 0 : index
    %64 = vector.load %arg12[%c0_37, %c0_38] : memref<6x1024xf32, #tpu.memory_space<vmem>>, vector<6x1024xf32>
    %65 = arith.truncf %64 : vector<6x1024xf32> to vector<6x1024xbf16>
    %cst_39 = arith.constant dense<0.000000e+00> : vector<16x1024xf32>
    %66 = tpu.matmul %63, %65, %cst_39 {dimension_numbers = #tpu.dot_dimension_numbers<[1], [0], [0], [1], [0, 0, 1, 1], [], []>} : vector<16x6xbf16>, vector<6x1024xbf16>, vector<16x1024xf32> -> vector<16x1024xf32>
    %c0_40 = arith.constant 0 : index
    %c0_41 = arith.constant 0 : index
    %67 = vector.load %arg13[%c0_40, %c0_41] : memref<1x1024xf32, #tpu.memory_space<vmem>>, vector<1x1024xf32>
    %68 = vector.broadcast %67 : vector<1x1024xf32> to vector<16x1024xf32>
    %69 = arith.addf %66, %68 : vector<16x1024xf32>
    %c0_42 = arith.constant 0 : index
    %c0_43 = arith.constant 0 : index
    %70 = vector.load %arg9[%c0_42, %c0_43] : memref<8x4xf32, #tpu.memory_space<vmem>>, vector<8x4xf32>
    %71 = arith.truncf %70 : vector<8x4xf32> to vector<8x4xbf16>
    %c0_44 = arith.constant 0 : index
    %c0_45 = arith.constant 0 : index
    %72 = vector.load %arg14[%c0_44, %c0_45] : memref<4x1024xf32, #tpu.memory_space<vmem>>, vector<4x1024xf32>
    %73 = arith.truncf %72 : vector<4x1024xf32> to vector<4x1024xbf16>
    %cst_46 = arith.constant dense<0.000000e+00> : vector<8x1024xf32>
    %74 = tpu.matmul %71, %73, %cst_46 {dimension_numbers = #tpu.dot_dimension_numbers<[1], [0], [0], [1], [0, 0, 1, 1], [], []>} : vector<8x4xbf16>, vector<4x1024xbf16>, vector<8x1024xf32> -> vector<8x1024xf32>
    %c0_47 = arith.constant 0 : index
    %c0_48 = arith.constant 0 : index
    %75 = vector.load %arg15[%c0_47, %c0_48] : memref<1x1024xf32, #tpu.memory_space<vmem>>, vector<1x1024xf32>
    %76 = vector.broadcast %75 : vector<1x1024xf32> to vector<8x1024xf32>
    %77 = arith.addf %74, %76 : vector<8x1024xf32>
    %c0_49 = arith.constant 0 : index
    %c0_50 = arith.constant 0 : index
    %78 = vector.load %arg18[%c0_49, %c0_50] : memref<32x96xf32, #tpu.memory_space<vmem>>, vector<32x96xf32>
    %79 = arith.truncf %78 : vector<32x96xf32> to vector<32x96xbf16>
    %c0_51 = arith.constant 0 : index
    %c0_52 = arith.constant 0 : index
    %80 = vector.load %arg19[%c0_51, %c0_52] : memref<32x96xf32, #tpu.memory_space<vmem>>, vector<32x96xf32>
    %81 = arith.truncf %80 : vector<32x96xf32> to vector<32x96xbf16>
    %c0_53 = arith.constant 0 : index
    %c0_54 = arith.constant 0 : index
    %82 = vector.load %arg20[%c0_53, %c0_54] : memref<1x96xf32, #tpu.memory_space<vmem>>, vector<1x96xf32>
    %c0_55 = arith.constant 0 : index
    %c0_56 = arith.constant 0 : index
    %83 = vector.load %arg21[%c0_55, %c0_56] : memref<1x96xf32, #tpu.memory_space<vmem>>, vector<1x96xf32>
    %c0_57 = arith.constant 0 : index
    %c0_58 = arith.constant 0 : index
    %84 = vector.load %arg6[%c0_57, %c0_58] : memref<16x32xf32, #tpu.memory_space<vmem>>, vector<16x32xf32>
    %85 = arith.truncf %84 : vector<16x32xf32> to vector<16x32xbf16>
    %cst_59 = arith.constant dense<0.000000e+00> : vector<24x32xf32>
    %86 = tpu.matmul %10, %85, %cst_59 {dimension_numbers = #tpu.dot_dimension_numbers<[1], [0], [0], [1], [0, 0, 1, 1], [], []>} : vector<24x16xbf16>, vector<16x32xbf16>, vector<24x32xf32> -> vector<24x32xf32>
    %87 = arith.truncf %86 : vector<24x32xf32> to vector<24x32xbf16>
    %cst_60 = arith.constant dense<0.000000e+00> : vector<24x1024xf32>
    %88 = tpu.matmul %87, %0, %cst_60 {dimension_numbers = #tpu.dot_dimension_numbers<[1], [0], [0], [1], [0, 0, 1, 1], [], []>} : vector<24x32xbf16>, vector<32x1024xbf16>, vector<24x1024xf32> -> vector<24x1024xf32>
    %89 = arith.mulf %61, %88 : vector<24x1024xf32>
    %90 = arith.truncf %89 : vector<24x1024xf32> to vector<24x1024xbf16>
    %cst_61 = arith.constant dense<0.000000e+00> : vector<24x32xf32>
    %91 = tpu.matmul %90, %1, %cst_61 {dimension_numbers = #tpu.dot_dimension_numbers<[1], [0], [0], [1], [0, 0, 1, 1], [], []>} : vector<24x1024xbf16>, vector<1024x32xbf16>, vector<24x32xf32> -> vector<24x32xf32>
    %92 = arith.truncf %91 : vector<24x32xf32> to vector<24x32xbf16>
    %cst_62 = arith.constant dense<0.000000e+00> : vector<16x32xf32>
    %93 = tpu.matmul %51, %92, %cst_62 {dimension_numbers = #tpu.dot_dimension_numbers<[1], [0], [0], [1], [0, 0, 1, 1], [], []>} : vector<16x24xbf16>, vector<24x32xbf16>, vector<16x32xf32> -> vector<16x32xf32>
    %94 = arith.truncf %93 : vector<16x32xf32> to vector<16x32xbf16>
    %cst_63 = arith.constant dense<0.000000e+00> : vector<16x1024xf32>
    %95 = tpu.matmul %94, %0, %cst_63 {dimension_numbers = #tpu.dot_dimension_numbers<[1], [0], [0], [1], [0, 0, 1, 1], [], []>} : vector<16x32xbf16>, vector<32x1024xbf16>, vector<16x1024xf32> -> vector<16x1024xf32>
    %96 = arith.mulf %69, %95 : vector<16x1024xf32>
    %97 = arith.truncf %96 : vector<16x1024xf32> to vector<16x1024xbf16>
    %cst_64 = arith.constant dense<0.000000e+00> : vector<16x32xf32>
    %98 = tpu.matmul %97, %1, %cst_64 {dimension_numbers = #tpu.dot_dimension_numbers<[1], [0], [0], [1], [0, 0, 1, 1], [], []>} : vector<16x1024xbf16>, vector<1024x32xbf16>, vector<16x32xf32> -> vector<16x32xf32>
    %99 = arith.truncf %98 : vector<16x32xf32> to vector<16x32xbf16>
    %cst_65 = arith.constant dense<0.000000e+00> : vector<8x32xf32>
    %100 = tpu.matmul %53, %99, %cst_65 {dimension_numbers = #tpu.dot_dimension_numbers<[1], [0], [0], [1], [0, 0, 1, 1], [], []>} : vector<8x16xbf16>, vector<16x32xbf16>, vector<8x32xf32> -> vector<8x32xf32>
    %101 = arith.truncf %100 : vector<8x32xf32> to vector<8x32xbf16>
    %cst_66 = arith.constant dense<0.000000e+00> : vector<8x1024xf32>
    %102 = tpu.matmul %101, %0, %cst_66 {dimension_numbers = #tpu.dot_dimension_numbers<[1], [0], [0], [1], [0, 0, 1, 1], [], []>} : vector<8x32xbf16>, vector<32x1024xbf16>, vector<8x1024xf32> -> vector<8x1024xf32>
    %103 = arith.mulf %77, %102 : vector<8x1024xf32>
    %104 = arith.truncf %103 : vector<8x1024xf32> to vector<8x1024xbf16>
    %cst_67 = arith.constant dense<0.000000e+00> : vector<8x32xf32>
    %105 = tpu.matmul %104, %1, %cst_67 {dimension_numbers = #tpu.dot_dimension_numbers<[1], [0], [0], [1], [0, 0, 1, 1], [], []>} : vector<8x1024xbf16>, vector<1024x32xbf16>, vector<8x32xf32> -> vector<8x32xf32>
    %106 = arith.truncf %105 : vector<8x32xf32> to vector<8x32xbf16>
    %cst_68 = arith.constant dense<0.000000e+00> : vector<16x32xf32>
    %107 = tpu.matmul %49, %106, %cst_68 {dimension_numbers = #tpu.dot_dimension_numbers<[1], [0], [0], [1], [0, 0, 1, 1], [], []>} : vector<16x8xbf16>, vector<8x32xbf16>, vector<16x32xf32> -> vector<16x32xf32>
    %108 = arith.truncf %107 : vector<16x32xf32> to vector<16x32xbf16>
    %cst_69 = arith.constant dense<0.000000e+00> : vector<16x96xf32>
    %109 = tpu.matmul %108, %79, %cst_69 {dimension_numbers = #tpu.dot_dimension_numbers<[1], [0], [0], [1], [0, 0, 1, 1], [], []>} : vector<16x32xbf16>, vector<32x96xbf16>, vector<16x96xf32> -> vector<16x96xf32>
    %110 = vector.broadcast %82 : vector<1x96xf32> to vector<16x96xf32>
    %111 = arith.addf %109, %110 : vector<16x96xf32>
    %112 = arith.truncf %84 : vector<16x32xf32> to vector<16x32xbf16>
    %cst_70 = arith.constant dense<0.000000e+00> : vector<16x96xf32>
    %113 = tpu.matmul %112, %81, %cst_70 {dimension_numbers = #tpu.dot_dimension_numbers<[1], [0], [0], [1], [0, 0, 1, 1], [], []>} : vector<16x32xbf16>, vector<32x96xbf16>, vector<16x96xf32> -> vector<16x96xf32>
    %114 = vector.broadcast %83 : vector<1x96xf32> to vector<16x96xf32>
    %115 = arith.addf %113, %114 : vector<16x96xf32>
    %116 = vector.extract_strided_slice %111 {offsets = [0, 0], sizes = [16, 32], strides = [1, 1]} : vector<16x96xf32> to vector<16x32xf32>
    %117 = vector.extract_strided_slice %115 {offsets = [0, 0], sizes = [16, 32], strides = [1, 1]} : vector<16x96xf32> to vector<16x32xf32>
    %118 = arith.addf %116, %117 : vector<16x32xf32>
    %119 = arith.negf %118 : vector<16x32xf32>
    %120 = math.exp %119 : vector<16x32xf32>
    %cst_71 = arith.constant 1.000000e+00 : f32
    %121 = vector.broadcast %cst_71 : f32 to vector<16x32xf32>
    %122 = arith.addf %121, %120 : vector<16x32xf32>
    %123 = arith.divf %121, %122 : vector<16x32xf32>
    %124 = vector.extract_strided_slice %111 {offsets = [0, 32], sizes = [16, 32], strides = [1, 1]} : vector<16x96xf32> to vector<16x32xf32>
    %125 = vector.extract_strided_slice %115 {offsets = [0, 32], sizes = [16, 32], strides = [1, 1]} : vector<16x96xf32> to vector<16x32xf32>
    %126 = arith.addf %124, %125 : vector<16x32xf32>
    %127 = arith.negf %126 : vector<16x32xf32>
    %128 = math.exp %127 : vector<16x32xf32>
    %cst_72 = arith.constant 1.000000e+00 : f32
    %129 = vector.broadcast %cst_72 : f32 to vector<16x32xf32>
    %130 = arith.addf %129, %128 : vector<16x32xf32>
    %131 = arith.divf %129, %130 : vector<16x32xf32>
    %132 = vector.extract_strided_slice %111 {offsets = [0, 64], sizes = [16, 32], strides = [1, 1]} : vector<16x96xf32> to vector<16x32xf32>
    %133 = vector.extract_strided_slice %115 {offsets = [0, 64], sizes = [16, 32], strides = [1, 1]} : vector<16x96xf32> to vector<16x32xf32>
    %134 = arith.mulf %123, %133 : vector<16x32xf32>
    %135 = arith.addf %132, %134 : vector<16x32xf32>
    %136 = math.tanh %135 : vector<16x32xf32>
    %cst_73 = arith.constant 1.000000e+00 : f32
    %137 = vector.broadcast %cst_73 : f32 to vector<16x32xf32>
    %138 = arith.subf %137, %131 : vector<16x32xf32>
    %139 = arith.mulf %138, %136 : vector<16x32xf32>
    %140 = arith.mulf %131, %84 : vector<16x32xf32>
    %141 = arith.addf %139, %140 : vector<16x32xf32>
    %142 = arith.truncf %141 : vector<16x32xf32> to vector<16x32xbf16>
    %cst_74 = arith.constant dense<0.000000e+00> : vector<24x32xf32>
    %143 = tpu.matmul %10, %142, %cst_74 {dimension_numbers = #tpu.dot_dimension_numbers<[1], [0], [0], [1], [0, 0, 1, 1], [], []>} : vector<24x16xbf16>, vector<16x32xbf16>, vector<24x32xf32> -> vector<24x32xf32>
    %144 = arith.truncf %143 : vector<24x32xf32> to vector<24x32xbf16>
    %cst_75 = arith.constant dense<0.000000e+00> : vector<24x1024xf32>
    %145 = tpu.matmul %144, %0, %cst_75 {dimension_numbers = #tpu.dot_dimension_numbers<[1], [0], [0], [1], [0, 0, 1, 1], [], []>} : vector<24x32xbf16>, vector<32x1024xbf16>, vector<24x1024xf32> -> vector<24x1024xf32>
    %146 = arith.mulf %61, %145 : vector<24x1024xf32>
    %147 = arith.truncf %146 : vector<24x1024xf32> to vector<24x1024xbf16>
    %cst_76 = arith.constant dense<0.000000e+00> : vector<24x32xf32>
    %148 = tpu.matmul %147, %1, %cst_76 {dimension_numbers = #tpu.dot_dimension_numbers<[1], [0], [0], [1], [0, 0, 1, 1], [], []>} : vector<24x1024xbf16>, vector<1024x32xbf16>, vector<24x32xf32> -> vector<24x32xf32>
    %149 = arith.truncf %148 : vector<24x32xf32> to vector<24x32xbf16>
    %cst_77 = arith.constant dense<0.000000e+00> : vector<16x32xf32>
    %150 = tpu.matmul %51, %149, %cst_77 {dimension_numbers = #tpu.dot_dimension_numbers<[1], [0], [0], [1], [0, 0, 1, 1], [], []>} : vector<16x24xbf16>, vector<24x32xbf16>, vector<16x32xf32> -> vector<16x32xf32>
    %151 = arith.truncf %150 : vector<16x32xf32> to vector<16x32xbf16>
    %cst_78 = arith.constant dense<0.000000e+00> : vector<16x1024xf32>
    %152 = tpu.matmul %151, %0, %cst_78 {dimension_numbers = #tpu.dot_dimension_numbers<[1], [0], [0], [1], [0, 0, 1, 1], [], []>} : vector<16x32xbf16>, vector<32x1024xbf16>, vector<16x1024xf32> -> vector<16x1024xf32>
    %153 = arith.mulf %69, %152 : vector<16x1024xf32>
    %154 = arith.truncf %153 : vector<16x1024xf32> to vector<16x1024xbf16>
    %cst_79 = arith.constant dense<0.000000e+00> : vector<16x32xf32>
    %155 = tpu.matmul %154, %1, %cst_79 {dimension_numbers = #tpu.dot_dimension_numbers<[1], [0], [0], [1], [0, 0, 1, 1], [], []>} : vector<16x1024xbf16>, vector<1024x32xbf16>, vector<16x32xf32> -> vector<16x32xf32>
    %156 = arith.truncf %155 : vector<16x32xf32> to vector<16x32xbf16>
    %cst_80 = arith.constant dense<0.000000e+00> : vector<8x32xf32>
    %157 = tpu.matmul %53, %156, %cst_80 {dimension_numbers = #tpu.dot_dimension_numbers<[1], [0], [0], [1], [0, 0, 1, 1], [], []>} : vector<8x16xbf16>, vector<16x32xbf16>, vector<8x32xf32> -> vector<8x32xf32>
    %158 = arith.truncf %157 : vector<8x32xf32> to vector<8x32xbf16>
    %cst_81 = arith.constant dense<0.000000e+00> : vector<8x1024xf32>
    %159 = tpu.matmul %158, %0, %cst_81 {dimension_numbers = #tpu.dot_dimension_numbers<[1], [0], [0], [1], [0, 0, 1, 1], [], []>} : vector<8x32xbf16>, vector<32x1024xbf16>, vector<8x1024xf32> -> vector<8x1024xf32>
    %160 = arith.mulf %77, %159 : vector<8x1024xf32>
    %161 = arith.truncf %160 : vector<8x1024xf32> to vector<8x1024xbf16>
    %cst_82 = arith.constant dense<0.000000e+00> : vector<8x32xf32>
    %162 = tpu.matmul %161, %1, %cst_82 {dimension_numbers = #tpu.dot_dimension_numbers<[1], [0], [0], [1], [0, 0, 1, 1], [], []>} : vector<8x1024xbf16>, vector<1024x32xbf16>, vector<8x32xf32> -> vector<8x32xf32>
    %163 = arith.truncf %162 : vector<8x32xf32> to vector<8x32xbf16>
    %cst_83 = arith.constant dense<0.000000e+00> : vector<16x32xf32>
    %164 = tpu.matmul %49, %163, %cst_83 {dimension_numbers = #tpu.dot_dimension_numbers<[1], [0], [0], [1], [0, 0, 1, 1], [], []>} : vector<16x8xbf16>, vector<8x32xbf16>, vector<16x32xf32> -> vector<16x32xf32>
    %165 = arith.truncf %164 : vector<16x32xf32> to vector<16x32xbf16>
    %cst_84 = arith.constant dense<0.000000e+00> : vector<16x96xf32>
    %166 = tpu.matmul %165, %79, %cst_84 {dimension_numbers = #tpu.dot_dimension_numbers<[1], [0], [0], [1], [0, 0, 1, 1], [], []>} : vector<16x32xbf16>, vector<32x96xbf16>, vector<16x96xf32> -> vector<16x96xf32>
    %167 = vector.broadcast %82 : vector<1x96xf32> to vector<16x96xf32>
    %168 = arith.addf %166, %167 : vector<16x96xf32>
    %169 = arith.truncf %141 : vector<16x32xf32> to vector<16x32xbf16>
    %cst_85 = arith.constant dense<0.000000e+00> : vector<16x96xf32>
    %170 = tpu.matmul %169, %81, %cst_85 {dimension_numbers = #tpu.dot_dimension_numbers<[1], [0], [0], [1], [0, 0, 1, 1], [], []>} : vector<16x32xbf16>, vector<32x96xbf16>, vector<16x96xf32> -> vector<16x96xf32>
    %171 = vector.broadcast %83 : vector<1x96xf32> to vector<16x96xf32>
    %172 = arith.addf %170, %171 : vector<16x96xf32>
    %173 = vector.extract_strided_slice %168 {offsets = [0, 0], sizes = [16, 32], strides = [1, 1]} : vector<16x96xf32> to vector<16x32xf32>
    %174 = vector.extract_strided_slice %172 {offsets = [0, 0], sizes = [16, 32], strides = [1, 1]} : vector<16x96xf32> to vector<16x32xf32>
    %175 = arith.addf %173, %174 : vector<16x32xf32>
    %176 = arith.negf %175 : vector<16x32xf32>
    %177 = math.exp %176 : vector<16x32xf32>
    %cst_86 = arith.constant 1.000000e+00 : f32
    %178 = vector.broadcast %cst_86 : f32 to vector<16x32xf32>
    %179 = arith.addf %178, %177 : vector<16x32xf32>
    %180 = arith.divf %178, %179 : vector<16x32xf32>
    %181 = vector.extract_strided_slice %168 {offsets = [0, 32], sizes = [16, 32], strides = [1, 1]} : vector<16x96xf32> to vector<16x32xf32>
    %182 = vector.extract_strided_slice %172 {offsets = [0, 32], sizes = [16, 32], strides = [1, 1]} : vector<16x96xf32> to vector<16x32xf32>
    %183 = arith.addf %181, %182 : vector<16x32xf32>
    %184 = arith.negf %183 : vector<16x32xf32>
    %185 = math.exp %184 : vector<16x32xf32>
    %cst_87 = arith.constant 1.000000e+00 : f32
    %186 = vector.broadcast %cst_87 : f32 to vector<16x32xf32>
    %187 = arith.addf %186, %185 : vector<16x32xf32>
    %188 = arith.divf %186, %187 : vector<16x32xf32>
    %189 = vector.extract_strided_slice %168 {offsets = [0, 64], sizes = [16, 32], strides = [1, 1]} : vector<16x96xf32> to vector<16x32xf32>
    %190 = vector.extract_strided_slice %172 {offsets = [0, 64], sizes = [16, 32], strides = [1, 1]} : vector<16x96xf32> to vector<16x32xf32>
    %191 = arith.mulf %180, %190 : vector<16x32xf32>
    %192 = arith.addf %189, %191 : vector<16x32xf32>
    %193 = math.tanh %192 : vector<16x32xf32>
    %cst_88 = arith.constant 1.000000e+00 : f32
    %194 = vector.broadcast %cst_88 : f32 to vector<16x32xf32>
    %195 = arith.subf %194, %188 : vector<16x32xf32>
    %196 = arith.mulf %195, %193 : vector<16x32xf32>
    %197 = arith.mulf %188, %141 : vector<16x32xf32>
    %198 = arith.addf %196, %197 : vector<16x32xf32>
    %199 = arith.truncf %198 : vector<16x32xf32> to vector<16x32xbf16>
    %cst_89 = arith.constant dense<0.000000e+00> : vector<24x32xf32>
    %200 = tpu.matmul %10, %199, %cst_89 {dimension_numbers = #tpu.dot_dimension_numbers<[1], [0], [0], [1], [0, 0, 1, 1], [], []>} : vector<24x16xbf16>, vector<16x32xbf16>, vector<24x32xf32> -> vector<24x32xf32>
    %201 = arith.truncf %200 : vector<24x32xf32> to vector<24x32xbf16>
    %cst_90 = arith.constant dense<0.000000e+00> : vector<24x1024xf32>
    %202 = tpu.matmul %201, %0, %cst_90 {dimension_numbers = #tpu.dot_dimension_numbers<[1], [0], [0], [1], [0, 0, 1, 1], [], []>} : vector<24x32xbf16>, vector<32x1024xbf16>, vector<24x1024xf32> -> vector<24x1024xf32>
    %203 = arith.mulf %61, %202 : vector<24x1024xf32>
    %204 = arith.truncf %203 : vector<24x1024xf32> to vector<24x1024xbf16>
    %cst_91 = arith.constant dense<0.000000e+00> : vector<24x32xf32>
    %205 = tpu.matmul %204, %1, %cst_91 {dimension_numbers = #tpu.dot_dimension_numbers<[1], [0], [0], [1], [0, 0, 1, 1], [], []>} : vector<24x1024xbf16>, vector<1024x32xbf16>, vector<24x32xf32> -> vector<24x32xf32>
    %206 = arith.truncf %205 : vector<24x32xf32> to vector<24x32xbf16>
    %cst_92 = arith.constant dense<0.000000e+00> : vector<16x32xf32>
    %207 = tpu.matmul %51, %206, %cst_92 {dimension_numbers = #tpu.dot_dimension_numbers<[1], [0], [0], [1], [0, 0, 1, 1], [], []>} : vector<16x24xbf16>, vector<24x32xbf16>, vector<16x32xf32> -> vector<16x32xf32>
    %208 = arith.truncf %207 : vector<16x32xf32> to vector<16x32xbf16>
    %cst_93 = arith.constant dense<0.000000e+00> : vector<16x1024xf32>
    %209 = tpu.matmul %208, %0, %cst_93 {dimension_numbers = #tpu.dot_dimension_numbers<[1], [0], [0], [1], [0, 0, 1, 1], [], []>} : vector<16x32xbf16>, vector<32x1024xbf16>, vector<16x1024xf32> -> vector<16x1024xf32>
    %210 = arith.mulf %69, %209 : vector<16x1024xf32>
    %211 = arith.truncf %210 : vector<16x1024xf32> to vector<16x1024xbf16>
    %cst_94 = arith.constant dense<0.000000e+00> : vector<16x32xf32>
    %212 = tpu.matmul %211, %1, %cst_94 {dimension_numbers = #tpu.dot_dimension_numbers<[1], [0], [0], [1], [0, 0, 1, 1], [], []>} : vector<16x1024xbf16>, vector<1024x32xbf16>, vector<16x32xf32> -> vector<16x32xf32>
    %213 = arith.truncf %212 : vector<16x32xf32> to vector<16x32xbf16>
    %cst_95 = arith.constant dense<0.000000e+00> : vector<8x32xf32>
    %214 = tpu.matmul %53, %213, %cst_95 {dimension_numbers = #tpu.dot_dimension_numbers<[1], [0], [0], [1], [0, 0, 1, 1], [], []>} : vector<8x16xbf16>, vector<16x32xbf16>, vector<8x32xf32> -> vector<8x32xf32>
    %215 = arith.truncf %214 : vector<8x32xf32> to vector<8x32xbf16>
    %cst_96 = arith.constant dense<0.000000e+00> : vector<8x1024xf32>
    %216 = tpu.matmul %215, %0, %cst_96 {dimension_numbers = #tpu.dot_dimension_numbers<[1], [0], [0], [1], [0, 0, 1, 1], [], []>} : vector<8x32xbf16>, vector<32x1024xbf16>, vector<8x1024xf32> -> vector<8x1024xf32>
    %217 = arith.mulf %77, %216 : vector<8x1024xf32>
    %218 = arith.truncf %217 : vector<8x1024xf32> to vector<8x1024xbf16>
    %cst_97 = arith.constant dense<0.000000e+00> : vector<8x32xf32>
    %219 = tpu.matmul %218, %1, %cst_97 {dimension_numbers = #tpu.dot_dimension_numbers<[1], [0], [0], [1], [0, 0, 1, 1], [], []>} : vector<8x1024xbf16>, vector<1024x32xbf16>, vector<8x32xf32> -> vector<8x32xf32>
    %220 = arith.truncf %219 : vector<8x32xf32> to vector<8x32xbf16>
    %cst_98 = arith.constant dense<0.000000e+00> : vector<16x32xf32>
    %221 = tpu.matmul %49, %220, %cst_98 {dimension_numbers = #tpu.dot_dimension_numbers<[1], [0], [0], [1], [0, 0, 1, 1], [], []>} : vector<16x8xbf16>, vector<8x32xbf16>, vector<16x32xf32> -> vector<16x32xf32>
    %222 = arith.truncf %221 : vector<16x32xf32> to vector<16x32xbf16>
    %cst_99 = arith.constant dense<0.000000e+00> : vector<16x96xf32>
    %223 = tpu.matmul %222, %79, %cst_99 {dimension_numbers = #tpu.dot_dimension_numbers<[1], [0], [0], [1], [0, 0, 1, 1], [], []>} : vector<16x32xbf16>, vector<32x96xbf16>, vector<16x96xf32> -> vector<16x96xf32>
    %224 = vector.broadcast %82 : vector<1x96xf32> to vector<16x96xf32>
    %225 = arith.addf %223, %224 : vector<16x96xf32>
    %226 = arith.truncf %198 : vector<16x32xf32> to vector<16x32xbf16>
    %cst_100 = arith.constant dense<0.000000e+00> : vector<16x96xf32>
    %227 = tpu.matmul %226, %81, %cst_100 {dimension_numbers = #tpu.dot_dimension_numbers<[1], [0], [0], [1], [0, 0, 1, 1], [], []>} : vector<16x32xbf16>, vector<32x96xbf16>, vector<16x96xf32> -> vector<16x96xf32>
    %228 = vector.broadcast %83 : vector<1x96xf32> to vector<16x96xf32>
    %229 = arith.addf %227, %228 : vector<16x96xf32>
    %230 = vector.extract_strided_slice %225 {offsets = [0, 0], sizes = [16, 32], strides = [1, 1]} : vector<16x96xf32> to vector<16x32xf32>
    %231 = vector.extract_strided_slice %229 {offsets = [0, 0], sizes = [16, 32], strides = [1, 1]} : vector<16x96xf32> to vector<16x32xf32>
    %232 = arith.addf %230, %231 : vector<16x32xf32>
    %233 = arith.negf %232 : vector<16x32xf32>
    %234 = math.exp %233 : vector<16x32xf32>
    %cst_101 = arith.constant 1.000000e+00 : f32
    %235 = vector.broadcast %cst_101 : f32 to vector<16x32xf32>
    %236 = arith.addf %235, %234 : vector<16x32xf32>
    %237 = arith.divf %235, %236 : vector<16x32xf32>
    %238 = vector.extract_strided_slice %225 {offsets = [0, 32], sizes = [16, 32], strides = [1, 1]} : vector<16x96xf32> to vector<16x32xf32>
    %239 = vector.extract_strided_slice %229 {offsets = [0, 32], sizes = [16, 32], strides = [1, 1]} : vector<16x96xf32> to vector<16x32xf32>
    %240 = arith.addf %238, %239 : vector<16x32xf32>
    %241 = arith.negf %240 : vector<16x32xf32>
    %242 = math.exp %241 : vector<16x32xf32>
    %cst_102 = arith.constant 1.000000e+00 : f32
    %243 = vector.broadcast %cst_102 : f32 to vector<16x32xf32>
    %244 = arith.addf %243, %242 : vector<16x32xf32>
    %245 = arith.divf %243, %244 : vector<16x32xf32>
    %246 = vector.extract_strided_slice %225 {offsets = [0, 64], sizes = [16, 32], strides = [1, 1]} : vector<16x96xf32> to vector<16x32xf32>
    %247 = vector.extract_strided_slice %229 {offsets = [0, 64], sizes = [16, 32], strides = [1, 1]} : vector<16x96xf32> to vector<16x32xf32>
    %248 = arith.mulf %237, %247 : vector<16x32xf32>
    %249 = arith.addf %246, %248 : vector<16x32xf32>
    %250 = math.tanh %249 : vector<16x32xf32>
    %cst_103 = arith.constant 1.000000e+00 : f32
    %251 = vector.broadcast %cst_103 : f32 to vector<16x32xf32>
    %252 = arith.subf %251, %245 : vector<16x32xf32>
    %253 = arith.mulf %252, %250 : vector<16x32xf32>
    %254 = arith.mulf %245, %198 : vector<16x32xf32>
    %255 = arith.addf %253, %254 : vector<16x32xf32>
    %256 = arith.truncf %255 : vector<16x32xf32> to vector<16x32xbf16>
    %cst_104 = arith.constant dense<0.000000e+00> : vector<24x32xf32>
    %257 = tpu.matmul %10, %256, %cst_104 {dimension_numbers = #tpu.dot_dimension_numbers<[1], [0], [0], [1], [0, 0, 1, 1], [], []>} : vector<24x16xbf16>, vector<16x32xbf16>, vector<24x32xf32> -> vector<24x32xf32>
    %258 = arith.truncf %257 : vector<24x32xf32> to vector<24x32xbf16>
    %cst_105 = arith.constant dense<0.000000e+00> : vector<24x1024xf32>
    %259 = tpu.matmul %258, %0, %cst_105 {dimension_numbers = #tpu.dot_dimension_numbers<[1], [0], [0], [1], [0, 0, 1, 1], [], []>} : vector<24x32xbf16>, vector<32x1024xbf16>, vector<24x1024xf32> -> vector<24x1024xf32>
    %260 = arith.mulf %61, %259 : vector<24x1024xf32>
    %261 = arith.truncf %260 : vector<24x1024xf32> to vector<24x1024xbf16>
    %cst_106 = arith.constant dense<0.000000e+00> : vector<24x32xf32>
    %262 = tpu.matmul %261, %1, %cst_106 {dimension_numbers = #tpu.dot_dimension_numbers<[1], [0], [0], [1], [0, 0, 1, 1], [], []>} : vector<24x1024xbf16>, vector<1024x32xbf16>, vector<24x32xf32> -> vector<24x32xf32>
    %263 = arith.truncf %262 : vector<24x32xf32> to vector<24x32xbf16>
    %cst_107 = arith.constant dense<0.000000e+00> : vector<16x32xf32>
    %264 = tpu.matmul %51, %263, %cst_107 {dimension_numbers = #tpu.dot_dimension_numbers<[1], [0], [0], [1], [0, 0, 1, 1], [], []>} : vector<16x24xbf16>, vector<24x32xbf16>, vector<16x32xf32> -> vector<16x32xf32>
    %265 = arith.truncf %264 : vector<16x32xf32> to vector<16x32xbf16>
    %cst_108 = arith.constant dense<0.000000e+00> : vector<16x1024xf32>
    %266 = tpu.matmul %265, %0, %cst_108 {dimension_numbers = #tpu.dot_dimension_numbers<[1], [0], [0], [1], [0, 0, 1, 1], [], []>} : vector<16x32xbf16>, vector<32x1024xbf16>, vector<16x1024xf32> -> vector<16x1024xf32>
    %267 = arith.mulf %69, %266 : vector<16x1024xf32>
    %268 = arith.truncf %267 : vector<16x1024xf32> to vector<16x1024xbf16>
    %cst_109 = arith.constant dense<0.000000e+00> : vector<16x32xf32>
    %269 = tpu.matmul %268, %1, %cst_109 {dimension_numbers = #tpu.dot_dimension_numbers<[1], [0], [0], [1], [0, 0, 1, 1], [], []>} : vector<16x1024xbf16>, vector<1024x32xbf16>, vector<16x32xf32> -> vector<16x32xf32>
    %270 = arith.truncf %269 : vector<16x32xf32> to vector<16x32xbf16>
    %cst_110 = arith.constant dense<0.000000e+00> : vector<8x32xf32>
    %271 = tpu.matmul %53, %270, %cst_110 {dimension_numbers = #tpu.dot_dimension_numbers<[1], [0], [0], [1], [0, 0, 1, 1], [], []>} : vector<8x16xbf16>, vector<16x32xbf16>, vector<8x32xf32> -> vector<8x32xf32>
    %272 = arith.truncf %271 : vector<8x32xf32> to vector<8x32xbf16>
    %cst_111 = arith.constant dense<0.000000e+00> : vector<8x1024xf32>
    %273 = tpu.matmul %272, %0, %cst_111 {dimension_numbers = #tpu.dot_dimension_numbers<[1], [0], [0], [1], [0, 0, 1, 1], [], []>} : vector<8x32xbf16>, vector<32x1024xbf16>, vector<8x1024xf32> -> vector<8x1024xf32>
    %274 = arith.mulf %77, %273 : vector<8x1024xf32>
    %275 = arith.truncf %274 : vector<8x1024xf32> to vector<8x1024xbf16>
    %cst_112 = arith.constant dense<0.000000e+00> : vector<8x32xf32>
    %276 = tpu.matmul %275, %1, %cst_112 {dimension_numbers = #tpu.dot_dimension_numbers<[1], [0], [0], [1], [0, 0, 1, 1], [], []>} : vector<8x1024xbf16>, vector<1024x32xbf16>, vector<8x32xf32> -> vector<8x32xf32>
    %277 = arith.truncf %276 : vector<8x32xf32> to vector<8x32xbf16>
    %cst_113 = arith.constant dense<0.000000e+00> : vector<16x32xf32>
    %278 = tpu.matmul %49, %277, %cst_113 {dimension_numbers = #tpu.dot_dimension_numbers<[1], [0], [0], [1], [0, 0, 1, 1], [], []>} : vector<16x8xbf16>, vector<8x32xbf16>, vector<16x32xf32> -> vector<16x32xf32>
    %279 = arith.truncf %278 : vector<16x32xf32> to vector<16x32xbf16>
    %cst_114 = arith.constant dense<0.000000e+00> : vector<16x96xf32>
    %280 = tpu.matmul %279, %79, %cst_114 {dimension_numbers = #tpu.dot_dimension_numbers<[1], [0], [0], [1], [0, 0, 1, 1], [], []>} : vector<16x32xbf16>, vector<32x96xbf16>, vector<16x96xf32> -> vector<16x96xf32>
    %281 = vector.broadcast %82 : vector<1x96xf32> to vector<16x96xf32>
    %282 = arith.addf %280, %281 : vector<16x96xf32>
    %283 = arith.truncf %255 : vector<16x32xf32> to vector<16x32xbf16>
    %cst_115 = arith.constant dense<0.000000e+00> : vector<16x96xf32>
    %284 = tpu.matmul %283, %81, %cst_115 {dimension_numbers = #tpu.dot_dimension_numbers<[1], [0], [0], [1], [0, 0, 1, 1], [], []>} : vector<16x32xbf16>, vector<32x96xbf16>, vector<16x96xf32> -> vector<16x96xf32>
    %285 = vector.broadcast %83 : vector<1x96xf32> to vector<16x96xf32>
    %286 = arith.addf %284, %285 : vector<16x96xf32>
    %287 = vector.extract_strided_slice %282 {offsets = [0, 0], sizes = [16, 32], strides = [1, 1]} : vector<16x96xf32> to vector<16x32xf32>
    %288 = vector.extract_strided_slice %286 {offsets = [0, 0], sizes = [16, 32], strides = [1, 1]} : vector<16x96xf32> to vector<16x32xf32>
    %289 = arith.addf %287, %288 : vector<16x32xf32>
    %290 = arith.negf %289 : vector<16x32xf32>
    %291 = math.exp %290 : vector<16x32xf32>
    %cst_116 = arith.constant 1.000000e+00 : f32
    %292 = vector.broadcast %cst_116 : f32 to vector<16x32xf32>
    %293 = arith.addf %292, %291 : vector<16x32xf32>
    %294 = arith.divf %292, %293 : vector<16x32xf32>
    %295 = vector.extract_strided_slice %282 {offsets = [0, 32], sizes = [16, 32], strides = [1, 1]} : vector<16x96xf32> to vector<16x32xf32>
    %296 = vector.extract_strided_slice %286 {offsets = [0, 32], sizes = [16, 32], strides = [1, 1]} : vector<16x96xf32> to vector<16x32xf32>
    %297 = arith.addf %295, %296 : vector<16x32xf32>
    %298 = arith.negf %297 : vector<16x32xf32>
    %299 = math.exp %298 : vector<16x32xf32>
    %cst_117 = arith.constant 1.000000e+00 : f32
    %300 = vector.broadcast %cst_117 : f32 to vector<16x32xf32>
    %301 = arith.addf %300, %299 : vector<16x32xf32>
    %302 = arith.divf %300, %301 : vector<16x32xf32>
    %303 = vector.extract_strided_slice %282 {offsets = [0, 64], sizes = [16, 32], strides = [1, 1]} : vector<16x96xf32> to vector<16x32xf32>
    %304 = vector.extract_strided_slice %286 {offsets = [0, 64], sizes = [16, 32], strides = [1, 1]} : vector<16x96xf32> to vector<16x32xf32>
    %305 = arith.mulf %294, %304 : vector<16x32xf32>
    %306 = arith.addf %303, %305 : vector<16x32xf32>
    %307 = math.tanh %306 : vector<16x32xf32>
    %cst_118 = arith.constant 1.000000e+00 : f32
    %308 = vector.broadcast %cst_118 : f32 to vector<16x32xf32>
    %309 = arith.subf %308, %302 : vector<16x32xf32>
    %310 = arith.mulf %309, %307 : vector<16x32xf32>
    %311 = arith.mulf %302, %255 : vector<16x32xf32>
    %312 = arith.addf %310, %311 : vector<16x32xf32>
    %c0_119 = arith.constant 0 : index
    %c0_120 = arith.constant 0 : index
    %313 = vector.load %arg22[%c0_119, %c0_120] : memref<16x32xf32, #tpu.memory_space<vmem>>, vector<16x32xf32>
    tpu.vector_store %arg22[%c0_119, %c0_120], %312 {strides = array<i32>} : memref<16x32xf32, #tpu.memory_space<vmem>>, vector<16x32xf32>,
    return
  }
}

</mosaic_0001>

<llo_original>
// kernel: mpnn_forward.1
$region0: #{mpnn_forward.1}
  #allocation0 [shape = 'u32[]', space=smem, size = 0x4, offset = 0x4, fixed_abs, tag = 'smem constant byte address 0x4 - core index']
  #allocation1 [shape = 'u32[144,128]{1,0:T(1,128)}', space=vmem, size = 0x12000, scoped, tag = 'internal scratch']
  %s0 = inlined_call_operand.vmem [shape: s32[24,1], index: 0, kind: input, shape index: {}]
  %s1 = inlined_call_operand.vmem [shape: s32[1,24], index: 1, kind: input, shape index: {}]
  %s2 = inlined_call_operand.vmem [shape: s32[16,1], index: 2, kind: input, shape index: {}]
  %s3 = inlined_call_operand.vmem [shape: s32[1,16], index: 3, kind: input, shape index: {}]
  %s4 = inlined_call_operand.vmem [shape: s32[8,1], index: 4, kind: input, shape index: {}]
  %s5 = inlined_call_operand.vmem [shape: s32[1,8], index: 5, kind: input, shape index: {}]
  %s6 = inlined_call_operand.vmem [shape: f32[16,32], index: 6, kind: input, shape index: {}]
  %s7 = inlined_call_operand.vmem [shape: f32[24,8], index: 7, kind: input, shape index: {}]
  %s8 = inlined_call_operand.vmem [shape: f32[16,6], index: 8, kind: input, shape index: {}]
  %s9 = inlined_call_operand.vmem [shape: f32[8,4], index: 9, kind: input, shape index: {}]
  %s10 = inlined_call_operand.vmem [shape: f32[8,1024], index: 10, kind: input, shape index: {}]
  %s11 = inlined_call_operand.hbm [shape: f32[1,1024], index: 11, kind: input, shape index: {}]
  %s12 = inlined_call_operand.vmem [shape: f32[6,1024], index: 12, kind: input, shape index: {}]
  %s13 = inlined_call_operand.hbm [shape: f32[1,1024], index: 13, kind: input, shape index: {}]
  %s14 = inlined_call_operand.hbm [shape: f32[4,1024], index: 14, kind: input, shape index: {}]
  %s15 = inlined_call_operand.hbm [shape: f32[1,1024], index: 15, kind: input, shape index: {}]
  %s16 = inlined_call_operand.vmem [shape: bf16[32,1024], index: 16, kind: input, shape index: {}]
  %s17 = inlined_call_operand.hbm [shape: bf16[1024,32], index: 17, kind: input, shape index: {}]
  %s18 = inlined_call_operand.vmem [shape: f32[32,96], index: 18, kind: input, shape index: {}]
  %s19 = inlined_call_operand.vmem [shape: f32[32,96], index: 19, kind: input, shape index: {}]
  %s20 = inlined_call_operand.vmem [shape: f32[1,96], index: 20, kind: input, shape index: {}]
  %s21 = inlined_call_operand.vmem [shape: f32[1,96], index: 21, kind: input, shape index: {}]
  %s22 = inlined_call_operand.hbm [shape: f32[16,32], index: 22, kind: output, shape index: {}]
  %s23 = sld [smem:[#allocation0]]
  $region118: #{mpnn_forward.1} parent=0
    _
  %s25 = ssub.s32 1, %s23
  %s26 = scalar_select 0, %s25, %s23
  $region1: #{mpnn_forward.1} parent=0
    #allocation2 [shape = 'u8[4096]{0}', space=vmem, size = 0x1000, scoped, tag = 'input window, operand 11, single buffered']
    #allocation3 [shape = 's32[1]{0}', space=sflag, size = 0x4, scoped, tag = 'scoped memory for mpnn_forward.1']
    #allocation4 [shape = 's32[1]{0}', space=sflag, size = 0x4, scoped, tag = 'scoped memory for mpnn_forward.1']
    #allocation5 [shape = 'u8[4096]{0}', space=vmem, size = 0x1000, scoped, tag = 'input window, operand 13, single buffered']
    #allocation6 [shape = 's32[1]{0}', space=sflag, size = 0x4, scoped, tag = 'scoped memory for mpnn_forward.1']
    #allocation7 [shape = 'u8[16384]{0}', space=vmem, size = 0x4000, scoped, tag = 'input window, operand 14, single buffered']
    #allocation8 [shape = 'u8[4096]{0}', space=vmem, size = 0x1000, scoped, tag = 'input window, operand 15, single buffered']
    #allocation9 [shape = 's32[1]{0}', space=sflag, size = 0x4, scoped, tag = 'scoped memory for mpnn_forward.1']
    #allocation10 [shape = 'u8[262144]{0}', space=vmem, size = 0x40000, scoped, tag = 'input window, operand 17, single buffered']
    #allocation11 [shape = 'u8[8192]{0}', space=vmem, size = 0x2000, scoped, tag = 'output window, operand 0, single buffered']
    %27 = vsyncpa [#allocation3], 0
    %28 = vsyncpa [#allocation6], 0
    %29 = vsyncpa [#allocation9], 0
    %30 = vsyncpa [#allocation4], 0
    // Predicated region
    $region2: #{mpnn_forward.1} parent=1 // pred_check
      _
    $region3: #{mpnn_forward.1} parent=1 // pred_check_branch
      %32 = sbr.rel (0) target = $region5
    $region4: #{mpnn_forward.1} parent=1 // pred_region
      _
    $region5: #{mpnn_forward.1} parent=1 // pred_fallthru
      _
    // Predicated region
    $region6: #{mpnn_forward.1} parent=1 // pred_check
      _
    $region7: #{mpnn_forward.1} parent=1 // pred_check_branch
      %34 = sbr.rel (0) target = $region9
    $region8: #{mpnn_forward.1} parent=1 // pred_region
      _
    $region9: #{mpnn_forward.1} parent=1 // pred_fallthru
      _
    // Predicated region
    $region10: #{mpnn_forward.1} parent=1 // pred_check
      _
    $region11: #{mpnn_forward.1} parent=1 // pred_check_branch
      %36 = sbr.rel (0) target = $region13
    $region12: #{mpnn_forward.1} parent=1 // pred_region
      _
    $region13: #{mpnn_forward.1} parent=1 // pred_fallthru
      _
    // Predicated region
    $region14: #{mpnn_forward.1} parent=1 // pred_check
      _
    $region15: #{mpnn_forward.1} parent=1 // pred_check_branch
      %38 = sbr.rel (0) target = $region17
    $region16: #{mpnn_forward.1} parent=1 // pred_region
      _
    $region17: #{mpnn_forward.1} parent=1 // pred_fallthru
      _
    // Predicated region
    $region18: #{mpnn_forward.1} parent=1 // pred_check
      _
    $region19: #{mpnn_forward.1} parent=1 // pred_check_branch
      %40 = sbr.rel (0) target = $region21
    $region20: #{mpnn_forward.1} parent=1 // pred_region
      _
    $region21: #{mpnn_forward.1} parent=1 // pred_fallthru
      _
    // Predicated region
    $region22: #{mpnn_forward.1} parent=1 // pred_check
      _
    $region23: #{mpnn_forward.1} parent=1 // pred_check_branch
      %42 = sbr.rel (0) target = $region25
    $region24: #{mpnn_forward.1} parent=1 // pred_region
      _
    $region25: #{mpnn_forward.1} parent=1 // pred_fallthru
      _
    // Predicated region
    $region26: #{mpnn_forward.1} parent=1 // pred_check
      _
    $region27: #{mpnn_forward.1} parent=1 // pred_check_branch
      %44 = sbr.rel (0) target = $region29
    $region28: #{mpnn_forward.1} parent=1 // pred_region
      _
    $region29: #{mpnn_forward.1} parent=1 // pred_fallthru
      _
    // Predicated region
    $region30: #{mpnn_forward.1} parent=1 // pred_check
      _
    $region31: #{mpnn_forward.1} parent=1 // pred_check_branch
      %46 = sbr.rel (0) target = $region33
    $region32: #{mpnn_forward.1} parent=1 // pred_region
      _
    $region33: #{mpnn_forward.1} parent=1 // pred_fallthru
      _
    // Predicated region
    $region34: #{mpnn_forward.1} parent=1 // pred_check
      _
    $region35: #{mpnn_forward.1} parent=1 // pred_check_branch
      %48 = sbr.rel (0) target = $region37
    $region36: #{mpnn_forward.1} parent=1 // pred_region
      _
    $region37: #{mpnn_forward.1} parent=1 // pred_fallthru
      _
    // Predicated region
    $region38: #{mpnn_forward.1} parent=1 // pred_check
      _
    $region39: #{mpnn_forward.1} parent=1 // pred_check_branch
      %50 = sbr.rel (0) target = $region41
    $region40: #{mpnn_forward.1} parent=1 // pred_region
      _
    $region41: #{mpnn_forward.1} parent=1 // pred_fallthru
      _
    // Predicated region
    $region42: #{mpnn_forward.1} parent=1 // pred_check
      _
    $region43: #{mpnn_forward.1} parent=1 // pred_check_branch
      %52 = sbr.rel (0) target = $region45
    $region44: #{mpnn_forward.1} parent=1 // pred_region
      _
    $region45: #{mpnn_forward.1} parent=1 // pred_fallthru
      _
    // Predicated region
    $region46: #{mpnn_forward.1} parent=1 // pred_check
      _
    $region47: #{mpnn_forward.1} parent=1 // pred_check_branch
      %54 = sbr.rel (0) target = $region49
    $region48: #{mpnn_forward.1} parent=1 // pred_region
      %s56 = ssub.s32 128, 128
      %57 = vsyncadd [#allocation3], %s56
      %s59 = sshll.u32 [#allocation2], 4
      %s60 = int_to_ptr.vmem [resolvable:$true] %s59
      %62 = dma.hbm_to_vmem [thread:$0]  %s11, 128, %s60, [#allocation3]
    $region49: #{mpnn_forward.1} parent=1 // pred_fallthru
      _
    // Predicated region
    $region50: #{mpnn_forward.1} parent=1 // pred_check
      _
    $region51: #{mpnn_forward.1} parent=1 // pred_check_branch
      %64 = sbr.rel (0) target = $region53
    $region52: #{mpnn_forward.1} parent=1 // pred_region
      _
    $region53: #{mpnn_forward.1} parent=1 // pred_fallthru
      _
    // Predicated region
    $region54: #{mpnn_forward.1} parent=1 // pred_check
      _
    $region55: #{mpnn_forward.1} parent=1 // pred_check_branch
      %66 = sbr.rel (0) target = $region57
    $region56: #{mpnn_forward.1} parent=1 // pred_region
      %s68 = ssub.s32 128, 128
      %69 = vsyncadd [#allocation6], %s68
      %s71 = sshll.u32 [#allocation5], 4
      %s72 = int_to_ptr.vmem [resolvable:$true] %s71
      %74 = dma.hbm_to_vmem [thread:$0]  %s13, 128, %s72, [#allocation6]
    $region57: #{mpnn_forward.1} parent=1 // pred_fallthru
      _
    // Predicated region
    $region58: #{mpnn_forward.1} parent=1 // pred_check
      _
    $region59: #{mpnn_forward.1} parent=1 // pred_check_branch
      %76 = sbr.rel (0) target = $region61
    $region60: #{mpnn_forward.1} parent=1 // pred_region
      %s78 = ssub.s32 512, 512
      %79 = vsyncadd [#allocation6], %s78
      %s81 = sshll.u32 [#allocation7], 4
      %s82 = int_to_ptr.vmem [resolvable:$true] %s81
      %84 = dma.hbm_to_vmem [thread:$0]  %s14, 512, %s82, [#allocation6]
    $region61: #{mpnn_forward.1} parent=1 // pred_fallthru
      _
    // Predicated region
    $region62: #{mpnn_forward.1} parent=1 // pred_check
      _
    $region63: #{mpnn_forward.1} parent=1 // pred_check_branch
      %86 = sbr.rel (0) target = $region65
    $region64: #{mpnn_forward.1} parent=1 // pred_region
      %s88 = ssub.s32 128, 128
      %89 = vsyncadd [#allocation9], %s88
      %s91 = sshll.u32 [#allocation8], 4
      %s92 = int_to_ptr.vmem [resolvable:$true] %s91
      %94 = dma.hbm_to_vmem [thread:$0]  %s15, 128, %s92, [#allocation9]
    $region65: #{mpnn_forward.1} parent=1 // pred_fallthru
      _
    // Predicated region
    $region66: #{mpnn_forward.1} parent=1 // pred_check
      _
    $region67: #{mpnn_forward.1} parent=1 // pred_check_branch
      %96 = sbr.rel (0) target = $region69
    $region68: #{mpnn_forward.1} parent=1 // pred_region
      _
    $region69: #{mpnn_forward.1} parent=1 // pred_fallthru
      _
    // Predicated region
    $region70: #{mpnn_forward.1} parent=1 // pred_check
      _
    $region71: #{mpnn_forward.1} parent=1 // pred_check_branch
      %98 = sbr.rel (0) target = $region73
    $region72: #{mpnn_forward.1} parent=1 // pred_region
      %s100 = ssub.s32 8192, 8192
      %101 = vsyncadd [#allocation9], %s100
      %s102 = sshll.u32 [#allocation10], 4
      %s103 = int_to_ptr.vmem [resolvable:$true] %s102
      %108 = dma.hbm_to_vmem [thread:$0]  %s17, 8192, %s103, [#allocation9], 64, 64, 4
    $region73: #{mpnn_forward.1} parent=1 // pred_fallthru
      _
    // Predicated region
    $region74: #{mpnn_forward.1} parent=1 // pred_check
      _
    $region75: #{mpnn_forward.1} parent=1 // pred_check_branch
      %110 = sbr.rel (0) target = $region77
    $region76: #{mpnn_forward.1} parent=1 // pred_region
      _
    $region77: #{mpnn_forward.1} parent=1 // pred_fallthru
      _
    // Predicated region
    $region78: #{mpnn_forward.1} parent=1 // pred_check
      _
    $region79: #{mpnn_forward.1} parent=1 // pred_check_branch
      %112 = sbr.rel (0) target = $region81
    $region80: #{mpnn_forward.1} parent=1 // pred_region
      _
    $region81: #{mpnn_forward.1} parent=1 // pred_fallthru
      _
    // Predicated region
    $region82: #{mpnn_forward.1} parent=1 // pred_check
      _
    $region83: #{mpnn_forward.1} parent=1 // pred_check_branch
      %114 = sbr.rel (0) target = $region85
    $region84: #{mpnn_forward.1} parent=1 // pred_region
      _
    $region85: #{mpnn_forward.1} parent=1 // pred_fallthru
      _
    // Predicated region
    $region86: #{mpnn_forward.1} parent=1 // pred_check
      _
    $region87: #{mpnn_forward.1} parent=1 // pred_check_branch
      %116 = sbr.rel (0) target = $region89
    $region88: #{mpnn_forward.1} parent=1 // pred_region
      _
    $region89: #{mpnn_forward.1} parent=1 // pred_fallthru
      _
    // Predicated region
    $region90: #{mpnn_forward.1} parent=1 // pred_check
      _
    $region91: #{mpnn_forward.1} parent=1 // pred_check_branch
      %118 = sbr.rel (0) target = $region93
    $region92: #{mpnn_forward.1} parent=1 // pred_region
      %119 = dma.done [#allocation3], 128
    $region93: #{mpnn_forward.1} parent=1 // pred_fallthru
      _
    // Predicated region
    $region94: #{mpnn_forward.1} parent=1 // pred_check
      _
    $region95: #{mpnn_forward.1} parent=1 // pred_check_branch
      %121 = sbr.rel (0) target = $region97
    $region96: #{mpnn_forward.1} parent=1 // pred_region
      %122 = dma.done [#allocation6], 128
    $region97: #{mpnn_forward.1} parent=1 // pred_fallthru
      _
    // Predicated region
    $region98: #{mpnn_forward.1} parent=1 // pred_check
      _
    $region99: #{mpnn_forward.1} parent=1 // pred_check_branch
      %124 = sbr.rel (0) target = $region101
    $region100: #{mpnn_forward.1} parent=1 // pred_region
      %125 = dma.done [#allocation6], 512
    $region101: #{mpnn_forward.1} parent=1 // pred_fallthru
      _
    // Predicated region
    $region102: #{mpnn_forward.1} parent=1 // pred_check
      _
    $region103: #{mpnn_forward.1} parent=1 // pred_check_branch
      %127 = sbr.rel (0) target = $region105
    $region104: #{mpnn_forward.1} parent=1 // pred_region
      %128 = dma.done [#allocation9], 128
    $region105: #{mpnn_forward.1} parent=1 // pred_fallthru
      _
    // Predicated region
    $region106: #{mpnn_forward.1} parent=1 // pred_check
      _
    $region107: #{mpnn_forward.1} parent=1 // pred_check_branch
      %130 = sbr.rel (0) target = $region109
    $region108: #{mpnn_forward.1} parent=1 // pred_region
      %131 = dma.done [#allocation9], 8192
    $region109: #{mpnn_forward.1} parent=1 // pred_fallthru
      _
    %v133 = vld [vmem:[%s16] sm:$0xff]
    %v134 = vld [vmem:[%s16 + $0x8] sm:$0xff]
    %v135 = vld [vmem:[%s16 + $0x10] sm:$0xff]
    %v136 = vld [vmem:[%s16 + $0x18] sm:$0xff]
    %v137 = vld [vmem:[%s16 + $0x20] sm:$0xff]
    %v138 = vld [vmem:[%s16 + $0x28] sm:$0xff]
    %v139 = vld [vmem:[%s16 + $0x30] sm:$0xff]
    %v140 = vld [vmem:[%s16 + $0x38] sm:$0xff]
    %v141 = vld [vmem:[%s16 + $0x40] sm:$0xff]
    %v142 = vld [vmem:[%s16 + $0x48] sm:$0xff]
    %v143 = vld [vmem:[%s16 + $0x50] sm:$0xff]
    %v144 = vld [vmem:[%s16 + $0x58] sm:$0xff]
    %v145 = vld [vmem:[%s16 + $0x60] sm:$0xff]
    %v146 = vld [vmem:[%s16 + $0x68] sm:$0xff]
    %v147 = vld [vmem:[%s16 + $0x70] sm:$0xff]
    %v148 = vld [vmem:[%s16 + $0x78] sm:$0xff]
    %v149 = vld [vmem:[#allocation10] sm:$0xf]
    %v150 = vld [vmem:[#allocation10 + $0x4] sm:$0xf]
    %v151 = vld [vmem:[#allocation10 + $0x8] sm:$0xf]
    %v152 = vld [vmem:[#allocation10 + $0xc] sm:$0xf]
    %v153 = vld [vmem:[#allocation10 + $0x10] sm:$0xf]
    %v154 = vld [vmem:[#allocation10 + $0x14] sm:$0xf]
    %v155 = vld [vmem:[#allocation10 + $0x18] sm:$0xf]
    %v156 = vld [vmem:[#allocation10 + $0x1c] sm:$0xf]
    %v157 = vld [vmem:[#allocation10 + $0x20] sm:$0xf]
    %v158 = vld [vmem:[#allocation10 + $0x24] sm:$0xf]
    %v159 = vld [vmem:[#allocation10 + $0x28] sm:$0xf]
    %v160 = vld [vmem:[#allocation10 + $0x2c] sm:$0xf]
    %v161 = vld [vmem:[#allocation10 + $0x30] sm:$0xf]
    %v162 = vld [vmem:[#allocation10 + $0x34] sm:$0xf]
    %v163 = vld [vmem:[#allocation10 + $0x38] sm:$0xf]
    %v164 = vld [vmem:[#allocation10 + $0x3c] sm:$0xf]
    %v165 = vld [vmem:[#allocation10 + $0x40] sm:$0xf]
    %v166 = vld [vmem:[#allocation10 + $0x44] sm:$0xf]
    %v167 = vld [vmem:[#allocation10 + $0x48] sm:$0xf]
    %v168 = vld [vmem:[#allocation10 + $0x4c] sm:$0xf]
    %v169 = vld [vmem:[#allocation10 + $0x50] sm:$0xf]
    %v170 = vld [vmem:[#allocation10 + $0x54] sm:$0xf]
    %v171 = vld [vmem:[#allocation10 + $0x58] sm:$0xf]
    %v172 = vld [vmem:[#allocation10 + $0x5c] sm:$0xf]
    %v173 = vld [vmem:[#allocation10 + $0x60] sm:$0xf]
    %v174 = vld [vmem:[#allocation10 + $0x64] sm:$0xf]
    %v175 = vld [vmem:[#allocation10 + $0x68] sm:$0xf]
    %v176 = vld [vmem:[#allocation10 + $0x6c] sm:$0xf]
    %v177 = vld [vmem:[#allocation10 + $0x70] sm:$0xf]
    %v178 = vld [vmem:[#allocation10 + $0x74] sm:$0xf]
    %v179 = vld [vmem:[#allocation10 + $0x78] sm:$0xf]
    %v180 = vld [vmem:[#allocation10 + $0x7c] sm:$0xf]
    %v181 = vld [vmem:[#allocation10 + $0x80] sm:$0xf]
    %v182 = vld [vmem:[#allocation10 + $0x84] sm:$0xf]
    %v183 = vld [vmem:[#allocation10 + $0x88] sm:$0xf]
    %v184 = vld [vmem:[#allocation10 + $0x8c] sm:$0xf]
    %v185 = vld [vmem:[#allocation10 + $0x90] sm:$0xf]
    %v186 = vld [vmem:[#allocation10 + $0x94] sm:$0xf]
    %v187 = vld [vmem:[#allocation10 + $0x98] sm:$0xf]
    %v188 = vld [vmem:[#allocation10 + $0x9c] sm:$0xf]
    %v189 = vld [vmem:[#allocation10 + $0xa0] sm:$0xf]
    %v190 = vld [vmem:[#allocation10 + $0xa4] sm:$0xf]
    %v191 = vld [vmem:[#allocation10 + $0xa8] sm:$0xf]
    %v192 = vld [vmem:[#allocation10 + $0xac] sm:$0xf]
    %v193 = vld [vmem:[#allocation10 + $0xb0] sm:$0xf]
    %v194 = vld [vmem:[#allocation10 + $0xb4] sm:$0xf]
    %v195 = vld [vmem:[#allocation10 + $0xb8] sm:$0xf]
    %v196 = vld [vmem:[#allocation10 + $0xbc] sm:$0xf]
    %v197 = vld [vmem:[#allocation10 + $0xc0] sm:$0xf]
    %v198 = vld [vmem:[#allocation10 + $0xc4] sm:$0xf]
    %v199 = vld [vmem:[#allocation10 + $0xc8] sm:$0xf]
    %v200 = vld [vmem:[#allocation10 + $0xcc] sm:$0xf]
    %v201 = vld [vmem:[#allocation10 + $0xd0] sm:$0xf]
    %v202 = vld [vmem:[#allocation10 + $0xd4] sm:$0xf]
    %v203 = vld [vmem:[#allocation10 + $0xd8] sm:$0xf]
    %v204 = vld [vmem:[#allocation10 + $0xdc] sm:$0xf]
    %v205 = vld [vmem:[#allocation10 + $0xe0] sm:$0xf]
    %v206 = vld [vmem:[#allocation10 + $0xe4] sm:$0xf]
    %v207 = vld [vmem:[#allocation10 + $0xe8] sm:$0xf]
    %v208 = vld [vmem:[#allocation10 + $0xec] sm:$0xf]
    %v209 = vld [vmem:[#allocation10 + $0xf0] sm:$0xf]
    %v210 = vld [vmem:[#allocation10 + $0xf4] sm:$0xf]
    %v211 = vld [vmem:[#allocation10 + $0xf8] sm:$0xf]
    %v212 = vld [vmem:[#allocation10 + $0xfc] sm:$0xf]
    %v213 = vld [vmem:[#allocation10 + $0x100] sm:$0xf]
    %v214 = vld [vmem:[#allocation10 + $0x104] sm:$0xf]
    %v215 = vld [vmem:[#allocation10 + $0x108] sm:$0xf]
    %v216 = vld [vmem:[#allocation10 + $0x10c] sm:$0xf]
    %v217 = vld [vmem:[#allocation10 + $0x110] sm:$0xf]
    %v218 = vld [vmem:[#allocation10 + $0x114] sm:$0xf]
    %v219 = vld [vmem:[#allocation10 + $0x118] sm:$0xf]
    %v220 = vld [vmem:[#allocation10 + $0x11c] sm:$0xf]
    %v221 = vld [vmem:[#allocation10 + $0x120] sm:$0xf]
    %v222 = vld [vmem:[#allocation10 + $0x124] sm:$0xf]
    %v223 = vld [vmem:[#allocation10 + $0x128] sm:$0xf]
    %v224 = vld [vmem:[#allocation10 + $0x12c] sm:$0xf]
    %v225 = vld [vmem:[#allocation10 + $0x130] sm:$0xf]
    %v226 = vld [vmem:[#allocation10 + $0x134] sm:$0xf]
    %v227 = vld [vmem:[#allocation10 + $0x138] sm:$0xf]
    %v228 = vld [vmem:[#allocation10 + $0x13c] sm:$0xf]
    %v229 = vld [vmem:[#allocation10 + $0x140] sm:$0xf]
    %v230 = vld [vmem:[#allocation10 + $0x144] sm:$0xf]
    %v231 = vld [vmem:[#allocation10 + $0x148] sm:$0xf]
    %v232 = vld [vmem:[#allocation10 + $0x14c] sm:$0xf]
    %v233 = vld [vmem:[#allocation10 + $0x150] sm:$0xf]
    %v234 = vld [vmem:[#allocation10 + $0x154] sm:$0xf]
    %v235 = vld [vmem:[#allocation10 + $0x158] sm:$0xf]
    %v236 = vld [vmem:[#allocation10 + $0x15c] sm:$0xf]
    %v237 = vld [vmem:[#allocation10 + $0x160] sm:$0xf]
    %v238 = vld [vmem:[#allocation10 + $0x164] sm:$0xf]
    %v239 = vld [vmem:[#allocation10 + $0x168] sm:$0xf]
    %v240 = vld [vmem:[#allocation10 + $0x16c] sm:$0xf]
    %v241 = vld [vmem:[#allocation10 + $0x170] sm:$0xf]
    %v242 = vld [vmem:[#allocation10 + $0x174] sm:$0xf]
    %v243 = vld [vmem:[#allocation10 + $0x178] sm:$0xf]
    %v244 = vld [vmem:[#allocation10 + $0x17c] sm:$0xf]
    %v245 = vld [vmem:[#allocation10 + $0x180] sm:$0xf]
    %v246 = vld [vmem:[#allocation10 + $0x184] sm:$0xf]
    %v247 = vld [vmem:[#allocation10 + $0x188] sm:$0xf]
    %v248 = vld [vmem:[#allocation10 + $0x18c] sm:$0xf]
    %v249 = vld [vmem:[#allocation10 + $0x190] sm:$0xf]
    %v250 = vld [vmem:[#allocation10 + $0x194] sm:$0xf]
    %v251 = vld [vmem:[#allocation10 + $0x198] sm:$0xf]
    %v252 = vld [vmem:[#allocation10 + $0x19c] sm:$0xf]
    %v253 = vld [vmem:[#allocation10 + $0x1a0] sm:$0xf]
    %v254 = vld [vmem:[#allocation10 + $0x1a4] sm:$0xf]
    %v255 = vld [vmem:[#allocation10 + $0x1a8] sm:$0xf]
    %v256 = vld [vmem:[#allocation10 + $0x1ac] sm:$0xf]
    %v257 = vld [vmem:[#allocation10 + $0x1b0] sm:$0xf]
    %v258 = vld [vmem:[#allocation10 + $0x1b4] sm:$0xf]
    %v259 = vld [vmem:[#allocation10 + $0x1b8] sm:$0xf]
    %v260 = vld [vmem:[#allocation10 + $0x1bc] sm:$0xf]
    %v261 = vld [vmem:[#allocation10 + $0x1c0] sm:$0xf]
    %v262 = vld [vmem:[#allocation10 + $0x1c4] sm:$0xf]
    %v263 = vld [vmem:[#allocation10 + $0x1c8] sm:$0xf]
    %v264 = vld [vmem:[#allocation10 + $0x1cc] sm:$0xf]
    %v265 = vld [vmem:[#allocation10 + $0x1d0] sm:$0xf]
    %v266 = vld [vmem:[#allocation10 + $0x1d4] sm:$0xf]
    %v267 = vld [vmem:[#allocation10 + $0x1d8] sm:$0xf]
    %v268 = vld [vmem:[#allocation10 + $0x1dc] sm:$0xf]
    %v269 = vld [vmem:[#allocation10 + $0x1e0] sm:$0xf]
    %v270 = vld [vmem:[#allocation10 + $0x1e4] sm:$0xf]
    %v271 = vld [vmem:[#allocation10 + $0x1e8] sm:$0xf]
    %v272 = vld [vmem:[#allocation10 + $0x1ec] sm:$0xf]
    %v273 = vld [vmem:[#allocation10 + $0x1f0] sm:$0xf]
    %v274 = vld [vmem:[#allocation10 + $0x1f4] sm:$0xf]
    %v275 = vld [vmem:[#allocation10 + $0x1f8] sm:$0xf]
    %v276 = vld [vmem:[#allocation10 + $0x1fc] sm:$0xf]
    %v277 = vlaneseq
    %v278 = vand.u32 %v277, 127
    %v279 = vlaneseq
    %v280 = vshrl.u32 %v279, 7
    %v281 = vadd.s32 %v280, 8
    %v282 = vld [vmem:[%s0] sm:$0xff]
    %v283 = vld [vmem:[%s0 + $0x8] sm:$0xff]
    %v284 = vld [vmem:[%s0 + $0x10] sm:$0xff]
    %285 = vset.pattern.permute.xlu0 0
    %286 = vperm.xlu0 %285, %v282
    %v287 = vpop.permute.xlu0 %286
    %288 = vset.pattern.permute.xlu0 0
    %289 = vperm.xlu0 %288, %v283
    %v290 = vpop.permute.xlu0 %289
    %291 = vset.pattern.permute.xlu0 0
    %292 = vperm.xlu0 %291, %v284
    %v293 = vpop.permute.xlu0 %292
    %vm294 = vcmp.eq.s32.totalorder %v287, %v278
    %vm295 = vcmp.eq.s32.totalorder %v290, %v278
    %vm296 = vcmp.eq.s32.totalorder %v293, %v278
    %v297 = vsel %vm294, 1.0, 0.0
    %v298 = vsel %vm295, 1.0, 0.0
    %v299 = vsel %vm296, 1.0, 0.0
    %v300 = vpack.c.bf16 %v298, %v297
    %v301 = vpack.c.bf16 %v299, %v299
    %v302 = vld [vmem:[%s1] sm:$0x1]
    %v303 = vlaneseq
    %v304 = vshrl.u32 %v303, 7
    %v305 = vsub.s32 0, %v304
    %v306 = vrot.slane %v302, %v305
    %vm307 = vcmp.eq.s32.totalorder %v306, %v280
    %vm308 = vcmp.eq.s32.totalorder %v306, %v281
    %v309 = vsel %vm307, 1.0, 0.0
    %v310 = vsel %vm308, 1.0, 0.0
    %v311 = vpack.c.bf16 %v310, %v309
    %v312 = vld [vmem:[%s2] sm:$0xff]
    %v313 = vld [vmem:[%s2 + $0x8] sm:$0xff]
    %314 = vset.pattern.permute.xlu0 0
    %315 = vperm.xlu0 %314, %v312
    %v316 = vpop.permute.xlu0 %315
    %317 = vset.pattern.permute.xlu0 0
    %318 = vperm.xlu0 %317, %v313
    %v319 = vpop.permute.xlu0 %318
    %vm320 = vcmp.eq.s32.totalorder %v316, %v278
    %vm321 = vcmp.eq.s32.totalorder %v319, %v278
    %v322 = vsel %vm320, 1.0, 0.0
    %v323 = vsel %vm321, 1.0, 0.0
    %v324 = vpack.c.bf16 %v323, %v322
    %v325 = vld [vmem:[%s3] sm:$0x1]
    %v326 = vlaneseq
    %v327 = vshrl.u32 %v326, 7
    %v328 = vsub.s32 0, %v327
    %v329 = vrot.slane %v325, %v328
    %vm330 = vcmp.eq.s32.totalorder %v329, %v280
    %vm331 = vcmp.eq.s32.totalorder %v329, %v281
    %v332 = vsel %vm330, 1.0, 0.0
    %v333 = vsel %vm331, 1.0, 0.0
    %v334 = vpack.c.bf16 %v333, %v332
    %v335 = vld [vmem:[%s4] sm:$0xff]
    %336 = vset.pattern.permute.xlu0 0
    %337 = vperm.xlu0 %336, %v335
    %v338 = vpop.permute.xlu0 %337
    %vm339 = vcmp.eq.s32.totalorder %v338, %v278
    %v340 = vsel %vm339, 1.0, 0.0
    %v341 = vpack.c.bf16 %v340, %v340
    %v342 = vld [vmem:[%s5] sm:$0x1]
    %v343 = vlaneseq
    %v344 = vshrl.u32 %v343, 7
    %v345 = vsub.s32 0, %v344
    %v346 = vrot.slane %v342, %v345
    %vm347 = vcmp.eq.s32.totalorder %v346, %v280
    %vm348 = vcmp.eq.s32.totalorder %v346, %v281
    %v349 = vsel %vm347, 1.0, 0.0
    %v350 = vsel %vm348, 1.0, 0.0
    %v351 = vpack.c.bf16 %v350, %v349
    %vm352 = vcmask 130048
    %v354 = vsel %vm352, %v324, 0
    %356 = vmatprep.subr.bf16.mxu0 0
    %357 = vmatpush1.bf16.msra.mxu0 0
    %358 = vmatprep.subr.bf16.mxu0 0
    %359 = vmatpush1.bf16.msra.mxu0 0
    %360 = vmatprep.subr.bf16.mxu0 0
    %361 = vmatpush1.bf16.msra.mxu0 0
    %362 = vmatprep.subr.bf16.mxu0 0
    %363 = vmatpush1.bf16.msra.mxu0 0
    %364 = vmatprep.subr.bf16.mxu0 0
    %365 = vmatpush1.bf16.msra.mxu0 0
    %366 = vmatprep.subr.bf16.mxu0 0
    %367 = vmatpush1.bf16.msra.mxu0 0
    %368 = vmatprep.subr.bf16.mxu0 0
    %369 = vmatpush1.bf16.msra.mxu0 0
    %370 = vmatprep.subr.bf16.mxu0 0
    %371 = vmatpush1.bf16.msra.mxu0 %v311
    %372 = vmatprep.subr.bf16.mxu0 0
    %373 = vmatpush2.bf16.msra.mxu0 0
    %374 = vmatprep.subr.bf16.mxu0 0
    %375 = vmatpush2.bf16.msra.mxu0 0
    %376 = vmatprep.subr.bf16.mxu0 0
    %377 = vmatpush2.bf16.msra.mxu0 0
    %378 = vmatprep.subr.bf16.mxu0 0
    %379 = vmatpush2.bf16.msra.mxu0 0
    %380 = vmatprep.subr.bf16.mxu0 0
    %381 = vmatpush2.bf16.msra.mxu0 0
    %382 = vmatprep.subr.bf16.mxu0 0
    %383 = vmatpush2.bf16.msra.mxu0 0
    %384 = vmatprep.subr.bf16.mxu0 0
    %385 = vmatpush2.bf16.msra.mxu0 0
    %386 = vmatprep.subr.bf16.mxu0 0
    %387 = vmatpush2.bf16.msra.mxu0 0
    %388 = vmatprep.mubr.bf16.mxu0 0
    %389 = vmatmul.mubr.bf16.gmra.mxu0 %v354
    %v390 = vpop.f32.mrf.mxu0
    %v391 = vadd.f32 0.0, %v390
    %v392 = vpop.f32.mrf.mxu0
    %v393 = vpop.f32.mrf.mxu0
    %v394 = vadd.f32 0.0, %v393
    %v395 = vpop.f32.mrf.mxu0
    %396 = vdwg.mxu0
    %v397 = vpack.c.bf16 %v394, %v391
    %v399 = vsel %vm352, %v341, 0
    %401 = vmatprep.subr.bf16.mxu0 0
    %402 = vmatpush1.bf16.msra.mxu0 0
    %403 = vmatprep.subr.bf16.mxu0 0
    %404 = vmatpush1.bf16.msra.mxu0 0
    %405 = vmatprep.subr.bf16.mxu0 0
    %406 = vmatpush1.bf16.msra.mxu0 0
    %407 = vmatprep.subr.bf16.mxu0 0
    %408 = vmatpush1.bf16.msra.mxu0 0
    %409 = vmatprep.subr.bf16.mxu0 0
    %410 = vmatpush1.bf16.msra.mxu0 0
    %411 = vmatprep.subr.bf16.mxu0 0
    %412 = vmatpush1.bf16.msra.mxu0 0
    %413 = vmatprep.subr.bf16.mxu0 0
    %414 = vmatpush1.bf16.msra.mxu0 0
    %415 = vmatprep.subr.bf16.mxu0 0
    %416 = vmatpush1.bf16.msra.mxu0 %v334
    %417 = vmatprep.subr.bf16.mxu0 0
    %418 = vmatpush2.bf16.msra.mxu0 0
    %419 = vmatprep.subr.bf16.mxu0 0
    %420 = vmatpush2.bf16.msra.mxu0 0
    %421 = vmatprep.subr.bf16.mxu0 0
    %422 = vmatpush2.bf16.msra.mxu0 0
    %423 = vmatprep.subr.bf16.mxu0 0
    %424 = vmatpush2.bf16.msra.mxu0 0
    %425 = vmatprep.subr.bf16.mxu0 0
    %426 = vmatpush2.bf16.msra.mxu0 0
    %427 = vmatprep.subr.bf16.mxu0 0
    %428 = vmatpush2.bf16.msra.mxu0 0
    %429 = vmatprep.subr.bf16.mxu0 0
    %430 = vmatpush2.bf16.msra.mxu0 0
    %431 = vmatprep.subr.bf16.mxu0 0
    %432 = vmatpush2.bf16.msra.mxu0 0
    %433 = vmatprep.mubr.bf16.mxu0 0
    %434 = vmatmul.mubr.bf16.gmra.mxu0 %v399
    %v435 = vpop.f32.mrf.mxu0
    %v436 = vadd.f32 0.0, %v435
    %v437 = vpop.f32.mrf.mxu0
    %v438 = vpop.f32.mrf.mxu0
    %v439 = vpop.f32.mrf.mxu0
    %440 = vdwg.mxu0
    %v441 = vpack.c.bf16 %v436, %v436
    %v442 = vld [vmem:[%s7] sm:$0xff]
    %v443 = vld [vmem:[%s7 + $0x8] sm:$0xff]
    %v444 = vld [vmem:[%s7 + $0x10] sm:$0xff]
    %v445 = vpack.c.bf16 %v443, %v442
    %v446 = vpack.c.bf16 %v444, %v444
    %v447 = vld [vmem:[%s10] sm:$0xff]
    %v448 = vld [vmem:[%s10 + $0x8] sm:$0xff]
    %v449 = vld [vmem:[%s10 + $0x10] sm:$0xff]
    %v450 = vld [vmem:[%s10 + $0x18] sm:$0xff]
    %v451 = vld [vmem:[%s10 + $0x20] sm:$0xff]
    %v452 = vld [vmem:[%s10 + $0x28] sm:$0xff]
    %v453 = vld [vmem:[%s10 + $0x30] sm:$0xff]
    %v454 = vld [vmem:[%s10 + $0x38] sm:$0xff]
    %v455 = vpack.c.bf16 %v447, %v447
    %v456 = vpack.c.bf16 %v448, %v448
    %v457 = vpack.c.bf16 %v449, %v449
    %v458 = vpack.c.bf16 %v450, %v450
    %v459 = vpack.c.bf16 %v451, %v451
    %v460 = vpack.c.bf16 %v452, %v452
    %v461 = vpack.c.bf16 %v453, %v453
    %v462 = vpack.c.bf16 %v454, %v454
    %v463 = vld [vmem:[#allocation2] sm:$0xff]
    %v465 = vlaneseq
    %v466 = vshrl.u32 %v465, 7
    %v467 = vsub.s32 0, %v466
    %v468 = vrot.slane %v463, %v467
    %v469 = vlaneseq
    %v470 = vshrl.u32 %v469, 7
    %v471 = vsub.s32 1, %v470
    %v472 = vrot.slane %v463, %v471
    %v473 = vlaneseq
    %v474 = vshrl.u32 %v473, 7
    %v475 = vsub.s32 2, %v474
    %v476 = vrot.slane %v463, %v475
    %v477 = vlaneseq
    %v478 = vshrl.u32 %v477, 7
    %v479 = vsub.s32 3, %v478
    %v480 = vrot.slane %v463, %v479
    %v481 = vlaneseq
    %v482 = vshrl.u32 %v481, 7
    %v483 = vsub.s32 4, %v482
    %v484 = vrot.slane %v463, %v483
    %v485 = vlaneseq
    %v486 = vshrl.u32 %v485, 7
    %v487 = vsub.s32 5, %v486
    %v488 = vrot.slane %v463, %v487
    %v489 = vlaneseq
    %v490 = vshrl.u32 %v489, 7
    %v491 = vsub.s32 6, %v490
    %v492 = vrot.slane %v463, %v491
    %v493 = vlaneseq
    %v494 = vshrl.u32 %v493, 7
    %v495 = vsub.s32 7, %v494
    %v496 = vrot.slane %v463, %v495
    %vm505 = vcmask 64512
    %v507 = vsel %vm505, %v445, 0
    %v510 = vsel %vm505, %v446, 0
    %vm512 = vcmask 1043456
    %v514 = vsel %vm512, %v455, 0
    %v517 = vsel %vm512, %v456, 0
    %v520 = vsel %vm512, %v457, 0
    %v523 = vsel %vm512, %v458, 0
    %v526 = vsel %vm512, %v459, 0
    %v529 = vsel %vm512, %v460, 0
    %v532 = vsel %vm512, %v461, 0
    %v535 = vsel %vm512, %v462, 0
    %537 = vmatprep.subr.bf16.mxu0 0
    %538 = vmatpush1.bf16.msra.mxu0 0
    %539 = vmatprep.subr.bf16.mxu0 0
    %540 = vmatpush1.bf16.msra.mxu0 0
    %541 = vmatprep.subr.bf16.mxu0 0
    %542 = vmatpush1.bf16.msra.mxu0 0
    %543 = vmatprep.subr.bf16.mxu0 0
    %544 = vmatpush1.bf16.msra.mxu0 0
    %545 = vmatprep.subr.bf16.mxu0 0
    %546 = vmatpush1.bf16.msra.mxu0 0
    %547 = vmatprep.subr.bf16.mxu0 0
    %548 = vmatpush1.bf16.msra.mxu0 0
    %549 = vmatprep.subr.bf16.mxu0 0
    %550 = vmatpush1.bf16.msra.mxu0 0
    %551 = vmatprep.subr.bf16.mxu0 %v517
    %552 = vmatpush1.bf16.msra.mxu0 %v514
    %553 = vmatprep.subr.bf16.mxu0 0
    %554 = vmatpush2.bf16.msra.mxu0 0
    %555 = vmatprep.subr.bf16.mxu0 0
    %556 = vmatpush2.bf16.msra.mxu0 0
    %557 = vmatprep.subr.bf16.mxu0 0
    %558 = vmatpush2.bf16.msra.mxu0 0
    %559 = vmatprep.subr.bf16.mxu0 0
    %560 = vmatpush2.bf16.msra.mxu0 0
    %561 = vmatprep.subr.bf16.mxu0 0
    %562 = vmatpush2.bf16.msra.mxu0 0
    %563 = vmatprep.subr.bf16.mxu0 0
    %564 = vmatpush2.bf16.msra.mxu0 0
    %565 = vmatprep.subr.bf16.mxu0 0
    %566 = vmatpush2.bf16.msra.mxu0 0
    %567 = vmatprep.subr.bf16.mxu0 0
    %568 = vmatpush2.bf16.msra.mxu0 0
    %569 = vmatprep.mubr.bf16.mxu0 0
    %570 = vmatmul.mubr.bf16.gmra.mxu0 %v507
    %v571 = vpop.f32.mrf.mxu0
    %v572 = vadd.f32 %v468, %v571
    %v573 = vpop.f32.mrf.mxu0
    %v574 = vadd.f32 %v472, %v573
    %v575 = vpop.f32.mrf.mxu0
    %v576 = vadd.f32 %v468, %v575
    %v577 = vpop.f32.mrf.mxu0
    %v578 = vadd.f32 %v472, %v577
    %579 = vmatprep.mubr.bf16.mxu0 0
    %580 = vmatmul.mubr.bf16.gmra.mxu0 %v510
    %v581 = vpop.f32.mrf.mxu0
    %v582 = vadd.f32 %v468, %v581
    %v583 = vpop.f32.mrf.mxu0
    %v584 = vadd.f32 %v472, %v583
    %v585 = vpop.f32.mrf.mxu0
    %v586 = vpop.f32.mrf.mxu0
    %587 = vdwg.mxu0
    %588 = vmatprep.subr.bf16.mxu0 0
    %589 = vmatpush1.bf16.msra.mxu0 0
    %590 = vmatprep.subr.bf16.mxu0 0
    %591 = vmatpush1.bf16.msra.mxu0 0
    %592 = vmatprep.subr.bf16.mxu0 0
    %593 = vmatpush1.bf16.msra.mxu0 0
    %594 = vmatprep.subr.bf16.mxu0 0
    %595 = vmatpush1.bf16.msra.mxu0 0
    %596 = vmatprep.subr.bf16.mxu0 0
    %597 = vmatpush1.bf16.msra.mxu0 0
    %598 = vmatprep.subr.bf16.mxu0 0
    %599 = vmatpush1.bf16.msra.mxu0 0
    %600 = vmatprep.subr.bf16.mxu0 0
    %601 = vmatpush1.bf16.msra.mxu0 0
    %602 = vmatprep.subr.bf16.mxu0 %v523
    %603 = vmatpush1.bf16.msra.mxu0 %v520
    %604 = vmatprep.subr.bf16.mxu0 0
    %605 = vmatpush2.bf16.msra.mxu0 0
    %606 = vmatprep.subr.bf16.mxu0 0
    %607 = vmatpush2.bf16.msra.mxu0 0
    %608 = vmatprep.subr.bf16.mxu0 0
    %609 = vmatpush2.bf16.msra.mxu0 0
    %610 = vmatprep.subr.bf16.mxu0 0
    %611 = vmatpush2.bf16.msra.mxu0 0
    %612 = vmatprep.subr.bf16.mxu0 0
    %613 = vmatpush2.bf16.msra.mxu0 0
    %614 = vmatprep.subr.bf16.mxu0 0
    %615 = vmatpush2.bf16.msra.mxu0 0
    %616 = vmatprep.subr.bf16.mxu0 0
    %617 = vmatpush2.bf16.msra.mxu0 0
    %618 = vmatprep.subr.bf16.mxu0 0
    %619 = vmatpush2.bf16.msra.mxu0 0
    %620 = vmatprep.mubr.bf16.mxu0 0
    %621 = vmatmul.mubr.bf16.gmra.mxu0 %v507
    %v622 = vpop.f32.mrf.mxu0
    %v623 = vadd.f32 %v476, %v622
    %v624 = vpop.f32.mrf.mxu0
    %v625 = vadd.f32 %v480, %v624
    %v626 = vpop.f32.mrf.mxu0
    %v627 = vadd.f32 %v476, %v626
    %v628 = vpop.f32.mrf.mxu0
    %v629 = vadd.f32 %v480, %v628
    %630 = vmatprep.mubr.bf16.mxu0 0
    %631 = vmatmul.mubr.bf16.gmra.mxu0 %v510
    %v632 = vpop.f32.mrf.mxu0
    %v633 = vadd.f32 %v476, %v632
    %v634 = vpop.f32.mrf.mxu0
    %v635 = vadd.f32 %v480, %v634
    %v636 = vpop.f32.mrf.mxu0
    %v637 = vpop.f32.mrf.mxu0
    %638 = vdwg.mxu0
    %639 = vmatprep.subr.bf16.mxu0 0
    %640 = vmatpush1.bf16.msra.mxu0 0
    %641 = vmatprep.subr.bf16.mxu0 0
    %642 = vmatpush1.bf16.msra.mxu0 0
    %643 = vmatprep.subr.bf16.mxu0 0
    %644 = vmatpush1.bf16.msra.mxu0 0
    %645 = vmatprep.subr.bf16.mxu0 0
    %646 = vmatpush1.bf16.msra.mxu0 0
    %647 = vmatprep.subr.bf16.mxu0 0
    %648 = vmatpush1.bf16.msra.mxu0 0
    %649 = vmatprep.subr.bf16.mxu0 0
    %650 = vmatpush1.bf16.msra.mxu0 0
    %651 = vmatprep.subr.bf16.mxu0 0
    %652 = vmatpush1.bf16.msra.mxu0 0
    %653 = vmatprep.subr.bf16.mxu0 %v529
    %654 = vmatpush1.bf16.msra.mxu0 %v526
    %655 = vmatprep.subr.bf16.mxu0 0
    %656 = vmatpush2.bf16.msra.mxu0 0
    %657 = vmatprep.subr.bf16.mxu0 0
    %658 = vmatpush2.bf16.msra.mxu0 0
    %659 = vmatprep.subr.bf16.mxu0 0
    %660 = vmatpush2.bf16.msra.mxu0 0
    %661 = vmatprep.subr.bf16.mxu0 0
    %662 = vmatpush2.bf16.msra.mxu0 0
    %663 = vmatprep.subr.bf16.mxu0 0
    %664 = vmatpush2.bf16.msra.mxu0 0
    %665 = vmatprep.subr.bf16.mxu0 0
    %666 = vmatpush2.bf16.msra.mxu0 0
    %667 = vmatprep.subr.bf16.mxu0 0
    %668 = vmatpush2.bf16.msra.mxu0 0
    %669 = vmatprep.subr.bf16.mxu0 0
    %670 = vmatpush2.bf16.msra.mxu0 0
    %671 = vmatprep.mubr.bf16.mxu0 0
    %672 = vmatmul.mubr.bf16.gmra.mxu0 %v507
    %v673 = vpop.f32.mrf.mxu0
    %v674 = vadd.f32 %v484, %v673
    %v675 = vpop.f32.mrf.mxu0
    %v676 = vadd.f32 %v488, %v675
    %v677 = vpop.f32.mrf.mxu0
    %v678 = vadd.f32 %v484, %v677
    %v679 = vpop.f32.mrf.mxu0
    %v680 = vadd.f32 %v488, %v679
    %681 = vmatprep.mubr.bf16.mxu0 0
    %682 = vmatmul.mubr.bf16.gmra.mxu0 %v510
    %v683 = vpop.f32.mrf.mxu0
    %v684 = vadd.f32 %v484, %v683
    %v685 = vpop.f32.mrf.mxu0
    %v686 = vadd.f32 %v488, %v685
    %v687 = vpop.f32.mrf.mxu0
    %v688 = vpop.f32.mrf.mxu0
    %689 = vdwg.mxu0
    %690 = vmatprep.subr.bf16.mxu0 0
    %691 = vmatpush1.bf16.msra.mxu0 0
    %692 = vmatprep.subr.bf16.mxu0 0
    %693 = vmatpush1.bf16.msra.mxu0 0
    %694 = vmatprep.subr.bf16.mxu0 0
    %695 = vmatpush1.bf16.msra.mxu0 0
    %696 = vmatprep.subr.bf16.mxu0 0
    %697 = vmatpush1.bf16.msra.mxu0 0
    %698 = vmatprep.subr.bf16.mxu0 0
    %699 = vmatpush1.bf16.msra.mxu0 0
    %700 = vmatprep.subr.bf16.mxu0 0
    %701 = vmatpush1.bf16.msra.mxu0 0
    %702 = vmatprep.subr.bf16.mxu0 0
    %703 = vmatpush1.bf16.msra.mxu0 0
    %704 = vmatprep.subr.bf16.mxu0 %v535
    %705 = vmatpush1.bf16.msra.mxu0 %v532
    %706 = vmatprep.subr.bf16.mxu0 0
    %707 = vmatpush2.bf16.msra.mxu0 0
    %708 = vmatprep.subr.bf16.mxu0 0
    %709 = vmatpush2.bf16.msra.mxu0 0
    %710 = vmatprep.subr.bf16.mxu0 0
    %711 = vmatpush2.bf16.msra.mxu0 0
    %712 = vmatprep.subr.bf16.mxu0 0
    %713 = vmatpush2.bf16.msra.mxu0 0
    %714 = vmatprep.subr.bf16.mxu0 0
    %715 = vmatpush2.bf16.msra.mxu0 0
    %716 = vmatprep.subr.bf16.mxu0 0
    %717 = vmatpush2.bf16.msra.mxu0 0
    %718 = vmatprep.subr.bf16.mxu0 0
    %719 = vmatpush2.bf16.msra.mxu0 0
    %720 = vmatprep.subr.bf16.mxu0 0
    %721 = vmatpush2.bf16.msra.mxu0 0
    %722 = vmatprep.mubr.bf16.mxu0 0
    %723 = vmatmul.mubr.bf16.gmra.mxu0 %v507
    %v724 = vpop.f32.mrf.mxu0
    %v725 = vadd.f32 %v492, %v724
    %v726 = vpop.f32.mrf.mxu0
    %v727 = vadd.f32 %v496, %v726
    %v728 = vpop.f32.mrf.mxu0
    %v729 = vadd.f32 %v492, %v728
    %v730 = vpop.f32.mrf.mxu0
    %v731 = vadd.f32 %v496, %v730
    %732 = vmatprep.mubr.bf16.mxu0 0
    %733 = vmatmul.mubr.bf16.gmra.mxu0 %v510
    %v734 = vpop.f32.mrf.mxu0
    %v735 = vadd.f32 %v492, %v734
    %v736 = vpop.f32.mrf.mxu0
    %v737 = vadd.f32 %v496, %v736
    %v738 = vpop.f32.mrf.mxu0
    %v739 = vpop.f32.mrf.mxu0
    %740 = vdwg.mxu0
    %v741 = vld [vmem:[%s8] sm:$0xff]
    %v742 = vld [vmem:[%s8 + $0x8] sm:$0xff]
    %v743 = vpack.c.bf16 %v742, %v741
    %v744 = vld [vmem:[%s12] sm:$0x3f]
    %v745 = vld [vmem:[%s12 + $0x8] sm:$0x3f]
    %v746 = vld [vmem:[%s12 + $0x10] sm:$0x3f]
    %v747 = vld [vmem:[%s12 + $0x18] sm:$0x3f]
    %v748 = vld [vmem:[%s12 + $0x20] sm:$0x3f]
    %v749 = vld [vmem:[%s12 + $0x28] sm:$0x3f]
    %v750 = vld [vmem:[%s12 + $0x30] sm:$0x3f]
    %v751 = vld [vmem:[%s12 + $0x38] sm:$0x3f]
    %v752 = vpack.c.bf16 %v744, %v744
    %v753 = vpack.c.bf16 %v745, %v745
    %v754 = vpack.c.bf16 %v746, %v746
    %v755 = vpack.c.bf16 %v747, %v747
    %v756 = vpack.c.bf16 %v748, %v748
    %v757 = vpack.c.bf16 %v749, %v749
    %v758 = vpack.c.bf16 %v750, %v750
    %v759 = vpack.c.bf16 %v751, %v751
    %v760 = vld [vmem:[#allocation5] sm:$0xff]
    %v762 = vlaneseq
    %v763 = vshrl.u32 %v762, 7
    %v764 = vsub.s32 0, %v763
    %v765 = vrot.slane %v760, %v764
    %v766 = vlaneseq
    %v767 = vshrl.u32 %v766, 7
    %v768 = vsub.s32 1, %v767
    %v769 = vrot.slane %v760, %v768
    %v770 = vlaneseq
    %v771 = vshrl.u32 %v770, 7
    %v772 = vsub.s32 2, %v771
    %v773 = vrot.slane %v760, %v772
    %v774 = vlaneseq
    %v775 = vshrl.u32 %v774, 7
    %v776 = vsub.s32 3, %v775
    %v777 = vrot.slane %v760, %v776
    %v778 = vlaneseq
    %v779 = vshrl.u32 %v778, 7
    %v780 = vsub.s32 4, %v779
    %v781 = vrot.slane %v760, %v780
    %v782 = vlaneseq
    %v783 = vshrl.u32 %v782, 7
    %v784 = vsub.s32 5, %v783
    %v785 = vrot.slane %v760, %v784
    %v786 = vlaneseq
    %v787 = vshrl.u32 %v786, 7
    %v788 = vsub.s32 6, %v787
    %v789 = vrot.slane %v760, %v788
    %v790 = vlaneseq
    %v791 = vshrl.u32 %v790, 7
    %v792 = vsub.s32 7, %v791
    %v793 = vrot.slane %v760, %v792
    %vm802 = vcmask 48128
    %v804 = vsel %vm802, %v743, 0
    %vm806 = vcmask 1042432
    %v808 = vsel %vm806, %v752, 0
    %v811 = vsel %vm806, %v753, 0
    %v814 = vsel %vm806, %v754, 0
    %v817 = vsel %vm806, %v755, 0
    %v820 = vsel %vm806, %v756, 0
    %v823 = vsel %vm806, %v757, 0
    %v826 = vsel %vm806, %v758, 0
    %v829 = vsel %vm806, %v759, 0
    %831 = vmatprep.subr.bf16.mxu0 0
    %832 = vmatpush1.bf16.msra.mxu0 0
    %833 = vmatprep.subr.bf16.mxu0 0
    %834 = vmatpush1.bf16.msra.mxu0 0
    %835 = vmatprep.subr.bf16.mxu0 0
    %836 = vmatpush1.bf16.msra.mxu0 0
    %837 = vmatprep.subr.bf16.mxu0 0
    %838 = vmatpush1.bf16.msra.mxu0 0
    %839 = vmatprep.subr.bf16.mxu0 0
    %840 = vmatpush1.bf16.msra.mxu0 0
    %841 = vmatprep.subr.bf16.mxu0 0
    %842 = vmatpush1.bf16.msra.mxu0 0
    %843 = vmatprep.subr.bf16.mxu0 0
    %844 = vmatpush1.bf16.msra.mxu0 0
    %845 = vmatprep.subr.bf16.mxu0 %v811
    %846 = vmatpush1.bf16.msra.mxu0 %v808
    %847 = vmatprep.subr.bf16.mxu0 0
    %848 = vmatpush2.bf16.msra.mxu0 0
    %849 = vmatprep.subr.bf16.mxu0 0
    %850 = vmatpush2.bf16.msra.mxu0 0
    %851 = vmatprep.subr.bf16.mxu0 0
    %852 = vmatpush2.bf16.msra.mxu0 0
    %853 = vmatprep.subr.bf16.mxu0 0
    %854 = vmatpush2.bf16.msra.mxu0 0
    %855 = vmatprep.subr.bf16.mxu0 0
    %856 = vmatpush2.bf16.msra.mxu0 0
    %857 = vmatprep.subr.bf16.mxu0 0
    %858 = vmatpush2.bf16.msra.mxu0 0
    %859 = vmatprep.subr.bf16.mxu0 0
    %860 = vmatpush2.bf16.msra.mxu0 0
    %861 = vmatprep.subr.bf16.mxu0 0
    %862 = vmatpush2.bf16.msra.mxu0 0
    %863 = vmatprep.mubr.bf16.mxu0 0
    %864 = vmatmul.mubr.bf16.gmra.mxu0 %v804
    %v865 = vpop.f32.mrf.mxu0
    %v866 = vadd.f32 %v765, %v865
    %v867 = vpop.f32.mrf.mxu0
    %v868 = vadd.f32 %v769, %v867
    %v869 = vpop.f32.mrf.mxu0
    %v870 = vadd.f32 %v765, %v869
    %v871 = vpop.f32.mrf.mxu0
    %v872 = vadd.f32 %v769, %v871
    %873 = vdwg.mxu0
    %874 = vmatprep.subr.bf16.mxu0 0
    %875 = vmatpush1.bf16.msra.mxu0 0
    %876 = vmatprep.subr.bf16.mxu0 0
    %877 = vmatpush1.bf16.msra.mxu0 0
    %878 = vmatprep.subr.bf16.mxu0 0
    %879 = vmatpush1.bf16.msra.mxu0 0
    %880 = vmatprep.subr.bf16.mxu0 0
    %881 = vmatpush1.bf16.msra.mxu0 0
    %882 = vmatprep.subr.bf16.mxu0 0
    %883 = vmatpush1.bf16.msra.mxu0 0
    %884 = vmatprep.subr.bf16.mxu0 0
    %885 = vmatpush1.bf16.msra.mxu0 0
    %886 = vmatprep.subr.bf16.mxu0 0
    %887 = vmatpush1.bf16.msra.mxu0 0
    %888 = vmatprep.subr.bf16.mxu0 %v817
    %889 = vmatpush1.bf16.msra.mxu0 %v814
    %890 = vmatprep.subr.bf16.mxu0 0
    %891 = vmatpush2.bf16.msra.mxu0 0
    %892 = vmatprep.subr.bf16.mxu0 0
    %893 = vmatpush2.bf16.msra.mxu0 0
    %894 = vmatprep.subr.bf16.mxu0 0
    %895 = vmatpush2.bf16.msra.mxu0 0
    %896 = vmatprep.subr.bf16.mxu0 0
    %897 = vmatpush2.bf16.msra.mxu0 0
    %898 = vmatprep.subr.bf16.mxu0 0
    %899 = vmatpush2.bf16.msra.mxu0 0
    %900 = vmatprep.subr.bf16.mxu0 0
    %901 = vmatpush2.bf16.msra.mxu0 0
    %902 = vmatprep.subr.bf16.mxu0 0
    %903 = vmatpush2.bf16.msra.mxu0 0
    %904 = vmatprep.subr.bf16.mxu0 0
    %905 = vmatpush2.bf16.msra.mxu0 0
    %906 = vmatprep.mubr.bf16.mxu0 0
    %907 = vmatmul.mubr.bf16.gmra.mxu0 %v804
    %v908 = vpop.f32.mrf.mxu0
    %v909 = vadd.f32 %v773, %v908
    %v910 = vpop.f32.mrf.mxu0
    %v911 = vadd.f32 %v777, %v910
    %v912 = vpop.f32.mrf.mxu0
    %v913 = vadd.f32 %v773, %v912
    %v914 = vpop.f32.mrf.mxu0
    %v915 = vadd.f32 %v777, %v914
    %916 = vdwg.mxu0
    %917 = vmatprep.subr.bf16.mxu0 0
    %918 = vmatpush1.bf16.msra.mxu0 0
    %919 = vmatprep.subr.bf16.mxu0 0
    %920 = vmatpush1.bf16.msra.mxu0 0
    %921 = vmatprep.subr.bf16.mxu0 0
    %922 = vmatpush1.bf16.msra.mxu0 0
    %923 = vmatprep.subr.bf16.mxu0 0
    %924 = vmatpush1.bf16.msra.mxu0 0
    %925 = vmatprep.subr.bf16.mxu0 0
    %926 = vmatpush1.bf16.msra.mxu0 0
    %927 = vmatprep.subr.bf16.mxu0 0
    %928 = vmatpush1.bf16.msra.mxu0 0
    %929 = vmatprep.subr.bf16.mxu0 0
    %930 = vmatpush1.bf16.msra.mxu0 0
    %931 = vmatprep.subr.bf16.mxu0 %v823
    %932 = vmatpush1.bf16.msra.mxu0 %v820
    %933 = vmatprep.subr.bf16.mxu0 0
    %934 = vmatpush2.bf16.msra.mxu0 0
    %935 = vmatprep.subr.bf16.mxu0 0
    %936 = vmatpush2.bf16.msra.mxu0 0
    %937 = vmatprep.subr.bf16.mxu0 0
    %938 = vmatpush2.bf16.msra.mxu0 0
    %939 = vmatprep.subr.bf16.mxu0 0
    %940 = vmatpush2.bf16.msra.mxu0 0
    %941 = vmatprep.subr.bf16.mxu0 0
    %942 = vmatpush2.bf16.msra.mxu0 0
    %943 = vmatprep.subr.bf16.mxu0 0
    %944 = vmatpush2.bf16.msra.mxu0 0
    %945 = vmatprep.subr.bf16.mxu0 0
    %946 = vmatpush2.bf16.msra.mxu0 0
    %947 = vmatprep.subr.bf16.mxu0 0
    %948 = vmatpush2.bf16.msra.mxu0 0
    %949 = vmatprep.mubr.bf16.mxu0 0
    %950 = vmatmul.mubr.bf16.gmra.mxu0 %v804
    %v951 = vpop.f32.mrf.mxu0
    %v952 = vadd.f32 %v781, %v951
    %v953 = vpop.f32.mrf.mxu0
    %v954 = vadd.f32 %v785, %v953
    %v955 = vpop.f32.mrf.mxu0
    %v956 = vadd.f32 %v781, %v955
    %v957 = vpop.f32.mrf.mxu0
    %v958 = vadd.f32 %v785, %v957
    %959 = vdwg.mxu0
    %960 = vmatprep.subr.bf16.mxu0 0
    %961 = vmatpush1.bf16.msra.mxu0 0
    %962 = vmatprep.subr.bf16.mxu0 0
    %963 = vmatpush1.bf16.msra.mxu0 0
    %964 = vmatprep.subr.bf16.mxu0 0
    %965 = vmatpush1.bf16.msra.mxu0 0
    %966 = vmatprep.subr.bf16.mxu0 0
    %967 = vmatpush1.bf16.msra.mxu0 0
    %968 = vmatprep.subr.bf16.mxu0 0
    %969 = vmatpush1.bf16.msra.mxu0 0
    %970 = vmatprep.subr.bf16.mxu0 0
    %971 = vmatpush1.bf16.msra.mxu0 0
    %972 = vmatprep.subr.bf16.mxu0 0
    %973 = vmatpush1.bf16.msra.mxu0 0
    %974 = vmatprep.subr.bf16.mxu0 %v829
    %975 = vmatpush1.bf16.msra.mxu0 %v826
    %976 = vmatprep.subr.bf16.mxu0 0
    %977 = vmatpush2.bf16.msra.mxu0 0
    %978 = vmatprep.subr.bf16.mxu0 0
    %979 = vmatpush2.bf16.msra.mxu0 0
    %980 = vmatprep.subr.bf16.mxu0 0
    %981 = vmatpush2.bf16.msra.mxu0 0
    %982 = vmatprep.subr.bf16.mxu0 0
    %983 = vmatpush2.bf16.msra.mxu0 0
    %984 = vmatprep.subr.bf16.mxu0 0
    %985 = vmatpush2.bf16.msra.mxu0 0
    %986 = vmatprep.subr.bf16.mxu0 0
    %987 = vmatpush2.bf16.msra.mxu0 0
    %988 = vmatprep.subr.bf16.mxu0 0
    %989 = vmatpush2.bf16.msra.mxu0 0
    %990 = vmatprep.subr.bf16.mxu0 0
    %991 = vmatpush2.bf16.msra.mxu0 0
    %992 = vmatprep.mubr.bf16.mxu0 0
    %993 = vmatmul.mubr.bf16.gmra.mxu0 %v804
    %v994 = vpop.f32.mrf.mxu0
    %v995 = vadd.f32 %v789, %v994
    %v996 = vpop.f32.mrf.mxu0
    %v997 = vadd.f32 %v793, %v996
    %v998 = vpop.f32.mrf.mxu0
    %v999 = vadd.f32 %v789, %v998
    %v1000 = vpop.f32.mrf.mxu0
    %v1001 = vadd.f32 %v793, %v1000
    %1002 = vdwg.mxu0
    %v1003 = vld [vmem:[%s9] sm:$0xff]
    %v1004 = vpack.c.bf16 %v1003, %v1003
    %v1005 = vld [vmem:[#allocation7] sm:$0xff]
    %v1006 = vld [vmem:[#allocation7 + $0x8] sm:$0xff]
    %v1007 = vld [vmem:[#allocation7 + $0x10] sm:$0xff]
    %v1008 = vld [vmem:[#allocation7 + $0x18] sm:$0xff]
    %v1013 = vcombine.high %v1005, %v1005
    %v1014 = vcombine.high %v1006, %v1006
    %v1015 = vcombine.high %v1007, %v1007
    %v1016 = vcombine.high %v1008, %v1008
    %v1021 = vpack.c.bf16 %v1005, %v1005
    %v1022 = vpack.c.bf16 %v1013, %v1013
    %v1023 = vpack.c.bf16 %v1006, %v1006
    %v1024 = vpack.c.bf16 %v1014, %v1014
    %v1025 = vpack.c.bf16 %v1007, %v1007
    %v1026 = vpack.c.bf16 %v1015, %v1015
    %v1027 = vpack.c.bf16 %v1008, %v1008
    %v1028 = vpack.c.bf16 %v1016, %v1016
    %v1029 = vld [vmem:[#allocation8] sm:$0xff]
    %v1031 = vlaneseq
    %v1032 = vshrl.u32 %v1031, 7
    %v1033 = vsub.s32 0, %v1032
    %v1034 = vrot.slane %v1029, %v1033
    %v1035 = vlaneseq
    %v1036 = vshrl.u32 %v1035, 7
    %v1037 = vsub.s32 1, %v1036
    %v1038 = vrot.slane %v1029, %v1037
    %v1039 = vlaneseq
    %v1040 = vshrl.u32 %v1039, 7
    %v1041 = vsub.s32 2, %v1040
    %v1042 = vrot.slane %v1029, %v1041
    %v1043 = vlaneseq
    %v1044 = vshrl.u32 %v1043, 7
    %v1045 = vsub.s32 3, %v1044
    %v1046 = vrot.slane %v1029, %v1045
    %v1047 = vlaneseq
    %v1048 = vshrl.u32 %v1047, 7
    %v1049 = vsub.s32 4, %v1048
    %v1050 = vrot.slane %v1029, %v1049
    %v1051 = vlaneseq
    %v1052 = vshrl.u32 %v1051, 7
    %v1053 = vsub.s32 5, %v1052
    %v1054 = vrot.slane %v1029, %v1053
    %v1055 = vlaneseq
    %v1056 = vshrl.u32 %v1055, 7
    %v1057 = vsub.s32 6, %v1056
    %v1058 = vrot.slane %v1029, %v1057
    %v1059 = vlaneseq
    %v1060 = vshrl.u32 %v1059, 7
    %v1061 = vsub.s32 7, %v1060
    %v1062 = vrot.slane %v1029, %v1061
    %vm1071 = vcmask 31744
    %v1073 = vsel %vm1071, %v1004, 0
    %vm1075 = vcmask 1041408
    %v1077 = vsel %vm1075, %v1021, 0
    %v1080 = vsel %vm1075, %v1022, 0
    %v1083 = vsel %vm1075, %v1023, 0
    %v1086 = vsel %vm1075, %v1024, 0
    %v1089 = vsel %vm1075, %v1025, 0
    %v1092 = vsel %vm1075, %v1026, 0
    %v1095 = vsel %vm1075, %v1027, 0
    %v1098 = vsel %vm1075, %v1028, 0
    %1100 = vmatprep.subr.bf16.mxu0 0
    %1101 = vmatpush1.bf16.msra.mxu0 0
    %1102 = vmatprep.subr.bf16.mxu0 0
    %1103 = vmatpush1.bf16.msra.mxu0 0
    %1104 = vmatprep.subr.bf16.mxu0 0
    %1105 = vmatpush1.bf16.msra.mxu0 0
    %1106 = vmatprep.subr.bf16.mxu0 0
    %1107 = vmatpush1.bf16.msra.mxu0 0
    %1108 = vmatprep.subr.bf16.mxu0 0
    %1109 = vmatpush1.bf16.msra.mxu0 0
    %1110 = vmatprep.subr.bf16.mxu0 0
    %1111 = vmatpush1.bf16.msra.mxu0 0
    %1112 = vmatprep.subr.bf16.mxu0 0
    %1113 = vmatpush1.bf16.msra.mxu0 0
    %1114 = vmatprep.subr.bf16.mxu0 %v1080
    %1115 = vmatpush1.bf16.msra.mxu0 %v1077
    %1116 = vmatprep.subr.bf16.mxu0 0
    %1117 = vmatpush2.bf16.msra.mxu0 0
    %1118 = vmatprep.subr.bf16.mxu0 0
    %1119 = vmatpush2.bf16.msra.mxu0 0
    %1120 = vmatprep.subr.bf16.mxu0 0
    %1121 = vmatpush2.bf16.msra.mxu0 0
    %1122 = vmatprep.subr.bf16.mxu0 0
    %1123 = vmatpush2.bf16.msra.mxu0 0
    %1124 = vmatprep.subr.bf16.mxu0 0
    %1125 = vmatpush2.bf16.msra.mxu0 0
    %1126 = vmatprep.subr.bf16.mxu0 0
    %1127 = vmatpush2.bf16.msra.mxu0 0
    %1128 = vmatprep.subr.bf16.mxu0 0
    %1129 = vmatpush2.bf16.msra.mxu0 0
    %1130 = vmatprep.subr.bf16.mxu0 0
    %1131 = vmatpush2.bf16.msra.mxu0 0
    %1132 = vmatprep.mubr.bf16.mxu0 0
    %1133 = vmatmul.mubr.bf16.gmra.mxu0 %v1073
    %v1134 = vpop.f32.mrf.mxu0
    %v1135 = vadd.f32 %v1034, %v1134
    %v1136 = vpop.f32.mrf.mxu0
    %v1137 = vadd.f32 %v1038, %v1136
    %v1138 = vpop.f32.mrf.mxu0
    %v1139 = vpop.f32.mrf.mxu0
    %1140 = vdwg.mxu0
    %1141 = vmatprep.subr.bf16.mxu0 0
    %1142 = vmatpush1.bf16.msra.mxu0 0
    %1143 = vmatprep.subr.bf16.mxu0 0
    %1144 = vmatpush1.bf16.msra.mxu0 0
    %1145 = vmatprep.subr.bf16.mxu0 0
    %1146 = vmatpush1.bf16.msra.mxu0 0
    %1147 = vmatprep.subr.bf16.mxu0 0
    %1148 = vmatpush1.bf16.msra.mxu0 0
    %1149 = vmatprep.subr.bf16.mxu0 0
    %1150 = vmatpush1.bf16.msra.mxu0 0
    %1151 = vmatprep.subr.bf16.mxu0 0
    %1152 = vmatpush1.bf16.msra.mxu0 0
    %1153 = vmatprep.subr.bf16.mxu0 0
    %1154 = vmatpush1.bf16.msra.mxu0 0
    %1155 = vmatprep.subr.bf16.mxu0 %v1086
    %1156 = vmatpush1.bf16.msra.mxu0 %v1083
    %1157 = vmatprep.subr.bf16.mxu0 0
    %1158 = vmatpush2.bf16.msra.mxu0 0
    %1159 = vmatprep.subr.bf16.mxu0 0
    %1160 = vmatpush2.bf16.msra.mxu0 0
    %1161 = vmatprep.subr.bf16.mxu0 0
    %1162 = vmatpush2.bf16.msra.mxu0 0
    %1163 = vmatprep.subr.bf16.mxu0 0
    %1164 = vmatpush2.bf16.msra.mxu0 0
    %1165 = vmatprep.subr.bf16.mxu0 0
    %1166 = vmatpush2.bf16.msra.mxu0 0
    %1167 = vmatprep.subr.bf16.mxu0 0
    %1168 = vmatpush2.bf16.msra.mxu0 0
    %1169 = vmatprep.subr.bf16.mxu0 0
    %1170 = vmatpush2.bf16.msra.mxu0 0
    %1171 = vmatprep.subr.bf16.mxu0 0
    %1172 = vmatpush2.bf16.msra.mxu0 0
    %1173 = vmatprep.mubr.bf16.mxu0 0
    %1174 = vmatmul.mubr.bf16.gmra.mxu0 %v1073
    %v1175 = vpop.f32.mrf.mxu0
    %v1176 = vadd.f32 %v1042, %v1175
    %v1177 = vpop.f32.mrf.mxu0
    %v1178 = vadd.f32 %v1046, %v1177
    %v1179 = vpop.f32.mrf.mxu0
    %v1180 = vpop.f32.mrf.mxu0
    %1181 = vdwg.mxu0
    %1182 = vmatprep.subr.bf16.mxu0 0
    %1183 = vmatpush1.bf16.msra.mxu0 0
    %1184 = vmatprep.subr.bf16.mxu0 0
    %1185 = vmatpush1.bf16.msra.mxu0 0
    %1186 = vmatprep.subr.bf16.mxu0 0
    %1187 = vmatpush1.bf16.msra.mxu0 0
    %1188 = vmatprep.subr.bf16.mxu0 0
    %1189 = vmatpush1.bf16.msra.mxu0 0
    %1190 = vmatprep.subr.bf16.mxu0 0
    %1191 = vmatpush1.bf16.msra.mxu0 0
    %1192 = vmatprep.subr.bf16.mxu0 0
    %1193 = vmatpush1.bf16.msra.mxu0 0
    %1194 = vmatprep.subr.bf16.mxu0 0
    %1195 = vmatpush1.bf16.msra.mxu0 0
    %1196 = vmatprep.subr.bf16.mxu0 %v1092
    %1197 = vmatpush1.bf16.msra.mxu0 %v1089
    %1198 = vmatprep.subr.bf16.mxu0 0
    %1199 = vmatpush2.bf16.msra.mxu0 0
    %1200 = vmatprep.subr.bf16.mxu0 0
    %1201 = vmatpush2.bf16.msra.mxu0 0
    %1202 = vmatprep.subr.bf16.mxu0 0
    %1203 = vmatpush2.bf16.msra.mxu0 0
    %1204 = vmatprep.subr.bf16.mxu0 0
    %1205 = vmatpush2.bf16.msra.mxu0 0
    %1206 = vmatprep.subr.bf16.mxu0 0
    %1207 = vmatpush2.bf16.msra.mxu0 0
    %1208 = vmatprep.subr.bf16.mxu0 0
    %1209 = vmatpush2.bf16.msra.mxu0 0
    %1210 = vmatprep.subr.bf16.mxu0 0
    %1211 = vmatpush2.bf16.msra.mxu0 0
    %1212 = vmatprep.subr.bf16.mxu0 0
    %1213 = vmatpush2.bf16.msra.mxu0 0
    %1214 = vmatprep.mubr.bf16.mxu0 0
    %1215 = vmatmul.mubr.bf16.gmra.mxu0 %v1073
    %v1216 = vpop.f32.mrf.mxu0
    %v1217 = vadd.f32 %v1050, %v1216
    %v1218 = vpop.f32.mrf.mxu0
    %v1219 = vadd.f32 %v1054, %v1218
    %v1220 = vpop.f32.mrf.mxu0
    %v1221 = vpop.f32.mrf.mxu0
    %1222 = vdwg.mxu0
    %1223 = vmatprep.subr.bf16.mxu0 0
    %1224 = vmatpush1.bf16.msra.mxu0 0
    %1225 = vmatprep.subr.bf16.mxu0 0
    %1226 = vmatpush1.bf16.msra.mxu0 0
    %1227 = vmatprep.subr.bf16.mxu0 0
    %1228 = vmatpush1.bf16.msra.mxu0 0
    %1229 = vmatprep.subr.bf16.mxu0 0
    %1230 = vmatpush1.bf16.msra.mxu0 0
    %1231 = vmatprep.subr.bf16.mxu0 0
    %1232 = vmatpush1.bf16.msra.mxu0 0
    %1233 = vmatprep.subr.bf16.mxu0 0
    %1234 = vmatpush1.bf16.msra.mxu0 0
    %1235 = vmatprep.subr.bf16.mxu0 0
    %1236 = vmatpush1.bf16.msra.mxu0 0
    %1237 = vmatprep.subr.bf16.mxu0 %v1098
    %1238 = vmatpush1.bf16.msra.mxu0 %v1095
    %1239 = vmatprep.subr.bf16.mxu0 0
    %1240 = vmatpush2.bf16.msra.mxu0 0
    %1241 = vmatprep.subr.bf16.mxu0 0
    %1242 = vmatpush2.bf16.msra.mxu0 0
    %1243 = vmatprep.subr.bf16.mxu0 0
    %1244 = vmatpush2.bf16.msra.mxu0 0
    %1245 = vmatprep.subr.bf16.mxu0 0
    %1246 = vmatpush2.bf16.msra.mxu0 0
    %1247 = vmatprep.subr.bf16.mxu0 0
    %1248 = vmatpush2.bf16.msra.mxu0 0
    %1249 = vmatprep.subr.bf16.mxu0 0
    %1250 = vmatpush2.bf16.msra.mxu0 0
    %1251 = vmatprep.subr.bf16.mxu0 0
    %1252 = vmatpush2.bf16.msra.mxu0 0
    %1253 = vmatprep.subr.bf16.mxu0 0
    %1254 = vmatpush2.bf16.msra.mxu0 0
    %1255 = vmatprep.mubr.bf16.mxu0 0
    %1256 = vmatmul.mubr.bf16.gmra.mxu0 %v1073
    %v1257 = vpop.f32.mrf.mxu0
    %v1258 = vadd.f32 %v1058, %v1257
    %v1259 = vpop.f32.mrf.mxu0
    %v1260 = vadd.f32 %v1062, %v1259
    %v1261 = vpop.f32.mrf.mxu0
    %v1262 = vpop.f32.mrf.mxu0
    %1263 = vdwg.mxu0
    %v1264 = vld [vmem:[%s18] sm:$0xff]
    %v1265 = vld [vmem:[%s18 + $0x8] sm:$0xff]
    %v1266 = vld [vmem:[%s18 + $0x10] sm:$0xff]
    %v1267 = vld [vmem:[%s18 + $0x18] sm:$0xff]
    %v1268 = vpack.c.bf16 %v1265, %v1264
    %v1269 = vpack.c.bf16 %v1267, %v1266
    %v1270 = vld [vmem:[%s19] sm:$0xff]
    %v1271 = vld [vmem:[%s19 + $0x8] sm:$0xff]
    %v1272 = vld [vmem:[%s19 + $0x10] sm:$0xff]
    %v1273 = vld [vmem:[%s19 + $0x18] sm:$0xff]
    %v1274 = vpack.c.bf16 %v1271, %v1270
    %v1275 = vpack.c.bf16 %v1273, %v1272
    %v1276 = vld [vmem:[%s20] sm:$0x1]
    %v1277 = vld [vmem:[%s21] sm:$0x1]
    %v1278 = vld [vmem:[%s6] sm:$0xff]
    %v1279 = vld [vmem:[%s6 + $0x8] sm:$0xff]
    %v1280 = vpack.c.bf16 %v1279, %v1278
    %v1282 = vsel %vm352, %v300, 0
    %v1285 = vsel %vm352, %v301, 0
    %1287 = vmatprep.subr.bf16.mxu0 0
    %1288 = vmatpush1.bf16.msra.mxu0 0
    %1289 = vmatprep.subr.bf16.mxu0 0
    %1290 = vmatpush1.bf16.msra.mxu0 0
    %1291 = vmatprep.subr.bf16.mxu0 0
    %1292 = vmatpush1.bf16.msra.mxu0 0
    %1293 = vmatprep.subr.bf16.mxu0 0
    %1294 = vmatpush1.bf16.msra.mxu0 0
    %1295 = vmatprep.subr.bf16.mxu0 0
    %1296 = vmatpush1.bf16.msra.mxu0 0
    %1297 = vmatprep.subr.bf16.mxu0 0
    %1298 = vmatpush1.bf16.msra.mxu0 0
    %1299 = vmatprep.subr.bf16.mxu0 0
    %1300 = vmatpush1.bf16.msra.mxu0 0
    %1301 = vmatprep.subr.bf16.mxu0 0
    %1302 = vmatpush1.bf16.msra.mxu0 %v1280
    %1303 = vmatprep.subr.bf16.mxu0 0
    %1304 = vmatpush2.bf16.msra.mxu0 0
    %1305 = vmatprep.subr.bf16.mxu0 0
    %1306 = vmatpush2.bf16.msra.mxu0 0
    %1307 = vmatprep.subr.bf16.mxu0 0
    %1308 = vmatpush2.bf16.msra.mxu0 0
    %1309 = vmatprep.subr.bf16.mxu0 0
    %1310 = vmatpush2.bf16.msra.mxu0 0
    %1311 = vmatprep.subr.bf16.mxu0 0
    %1312 = vmatpush2.bf16.msra.mxu0 0
    %1313 = vmatprep.subr.bf16.mxu0 0
    %1314 = vmatpush2.bf16.msra.mxu0 0
    %1315 = vmatprep.subr.bf16.mxu0 0
    %1316 = vmatpush2.bf16.msra.mxu0 0
    %1317 = vmatprep.subr.bf16.mxu0 0
    %1318 = vmatpush2.bf16.msra.mxu0 0
    %1319 = vmatprep.mubr.bf16.mxu0 0
    %1320 = vmatmul.mubr.bf16.gmra.mxu0 %v1282
    %v1321 = vpop.f32.mrf.mxu0
    %v1322 = vadd.f32 0.0, %v1321
    %v1323 = vpop.f32.mrf.mxu0
    %v1324 = vpop.f32.mrf.mxu0
    %v1325 = vadd.f32 0.0, %v1324
    %v1326 = vpop.f32.mrf.mxu0
    %1327 = vmatprep.mubr.bf16.mxu0 0
    %1328 = vmatmul.mubr.bf16.gmra.mxu0 %v1285
    %v1329 = vpop.f32.mrf.mxu0
    %v1330 = vadd.f32 0.0, %v1329
    %v1331 = vpop.f32.mrf.mxu0
    %v1332 = vpop.f32.mrf.mxu0
    %v1333 = vpop.f32.mrf.mxu0
    %1334 = vdwg.mxu0
    %v1335 = vpack.c.bf16 %v1325, %v1322
    %v1336 = vpack.c.bf16 %v1330, %v1330
    %v1353 = vunpack.c.l.b16 %v133
    %v1354 = vunpack.c.h.b16 %v133
    %v1355 = vunpack.c.l.b16 %v134
    %v1356 = vunpack.c.h.b16 %v134
    %v1357 = vunpack.c.l.b16 %v135
    %v1358 = vunpack.c.h.b16 %v135
    %v1359 = vunpack.c.l.b16 %v136
    %v1360 = vunpack.c.h.b16 %v136
    %v1361 = vunpack.c.l.b16 %v137
    %v1362 = vunpack.c.h.b16 %v137
    %v1363 = vunpack.c.l.b16 %v138
    %v1364 = vunpack.c.h.b16 %v138
    %v1365 = vunpack.c.l.b16 %v139
    %v1366 = vunpack.c.h.b16 %v139
    %v1367 = vunpack.c.l.b16 %v140
    %v1368 = vunpack.c.h.b16 %v140
    %v1369 = vunpack.c.l.b16 %v141
    %v1370 = vunpack.c.h.b16 %v141
    %v1371 = vunpack.c.l.b16 %v142
    %v1372 = vunpack.c.h.b16 %v142
    %v1373 = vunpack.c.l.b16 %v143
    %v1374 = vunpack.c.h.b16 %v143
    %v1375 = vunpack.c.l.b16 %v144
    %v1376 = vunpack.c.h.b16 %v144
    %v1377 = vunpack.c.l.b16 %v145
    %v1378 = vunpack.c.h.b16 %v145
    %v1379 = vunpack.c.l.b16 %v146
    %v1380 = vunpack.c.h.b16 %v146
    %v1381 = vunpack.c.l.b16 %v147
    %v1382 = vunpack.c.h.b16 %v147
    %v1383 = vunpack.c.l.b16 %v148
    %v1384 = vunpack.c.h.b16 %v148
    %v1385 = vpack.c.b16 %v1361, %v1353
    %v1386 = vpack.c.b16 %v1362, %v1354
    %v1387 = vpack.c.b16 %v1363, %v1355
    %v1388 = vpack.c.b16 %v1364, %v1356
    %v1389 = vpack.c.b16 %v1365, %v1357
    %v1390 = vpack.c.b16 %v1366, %v1358
    %v1391 = vpack.c.b16 %v1367, %v1359
    %v1392 = vpack.c.b16 %v1368, %v1360
    %v1393 = vpack.c.b16 %v1377, %v1369
    %v1394 = vpack.c.b16 %v1378, %v1370
    %v1395 = vpack.c.b16 %v1379, %v1371
    %v1396 = vpack.c.b16 %v1380, %v1372
    %v1397 = vpack.c.b16 %v1381, %v1373
    %v1398 = vpack.c.b16 %v1382, %v1374
    %v1399 = vpack.c.b16 %v1383, %v1375
    %v1400 = vpack.c.b16 %v1384, %v1376
    %vm1417 = vcmask 261120
    %v1419 = vsel %vm1417, %v1335, 0
    %v1422 = vsel %vm1417, %v1336, 0
    %1424 = vmatprep.subr.bf16.mxu0 0
    %1425 = vmatpush1.bf16.msra.mxu0 0
    %1426 = vmatprep.subr.bf16.mxu0 0
    %1427 = vmatpush1.bf16.msra.mxu0 0
    %1428 = vmatprep.subr.bf16.mxu0 0
    %1429 = vmatpush1.bf16.msra.mxu0 0
    %1430 = vmatprep.subr.bf16.mxu0 0
    %1431 = vmatpush1.bf16.msra.mxu0 0
    %1432 = vmatprep.subr.bf16.mxu0 0
    %1433 = vmatpush1.bf16.msra.mxu0 0
    %1434 = vmatprep.subr.bf16.mxu0 0
    %1435 = vmatpush1.bf16.msra.mxu0 0
    %1436 = vmatprep.subr.bf16.mxu0 %v1394
    %1437 = vmatpush1.bf16.msra.mxu0 %v1393
    %1438 = vmatprep.subr.bf16.mxu0 %v1386
    %1439 = vmatpush1.bf16.msra.mxu0 %v1385
    %1440 = vmatprep.subr.bf16.mxu0 0
    %1441 = vmatpush2.bf16.msra.mxu0 0
    %1442 = vmatprep.subr.bf16.mxu0 0
    %1443 = vmatpush2.bf16.msra.mxu0 0
    %1444 = vmatprep.subr.bf16.mxu0 0
    %1445 = vmatpush2.bf16.msra.mxu0 0
    %1446 = vmatprep.subr.bf16.mxu0 0
    %1447 = vmatpush2.bf16.msra.mxu0 0
    %1448 = vmatprep.subr.bf16.mxu0 0
    %1449 = vmatpush2.bf16.msra.mxu0 0
    %1450 = vmatprep.subr.bf16.mxu0 0
    %1451 = vmatpush2.bf16.msra.mxu0 0
    %1452 = vmatprep.subr.bf16.mxu0 0
    %1453 = vmatpush2.bf16.msra.mxu0 0
    %1454 = vmatprep.subr.bf16.mxu0 0
    %1455 = vmatpush2.bf16.msra.mxu0 0
    %1456 = vmatprep.mubr.bf16.mxu0 0
    %1457 = vmatmul.mubr.bf16.gmra.mxu0 %v1419
    %v1458 = vpop.f32.mrf.mxu0
    %v1459 = vadd.f32 0.0, %v1458
    %v1460 = vpop.f32.mrf.mxu0
    %v1461 = vadd.f32 0.0, %v1460
    %v1462 = vpop.f32.mrf.mxu0
    %v1463 = vadd.f32 0.0, %v1462
    %v1464 = vpop.f32.mrf.mxu0
    %v1465 = vadd.f32 0.0, %v1464
    %1466 = vmatprep.mubr.bf16.mxu0 0
    %1467 = vmatmul.mubr.bf16.gmra.mxu0 %v1422
    %v1468 = vpop.f32.mrf.mxu0
    %v1469 = vadd.f32 0.0, %v1468
    %v1470 = vpop.f32.mrf.mxu0
    %v1471 = vadd.f32 0.0, %v1470
    %v1472 = vpop.f32.mrf.mxu0
    %v1473 = vpop.f32.mrf.mxu0
    %1474 = vdwg.mxu0
    %1475 = vmatprep.subr.bf16.mxu0 0
    %1476 = vmatpush1.bf16.msra.mxu0 0
    %1477 = vmatprep.subr.bf16.mxu0 0
    %1478 = vmatpush1.bf16.msra.mxu0 0
    %1479 = vmatprep.subr.bf16.mxu0 0
    %1480 = vmatpush1.bf16.msra.mxu0 0
    %1481 = vmatprep.subr.bf16.mxu0 0
    %1482 = vmatpush1.bf16.msra.mxu0 0
    %1483 = vmatprep.subr.bf16.mxu0 0
    %1484 = vmatpush1.bf16.msra.mxu0 0
    %1485 = vmatprep.subr.bf16.mxu0 0
    %1486 = vmatpush1.bf16.msra.mxu0 0
    %1487 = vmatprep.subr.bf16.mxu0 %v1396
    %1488 = vmatpush1.bf16.msra.mxu0 %v1395
    %1489 = vmatprep.subr.bf16.mxu0 %v1388
    %1490 = vmatpush1.bf16.msra.mxu0 %v1387
    %1491 = vmatprep.subr.bf16.mxu0 0
    %1492 = vmatpush2.bf16.msra.mxu0 0
    %1493 = vmatprep.subr.bf16.mxu0 0
    %1494 = vmatpush2.bf16.msra.mxu0 0
    %1495 = vmatprep.subr.bf16.mxu0 0
    %1496 = vmatpush2.bf16.msra.mxu0 0
    %1497 = vmatprep.subr.bf16.mxu0 0
    %1498 = vmatpush2.bf16.msra.mxu0 0
    %1499 = vmatprep.subr.bf16.mxu0 0
    %1500 = vmatpush2.bf16.msra.mxu0 0
    %1501 = vmatprep.subr.bf16.mxu0 0
    %1502 = vmatpush2.bf16.msra.mxu0 0
    %1503 = vmatprep.subr.bf16.mxu0 0
    %1504 = vmatpush2.bf16.msra.mxu0 0
    %1505 = vmatprep.subr.bf16.mxu0 0
    %1506 = vmatpush2.bf16.msra.mxu0 0
    %1507 = vmatprep.mubr.bf16.mxu0 0
    %1508 = vmatmul.mubr.bf16.gmra.mxu0 %v1419
    %v1509 = vpop.f32.mrf.mxu0
    %v1510 = vadd.f32 0.0, %v1509
    %v1511 = vpop.f32.mrf.mxu0
    %v1512 = vadd.f32 0.0, %v1511
    %v1513 = vpop.f32.mrf.mxu0
    %v1514 = vadd.f32 0.0, %v1513
    %v1515 = vpop.f32.mrf.mxu0
    %v1516 = vadd.f32 0.0, %v1515
    %1517 = vmatprep.mubr.bf16.mxu0 0
    %1518 = vmatmul.mubr.bf16.gmra.mxu0 %v1422
    %v1519 = vpop.f32.mrf.mxu0
    %v1520 = vadd.f32 0.0, %v1519
    %v1521 = vpop.f32.mrf.mxu0
    %v1522 = vadd.f32 0.0, %v1521
    %v1523 = vpop.f32.mrf.mxu0
    %v1524 = vpop.f32.mrf.mxu0
    %1525 = vdwg.mxu0
    %1526 = vmatprep.subr.bf16.mxu0 0
    %1527 = vmatpush1.bf16.msra.mxu0 0
    %1528 = vmatprep.subr.bf16.mxu0 0
    %1529 = vmatpush1.bf16.msra.mxu0 0
    %1530 = vmatprep.subr.bf16.mxu0 0
    %1531 = vmatpush1.bf16.msra.mxu0 0
    %1532 = vmatprep.subr.bf16.mxu0 0
    %1533 = vmatpush1.bf16.msra.mxu0 0
    %1534 = vmatprep.subr.bf16.mxu0 0
    %1535 = vmatpush1.bf16.msra.mxu0 0
    %1536 = vmatprep.subr.bf16.mxu0 0
    %1537 = vmatpush1.bf16.msra.mxu0 0
    %1538 = vmatprep.subr.bf16.mxu0 %v1398
    %1539 = vmatpush1.bf16.msra.mxu0 %v1397
    %1540 = vmatprep.subr.bf16.mxu0 %v1390
    %1541 = vmatpush1.bf16.msra.mxu0 %v1389
    %1542 = vmatprep.subr.bf16.mxu0 0
    %1543 = vmatpush2.bf16.msra.mxu0 0
    %1544 = vmatprep.subr.bf16.mxu0 0
    %1545 = vmatpush2.bf16.msra.mxu0 0
    %1546 = vmatprep.subr.bf16.mxu0 0
    %1547 = vmatpush2.bf16.msra.mxu0 0
    %1548 = vmatprep.subr.bf16.mxu0 0
    %1549 = vmatpush2.bf16.msra.mxu0 0
    %1550 = vmatprep.subr.bf16.mxu0 0
    %1551 = vmatpush2.bf16.msra.mxu0 0
    %1552 = vmatprep.subr.bf16.mxu0 0
    %1553 = vmatpush2.bf16.msra.mxu0 0
    %1554 = vmatprep.subr.bf16.mxu0 0
    %1555 = vmatpush2.bf16.msra.mxu0 0
    %1556 = vmatprep.subr.bf16.mxu0 0
    %1557 = vmatpush2.bf16.msra.mxu0 0
    %1558 = vmatprep.mubr.bf16.mxu0 0
    %1559 = vmatmul.mubr.bf16.gmra.mxu0 %v1419
    %v1560 = vpop.f32.mrf.mxu0
    %v1561 = vadd.f32 0.0, %v1560
    %v1562 = vpop.f32.mrf.mxu0
    %v1563 = vadd.f32 0.0, %v1562
    %v1564 = vpop.f32.mrf.mxu0
    %v1565 = vadd.f32 0.0, %v1564
    %v1566 = vpop.f32.mrf.mxu0
    %v1567 = vadd.f32 0.0, %v1566
    %1568 = vmatprep.mubr.bf16.mxu0 0
    %1569 = vmatmul.mubr.bf16.gmra.mxu0 %v1422
    %v1570 = vpop.f32.mrf.mxu0
    %v1571 = vadd.f32 0.0, %v1570
    %v1572 = vpop.f32.mrf.mxu0
    %v1573 = vadd.f32 0.0, %v1572
    %v1574 = vpop.f32.mrf.mxu0
    %v1575 = vpop.f32.mrf.mxu0
    %1576 = vdwg.mxu0
    %1577 = vmatprep.subr.bf16.mxu0 0
    %1578 = vmatpush1.bf16.msra.mxu0 0
    %1579 = vmatprep.subr.bf16.mxu0 0
    %1580 = vmatpush1.bf16.msra.mxu0 0
    %1581 = vmatprep.subr.bf16.mxu0 0
    %1582 = vmatpush1.bf16.msra.mxu0 0
    %1583 = vmatprep.subr.bf16.mxu0 0
    %1584 = vmatpush1.bf16.msra.mxu0 0
    %1585 = vmatprep.subr.bf16.mxu0 0
    %1586 = vmatpush1.bf16.msra.mxu0 0
    %1587 = vmatprep.subr.bf16.mxu0 0
    %1588 = vmatpush1.bf16.msra.mxu0 0
    %1589 = vmatprep.subr.bf16.mxu0 %v1400
    %1590 = vmatpush1.bf16.msra.mxu0 %v1399
    %1591 = vmatprep.subr.bf16.mxu0 %v1392
    %1592 = vmatpush1.bf16.msra.mxu0 %v1391
    %1593 = vmatprep.subr.bf16.mxu0 0
    %1594 = vmatpush2.bf16.msra.mxu0 0
    %1595 = vmatprep.subr.bf16.mxu0 0
    %1596 = vmatpush2.bf16.msra.mxu0 0
    %1597 = vmatprep.subr.bf16.mxu0 0
    %1598 = vmatpush2.bf16.msra.mxu0 0
    %1599 = vmatprep.subr.bf16.mxu0 0
    %1600 = vmatpush2.bf16.msra.mxu0 0
    %1601 = vmatprep.subr.bf16.mxu0 0
    %1602 = vmatpush2.bf16.msra.mxu0 0
    %1603 = vmatprep.subr.bf16.mxu0 0
    %1604 = vmatpush2.bf16.msra.mxu0 0
    %1605 = vmatprep.subr.bf16.mxu0 0
    %1606 = vmatpush2.bf16.msra.mxu0 0
    %1607 = vmatprep.subr.bf16.mxu0 0
    %1608 = vmatpush2.bf16.msra.mxu0 0
    %1609 = vmatprep.mubr.bf16.mxu0 0
    %1610 = vmatmul.mubr.bf16.gmra.mxu0 %v1419
    %v1611 = vpop.f32.mrf.mxu0
    %v1612 = vadd.f32 0.0, %v1611
    %v1613 = vpop.f32.mrf.mxu0
    %v1614 = vadd.f32 0.0, %v1613
    %v1615 = vpop.f32.mrf.mxu0
    %v1616 = vadd.f32 0.0, %v1615
    %v1617 = vpop.f32.mrf.mxu0
    %v1618 = vadd.f32 0.0, %v1617
    %1619 = vmatprep.mubr.bf16.mxu0 0
    %1620 = vmatmul.mubr.bf16.gmra.mxu0 %v1422
    %v1621 = vpop.f32.mrf.mxu0
    %v1622 = vadd.f32 0.0, %v1621
    %v1623 = vpop.f32.mrf.mxu0
    %v1624 = vadd.f32 0.0, %v1623
    %v1625 = vpop.f32.mrf.mxu0
    %v1626 = vpop.f32.mrf.mxu0
    %1627 = vdwg.mxu0
    %v1628 = vmul.f32 %v572, %v1459
    %v1629 = vmul.f32 %v574, %v1461
    %v1630 = vmul.f32 %v623, %v1510
    %v1631 = vmul.f32 %v625, %v1512
    %v1632 = vmul.f32 %v674, %v1561
    %v1633 = vmul.f32 %v676, %v1563
    %v1634 = vmul.f32 %v725, %v1612
    %v1635 = vmul.f32 %v727, %v1614
    %v1636 = vmul.f32 %v576, %v1463
    %v1637 = vmul.f32 %v578, %v1465
    %v1638 = vmul.f32 %v627, %v1514
    %v1639 = vmul.f32 %v629, %v1516
    %v1640 = vmul.f32 %v678, %v1565
    %v1641 = vmul.f32 %v680, %v1567
    %v1642 = vmul.f32 %v729, %v1616
    %v1643 = vmul.f32 %v731, %v1618
    %v1644 = vmul.f32 %v582, %v1469
    %v1645 = vmul.f32 %v584, %v1471
    %v1646 = vmul.f32 %v633, %v1520
    %v1647 = vmul.f32 %v635, %v1522
    %v1648 = vmul.f32 %v684, %v1571
    %v1649 = vmul.f32 %v686, %v1573
    %v1650 = vmul.f32 %v735, %v1622
    %v1651 = vmul.f32 %v737, %v1624
    %v1652 = vpack.c.bf16 %v1636, %v1628
    %v1653 = vpack.c.bf16 %v1637, %v1629
    %v1654 = vpack.c.bf16 %v1638, %v1630
    %v1655 = vpack.c.bf16 %v1639, %v1631
    %v1656 = vpack.c.bf16 %v1640, %v1632
    %v1657 = vpack.c.bf16 %v1641, %v1633
    %v1658 = vpack.c.bf16 %v1642, %v1634
    %v1659 = vpack.c.bf16 %v1643, %v1635
    %v1660 = vpack.c.bf16 %v1644, %v1644
    %v1661 = vpack.c.bf16 %v1645, %v1645
    %v1662 = vpack.c.bf16 %v1646, %v1646
    %v1663 = vpack.c.bf16 %v1647, %v1647
    %v1664 = vpack.c.bf16 %v1648, %v1648
    %v1665 = vpack.c.bf16 %v1649, %v1649
    %v1666 = vpack.c.bf16 %v1650, %v1650
    %v1667 = vpack.c.bf16 %v1651, %v1651
    %v1796 = vunpack.c.l.b16 %v149
    %v1797 = vunpack.c.l.b16 %v150
    %v1798 = vunpack.c.l.b16 %v151
    %v1799 = vunpack.c.l.b16 %v152
    %v1800 = vunpack.c.l.b16 %v153
    %v1801 = vunpack.c.l.b16 %v154
    %v1802 = vunpack.c.l.b16 %v155
    %v1803 = vunpack.c.l.b16 %v156
    %v1804 = vunpack.c.l.b16 %v157
    %v1805 = vunpack.c.l.b16 %v158
    %v1806 = vunpack.c.l.b16 %v159
    %v1807 = vunpack.c.l.b16 %v160
    %v1808 = vunpack.c.l.b16 %v161
    %v1809 = vunpack.c.l.b16 %v162
    %v1810 = vunpack.c.l.b16 %v163
    %v1811 = vunpack.c.l.b16 %v164
    %v1812 = vunpack.c.l.b16 %v165
    %v1813 = vunpack.c.l.b16 %v166
    %v1814 = vunpack.c.l.b16 %v167
    %v1815 = vunpack.c.l.b16 %v168
    %v1816 = vunpack.c.l.b16 %v169
    %v1817 = vunpack.c.l.b16 %v170
    %v1818 = vunpack.c.l.b16 %v171
    %v1819 = vunpack.c.l.b16 %v172
    %v1820 = vunpack.c.l.b16 %v173
    %v1821 = vunpack.c.l.b16 %v174
    %v1822 = vunpack.c.l.b16 %v175
    %v1823 = vunpack.c.l.b16 %v176
    %v1824 = vunpack.c.l.b16 %v177
    %v1825 = vunpack.c.l.b16 %v178
    %v1826 = vunpack.c.l.b16 %v179
    %v1827 = vunpack.c.l.b16 %v180
    %v1828 = vunpack.c.l.b16 %v181
    %v1829 = vunpack.c.l.b16 %v182
    %v1830 = vunpack.c.l.b16 %v183
    %v1831 = vunpack.c.l.b16 %v184
    %v1832 = vunpack.c.l.b16 %v185
    %v1833 = vunpack.c.l.b16 %v186
    %v1834 = vunpack.c.l.b16 %v187
    %v1835 = vunpack.c.l.b16 %v188
    %v1836 = vunpack.c.l.b16 %v189
    %v1837 = vunpack.c.l.b16 %v190
    %v1838 = vunpack.c.l.b16 %v191
    %v1839 = vunpack.c.l.b16 %v192
    %v1840 = vunpack.c.l.b16 %v193
    %v1841 = vunpack.c.l.b16 %v194
    %v1842 = vunpack.c.l.b16 %v195
    %v1843 = vunpack.c.l.b16 %v196
    %v1844 = vunpack.c.l.b16 %v197
    %v1845 = vunpack.c.l.b16 %v198
    %v1846 = vunpack.c.l.b16 %v199
    %v1847 = vunpack.c.l.b16 %v200
    %v1848 = vunpack.c.l.b16 %v201
    %v1849 = vunpack.c.l.b16 %v202
    %v1850 = vunpack.c.l.b16 %v203
    %v1851 = vunpack.c.l.b16 %v204
    %v1852 = vunpack.c.l.b16 %v205
    %v1853 = vunpack.c.l.b16 %v206
    %v1854 = vunpack.c.l.b16 %v207
    %v1855 = vunpack.c.l.b16 %v208
    %v1856 = vunpack.c.l.b16 %v209
    %v1857 = vunpack.c.l.b16 %v210
    %v1858 = vunpack.c.l.b16 %v211
    %v1859 = vunpack.c.l.b16 %v212
    %v1860 = vunpack.c.l.b16 %v213
    %v1861 = vunpack.c.l.b16 %v214
    %v1862 = vunpack.c.l.b16 %v215
    %v1863 = vunpack.c.l.b16 %v216
    %v1864 = vunpack.c.l.b16 %v217
    %v1865 = vunpack.c.l.b16 %v218
    %v1866 = vunpack.c.l.b16 %v219
    %v1867 = vunpack.c.l.b16 %v220
    %v1868 = vunpack.c.l.b16 %v221
    %v1869 = vunpack.c.l.b16 %v222
    %v1870 = vunpack.c.l.b16 %v223
    %v1871 = vunpack.c.l.b16 %v224
    %v1872 = vunpack.c.l.b16 %v225
    %v1873 = vunpack.c.l.b16 %v226
    %v1874 = vunpack.c.l.b16 %v227
    %v1875 = vunpack.c.l.b16 %v228
    %v1876 = vunpack.c.l.b16 %v229
    %v1877 = vunpack.c.l.b16 %v230
    %v1878 = vunpack.c.l.b16 %v231
    %v1879 = vunpack.c.l.b16 %v232
    %v1880 = vunpack.c.l.b16 %v233
    %v1881 = vunpack.c.l.b16 %v234
    %v1882 = vunpack.c.l.b16 %v235
    %v1883 = vunpack.c.l.b16 %v236
    %v1884 = vunpack.c.l.b16 %v237
    %v1885 = vunpack.c.l.b16 %v238
    %v1886 = vunpack.c.l.b16 %v239
    %v1887 = vunpack.c.l.b16 %v240
    %v1888 = vunpack.c.l.b16 %v241
    %v1889 = vunpack.c.l.b16 %v242
    %v1890 = vunpack.c.l.b16 %v243
    %v1891 = vunpack.c.l.b16 %v244
    %v1892 = vunpack.c.l.b16 %v245
    %v1893 = vunpack.c.l.b16 %v246
    %v1894 = vunpack.c.l.b16 %v247
    %v1895 = vunpack.c.l.b16 %v248
    %v1896 = vunpack.c.l.b16 %v249
    %v1897 = vunpack.c.l.b16 %v250
    %v1898 = vunpack.c.l.b16 %v251
    %v1899 = vunpack.c.l.b16 %v252
    %v1900 = vunpack.c.l.b16 %v253
    %v1901 = vunpack.c.l.b16 %v254
    %v1902 = vunpack.c.l.b16 %v255
    %v1903 = vunpack.c.l.b16 %v256
    %v1904 = vunpack.c.l.b16 %v257
    %v1905 = vunpack.c.l.b16 %v258
    %v1906 = vunpack.c.l.b16 %v259
    %v1907 = vunpack.c.l.b16 %v260
    %v1908 = vunpack.c.l.b16 %v261
    %v1909 = vunpack.c.l.b16 %v262
    %v1910 = vunpack.c.l.b16 %v263
    %v1911 = vunpack.c.l.b16 %v264
    %v1912 = vunpack.c.l.b16 %v265
    %v1913 = vunpack.c.l.b16 %v266
    %v1914 = vunpack.c.l.b16 %v267
    %v1915 = vunpack.c.l.b16 %v268
    %v1916 = vunpack.c.l.b16 %v269
    %v1917 = vunpack.c.l.b16 %v270
    %v1918 = vunpack.c.l.b16 %v271
    %v1919 = vunpack.c.l.b16 %v272
    %v1920 = vunpack.c.l.b16 %v273
    %v1921 = vunpack.c.l.b16 %v274
    %v1922 = vunpack.c.l.b16 %v275
    %v1923 = vunpack.c.l.b16 %v276
    %v1924 = vpack.c.b16 %v1797, %v1796
    %v1925 = vpack.c.b16 %v1799, %v1798
    %v1926 = vpack.c.b16 %v1801, %v1800
    %v1927 = vpack.c.b16 %v1803, %v1802
    %v1928 = vpack.c.b16 %v1805, %v1804
    %v1929 = vpack.c.b16 %v1807, %v1806
    %v1930 = vpack.c.b16 %v1809, %v1808
    %v1931 = vpack.c.b16 %v1811, %v1810
    %v1932 = vpack.c.b16 %v1813, %v1812
    %v1933 = vpack.c.b16 %v1815, %v1814
    %v1934 = vpack.c.b16 %v1817, %v1816
    %v1935 = vpack.c.b16 %v1819, %v1818
    %v1936 = vpack.c.b16 %v1821, %v1820
    %v1937 = vpack.c.b16 %v1823, %v1822
    %v1938 = vpack.c.b16 %v1825, %v1824
    %v1939 = vpack.c.b16 %v1827, %v1826
    %v1940 = vpack.c.b16 %v1829, %v1828
    %v1941 = vpack.c.b16 %v1831, %v1830
    %v1942 = vpack.c.b16 %v1833, %v1832
    %v1943 = vpack.c.b16 %v1835, %v1834
    %v1944 = vpack.c.b16 %v1837, %v1836
    %v1945 = vpack.c.b16 %v1839, %v1838
    %v1946 = vpack.c.b16 %v1841, %v1840
    %v1947 = vpack.c.b16 %v1843, %v1842
    %v1948 = vpack.c.b16 %v1845, %v1844
    %v1949 = vpack.c.b16 %v1847, %v1846
    %v1950 = vpack.c.b16 %v1849, %v1848
    %v1951 = vpack.c.b16 %v1851, %v1850
    %v1952 = vpack.c.b16 %v1853, %v1852
    %v1953 = vpack.c.b16 %v1855, %v1854
    %v1954 = vpack.c.b16 %v1857, %v1856
    %v1955 = vpack.c.b16 %v1859, %v1858
    %v1956 = vpack.c.b16 %v1861, %v1860
    %v1957 = vpack.c.b16 %v1863, %v1862
    %v1958 = vpack.c.b16 %v1865, %v1864
    %v1959 = vpack.c.b16 %v1867, %v1866
    %v1960 = vpack.c.b16 %v1869, %v1868
    %v1961 = vpack.c.b16 %v1871, %v1870
    %v1962 = vpack.c.b16 %v1873, %v1872
    %v1963 = vpack.c.b16 %v1875, %v1874
    %v1964 = vpack.c.b16 %v1877, %v1876
    %v1965 = vpack.c.b16 %v1879, %v1878
    %v1966 = vpack.c.b16 %v1881, %v1880
    %v1967 = vpack.c.b16 %v1883, %v1882
    %v1968 = vpack.c.b16 %v1885, %v1884
    %v1969 = vpack.c.b16 %v1887, %v1886
    %v1970 = vpack.c.b16 %v1889, %v1888
    %v1971 = vpack.c.b16 %v1891, %v1890
    %v1972 = vpack.c.b16 %v1893, %v1892
    %v1973 = vpack.c.b16 %v1895, %v1894
    %v1974 = vpack.c.b16 %v1897, %v1896
    %v1975 = vpack.c.b16 %v1899, %v1898
    %v1976 = vpack.c.b16 %v1901, %v1900
    %v1977 = vpack.c.b16 %v1903, %v1902
    %v1978 = vpack.c.b16 %v1905, %v1904
    %v1979 = vpack.c.b16 %v1907, %v1906
    %v1980 = vpack.c.b16 %v1909, %v1908
    %v1981 = vpack.c.b16 %v1911, %v1910
    %v1982 = vpack.c.b16 %v1913, %v1912
    %v1983 = vpack.c.b16 %v1915, %v1914
    %v1984 = vpack.c.b16 %v1917, %v1916
    %v1985 = vpack.c.b16 %v1919, %v1918
    %v1986 = vpack.c.b16 %v1921, %v1920
    %v1987 = vpack.c.b16 %v1923, %v1922
    %2052 = vmatprep.subr.bf16.mxu0 0
    %2053 = vmatpush1.bf16.msra.mxu0 %v1931
    %2054 = vmatprep.subr.bf16.mxu0 0
    %2055 = vmatpush1.bf16.msra.mxu0 %v1930
    %2056 = vmatprep.subr.bf16.mxu0 0
    %2057 = vmatpush1.bf16.msra.mxu0 %v1929
    %2058 = vmatprep.subr.bf16.mxu0 0
    %2059 = vmatpush1.bf16.msra.mxu0 %v1928
    %2060 = vmatprep.subr.bf16.mxu0 0
    %2061 = vmatpush1.bf16.msra.mxu0 %v1927
    %2062 = vmatprep.subr.bf16.mxu0 0
    %2063 = vmatpush1.bf16.msra.mxu0 %v1926
    %2064 = vmatprep.subr.bf16.mxu0 0
    %2065 = vmatpush1.bf16.msra.mxu0 %v1925
    %2066 = vmatprep.subr.bf16.mxu0 0
    %2067 = vmatpush1.bf16.msra.mxu0 %v1924
    %2068 = vmatprep.subr.bf16.mxu0 0
    %2069 = vmatpush2.bf16.msra.mxu0 %v1939
    %2070 = vmatprep.subr.bf16.mxu0 0
    %2071 = vmatpush2.bf16.msra.mxu0 %v1938
    %2072 = vmatprep.subr.bf16.mxu0 0
    %2073 = vmatpush2.bf16.msra.mxu0 %v1937
    %2074 = vmatprep.subr.bf16.mxu0 0
    %2075 = vmatpush2.bf16.msra.mxu0 %v1936
    %2076 = vmatprep.subr.bf16.mxu0 0
    %2077 = vmatpush2.bf16.msra.mxu0 %v1935
    %2078 = vmatprep.subr.bf16.mxu0 0
    %2079 = vmatpush2.bf16.msra.mxu0 %v1934
    %2080 = vmatprep.subr.bf16.mxu0 0
    %2081 = vmatpush2.bf16.msra.mxu0 %v1933
    %2082 = vmatprep.subr.bf16.mxu0 0
    %2083 = vmatpush2.bf16.msra.mxu0 %v1932
    %2084 = vmatprep.mubr.bf16.mxu0 %v1653
    %2085 = vmatmul.mubr.bf16.gmra.mxu0 %v1652
    %v2086 = vpop.f32.mrf.mxu0
    %v2087 = vadd.f32 0.0, %v2086
    %v2088 = vpop.f32.mrf.mxu0
    %v2089 = vpop.f32.mrf.mxu0
    %v2090 = vadd.f32 0.0, %v2089
    %v2091 = vpop.f32.mrf.mxu0
    %2092 = vmatprep.mubr.bf16.mxu0 %v1661
    %2093 = vmatmul.mubr.bf16.gmra.mxu0 %v1660
    %v2094 = vpop.f32.mrf.mxu0
    %v2095 = vadd.f32 0.0, %v2094
    %v2096 = vpop.f32.mrf.mxu0
    %v2097 = vpop.f32.mrf.mxu0
    %v2098 = vpop.f32.mrf.mxu0
    %2099 = vdwg.mxu0
    %2100 = vmatprep.subr.bf16.mxu0 0
    %2101 = vmatpush1.bf16.msra.mxu0 %v1947
    %2102 = vmatprep.subr.bf16.mxu0 0
    %2103 = vmatpush1.bf16.msra.mxu0 %v1946
    %2104 = vmatprep.subr.bf16.mxu0 0
    %2105 = vmatpush1.bf16.msra.mxu0 %v1945
    %2106 = vmatprep.subr.bf16.mxu0 0
    %2107 = vmatpush1.bf16.msra.mxu0 %v1944
    %2108 = vmatprep.subr.bf16.mxu0 0
    %2109 = vmatpush1.bf16.msra.mxu0 %v1943
    %2110 = vmatprep.subr.bf16.mxu0 0
    %2111 = vmatpush1.bf16.msra.mxu0 %v1942
    %2112 = vmatprep.subr.bf16.mxu0 0
    %2113 = vmatpush1.bf16.msra.mxu0 %v1941
    %2114 = vmatprep.subr.bf16.mxu0 0
    %2115 = vmatpush1.bf16.msra.mxu0 %v1940
    %2116 = vmatprep.subr.bf16.mxu0 0
    %2117 = vmatpush2.bf16.msra.mxu0 %v1955
    %2118 = vmatprep.subr.bf16.mxu0 0
    %2119 = vmatpush2.bf16.msra.mxu0 %v1954
    %2120 = vmatprep.subr.bf16.mxu0 0
    %2121 = vmatpush2.bf16.msra.mxu0 %v1953
    %2122 = vmatprep.subr.bf16.mxu0 0
    %2123 = vmatpush2.bf16.msra.mxu0 %v1952
    %2124 = vmatprep.subr.bf16.mxu0 0
    %2125 = vmatpush2.bf16.msra.mxu0 %v1951
    %2126 = vmatprep.subr.bf16.mxu0 0
    %2127 = vmatpush2.bf16.msra.mxu0 %v1950
    %2128 = vmatprep.subr.bf16.mxu0 0
    %2129 = vmatpush2.bf16.msra.mxu0 %v1949
    %2130 = vmatprep.subr.bf16.mxu0 0
    %2131 = vmatpush2.bf16.msra.mxu0 %v1948
    %2132 = vmatprep.mubr.bf16.mxu0 %v1655
    %2133 = vmatmul.mubr.bf16.gmra.mxu0 %v1654
    %v2134 = vpop.f32.mrf.mxu0
    %v2135 = vadd.f32 %v2087, %v2134
    %v2136 = vpop.f32.mrf.mxu0
    %v2137 = vpop.f32.mrf.mxu0
    %v2138 = vadd.f32 %v2090, %v2137
    %v2139 = vpop.f32.mrf.mxu0
    %2140 = vmatprep.mubr.bf16.mxu0 %v1663
    %2141 = vmatmul.mubr.bf16.gmra.mxu0 %v1662
    %v2142 = vpop.f32.mrf.mxu0
    %v2143 = vadd.f32 %v2095, %v2142
    %v2144 = vpop.f32.mrf.mxu0
    %v2145 = vpop.f32.mrf.mxu0
    %v2146 = vpop.f32.mrf.mxu0
    %2147 = vdwg.mxu0
    %2148 = vmatprep.subr.bf16.mxu0 0
    %2149 = vmatpush1.bf16.msra.mxu0 %v1963
    %2150 = vmatprep.subr.bf16.mxu0 0
    %2151 = vmatpush1.bf16.msra.mxu0 %v1962
    %2152 = vmatprep.subr.bf16.mxu0 0
    %2153 = vmatpush1.bf16.msra.mxu0 %v1961
    %2154 = vmatprep.subr.bf16.mxu0 0
    %2155 = vmatpush1.bf16.msra.mxu0 %v1960
    %2156 = vmatprep.subr.bf16.mxu0 0
    %2157 = vmatpush1.bf16.msra.mxu0 %v1959
    %2158 = vmatprep.subr.bf16.mxu0 0
    %2159 = vmatpush1.bf16.msra.mxu0 %v1958
    %2160 = vmatprep.subr.bf16.mxu0 0
    %2161 = vmatpush1.bf16.msra.mxu0 %v1957
    %2162 = vmatprep.subr.bf16.mxu0 0
    %2163 = vmatpush1.bf16.msra.mxu0 %v1956
    %2164 = vmatprep.subr.bf16.mxu0 0
    %2165 = vmatpush2.bf16.msra.mxu0 %v1971
    %2166 = vmatprep.subr.bf16.mxu0 0
    %2167 = vmatpush2.bf16.msra.mxu0 %v1970
    %2168 = vmatprep.subr.bf16.mxu0 0
    %2169 = vmatpush2.bf16.msra.mxu0 %v1969
    %2170 = vmatprep.subr.bf16.mxu0 0
    %2171 = vmatpush2.bf16.msra.mxu0 %v1968
    %2172 = vmatprep.subr.bf16.mxu0 0
    %2173 = vmatpush2.bf16.msra.mxu0 %v1967
    %2174 = vmatprep.subr.bf16.mxu0 0
    %2175 = vmatpush2.bf16.msra.mxu0 %v1966
    %2176 = vmatprep.subr.bf16.mxu0 0
    %2177 = vmatpush2.bf16.msra.mxu0 %v1965
    %2178 = vmatprep.subr.bf16.mxu0 0
    %2179 = vmatpush2.bf16.msra.mxu0 %v1964
    %2180 = vmatprep.mubr.bf16.mxu0 %v1657
    %2181 = vmatmul.mubr.bf16.gmra.mxu0 %v1656
    %v2182 = vpop.f32.mrf.mxu0
    %v2183 = vadd.f32 %v2135, %v2182
    %v2184 = vpop.f32.mrf.mxu0
    %v2185 = vpop.f32.mrf.mxu0
    %v2186 = vadd.f32 %v2138, %v2185
    %v2187 = vpop.f32.mrf.mxu0
    %2188 = vmatprep.mubr.bf16.mxu0 %v1665
    %2189 = vmatmul.mubr.bf16.gmra.mxu0 %v1664
    %v2190 = vpop.f32.mrf.mxu0
    %v2191 = vadd.f32 %v2143, %v2190
    %v2192 = vpop.f32.mrf.mxu0
    %v2193 = vpop.f32.mrf.mxu0
    %v2194 = vpop.f32.mrf.mxu0
    %2195 = vdwg.mxu0
    %2196 = vmatprep.subr.bf16.mxu0 0
    %2197 = vmatpush1.bf16.msra.mxu0 %v1979
    %2198 = vmatprep.subr.bf16.mxu0 0
    %2199 = vmatpush1.bf16.msra.mxu0 %v1978
    %2200 = vmatprep.subr.bf16.mxu0 0
    %2201 = vmatpush1.bf16.msra.mxu0 %v1977
    %2202 = vmatprep.subr.bf16.mxu0 0
    %2203 = vmatpush1.bf16.msra.mxu0 %v1976
    %2204 = vmatprep.subr.bf16.mxu0 0
    %2205 = vmatpush1.bf16.msra.mxu0 %v1975
    %2206 = vmatprep.subr.bf16.mxu0 0
    %2207 = vmatpush1.bf16.msra.mxu0 %v1974
    %2208 = vmatprep.subr.bf16.mxu0 0
    %2209 = vmatpush1.bf16.msra.mxu0 %v1973
    %2210 = vmatprep.subr.bf16.mxu0 0
    %2211 = vmatpush1.bf16.msra.mxu0 %v1972
    %2212 = vmatprep.subr.bf16.mxu0 0
    %2213 = vmatpush2.bf16.msra.mxu0 %v1987
    %2214 = vmatprep.subr.bf16.mxu0 0
    %2215 = vmatpush2.bf16.msra.mxu0 %v1986
    %2216 = vmatprep.subr.bf16.mxu0 0
    %2217 = vmatpush2.bf16.msra.mxu0 %v1985
    %2218 = vmatprep.subr.bf16.mxu0 0
    %2219 = vmatpush2.bf16.msra.mxu0 %v1984
    %2220 = vmatprep.subr.bf16.mxu0 0
    %2221 = vmatpush2.bf16.msra.mxu0 %v1983
    %2222 = vmatprep.subr.bf16.mxu0 0
    %2223 = vmatpush2.bf16.msra.mxu0 %v1982
    %2224 = vmatprep.subr.bf16.mxu0 0
    %2225 = vmatpush2.bf16.msra.mxu0 %v1981
    %2226 = vmatprep.subr.bf16.mxu0 0
    %2227 = vmatpush2.bf16.msra.mxu0 %v1980
    %2228 = vmatprep.mubr.bf16.mxu0 %v1659
    %2229 = vmatmul.mubr.bf16.gmra.mxu0 %v1658
    %v2230 = vpop.f32.mrf.mxu0
    %v2231 = vadd.f32 %v2183, %v2230
    %v2232 = vpop.f32.mrf.mxu0
    %v2233 = vpop.f32.mrf.mxu0
    %v2234 = vadd.f32 %v2186, %v2233
    %v2235 = vpop.f32.mrf.mxu0
    %2236 = vmatprep.mubr.bf16.mxu0 %v1667
    %2237 = vmatmul.mubr.bf16.gmra.mxu0 %v1666
    %v2238 = vpop.f32.mrf.mxu0
    %v2239 = vadd.f32 %v2191, %v2238
    %v2240 = vpop.f32.mrf.mxu0
    %v2241 = vpop.f32.mrf.mxu0
    %v2242 = vpop.f32.mrf.mxu0
    %2243 = vdwg.mxu0
    %v2244 = vpack.c.bf16 %v2234, %v2231
    %v2245 = vpack.c.bf16 %v2239, %v2239
    %vm2246 = vcmask 195584
    %v2248 = vsel %vm2246, %v397, 0
    %v2251 = vsel %vm512, %v2245, 0
    %2253 = vmatprep.subr.bf16.mxu0 0
    %2254 = vmatpush1.bf16.msra.mxu0 0
    %2255 = vmatprep.subr.bf16.mxu0 0
    %2256 = vmatpush1.bf16.msra.mxu0 0
    %2257 = vmatprep.subr.bf16.mxu0 0
    %2258 = vmatpush1.bf16.msra.mxu0 0
    %2259 = vmatprep.subr.bf16.mxu0 0
    %2260 = vmatpush1.bf16.msra.mxu0 0
    %2261 = vmatprep.subr.bf16.mxu0 0
    %2262 = vmatpush1.bf16.msra.mxu0 0
    %2263 = vmatprep.subr.bf16.mxu0 0
    %2264 = vmatpush1.bf16.msra.mxu0 0
    %2265 = vmatprep.subr.bf16.mxu0 0
    %2266 = vmatpush1.bf16.msra.mxu0 %v2251
    %2267 = vmatprep.subr.bf16.mxu0 0
    %2268 = vmatpush1.bf16.msra.mxu0 %v2244
    %2269 = vmatprep.subr.bf16.mxu0 0
    %2270 = vmatpush2.bf16.msra.mxu0 0
    %2271 = vmatprep.subr.bf16.mxu0 0
    %2272 = vmatpush2.bf16.msra.mxu0 0
    %2273 = vmatprep.subr.bf16.mxu0 0
    %2274 = vmatpush2.bf16.msra.mxu0 0
    %2275 = vmatprep.subr.bf16.mxu0 0
    %2276 = vmatpush2.bf16.msra.mxu0 0
    %2277 = vmatprep.subr.bf16.mxu0 0
    %2278 = vmatpush2.bf16.msra.mxu0 0
    %2279 = vmatprep.subr.bf16.mxu0 0
    %2280 = vmatpush2.bf16.msra.mxu0 0
    %2281 = vmatprep.subr.bf16.mxu0 0
    %2282 = vmatpush2.bf16.msra.mxu0 0
    %2283 = vmatprep.subr.bf16.mxu0 0
    %2284 = vmatpush2.bf16.msra.mxu0 0
    %2285 = vmatprep.mubr.bf16.mxu0 0
    %2286 = vmatmul.mubr.bf16.gmra.mxu0 %v2248
    %v2287 = vpop.f32.mrf.mxu0
    %v2288 = vadd.f32 0.0, %v2287
    %v2289 = vpop.f32.mrf.mxu0
    %v2290 = vpop.f32.mrf.mxu0
    %v2291 = vadd.f32 0.0, %v2290
    %v2292 = vpop.f32.mrf.mxu0
    %2293 = vdwg.mxu0
    %v2294 = vpack.c.bf16 %v2291, %v2288
    %v2296 = vsel %vm1417, %v2294, 0
    %2298 = vmatprep.subr.bf16.mxu0 0
    %2299 = vmatpush1.bf16.msra.mxu0 0
    %2300 = vmatprep.subr.bf16.mxu0 0
    %2301 = vmatpush1.bf16.msra.mxu0 0
    %2302 = vmatprep.subr.bf16.mxu0 0
    %2303 = vmatpush1.bf16.msra.mxu0 0
    %2304 = vmatprep.subr.bf16.mxu0 0
    %2305 = vmatpush1.bf16.msra.mxu0 0
    %2306 = vmatprep.subr.bf16.mxu0 0
    %2307 = vmatpush1.bf16.msra.mxu0 0
    %2308 = vmatprep.subr.bf16.mxu0 0
    %2309 = vmatpush1.bf16.msra.mxu0 0
    %2310 = vmatprep.subr.bf16.mxu0 %v1394
    %2311 = vmatpush1.bf16.msra.mxu0 %v1393
    %2312 = vmatprep.subr.bf16.mxu0 %v1386
    %2313 = vmatpush1.bf16.msra.mxu0 %v1385
    %2314 = vmatprep.subr.bf16.mxu0 0
    %2315 = vmatpush2.bf16.msra.mxu0 0
    %2316 = vmatprep.subr.bf16.mxu0 0
    %2317 = vmatpush2.bf16.msra.mxu0 0
    %2318 = vmatprep.subr.bf16.mxu0 0
    %2319 = vmatpush2.bf16.msra.mxu0 0
    %2320 = vmatprep.subr.bf16.mxu0 0
    %2321 = vmatpush2.bf16.msra.mxu0 0
    %2322 = vmatprep.subr.bf16.mxu0 0
    %2323 = vmatpush2.bf16.msra.mxu0 0
    %2324 = vmatprep.subr.bf16.mxu0 0
    %2325 = vmatpush2.bf16.msra.mxu0 0
    %2326 = vmatprep.subr.bf16.mxu0 0
    %2327 = vmatpush2.bf16.msra.mxu0 0
    %2328 = vmatprep.subr.bf16.mxu0 0
    %2329 = vmatpush2.bf16.msra.mxu0 0
    %2330 = vmatprep.mubr.bf16.mxu0 0
    %2331 = vmatmul.mubr.bf16.gmra.mxu0 %v2296
    %v2332 = vpop.f32.mrf.mxu0
    %v2333 = vadd.f32 0.0, %v2332
    %v2334 = vpop.f32.mrf.mxu0
    %v2335 = vadd.f32 0.0, %v2334
    %v2336 = vpop.f32.mrf.mxu0
    %v2337 = vadd.f32 0.0, %v2336
    %v2338 = vpop.f32.mrf.mxu0
    %v2339 = vadd.f32 0.0, %v2338
    %2340 = vdwg.mxu0
    %2341 = vmatprep.subr.bf16.mxu0 0
    %2342 = vmatpush1.bf16.msra.mxu0 0
    %2343 = vmatprep.subr.bf16.mxu0 0
    %2344 = vmatpush1.bf16.msra.mxu0 0
    %2345 = vmatprep.subr.bf16.mxu0 0
    %2346 = vmatpush1.bf16.msra.mxu0 0
    %2347 = vmatprep.subr.bf16.mxu0 0
    %2348 = vmatpush1.bf16.msra.mxu0 0
    %2349 = vmatprep.subr.bf16.mxu0 0
    %2350 = vmatpush1.bf16.msra.mxu0 0
    %2351 = vmatprep.subr.bf16.mxu0 0
    %2352 = vmatpush1.bf16.msra.mxu0 0
    %2353 = vmatprep.subr.bf16.mxu0 %v1396
    %2354 = vmatpush1.bf16.msra.mxu0 %v1395
    %2355 = vmatprep.subr.bf16.mxu0 %v1388
    %2356 = vmatpush1.bf16.msra.mxu0 %v1387
    %2357 = vmatprep.subr.bf16.mxu0 0
    %2358 = vmatpush2.bf16.msra.mxu0 0
    %2359 = vmatprep.subr.bf16.mxu0 0
    %2360 = vmatpush2.bf16.msra.mxu0 0
    %2361 = vmatprep.subr.bf16.mxu0 0
    %2362 = vmatpush2.bf16.msra.mxu0 0
    %2363 = vmatprep.subr.bf16.mxu0 0
    %2364 = vmatpush2.bf16.msra.mxu0 0
    %2365 = vmatprep.subr.bf16.mxu0 0
    %2366 = vmatpush2.bf16.msra.mxu0 0
    %2367 = vmatprep.subr.bf16.mxu0 0
    %2368 = vmatpush2.bf16.msra.mxu0 0
    %2369 = vmatprep.subr.bf16.mxu0 0
    %2370 = vmatpush2.bf16.msra.mxu0 0
    %2371 = vmatprep.subr.bf16.mxu0 0
    %2372 = vmatpush2.bf16.msra.mxu0 0
    %2373 = vmatprep.mubr.bf16.mxu0 0
    %2374 = vmatmul.mubr.bf16.gmra.mxu0 %v2296
    %v2375 = vpop.f32.mrf.mxu0
    %v2376 = vadd.f32 0.0, %v2375
    %v2377 = vpop.f32.mrf.mxu0
    %v2378 = vadd.f32 0.0, %v2377
    %v2379 = vpop.f32.mrf.mxu0
    %v2380 = vadd.f32 0.0, %v2379
    %v2381 = vpop.f32.mrf.mxu0
    %v2382 = vadd.f32 0.0, %v2381
    %2383 = vdwg.mxu0
    %2384 = vmatprep.subr.bf16.mxu0 0
    %2385 = vmatpush1.bf16.msra.mxu0 0
    %2386 = vmatprep.subr.bf16.mxu0 0
    %2387 = vmatpush1.bf16.msra.mxu0 0
    %2388 = vmatprep.subr.bf16.mxu0 0
    %2389 = vmatpush1.bf16.msra.mxu0 0
    %2390 = vmatprep.subr.bf16.mxu0 0
    %2391 = vmatpush1.bf16.msra.mxu0 0
    %2392 = vmatprep.subr.bf16.mxu0 0
    %2393 = vmatpush1.bf16.msra.mxu0 0
    %2394 = vmatprep.subr.bf16.mxu0 0
    %2395 = vmatpush1.bf16.msra.mxu0 0
    %2396 = vmatprep.subr.bf16.mxu0 %v1398
    %2397 = vmatpush1.bf16.msra.mxu0 %v1397
    %2398 = vmatprep.subr.bf16.mxu0 %v1390
    %2399 = vmatpush1.bf16.msra.mxu0 %v1389
    %2400 = vmatprep.subr.bf16.mxu0 0
    %2401 = vmatpush2.bf16.msra.mxu0 0
    %2402 = vmatprep.subr.bf16.mxu0 0
    %2403 = vmatpush2.bf16.msra.mxu0 0
    %2404 = vmatprep.subr.bf16.mxu0 0
    %2405 = vmatpush2.bf16.msra.mxu0 0
    %2406 = vmatprep.subr.bf16.mxu0 0
    %2407 = vmatpush2.bf16.msra.mxu0 0
    %2408 = vmatprep.subr.bf16.mxu0 0
    %2409 = vmatpush2.bf16.msra.mxu0 0
    %2410 = vmatprep.subr.bf16.mxu0 0
    %2411 = vmatpush2.bf16.msra.mxu0 0
    %2412 = vmatprep.subr.bf16.mxu0 0
    %2413 = vmatpush2.bf16.msra.mxu0 0
    %2414 = vmatprep.subr.bf16.mxu0 0
    %2415 = vmatpush2.bf16.msra.mxu0 0
    %2416 = vmatprep.mubr.bf16.mxu0 0
    %2417 = vmatmul.mubr.bf16.gmra.mxu0 %v2296
    %v2418 = vpop.f32.mrf.mxu0
    %v2419 = vadd.f32 0.0, %v2418
    %v2420 = vpop.f32.mrf.mxu0
    %v2421 = vadd.f32 0.0, %v2420
    %v2422 = vpop.f32.mrf.mxu0
    %v2423 = vadd.f32 0.0, %v2422
    %v2424 = vpop.f32.mrf.mxu0
    %v2425 = vadd.f32 0.0, %v2424
    %2426 = vdwg.mxu0
    %2427 = vmatprep.subr.bf16.mxu0 0
    %2428 = vmatpush1.bf16.msra.mxu0 0
    %2429 = vmatprep.subr.bf16.mxu0 0
    %2430 = vmatpush1.bf16.msra.mxu0 0
    %2431 = vmatprep.subr.bf16.mxu0 0
    %2432 = vmatpush1.bf16.msra.mxu0 0
    %2433 = vmatprep.subr.bf16.mxu0 0
    %2434 = vmatpush1.bf16.msra.mxu0 0
    %2435 = vmatprep.subr.bf16.mxu0 0
    %2436 = vmatpush1.bf16.msra.mxu0 0
    %2437 = vmatprep.subr.bf16.mxu0 0
    %2438 = vmatpush1.bf16.msra.mxu0 0
    %2439 = vmatprep.subr.bf16.mxu0 %v1400
    %2440 = vmatpush1.bf16.msra.mxu0 %v1399
    %2441 = vmatprep.subr.bf16.mxu0 %v1392
    %2442 = vmatpush1.bf16.msra.mxu0 %v1391
    %2443 = vmatprep.subr.bf16.mxu0 0
    %2444 = vmatpush2.bf16.msra.mxu0 0
    %2445 = vmatprep.subr.bf16.mxu0 0
    %2446 = vmatpush2.bf16.msra.mxu0 0
    %2447 = vmatprep.subr.bf16.mxu0 0
    %2448 = vmatpush2.bf16.msra.mxu0 0
    %2449 = vmatprep.subr.bf16.mxu0 0
    %2450 = vmatpush2.bf16.msra.mxu0 0
    %2451 = vmatprep.subr.bf16.mxu0 0
    %2452 = vmatpush2.bf16.msra.mxu0 0
    %2453 = vmatprep.subr.bf16.mxu0 0
    %2454 = vmatpush2.bf16.msra.mxu0 0
    %2455 = vmatprep.subr.bf16.mxu0 0
    %2456 = vmatpush2.bf16.msra.mxu0 0
    %2457 = vmatprep.subr.bf16.mxu0 0
    %2458 = vmatpush2.bf16.msra.mxu0 0
    %2459 = vmatprep.mubr.bf16.mxu0 0
    %2460 = vmatmul.mubr.bf16.gmra.mxu0 %v2296
    %v2461 = vpop.f32.mrf.mxu0
    %v2462 = vadd.f32 0.0, %v2461
    %v2463 = vpop.f32.mrf.mxu0
    %v2464 = vadd.f32 0.0, %v2463
    %v2465 = vpop.f32.mrf.mxu0
    %v2466 = vadd.f32 0.0, %v2465
    %v2467 = vpop.f32.mrf.mxu0
    %v2468 = vadd.f32 0.0, %v2467
    %2469 = vdwg.mxu0
    %v2470 = vmul.f32 %v866, %v2333
    %v2471 = vmul.f32 %v868, %v2335
    %v2472 = vmul.f32 %v909, %v2376
    %v2473 = vmul.f32 %v911, %v2378
    %v2474 = vmul.f32 %v952, %v2419
    %v2475 = vmul.f32 %v954, %v2421
    %v2476 = vmul.f32 %v995, %v2462
    %v2477 = vmul.f32 %v997, %v2464
    %v2478 = vmul.f32 %v870, %v2337
    %v2479 = vmul.f32 %v872, %v2339
    %v2480 = vmul.f32 %v913, %v2380
    %v2481 = vmul.f32 %v915, %v2382
    %v2482 = vmul.f32 %v956, %v2423
    %v2483 = vmul.f32 %v958, %v2425
    %v2484 = vmul.f32 %v999, %v2466
    %v2485 = vmul.f32 %v1001, %v2468
    %v2486 = vpack.c.bf16 %v2478, %v2470
    %v2487 = vpack.c.bf16 %v2479, %v2471
    %v2488 = vpack.c.bf16 %v2480, %v2472
    %v2489 = vpack.c.bf16 %v2481, %v2473
    %v2490 = vpack.c.bf16 %v2482, %v2474
    %v2491 = vpack.c.bf16 %v2483, %v2475
    %v2492 = vpack.c.bf16 %v2484, %v2476
    %v2493 = vpack.c.bf16 %v2485, %v2477
    %2494 = vmatprep.subr.bf16.mxu0 0
    %2495 = vmatpush1.bf16.msra.mxu0 %v1931
    %2496 = vmatprep.subr.bf16.mxu0 0
    %2497 = vmatpush1.bf16.msra.mxu0 %v1930
    %2498 = vmatprep.subr.bf16.mxu0 0
    %2499 = vmatpush1.bf16.msra.mxu0 %v1929
    %2500 = vmatprep.subr.bf16.mxu0 0
    %2501 = vmatpush1.bf16.msra.mxu0 %v1928
    %2502 = vmatprep.subr.bf16.mxu0 0
    %2503 = vmatpush1.bf16.msra.mxu0 %v1927
    %2504 = vmatprep.subr.bf16.mxu0 0
    %2505 = vmatpush1.bf16.msra.mxu0 %v1926
    %2506 = vmatprep.subr.bf16.mxu0 0
    %2507 = vmatpush1.bf16.msra.mxu0 %v1925
    %2508 = vmatprep.subr.bf16.mxu0 0
    %2509 = vmatpush1.bf16.msra.mxu0 %v1924
    %2510 = vmatprep.subr.bf16.mxu0 0
    %2511 = vmatpush2.bf16.msra.mxu0 %v1939
    %2512 = vmatprep.subr.bf16.mxu0 0
    %2513 = vmatpush2.bf16.msra.mxu0 %v1938
    %2514 = vmatprep.subr.bf16.mxu0 0
    %2515 = vmatpush2.bf16.msra.mxu0 %v1937
    %2516 = vmatprep.subr.bf16.mxu0 0
    %2517 = vmatpush2.bf16.msra.mxu0 %v1936
    %2518 = vmatprep.subr.bf16.mxu0 0
    %2519 = vmatpush2.bf16.msra.mxu0 %v1935
    %2520 = vmatprep.subr.bf16.mxu0 0
    %2521 = vmatpush2.bf16.msra.mxu0 %v1934
    %2522 = vmatprep.subr.bf16.mxu0 0
    %2523 = vmatpush2.bf16.msra.mxu0 %v1933
    %2524 = vmatprep.subr.bf16.mxu0 0
    %2525 = vmatpush2.bf16.msra.mxu0 %v1932
    %2526 = vmatprep.mubr.bf16.mxu0 %v2487
    %2527 = vmatmul.mubr.bf16.gmra.mxu0 %v2486
    %v2528 = vpop.f32.mrf.mxu0
    %v2529 = vadd.f32 0.0, %v2528
    %v2530 = vpop.f32.mrf.mxu0
    %v2531 = vpop.f32.mrf.mxu0
    %v2532 = vadd.f32 0.0, %v2531
    %v2533 = vpop.f32.mrf.mxu0
    %2534 = vdwg.mxu0
    %2535 = vmatprep.subr.bf16.mxu0 0
    %2536 = vmatpush1.bf16.msra.mxu0 %v1947
    %2537 = vmatprep.subr.bf16.mxu0 0
    %2538 = vmatpush1.bf16.msra.mxu0 %v1946
    %2539 = vmatprep.subr.bf16.mxu0 0
    %2540 = vmatpush1.bf16.msra.mxu0 %v1945
    %2541 = vmatprep.subr.bf16.mxu0 0
    %2542 = vmatpush1.bf16.msra.mxu0 %v1944
    %2543 = vmatprep.subr.bf16.mxu0 0
    %2544 = vmatpush1.bf16.msra.mxu0 %v1943
    %2545 = vmatprep.subr.bf16.mxu0 0
    %2546 = vmatpush1.bf16.msra.mxu0 %v1942
    %2547 = vmatprep.subr.bf16.mxu0 0
    %2548 = vmatpush1.bf16.msra.mxu0 %v1941
    %2549 = vmatprep.subr.bf16.mxu0 0
    %2550 = vmatpush1.bf16.msra.mxu0 %v1940
    %2551 = vmatprep.subr.bf16.mxu0 0
    %2552 = vmatpush2.bf16.msra.mxu0 %v1955
    %2553 = vmatprep.subr.bf16.mxu0 0
    %2554 = vmatpush2.bf16.msra.mxu0 %v1954
    %2555 = vmatprep.subr.bf16.mxu0 0
    %2556 = vmatpush2.bf16.msra.mxu0 %v1953
    %2557 = vmatprep.subr.bf16.mxu0 0
    %2558 = vmatpush2.bf16.msra.mxu0 %v1952
    %2559 = vmatprep.subr.bf16.mxu0 0
    %2560 = vmatpush2.bf16.msra.mxu0 %v1951
    %2561 = vmatprep.subr.bf16.mxu0 0
    %2562 = vmatpush2.bf16.msra.mxu0 %v1950
    %2563 = vmatprep.subr.bf16.mxu0 0
    %2564 = vmatpush2.bf16.msra.mxu0 %v1949
    %2565 = vmatprep.subr.bf16.mxu0 0
    %2566 = vmatpush2.bf16.msra.mxu0 %v1948
    %2567 = vmatprep.mubr.bf16.mxu0 %v2489
    %2568 = vmatmul.mubr.bf16.gmra.mxu0 %v2488
    %v2569 = vpop.f32.mrf.mxu0
    %v2570 = vadd.f32 %v2529, %v2569
    %v2571 = vpop.f32.mrf.mxu0
    %v2572 = vpop.f32.mrf.mxu0
    %v2573 = vadd.f32 %v2532, %v2572
    %v2574 = vpop.f32.mrf.mxu0
    %2575 = vdwg.mxu0
    %2576 = vmatprep.subr.bf16.mxu0 0
    %2577 = vmatpush1.bf16.msra.mxu0 %v1963
    %2578 = vmatprep.subr.bf16.mxu0 0
    %2579 = vmatpush1.bf16.msra.mxu0 %v1962
    %2580 = vmatprep.subr.bf16.mxu0 0
    %2581 = vmatpush1.bf16.msra.mxu0 %v1961
    %2582 = vmatprep.subr.bf16.mxu0 0
    %2583 = vmatpush1.bf16.msra.mxu0 %v1960
    %2584 = vmatprep.subr.bf16.mxu0 0
    %2585 = vmatpush1.bf16.msra.mxu0 %v1959
    %2586 = vmatprep.subr.bf16.mxu0 0
    %2587 = vmatpush1.bf16.msra.mxu0 %v1958
    %2588 = vmatprep.subr.bf16.mxu0 0
    %2589 = vmatpush1.bf16.msra.mxu0 %v1957
    %2590 = vmatprep.subr.bf16.mxu0 0
    %2591 = vmatpush1.bf16.msra.mxu0 %v1956
    %2592 = vmatprep.subr.bf16.mxu0 0
    %2593 = vmatpush2.bf16.msra.mxu0 %v1971
    %2594 = vmatprep.subr.bf16.mxu0 0
    %2595 = vmatpush2.bf16.msra.mxu0 %v1970
    %2596 = vmatprep.subr.bf16.mxu0 0
    %2597 = vmatpush2.bf16.msra.mxu0 %v1969
    %2598 = vmatprep.subr.bf16.mxu0 0
    %2599 = vmatpush2.bf16.msra.mxu0 %v1968
    %2600 = vmatprep.subr.bf16.mxu0 0
    %2601 = vmatpush2.bf16.msra.mxu0 %v1967
    %2602 = vmatprep.subr.bf16.mxu0 0
    %2603 = vmatpush2.bf16.msra.mxu0 %v1966
    %2604 = vmatprep.subr.bf16.mxu0 0
    %2605 = vmatpush2.bf16.msra.mxu0 %v1965
    %2606 = vmatprep.subr.bf16.mxu0 0
    %2607 = vmatpush2.bf16.msra.mxu0 %v1964
    %2608 = vmatprep.mubr.bf16.mxu0 %v2491
    %2609 = vmatmul.mubr.bf16.gmra.mxu0 %v2490
    %v2610 = vpop.f32.mrf.mxu0
    %v2611 = vadd.f32 %v2570, %v2610
    %v2612 = vpop.f32.mrf.mxu0
    %v2613 = vpop.f32.mrf.mxu0
    %v2614 = vadd.f32 %v2573, %v2613
    %v2615 = vpop.f32.mrf.mxu0
    %2616 = vdwg.mxu0
    %2617 = vmatprep.subr.bf16.mxu0 0
    %2618 = vmatpush1.bf16.msra.mxu0 %v1979
    %2619 = vmatprep.subr.bf16.mxu0 0
    %2620 = vmatpush1.bf16.msra.mxu0 %v1978
    %2621 = vmatprep.subr.bf16.mxu0 0
    %2622 = vmatpush1.bf16.msra.mxu0 %v1977
    %2623 = vmatprep.subr.bf16.mxu0 0
    %2624 = vmatpush1.bf16.msra.mxu0 %v1976
    %2625 = vmatprep.subr.bf16.mxu0 0
    %2626 = vmatpush1.bf16.msra.mxu0 %v1975
    %2627 = vmatprep.subr.bf16.mxu0 0
    %2628 = vmatpush1.bf16.msra.mxu0 %v1974
    %2629 = vmatprep.subr.bf16.mxu0 0
    %2630 = vmatpush1.bf16.msra.mxu0 %v1973
    %2631 = vmatprep.subr.bf16.mxu0 0
    %2632 = vmatpush1.bf16.msra.mxu0 %v1972
    %2633 = vmatprep.subr.bf16.mxu0 0
    %2634 = vmatpush2.bf16.msra.mxu0 %v1987
    %2635 = vmatprep.subr.bf16.mxu0 0
    %2636 = vmatpush2.bf16.msra.mxu0 %v1986
    %2637 = vmatprep.subr.bf16.mxu0 0
    %2638 = vmatpush2.bf16.msra.mxu0 %v1985
    %2639 = vmatprep.subr.bf16.mxu0 0
    %2640 = vmatpush2.bf16.msra.mxu0 %v1984
    %2641 = vmatprep.subr.bf16.mxu0 0
    %2642 = vmatpush2.bf16.msra.mxu0 %v1983
    %2643 = vmatprep.subr.bf16.mxu0 0
    %2644 = vmatpush2.bf16.msra.mxu0 %v1982
    %2645 = vmatprep.subr.bf16.mxu0 0
    %2646 = vmatpush2.bf16.msra.mxu0 %v1981
    %2647 = vmatprep.subr.bf16.mxu0 0
    %2648 = vmatpush2.bf16.msra.mxu0 %v1980
    %2649 = vmatprep.mubr.bf16.mxu0 %v2493
    %2650 = vmatmul.mubr.bf16.gmra.mxu0 %v2492
    %v2651 = vpop.f32.mrf.mxu0
    %v2652 = vadd.f32 %v2611, %v2651
    %v2653 = vpop.f32.mrf.mxu0
    %v2654 = vpop.f32.mrf.mxu0
    %v2655 = vadd.f32 %v2614, %v2654
    %v2656 = vpop.f32.mrf.mxu0
    %2657 = vdwg.mxu0
    %v2658 = vpack.c.bf16 %v2655, %v2652
    %v2660 = vsel %vm352, %v441, 0
    %2662 = vmatprep.subr.bf16.mxu0 0
    %2663 = vmatpush1.bf16.msra.mxu0 0
    %2664 = vmatprep.subr.bf16.mxu0 0
    %2665 = vmatpush1.bf16.msra.mxu0 0
    %2666 = vmatprep.subr.bf16.mxu0 0
    %2667 = vmatpush1.bf16.msra.mxu0 0
    %2668 = vmatprep.subr.bf16.mxu0 0
    %2669 = vmatpush1.bf16.msra.mxu0 0
    %2670 = vmatprep.subr.bf16.mxu0 0
    %2671 = vmatpush1.bf16.msra.mxu0 0
    %2672 = vmatprep.subr.bf16.mxu0 0
    %2673 = vmatpush1.bf16.msra.mxu0 0
    %2674 = vmatprep.subr.bf16.mxu0 0
    %2675 = vmatpush1.bf16.msra.mxu0 0
    %2676 = vmatprep.subr.bf16.mxu0 0
    %2677 = vmatpush1.bf16.msra.mxu0 %v2658
    %2678 = vmatprep.subr.bf16.mxu0 0
    %2679 = vmatpush2.bf16.msra.mxu0 0
    %2680 = vmatprep.subr.bf16.mxu0 0
    %2681 = vmatpush2.bf16.msra.mxu0 0
    %2682 = vmatprep.subr.bf16.mxu0 0
    %2683 = vmatpush2.bf16.msra.mxu0 0
    %2684 = vmatprep.subr.bf16.mxu0 0
    %2685 = vmatpush2.bf16.msra.mxu0 0
    %2686 = vmatprep.subr.bf16.mxu0 0
    %2687 = vmatpush2.bf16.msra.mxu0 0
    %2688 = vmatprep.subr.bf16.mxu0 0
    %2689 = vmatpush2.bf16.msra.mxu0 0
    %2690 = vmatprep.subr.bf16.mxu0 0
    %2691 = vmatpush2.bf16.msra.mxu0 0
    %2692 = vmatprep.subr.bf16.mxu0 0
    %2693 = vmatpush2.bf16.msra.mxu0 0
    %2694 = vmatprep.mubr.bf16.mxu0 0
    %2695 = vmatmul.mubr.bf16.gmra.mxu0 %v2660
    %v2696 = vpop.f32.mrf.mxu0
    %v2697 = vadd.f32 0.0, %v2696
    %v2698 = vpop.f32.mrf.mxu0
    %v2699 = vpop.f32.mrf.mxu0
    %v2700 = vpop.f32.mrf.mxu0
    %2701 = vdwg.mxu0
    %v2702 = vpack.c.bf16 %v2697, %v2697
    %v2704 = vsel %vm1417, %v2702, 0
    %2706 = vmatprep.subr.bf16.mxu0 0
    %2707 = vmatpush1.bf16.msra.mxu0 0
    %2708 = vmatprep.subr.bf16.mxu0 0
    %2709 = vmatpush1.bf16.msra.mxu0 0
    %2710 = vmatprep.subr.bf16.mxu0 0
    %2711 = vmatpush1.bf16.msra.mxu0 0
    %2712 = vmatprep.subr.bf16.mxu0 0
    %2713 = vmatpush1.bf16.msra.mxu0 0
    %2714 = vmatprep.subr.bf16.mxu0 0
    %2715 = vmatpush1.bf16.msra.mxu0 0
    %2716 = vmatprep.subr.bf16.mxu0 0
    %2717 = vmatpush1.bf16.msra.mxu0 0
    %2718 = vmatprep.subr.bf16.mxu0 %v1394
    %2719 = vmatpush1.bf16.msra.mxu0 %v1393
    %2720 = vmatprep.subr.bf16.mxu0 %v1386
    %2721 = vmatpush1.bf16.msra.mxu0 %v1385
    %2722 = vmatprep.subr.bf16.mxu0 0
    %2723 = vmatpush2.bf16.msra.mxu0 0
    %2724 = vmatprep.subr.bf16.mxu0 0
    %2725 = vmatpush2.bf16.msra.mxu0 0
    %2726 = vmatprep.subr.bf16.mxu0 0
    %2727 = vmatpush2.bf16.msra.mxu0 0
    %2728 = vmatprep.subr.bf16.mxu0 0
    %2729 = vmatpush2.bf16.msra.mxu0 0
    %2730 = vmatprep.subr.bf16.mxu0 0
    %2731 = vmatpush2.bf16.msra.mxu0 0
    %2732 = vmatprep.subr.bf16.mxu0 0
    %2733 = vmatpush2.bf16.msra.mxu0 0
    %2734 = vmatprep.subr.bf16.mxu0 0
    %2735 = vmatpush2.bf16.msra.mxu0 0
    %2736 = vmatprep.subr.bf16.mxu0 0
    %2737 = vmatpush2.bf16.msra.mxu0 0
    %2738 = vmatprep.mubr.bf16.mxu0 0
    %2739 = vmatmul.mubr.bf16.gmra.mxu0 %v2704
    %v2740 = vpop.f32.mrf.mxu0
    %v2741 = vadd.f32 0.0, %v2740
    %v2742 = vpop.f32.mrf.mxu0
    %v2743 = vadd.f32 0.0, %v2742
    %v2744 = vpop.f32.mrf.mxu0
    %v2745 = vpop.f32.mrf.mxu0
    %2746 = vdwg.mxu0
    %2747 = vmatprep.subr.bf16.mxu0 0
    %2748 = vmatpush1.bf16.msra.mxu0 0
    %2749 = vmatprep.subr.bf16.mxu0 0
    %2750 = vmatpush1.bf16.msra.mxu0 0
    %2751 = vmatprep.subr.bf16.mxu0 0
    %2752 = vmatpush1.bf16.msra.mxu0 0
    %2753 = vmatprep.subr.bf16.mxu0 0
    %2754 = vmatpush1.bf16.msra.mxu0 0
    %2755 = vmatprep.subr.bf16.mxu0 0
    %2756 = vmatpush1.bf16.msra.mxu0 0
    %2757 = vmatprep.subr.bf16.mxu0 0
    %2758 = vmatpush1.bf16.msra.mxu0 0
    %2759 = vmatprep.subr.bf16.mxu0 %v1396
    %2760 = vmatpush1.bf16.msra.mxu0 %v1395
    %2761 = vmatprep.subr.bf16.mxu0 %v1388
    %2762 = vmatpush1.bf16.msra.mxu0 %v1387
    %2763 = vmatprep.subr.bf16.mxu0 0
    %2764 = vmatpush2.bf16.msra.mxu0 0
    %2765 = vmatprep.subr.bf16.mxu0 0
    %2766 = vmatpush2.bf16.msra.mxu0 0
    %2767 = vmatprep.subr.bf16.mxu0 0
    %2768 = vmatpush2.bf16.msra.mxu0 0
    %2769 = vmatprep.subr.bf16.mxu0 0
    %2770 = vmatpush2.bf16.msra.mxu0 0
    %2771 = vmatprep.subr.bf16.mxu0 0
    %2772 = vmatpush2.bf16.msra.mxu0 0
    %2773 = vmatprep.subr.bf16.mxu0 0
    %2774 = vmatpush2.bf16.msra.mxu0 0
    %2775 = vmatprep.subr.bf16.mxu0 0
    %2776 = vmatpush2.bf16.msra.mxu0 0
    %2777 = vmatprep.subr.bf16.mxu0 0
    %2778 = vmatpush2.bf16.msra.mxu0 0
    %2779 = vmatprep.mubr.bf16.mxu0 0
    %2780 = vmatmul.mubr.bf16.gmra.mxu0 %v2704
    %v2781 = vpop.f32.mrf.mxu0
    %v2782 = vadd.f32 0.0, %v2781
    %v2783 = vpop.f32.mrf.mxu0
    %v2784 = vadd.f32 0.0, %v2783
    %v2785 = vpop.f32.mrf.mxu0
    %v2786 = vpop.f32.mrf.mxu0
    %2787 = vdwg.mxu0
    %2788 = vmatprep.subr.bf16.mxu0 0
    %2789 = vmatpush1.bf16.msra.mxu0 0
    %2790 = vmatprep.subr.bf16.mxu0 0
    %2791 = vmatpush1.bf16.msra.mxu0 0
    %2792 = vmatprep.subr.bf16.mxu0 0
    %2793 = vmatpush1.bf16.msra.mxu0 0
    %2794 = vmatprep.subr.bf16.mxu0 0
    %2795 = vmatpush1.bf16.msra.mxu0 0
    %2796 = vmatprep.subr.bf16.mxu0 0
    %2797 = vmatpush1.bf16.msra.mxu0 0
    %2798 = vmatprep.subr.bf16.mxu0 0
    %2799 = vmatpush1.bf16.msra.mxu0 0
    %2800 = vmatprep.subr.bf16.mxu0 %v1398
    %2801 = vmatpush1.bf16.msra.mxu0 %v1397
    %2802 = vmatprep.subr.bf16.mxu0 %v1390
    %2803 = vmatpush1.bf16.msra.mxu0 %v1389
    %2804 = vmatprep.subr.bf16.mxu0 0
    %2805 = vmatpush2.bf16.msra.mxu0 0
    %2806 = vmatprep.subr.bf16.mxu0 0
    %2807 = vmatpush2.bf16.msra.mxu0 0
    %2808 = vmatprep.subr.bf16.mxu0 0
    %2809 = vmatpush2.bf16.msra.mxu0 0
    %2810 = vmatprep.subr.bf16.mxu0 0
    %2811 = vmatpush2.bf16.msra.mxu0 0
    %2812 = vmatprep.subr.bf16.mxu0 0
    %2813 = vmatpush2.bf16.msra.mxu0 0
    %2814 = vmatprep.subr.bf16.mxu0 0
    %2815 = vmatpush2.bf16.msra.mxu0 0
    %2816 = vmatprep.subr.bf16.mxu0 0
    %2817 = vmatpush2.bf16.msra.mxu0 0
    %2818 = vmatprep.subr.bf16.mxu0 0
    %2819 = vmatpush2.bf16.msra.mxu0 0
    %2820 = vmatprep.mubr.bf16.mxu0 0
    %2821 = vmatmul.mubr.bf16.gmra.mxu0 %v2704
    %v2822 = vpop.f32.mrf.mxu0
    %v2823 = vadd.f32 0.0, %v2822
    %v2824 = vpop.f32.mrf.mxu0
    %v2825 = vadd.f32 0.0, %v2824
    %v2826 = vpop.f32.mrf.mxu0
    %v2827 = vpop.f32.mrf.mxu0
    %2828 = vdwg.mxu0
    %2829 = vmatprep.subr.bf16.mxu0 0
    %2830 = vmatpush1.bf16.msra.mxu0 0
    %2831 = vmatprep.subr.bf16.mxu0 0
    %2832 = vmatpush1.bf16.msra.mxu0 0
    %2833 = vmatprep.subr.bf16.mxu0 0
    %2834 = vmatpush1.bf16.msra.mxu0 0
    %2835 = vmatprep.subr.bf16.mxu0 0
    %2836 = vmatpush1.bf16.msra.mxu0 0
    %2837 = vmatprep.subr.bf16.mxu0 0
    %2838 = vmatpush1.bf16.msra.mxu0 0
    %2839 = vmatprep.subr.bf16.mxu0 0
    %2840 = vmatpush1.bf16.msra.mxu0 0
    %2841 = vmatprep.subr.bf16.mxu0 %v1400
    %2842 = vmatpush1.bf16.msra.mxu0 %v1399
    %2843 = vmatprep.subr.bf16.mxu0 %v1392
    %2844 = vmatpush1.bf16.msra.mxu0 %v1391
    %2845 = vmatprep.subr.bf16.mxu0 0
    %2846 = vmatpush2.bf16.msra.mxu0 0
    %2847 = vmatprep.subr.bf16.mxu0 0
    %2848 = vmatpush2.bf16.msra.mxu0 0
    %2849 = vmatprep.subr.bf16.mxu0 0
    %2850 = vmatpush2.bf16.msra.mxu0 0
    %2851 = vmatprep.subr.bf16.mxu0 0
    %2852 = vmatpush2.bf16.msra.mxu0 0
    %2853 = vmatprep.subr.bf16.mxu0 0
    %2854 = vmatpush2.bf16.msra.mxu0 0
    %2855 = vmatprep.subr.bf16.mxu0 0
    %2856 = vmatpush2.bf16.msra.mxu0 0
    %2857 = vmatprep.subr.bf16.mxu0 0
    %2858 = vmatpush2.bf16.msra.mxu0 0
    %2859 = vmatprep.subr.bf16.mxu0 0
    %2860 = vmatpush2.bf16.msra.mxu0 0
    %2861 = vmatprep.mubr.bf16.mxu0 0
    %2862 = vmatmul.mubr.bf16.gmra.mxu0 %v2704
    %v2863 = vpop.f32.mrf.mxu0
    %v2864 = vadd.f32 0.0, %v2863
    %v2865 = vpop.f32.mrf.mxu0
    %v2866 = vadd.f32 0.0, %v2865
    %v2867 = vpop.f32.mrf.mxu0
    %v2868 = vpop.f32.mrf.mxu0
    %2869 = vdwg.mxu0
    %v2870 = vmul.f32 %v1135, %v2741
    %v2871 = vmul.f32 %v1137, %v2743
    %v2872 = vmul.f32 %v1176, %v2782
    %v2873 = vmul.f32 %v1178, %v2784
    %v2874 = vmul.f32 %v1217, %v2823
    %v2875 = vmul.f32 %v1219, %v2825
    %v2876 = vmul.f32 %v1258, %v2864
    %v2877 = vmul.f32 %v1260, %v2866
    %v2878 = vpack.c.bf16 %v2870, %v2870
    %v2879 = vpack.c.bf16 %v2871, %v2871
    %v2880 = vpack.c.bf16 %v2872, %v2872
    %v2881 = vpack.c.bf16 %v2873, %v2873
    %v2882 = vpack.c.bf16 %v2874, %v2874
    %v2883 = vpack.c.bf16 %v2875, %v2875
    %v2884 = vpack.c.bf16 %v2876, %v2876
    %v2885 = vpack.c.bf16 %v2877, %v2877
    %2886 = vmatprep.subr.bf16.mxu0 0
    %2887 = vmatpush1.bf16.msra.mxu0 %v1931
    %2888 = vmatprep.subr.bf16.mxu0 0
    %2889 = vmatpush1.bf16.msra.mxu0 %v1930
    %2890 = vmatprep.subr.bf16.mxu0 0
    %2891 = vmatpush1.bf16.msra.mxu0 %v1929
    %2892 = vmatprep.subr.bf16.mxu0 0
    %2893 = vmatpush1.bf16.msra.mxu0 %v1928
    %2894 = vmatprep.subr.bf16.mxu0 0
    %2895 = vmatpush1.bf16.msra.mxu0 %v1927
    %2896 = vmatprep.subr.bf16.mxu0 0
    %2897 = vmatpush1.bf16.msra.mxu0 %v1926
    %2898 = vmatprep.subr.bf16.mxu0 0
    %2899 = vmatpush1.bf16.msra.mxu0 %v1925
    %2900 = vmatprep.subr.bf16.mxu0 0
    %2901 = vmatpush1.bf16.msra.mxu0 %v1924
    %2902 = vmatprep.subr.bf16.mxu0 0
    %2903 = vmatpush2.bf16.msra.mxu0 %v1939
    %2904 = vmatprep.subr.bf16.mxu0 0
    %2905 = vmatpush2.bf16.msra.mxu0 %v1938
    %2906 = vmatprep.subr.bf16.mxu0 0
    %2907 = vmatpush2.bf16.msra.mxu0 %v1937
    %2908 = vmatprep.subr.bf16.mxu0 0
    %2909 = vmatpush2.bf16.msra.mxu0 %v1936
    %2910 = vmatprep.subr.bf16.mxu0 0
    %2911 = vmatpush2.bf16.msra.mxu0 %v1935
    %2912 = vmatprep.subr.bf16.mxu0 0
    %2913 = vmatpush2.bf16.msra.mxu0 %v1934
    %2914 = vmatprep.subr.bf16.mxu0 0
    %2915 = vmatpush2.bf16.msra.mxu0 %v1933
    %2916 = vmatprep.subr.bf16.mxu0 0
    %2917 = vmatpush2.bf16.msra.mxu0 %v1932
    %2918 = vmatprep.mubr.bf16.mxu0 %v2879
    %2919 = vmatmul.mubr.bf16.gmra.mxu0 %v2878
    %v2920 = vpop.f32.mrf.mxu0
    %v2921 = vadd.f32 0.0, %v2920
    %v2922 = vpop.f32.mrf.mxu0
    %v2923 = vpop.f32.mrf.mxu0
    %v2924 = vpop.f32.mrf.mxu0
    %2925 = vdwg.mxu0
    %2926 = vmatprep.subr.bf16.mxu0 0
    %2927 = vmatpush1.bf16.msra.mxu0 %v1947
    %2928 = vmatprep.subr.bf16.mxu0 0
    %2929 = vmatpush1.bf16.msra.mxu0 %v1946
    %2930 = vmatprep.subr.bf16.mxu0 0
    %2931 = vmatpush1.bf16.msra.mxu0 %v1945
    %2932 = vmatprep.subr.bf16.mxu0 0
    %2933 = vmatpush1.bf16.msra.mxu0 %v1944
    %2934 = vmatprep.subr.bf16.mxu0 0
    %2935 = vmatpush1.bf16.msra.mxu0 %v1943
    %2936 = vmatprep.subr.bf16.mxu0 0
    %2937 = vmatpush1.bf16.msra.mxu0 %v1942
    %2938 = vmatprep.subr.bf16.mxu0 0
    %2939 = vmatpush1.bf16.msra.mxu0 %v1941
    %2940 = vmatprep.subr.bf16.mxu0 0
    %2941 = vmatpush1.bf16.msra.mxu0 %v1940
    %2942 = vmatprep.subr.bf16.mxu0 0
    %2943 = vmatpush2.bf16.msra.mxu0 %v1955
    %2944 = vmatprep.subr.bf16.mxu0 0
    %2945 = vmatpush2.bf16.msra.mxu0 %v1954
    %2946 = vmatprep.subr.bf16.mxu0 0
    %2947 = vmatpush2.bf16.msra.mxu0 %v1953
    %2948 = vmatprep.subr.bf16.mxu0 0
    %2949 = vmatpush2.bf16.msra.mxu0 %v1952
    %2950 = vmatprep.subr.bf16.mxu0 0
    %2951 = vmatpush2.bf16.msra.mxu0 %v1951
    %2952 = vmatprep.subr.bf16.mxu0 0
    %2953 = vmatpush2.bf16.msra.mxu0 %v1950
    %2954 = vmatprep.subr.bf16.mxu0 0
    %2955 = vmatpush2.bf16.msra.mxu0 %v1949
    %2956 = vmatprep.subr.bf16.mxu0 0
    %2957 = vmatpush2.bf16.msra.mxu0 %v1948
    %2958 = vmatprep.mubr.bf16.mxu0 %v2881
    %2959 = vmatmul.mubr.bf16.gmra.mxu0 %v2880
    %v2960 = vpop.f32.mrf.mxu0
    %v2961 = vadd.f32 %v2921, %v2960
    %v2962 = vpop.f32.mrf.mxu0
    %v2963 = vpop.f32.mrf.mxu0
    %v2964 = vpop.f32.mrf.mxu0
    %2965 = vdwg.mxu0
    %2966 = vmatprep.subr.bf16.mxu0 0
    %2967 = vmatpush1.bf16.msra.mxu0 %v1963
    %2968 = vmatprep.subr.bf16.mxu0 0
    %2969 = vmatpush1.bf16.msra.mxu0 %v1962
    %2970 = vmatprep.subr.bf16.mxu0 0
    %2971 = vmatpush1.bf16.msra.mxu0 %v1961
    %2972 = vmatprep.subr.bf16.mxu0 0
    %2973 = vmatpush1.bf16.msra.mxu0 %v1960
    %2974 = vmatprep.subr.bf16.mxu0 0
    %2975 = vmatpush1.bf16.msra.mxu0 %v1959
    %2976 = vmatprep.subr.bf16.mxu0 0
    %2977 = vmatpush1.bf16.msra.mxu0 %v1958
    %2978 = vmatprep.subr.bf16.mxu0 0
    %2979 = vmatpush1.bf16.msra.mxu0 %v1957
    %2980 = vmatprep.subr.bf16.mxu0 0
    %2981 = vmatpush1.bf16.msra.mxu0 %v1956
    %2982 = vmatprep.subr.bf16.mxu0 0
    %2983 = vmatpush2.bf16.msra.mxu0 %v1971
    %2984 = vmatprep.subr.bf16.mxu0 0
    %2985 = vmatpush2.bf16.msra.mxu0 %v1970
    %2986 = vmatprep.subr.bf16.mxu0 0
    %2987 = vmatpush2.bf16.msra.mxu0 %v1969
    %2988 = vmatprep.subr.bf16.mxu0 0
    %2989 = vmatpush2.bf16.msra.mxu0 %v1968
    %2990 = vmatprep.subr.bf16.mxu0 0
    %2991 = vmatpush2.bf16.msra.mxu0 %v1967
    %2992 = vmatprep.subr.bf16.mxu0 0
    %2993 = vmatpush2.bf16.msra.mxu0 %v1966
    %2994 = vmatprep.subr.bf16.mxu0 0
    %2995 = vmatpush2.bf16.msra.mxu0 %v1965
    %2996 = vmatprep.subr.bf16.mxu0 0
    %2997 = vmatpush2.bf16.msra.mxu0 %v1964
    %2998 = vmatprep.mubr.bf16.mxu0 %v2883
    %2999 = vmatmul.mubr.bf16.gmra.mxu0 %v2882
    %v3000 = vpop.f32.mrf.mxu0
    %v3001 = vadd.f32 %v2961, %v3000
    %v3002 = vpop.f32.mrf.mxu0
    %v3003 = vpop.f32.mrf.mxu0
    %v3004 = vpop.f32.mrf.mxu0
    %3005 = vdwg.mxu0
    %3006 = vmatprep.subr.bf16.mxu0 0
    %3007 = vmatpush1.bf16.msra.mxu0 %v1979
    %3008 = vmatprep.subr.bf16.mxu0 0
    %3009 = vmatpush1.bf16.msra.mxu0 %v1978
    %3010 = vmatprep.subr.bf16.mxu0 0
    %3011 = vmatpush1.bf16.msra.mxu0 %v1977
    %3012 = vmatprep.subr.bf16.mxu0 0
    %3013 = vmatpush1.bf16.msra.mxu0 %v1976
    %3014 = vmatprep.subr.bf16.mxu0 0
    %3015 = vmatpush1.bf16.msra.mxu0 %v1975
    %3016 = vmatprep.subr.bf16.mxu0 0
    %3017 = vmatpush1.bf16.msra.mxu0 %v1974
    %3018 = vmatprep.subr.bf16.mxu0 0
    %3019 = vmatpush1.bf16.msra.mxu0 %v1973
    %3020 = vmatprep.subr.bf16.mxu0 0
    %3021 = vmatpush1.bf16.msra.mxu0 %v1972
    %3022 = vmatprep.subr.bf16.mxu0 0
    %3023 = vmatpush2.bf16.msra.mxu0 %v1987
    %3024 = vmatprep.subr.bf16.mxu0 0
    %3025 = vmatpush2.bf16.msra.mxu0 %v1986
    %3026 = vmatprep.subr.bf16.mxu0 0
    %3027 = vmatpush2.bf16.msra.mxu0 %v1985
    %3028 = vmatprep.subr.bf16.mxu0 0
    %3029 = vmatpush2.bf16.msra.mxu0 %v1984
    %3030 = vmatprep.subr.bf16.mxu0 0
    %3031 = vmatpush2.bf16.msra.mxu0 %v1983
    %3032 = vmatprep.subr.bf16.mxu0 0
    %3033 = vmatpush2.bf16.msra.mxu0 %v1982
    %3034 = vmatprep.subr.bf16.mxu0 0
    %3035 = vmatpush2.bf16.msra.mxu0 %v1981
    %3036 = vmatprep.subr.bf16.mxu0 0
    %3037 = vmatpush2.bf16.msra.mxu0 %v1980
    %3038 = vmatprep.mubr.bf16.mxu0 %v2885
    %3039 = vmatmul.mubr.bf16.gmra.mxu0 %v2884
    %v3040 = vpop.f32.mrf.mxu0
    %v3041 = vadd.f32 %v3001, %v3040
    %v3042 = vpop.f32.mrf.mxu0
    %v3043 = vpop.f32.mrf.mxu0
    %v3044 = vpop.f32.mrf.mxu0
    %3045 = vdwg.mxu0
    %v3046 = vpack.c.bf16 %v3041, %v3041
    %v3048 = vsel %vm505, %v351, 0
    %v3051 = vsel %vm512, %v3046, 0
    %3053 = vmatprep.subr.bf16.mxu0 0
    %3054 = vmatpush1.bf16.msra.mxu0 0
    %3055 = vmatprep.subr.bf16.mxu0 0
    %3056 = vmatpush1.bf16.msra.mxu0 0
    %3057 = vmatprep.subr.bf16.mxu0 0
    %3058 = vmatpush1.bf16.msra.mxu0 0
    %3059 = vmatprep.subr.bf16.mxu0 0
    %3060 = vmatpush1.bf16.msra.mxu0 0
    %3061 = vmatprep.subr.bf16.mxu0 0
    %3062 = vmatpush1.bf16.msra.mxu0 0
    %3063 = vmatprep.subr.bf16.mxu0 0
    %3064 = vmatpush1.bf16.msra.mxu0 0
    %3065 = vmatprep.subr.bf16.mxu0 0
    %3066 = vmatpush1.bf16.msra.mxu0 0
    %3067 = vmatprep.subr.bf16.mxu0 0
    %3068 = vmatpush1.bf16.msra.mxu0 %v3051
    %3069 = vmatprep.subr.bf16.mxu0 0
    %3070 = vmatpush2.bf16.msra.mxu0 0
    %3071 = vmatprep.subr.bf16.mxu0 0
    %3072 = vmatpush2.bf16.msra.mxu0 0
    %3073 = vmatprep.subr.bf16.mxu0 0
    %3074 = vmatpush2.bf16.msra.mxu0 0
    %3075 = vmatprep.subr.bf16.mxu0 0
    %3076 = vmatpush2.bf16.msra.mxu0 0
    %3077 = vmatprep.subr.bf16.mxu0 0
    %3078 = vmatpush2.bf16.msra.mxu0 0
    %3079 = vmatprep.subr.bf16.mxu0 0
    %3080 = vmatpush2.bf16.msra.mxu0 0
    %3081 = vmatprep.subr.bf16.mxu0 0
    %3082 = vmatpush2.bf16.msra.mxu0 0
    %3083 = vmatprep.subr.bf16.mxu0 0
    %3084 = vmatpush2.bf16.msra.mxu0 0
    %3085 = vmatprep.mubr.bf16.mxu0 0
    %3086 = vmatmul.mubr.bf16.gmra.mxu0 %v3048
    %v3087 = vpop.f32.mrf.mxu0
    %v3088 = vadd.f32 0.0, %v3087
    %v3089 = vpop.f32.mrf.mxu0
    %v3090 = vpop.f32.mrf.mxu0
    %v3091 = vadd.f32 0.0, %v3090
    %v3092 = vpop.f32.mrf.mxu0
    %3093 = vdwg.mxu0
    %v3094 = vpack.c.bf16 %v3091, %v3088
    %v3096 = vlaneseq
    %v3097 = vshrl.u32 %v3096, 7
    %v3098 = vsub.s32 0, %v3097
    %v3099 = vrot.slane %v1276, %v3098
    %v3102 = vsel %vm1417, %v3094, 0
    %3104 = vmatprep.subr.bf16.mxu0 0
    %3105 = vmatpush1.bf16.msra.mxu0 0
    %3106 = vmatprep.subr.bf16.mxu0 0
    %3107 = vmatpush1.bf16.msra.mxu0 0
    %3108 = vmatprep.subr.bf16.mxu0 0
    %3109 = vmatpush1.bf16.msra.mxu0 0
    %3110 = vmatprep.subr.bf16.mxu0 0
    %3111 = vmatpush1.bf16.msra.mxu0 0
    %3112 = vmatprep.subr.bf16.mxu0 0
    %3113 = vmatpush1.bf16.msra.mxu0 0
    %3114 = vmatprep.subr.bf16.mxu0 0
    %3115 = vmatpush1.bf16.msra.mxu0 0
    %3116 = vmatprep.subr.bf16.mxu0 0
    %3117 = vmatpush1.bf16.msra.mxu0 %v1269
    %3118 = vmatprep.subr.bf16.mxu0 0
    %3119 = vmatpush1.bf16.msra.mxu0 %v1268
    %3120 = vmatprep.subr.bf16.mxu0 0
    %3121 = vmatpush2.bf16.msra.mxu0 0
    %3122 = vmatprep.subr.bf16.mxu0 0
    %3123 = vmatpush2.bf16.msra.mxu0 0
    %3124 = vmatprep.subr.bf16.mxu0 0
    %3125 = vmatpush2.bf16.msra.mxu0 0
    %3126 = vmatprep.subr.bf16.mxu0 0
    %3127 = vmatpush2.bf16.msra.mxu0 0
    %3128 = vmatprep.subr.bf16.mxu0 0
    %3129 = vmatpush2.bf16.msra.mxu0 0
    %3130 = vmatprep.subr.bf16.mxu0 0
    %3131 = vmatpush2.bf16.msra.mxu0 0
    %3132 = vmatprep.subr.bf16.mxu0 0
    %3133 = vmatpush2.bf16.msra.mxu0 0
    %3134 = vmatprep.subr.bf16.mxu0 0
    %3135 = vmatpush2.bf16.msra.mxu0 0
    %3136 = vmatprep.mubr.bf16.mxu0 0
    %3137 = vmatmul.mubr.bf16.gmra.mxu0 %v3102
    %v3138 = vpop.f32.mrf.mxu0
    %v3139 = vadd.f32 %v3099, %v3138
    %v3140 = vpop.f32.mrf.mxu0
    %v3141 = vpop.f32.mrf.mxu0
    %v3142 = vadd.f32 %v3099, %v3141
    %v3143 = vpop.f32.mrf.mxu0
    %3144 = vdwg.mxu0
    %v3146 = vlaneseq
    %v3147 = vshrl.u32 %v3146, 7
    %v3148 = vsub.s32 0, %v3147
    %v3149 = vrot.slane %v1277, %v3148
    %v3152 = vsel %vm1417, %v1280, 0
    %3154 = vmatprep.subr.bf16.mxu0 0
    %3155 = vmatpush1.bf16.msra.mxu0 0
    %3156 = vmatprep.subr.bf16.mxu0 0
    %3157 = vmatpush1.bf16.msra.mxu0 0
    %3158 = vmatprep.subr.bf16.mxu0 0
    %3159 = vmatpush1.bf16.msra.mxu0 0
    %3160 = vmatprep.subr.bf16.mxu0 0
    %3161 = vmatpush1.bf16.msra.mxu0 0
    %3162 = vmatprep.subr.bf16.mxu0 0
    %3163 = vmatpush1.bf16.msra.mxu0 0
    %3164 = vmatprep.subr.bf16.mxu0 0
    %3165 = vmatpush1.bf16.msra.mxu0 0
    %3166 = vmatprep.subr.bf16.mxu0 0
    %3167 = vmatpush1.bf16.msra.mxu0 %v1275
    %3168 = vmatprep.subr.bf16.mxu0 0
    %3169 = vmatpush1.bf16.msra.mxu0 %v1274
    %3170 = vmatprep.subr.bf16.mxu0 0
    %3171 = vmatpush2.bf16.msra.mxu0 0
    %3172 = vmatprep.subr.bf16.mxu0 0
    %3173 = vmatpush2.bf16.msra.mxu0 0
    %3174 = vmatprep.subr.bf16.mxu0 0
    %3175 = vmatpush2.bf16.msra.mxu0 0
    %3176 = vmatprep.subr.bf16.mxu0 0
    %3177 = vmatpush2.bf16.msra.mxu0 0
    %3178 = vmatprep.subr.bf16.mxu0 0
    %3179 = vmatpush2.bf16.msra.mxu0 0
    %3180 = vmatprep.subr.bf16.mxu0 0
    %3181 = vmatpush2.bf16.msra.mxu0 0
    %3182 = vmatprep.subr.bf16.mxu0 0
    %3183 = vmatpush2.bf16.msra.mxu0 0
    %3184 = vmatprep.subr.bf16.mxu0 0
    %3185 = vmatpush2.bf16.msra.mxu0 0
    %3186 = vmatprep.mubr.bf16.mxu0 0
    %3187 = vmatmul.mubr.bf16.gmra.mxu0 %v3152
    %v3188 = vpop.f32.mrf.mxu0
    %v3189 = vadd.f32 %v3149, %v3188
    %v3190 = vpop.f32.mrf.mxu0
    %v3191 = vpop.f32.mrf.mxu0
    %v3192 = vadd.f32 %v3149, %v3191
    %v3193 = vpop.f32.mrf.mxu0
    %3194 = vdwg.mxu0
    %v3195 = vadd.f32 %v3139, %v3189
    %v3196 = vadd.f32 %v3142, %v3192
    %v3197 = vxor.u32 %v3195, 2147483648
    %v3198 = vxor.u32 %v3196, 2147483648
    %v3199 = vmul.f32 %v3197, 1.442695
    %v3200 = vpow.pop %v3199
    %v3201 = vmul.f32 %v3198, 1.442695
    %v3202 = vpow.pop %v3201
    %v3203 = vadd.f32 %v3200, 1.0
    %v3204 = vadd.f32 %v3202, 1.0
    %v3205 = vrcp.pop %v3203
    %v3206 = vmul.f32 1.0, %v3205
    %v3207 = vrcp.pop %v3204
    %v3208 = vmul.f32 1.0, %v3207
    %3211 = vrot.lane.b32.xlu0 %v3189, 64
    %v3212 = vpop.permute.xlu0 %3211
    %3213 = vrot.lane.b32.xlu0 %v3192, 64
    %v3214 = vpop.permute.xlu0 %3213
    %v3217 = vmul.f32 %v3206, %v3212
    %v3218 = vmul.f32 %v3208, %v3214
    %3221 = vrot.lane.b32.xlu0 %v3217, 64
    %v3222 = vpop.permute.xlu0 %3221
    %3223 = vrot.lane.b32.xlu0 %v3218, 64
    %v3224 = vpop.permute.xlu0 %3223
    %v3227 = vadd.f32 %v3139, %v3222
    %v3228 = vadd.f32 %v3142, %v3224
    %v3229 = vtanh.pop %v3227
    %v3230 = vtanh.pop %v3228
    %v3231 = vsub.f32 1.0, %v3206
    %v3232 = vsub.f32 1.0, %v3208
    %3235 = vrot.lane.b32.xlu0 %v3229, 96
    %v3236 = vpop.permute.xlu0 %3235
    %3237 = vrot.lane.b32.xlu0 %v3230, 96
    %v3238 = vpop.permute.xlu0 %3237
    %v3241 = vmul.f32 %v3231, %v3236
    %v3242 = vmul.f32 %v3232, %v3238
    %3245 = vrot.lane.b32.xlu0 %v1278, 32
    %v3246 = vpop.permute.xlu0 %3245
    %3247 = vrot.lane.b32.xlu0 %v1279, 32
    %v3248 = vpop.permute.xlu0 %3247
    %v3251 = vmul.f32 %v3206, %v3246
    %v3252 = vmul.f32 %v3208, %v3248
    %v3253 = vadd.f32 %v3241, %v3251
    %v3254 = vadd.f32 %v3242, %v3252
    %v3255 = vpack.c.bf16 %v3254, %v3253
    %3257 = vrot.lane.b32.xlu0 %v3255, 96
    %v3258 = vpop.permute.xlu0 %3257
    %3260 = vmatprep.subr.bf16.mxu0 0
    %3261 = vmatpush1.bf16.msra.mxu0 0
    %3262 = vmatprep.subr.bf16.mxu0 0
    %3263 = vmatpush1.bf16.msra.mxu0 0
    %3264 = vmatprep.subr.bf16.mxu0 0
    %3265 = vmatpush1.bf16.msra.mxu0 0
    %3266 = vmatprep.subr.bf16.mxu0 0
    %3267 = vmatpush1.bf16.msra.mxu0 0
    %3268 = vmatprep.subr.bf16.mxu0 0
    %3269 = vmatpush1.bf16.msra.mxu0 0
    %3270 = vmatprep.subr.bf16.mxu0 0
    %3271 = vmatpush1.bf16.msra.mxu0 0
    %3272 = vmatprep.subr.bf16.mxu0 0
    %3273 = vmatpush1.bf16.msra.mxu0 0
    %3274 = vmatprep.subr.bf16.mxu0 0
    %3275 = vmatpush1.bf16.msra.mxu0 %v3258
    %3276 = vmatprep.subr.bf16.mxu0 0
    %3277 = vmatpush2.bf16.msra.mxu0 0
    %3278 = vmatprep.subr.bf16.mxu0 0
    %3279 = vmatpush2.bf16.msra.mxu0 0
    %3280 = vmatprep.subr.bf16.mxu0 0
    %3281 = vmatpush2.bf16.msra.mxu0 0
    %3282 = vmatprep.subr.bf16.mxu0 0
    %3283 = vmatpush2.bf16.msra.mxu0 0
    %3284 = vmatprep.subr.bf16.mxu0 0
    %3285 = vmatpush2.bf16.msra.mxu0 0
    %3286 = vmatprep.subr.bf16.mxu0 0
    %3287 = vmatpush2.bf16.msra.mxu0 0
    %3288 = vmatprep.subr.bf16.mxu0 0
    %3289 = vmatpush2.bf16.msra.mxu0 0
    %3290 = vmatprep.subr.bf16.mxu0 0
    %3291 = vmatpush2.bf16.msra.mxu0 0
    %3292 = vmatprep.mubr.bf16.mxu0 0
    %3293 = vmatmul.mubr.bf16.gmra.mxu0 %v1282
    %v3294 = vpop.f32.mrf.mxu0
    %v3295 = vadd.f32 0.0, %v3294
    %v3296 = vpop.f32.mrf.mxu0
    %v3297 = vpop.f32.mrf.mxu0
    %v3298 = vadd.f32 0.0, %v3297
    %v3299 = vpop.f32.mrf.mxu0
    %3300 = vmatprep.mubr.bf16.mxu0 0
    %3301 = vmatmul.mubr.bf16.gmra.mxu0 %v1285
    %v3302 = vpop.f32.mrf.mxu0
    %v3303 = vadd.f32 0.0, %v3302
    %v3304 = vpop.f32.mrf.mxu0
    %v3305 = vpop.f32.mrf.mxu0
    %v3306 = vpop.f32.mrf.mxu0
    %3307 = vdwg.mxu0
    %v3308 = vpack.c.bf16 %v3298, %v3295
    %v3309 = vpack.c.bf16 %v3303, %v3303
    %v3311 = vsel %vm1417, %v3308, 0
    %v3314 = vsel %vm1417, %v3309, 0
    %3316 = vmatprep.subr.bf16.mxu0 0
    %3317 = vmatpush1.bf16.msra.mxu0 0
    %3318 = vmatprep.subr.bf16.mxu0 0
    %3319 = vmatpush1.bf16.msra.mxu0 0
    %3320 = vmatprep.subr.bf16.mxu0 0
    %3321 = vmatpush1.bf16.msra.mxu0 0
    %3322 = vmatprep.subr.bf16.mxu0 0
    %3323 = vmatpush1.bf16.msra.mxu0 0
    %3324 = vmatprep.subr.bf16.mxu0 0
    %3325 = vmatpush1.bf16.msra.mxu0 0
    %3326 = vmatprep.subr.bf16.mxu0 0
    %3327 = vmatpush1.bf16.msra.mxu0 0
    %3328 = vmatprep.subr.bf16.mxu0 %v1394
    %3329 = vmatpush1.bf16.msra.mxu0 %v1393
    %3330 = vmatprep.subr.bf16.mxu0 %v1386
    %3331 = vmatpush1.bf16.msra.mxu0 %v1385
    %3332 = vmatprep.subr.bf16.mxu0 0
    %3333 = vmatpush2.bf16.msra.mxu0 0
    %3334 = vmatprep.subr.bf16.mxu0 0
    %3335 = vmatpush2.bf16.msra.mxu0 0
    %3336 = vmatprep.subr.bf16.mxu0 0
    %3337 = vmatpush2.bf16.msra.mxu0 0
    %3338 = vmatprep.subr.bf16.mxu0 0
    %3339 = vmatpush2.bf16.msra.mxu0 0
    %3340 = vmatprep.subr.bf16.mxu0 0
    %3341 = vmatpush2.bf16.msra.mxu0 0
    %3342 = vmatprep.subr.bf16.mxu0 0
    %3343 = vmatpush2.bf16.msra.mxu0 0
    %3344 = vmatprep.subr.bf16.mxu0 0
    %3345 = vmatpush2.bf16.msra.mxu0 0
    %3346 = vmatprep.subr.bf16.mxu0 0
    %3347 = vmatpush2.bf16.msra.mxu0 0
    %3348 = vmatprep.mubr.bf16.mxu0 0
    %3349 = vmatmul.mubr.bf16.gmra.mxu0 %v3311
    %v3350 = vpop.f32.mrf.mxu0
    %v3351 = vadd.f32 0.0, %v3350
    %v3352 = vpop.f32.mrf.mxu0
    %v3353 = vadd.f32 0.0, %v3352
    %v3354 = vpop.f32.mrf.mxu0
    %v3355 = vadd.f32 0.0, %v3354
    %v3356 = vpop.f32.mrf.mxu0
    %v3357 = vadd.f32 0.0, %v3356
    %3358 = vmatprep.mubr.bf16.mxu0 0
    %3359 = vmatmul.mubr.bf16.gmra.mxu0 %v3314
    %v3360 = vpop.f32.mrf.mxu0
    %v3361 = vadd.f32 0.0, %v3360
    %v3362 = vpop.f32.mrf.mxu0
    %v3363 = vadd.f32 0.0, %v3362
    %v3364 = vpop.f32.mrf.mxu0
    %v3365 = vpop.f32.mrf.mxu0
    %3366 = vdwg.mxu0
    %3367 = vmatprep.subr.bf16.mxu0 0
    %3368 = vmatpush1.bf16.msra.mxu0 0
    %3369 = vmatprep.subr.bf16.mxu0 0
    %3370 = vmatpush1.bf16.msra.mxu0 0
    %3371 = vmatprep.subr.bf16.mxu0 0
    %3372 = vmatpush1.bf16.msra.mxu0 0
    %3373 = vmatprep.subr.bf16.mxu0 0
    %3374 = vmatpush1.bf16.msra.mxu0 0
    %3375 = vmatprep.subr.bf16.mxu0 0
    %3376 = vmatpush1.bf16.msra.mxu0 0
    %3377 = vmatprep.subr.bf16.mxu0 0
    %3378 = vmatpush1.bf16.msra.mxu0 0
    %3379 = vmatprep.subr.bf16.mxu0 %v1396
    %3380 = vmatpush1.bf16.msra.mxu0 %v1395
    %3381 = vmatprep.subr.bf16.mxu0 %v1388
    %3382 = vmatpush1.bf16.msra.mxu0 %v1387
    %3383 = vmatprep.subr.bf16.mxu0 0
    %3384 = vmatpush2.bf16.msra.mxu0 0
    %3385 = vmatprep.subr.bf16.mxu0 0
    %3386 = vmatpush2.bf16.msra.mxu0 0
    %3387 = vmatprep.subr.bf16.mxu0 0
    %3388 = vmatpush2.bf16.msra.mxu0 0
    %3389 = vmatprep.subr.bf16.mxu0 0
    %3390 = vmatpush2.bf16.msra.mxu0 0
    %3391 = vmatprep.subr.bf16.mxu0 0
    %3392 = vmatpush2.bf16.msra.mxu0 0
    %3393 = vmatprep.subr.bf16.mxu0 0
    %3394 = vmatpush2.bf16.msra.mxu0 0
    %3395 = vmatprep.subr.bf16.mxu0 0
    %3396 = vmatpush2.bf16.msra.mxu0 0
    %3397 = vmatprep.subr.bf16.mxu0 0
    %3398 = vmatpush2.bf16.msra.mxu0 0
    %3399 = vmatprep.mubr.bf16.mxu0 0
    %3400 = vmatmul.mubr.bf16.gmra.mxu0 %v3311
    %v3401 = vpop.f32.mrf.mxu0
    %v3402 = vadd.f32 0.0, %v3401
    %v3403 = vpop.f32.mrf.mxu0
    %v3404 = vadd.f32 0.0, %v3403
    %v3405 = vpop.f32.mrf.mxu0
    %v3406 = vadd.f32 0.0, %v3405
    %v3407 = vpop.f32.mrf.mxu0
    %v3408 = vadd.f32 0.0, %v3407
    %3409 = vmatprep.mubr.bf16.mxu0 0
    %3410 = vmatmul.mubr.bf16.gmra.mxu0 %v3314
    %v3411 = vpop.f32.mrf.mxu0
    %v3412 = vadd.f32 0.0, %v3411
    %v3413 = vpop.f32.mrf.mxu0
    %v3414 = vadd.f32 0.0, %v3413
    %v3415 = vpop.f32.mrf.mxu0
    %v3416 = vpop.f32.mrf.mxu0
    %3417 = vdwg.mxu0
    %3418 = vmatprep.subr.bf16.mxu0 0
    %3419 = vmatpush1.bf16.msra.mxu0 0
    %3420 = vmatprep.subr.bf16.mxu0 0
    %3421 = vmatpush1.bf16.msra.mxu0 0
    %3422 = vmatprep.subr.bf16.mxu0 0
    %3423 = vmatpush1.bf16.msra.mxu0 0
    %3424 = vmatprep.subr.bf16.mxu0 0
    %3425 = vmatpush1.bf16.msra.mxu0 0
    %3426 = vmatprep.subr.bf16.mxu0 0
    %3427 = vmatpush1.bf16.msra.mxu0 0
    %3428 = vmatprep.subr.bf16.mxu0 0
    %3429 = vmatpush1.bf16.msra.mxu0 0
    %3430 = vmatprep.subr.bf16.mxu0 %v1398
    %3431 = vmatpush1.bf16.msra.mxu0 %v1397
    %3432 = vmatprep.subr.bf16.mxu0 %v1390
    %3433 = vmatpush1.bf16.msra.mxu0 %v1389
    %3434 = vmatprep.subr.bf16.mxu0 0
    %3435 = vmatpush2.bf16.msra.mxu0 0
    %3436 = vmatprep.subr.bf16.mxu0 0
    %3437 = vmatpush2.bf16.msra.mxu0 0
    %3438 = vmatprep.subr.bf16.mxu0 0
    %3439 = vmatpush2.bf16.msra.mxu0 0
    %3440 = vmatprep.subr.bf16.mxu0 0
    %3441 = vmatpush2.bf16.msra.mxu0 0
    %3442 = vmatprep.subr.bf16.mxu0 0
    %3443 = vmatpush2.bf16.msra.mxu0 0
    %3444 = vmatprep.subr.bf16.mxu0 0
    %3445 = vmatpush2.bf16.msra.mxu0 0
    %3446 = vmatprep.subr.bf16.mxu0 0
    %3447 = vmatpush2.bf16.msra.mxu0 0
    %3448 = vmatprep.subr.bf16.mxu0 0
    %3449 = vmatpush2.bf16.msra.mxu0 0
    %3450 = vmatprep.mubr.bf16.mxu0 0
    %3451 = vmatmul.mubr.bf16.gmra.mxu0 %v3311
    %v3452 = vpop.f32.mrf.mxu0
    %v3453 = vadd.f32 0.0, %v3452
    %v3454 = vpop.f32.mrf.mxu0
    %v3455 = vadd.f32 0.0, %v3454
    %v3456 = vpop.f32.mrf.mxu0
    %v3457 = vadd.f32 0.0, %v3456
    %v3458 = vpop.f32.mrf.mxu0
    %v3459 = vadd.f32 0.0, %v3458
    %3460 = vmatprep.mubr.bf16.mxu0 0
    %3461 = vmatmul.mubr.bf16.gmra.mxu0 %v3314
    %v3462 = vpop.f32.mrf.mxu0
    %v3463 = vadd.f32 0.0, %v3462
    %v3464 = vpop.f32.mrf.mxu0
    %v3465 = vadd.f32 0.0, %v3464
    %v3466 = vpop.f32.mrf.mxu0
    %v3467 = vpop.f32.mrf.mxu0
    %3468 = vdwg.mxu0
    %3469 = vmatprep.subr.bf16.mxu0 0
    %3470 = vmatpush1.bf16.msra.mxu0 0
    %3471 = vmatprep.subr.bf16.mxu0 0
    %3472 = vmatpush1.bf16.msra.mxu0 0
    %3473 = vmatprep.subr.bf16.mxu0 0
    %3474 = vmatpush1.bf16.msra.mxu0 0
    %3475 = vmatprep.subr.bf16.mxu0 0
    %3476 = vmatpush1.bf16.msra.mxu0 0
    %3477 = vmatprep.subr.bf16.mxu0 0
    %3478 = vmatpush1.bf16.msra.mxu0 0
    %3479 = vmatprep.subr.bf16.mxu0 0
    %3480 = vmatpush1.bf16.msra.mxu0 0
    %3481 = vmatprep.subr.bf16.mxu0 %v1400
    %3482 = vmatpush1.bf16.msra.mxu0 %v1399
    %3483 = vmatprep.subr.bf16.mxu0 %v1392
    %3484 = vmatpush1.bf16.msra.mxu0 %v1391
    %3485 = vmatprep.subr.bf16.mxu0 0
    %3486 = vmatpush2.bf16.msra.mxu0 0
    %3487 = vmatprep.subr.bf16.mxu0 0
    %3488 = vmatpush2.bf16.msra.mxu0 0
    %3489 = vmatprep.subr.bf16.mxu0 0
    %3490 = vmatpush2.bf16.msra.mxu0 0
    %3491 = vmatprep.subr.bf16.mxu0 0
    %3492 = vmatpush2.bf16.msra.mxu0 0
    %3493 = vmatprep.subr.bf16.mxu0 0
    %3494 = vmatpush2.bf16.msra.mxu0 0
    %3495 = vmatprep.subr.bf16.mxu0 0
    %3496 = vmatpush2.bf16.msra.mxu0 0
    %3497 = vmatprep.subr.bf16.mxu0 0
    %3498 = vmatpush2.bf16.msra.mxu0 0
    %3499 = vmatprep.subr.bf16.mxu0 0
    %3500 = vmatpush2.bf16.msra.mxu0 0
    %3501 = vmatprep.mubr.bf16.mxu0 0
    %3502 = vmatmul.mubr.bf16.gmra.mxu0 %v3311
    %v3503 = vpop.f32.mrf.mxu0
    %v3504 = vadd.f32 0.0, %v3503
    %v3505 = vpop.f32.mrf.mxu0
    %v3506 = vadd.f32 0.0, %v3505
    %v3507 = vpop.f32.mrf.mxu0
    %v3508 = vadd.f32 0.0, %v3507
    %v3509 = vpop.f32.mrf.mxu0
    %v3510 = vadd.f32 0.0, %v3509
    %3511 = vmatprep.mubr.bf16.mxu0 0
    %3512 = vmatmul.mubr.bf16.gmra.mxu0 %v3314
    %v3513 = vpop.f32.mrf.mxu0
    %v3514 = vadd.f32 0.0, %v3513
    %v3515 = vpop.f32.mrf.mxu0
    %v3516 = vadd.f32 0.0, %v3515
    %v3517 = vpop.f32.mrf.mxu0
    %v3518 = vpop.f32.mrf.mxu0
    %3519 = vdwg.mxu0
    %v3520 = vmul.f32 %v572, %v3351
    %v3521 = vmul.f32 %v574, %v3353
    %v3522 = vmul.f32 %v623, %v3402
    %v3523 = vmul.f32 %v625, %v3404
    %v3524 = vmul.f32 %v674, %v3453
    %v3525 = vmul.f32 %v676, %v3455
    %v3526 = vmul.f32 %v725, %v3504
    %v3527 = vmul.f32 %v727, %v3506
    %v3528 = vmul.f32 %v576, %v3355
    %v3529 = vmul.f32 %v578, %v3357
    %v3530 = vmul.f32 %v627, %v3406
    %v3531 = vmul.f32 %v629, %v3408
    %v3532 = vmul.f32 %v678, %v3457
    %v3533 = vmul.f32 %v680, %v3459
    %v3534 = vmul.f32 %v729, %v3508
    %v3535 = vmul.f32 %v731, %v3510
    %v3536 = vmul.f32 %v582, %v3361
    %v3537 = vmul.f32 %v584, %v3363
    %v3538 = vmul.f32 %v633, %v3412
    %v3539 = vmul.f32 %v635, %v3414
    %v3540 = vmul.f32 %v684, %v3463
    %v3541 = vmul.f32 %v686, %v3465
    %v3542 = vmul.f32 %v735, %v3514
    %v3543 = vmul.f32 %v737, %v3516
    %v3544 = vpack.c.bf16 %v3528, %v3520
    %v3545 = vpack.c.bf16 %v3529, %v3521
    %v3546 = vpack.c.bf16 %v3530, %v3522
    %v3547 = vpack.c.bf16 %v3531, %v3523
    %v3548 = vpack.c.bf16 %v3532, %v3524
    %v3549 = vpack.c.bf16 %v3533, %v3525
    %v3550 = vpack.c.bf16 %v3534, %v3526
    %v3551 = vpack.c.bf16 %v3535, %v3527
    %v3552 = vpack.c.bf16 %v3536, %v3536
    %v3553 = vpack.c.bf16 %v3537, %v3537
    %v3554 = vpack.c.bf16 %v3538, %v3538
    %v3555 = vpack.c.bf16 %v3539, %v3539
    %v3556 = vpack.c.bf16 %v3540, %v3540
    %v3557 = vpack.c.bf16 %v3541, %v3541
    %v3558 = vpack.c.bf16 %v3542, %v3542
    %v3559 = vpack.c.bf16 %v3543, %v3543
    %3560 = vmatprep.subr.bf16.mxu0 0
    %3561 = vmatpush1.bf16.msra.mxu0 %v1931
    %3562 = vmatprep.subr.bf16.mxu0 0
    %3563 = vmatpush1.bf16.msra.mxu0 %v1930
    %3564 = vmatprep.subr.bf16.mxu0 0
    %3565 = vmatpush1.bf16.msra.mxu0 %v1929
    %3566 = vmatprep.subr.bf16.mxu0 0
    %3567 = vmatpush1.bf16.msra.mxu0 %v1928
    %3568 = vmatprep.subr.bf16.mxu0 0
    %3569 = vmatpush1.bf16.msra.mxu0 %v1927
    %3570 = vmatprep.subr.bf16.mxu0 0
    %3571 = vmatpush1.bf16.msra.mxu0 %v1926
    %3572 = vmatprep.subr.bf16.mxu0 0
    %3573 = vmatpush1.bf16.msra.mxu0 %v1925
    %3574 = vmatprep.subr.bf16.mxu0 0
    %3575 = vmatpush1.bf16.msra.mxu0 %v1924
    %3576 = vmatprep.subr.bf16.mxu0 0
    %3577 = vmatpush2.bf16.msra.mxu0 %v1939
    %3578 = vmatprep.subr.bf16.mxu0 0
    %3579 = vmatpush2.bf16.msra.mxu0 %v1938
    %3580 = vmatprep.subr.bf16.mxu0 0
    %3581 = vmatpush2.bf16.msra.mxu0 %v1937
    %3582 = vmatprep.subr.bf16.mxu0 0
    %3583 = vmatpush2.bf16.msra.mxu0 %v1936
    %3584 = vmatprep.subr.bf16.mxu0 0
    %3585 = vmatpush2.bf16.msra.mxu0 %v1935
    %3586 = vmatprep.subr.bf16.mxu0 0
    %3587 = vmatpush2.bf16.msra.mxu0 %v1934
    %3588 = vmatprep.subr.bf16.mxu0 0
    %3589 = vmatpush2.bf16.msra.mxu0 %v1933
    %3590 = vmatprep.subr.bf16.mxu0 0
    %3591 = vmatpush2.bf16.msra.mxu0 %v1932
    %3592 = vmatprep.mubr.bf16.mxu0 %v3545
    %3593 = vmatmul.mubr.bf16.gmra.mxu0 %v3544
    %v3594 = vpop.f32.mrf.mxu0
    %v3595 = vadd.f32 0.0, %v3594
    %v3596 = vpop.f32.mrf.mxu0
    %v3597 = vpop.f32.mrf.mxu0
    %v3598 = vadd.f32 0.0, %v3597
    %v3599 = vpop.f32.mrf.mxu0
    %3600 = vmatprep.mubr.bf16.mxu0 %v3553
    %3601 = vmatmul.mubr.bf16.gmra.mxu0 %v3552
    %v3602 = vpop.f32.mrf.mxu0
    %v3603 = vadd.f32 0.0, %v3602
    %v3604 = vpop.f32.mrf.mxu0
    %v3605 = vpop.f32.mrf.mxu0
    %v3606 = vpop.f32.mrf.mxu0
    %3607 = vdwg.mxu0
    %3608 = vmatprep.subr.bf16.mxu0 0
    %3609 = vmatpush1.bf16.msra.mxu0 %v1947
    %3610 = vmatprep.subr.bf16.mxu0 0
    %3611 = vmatpush1.bf16.msra.mxu0 %v1946
    %3612 = vmatprep.subr.bf16.mxu0 0
    %3613 = vmatpush1.bf16.msra.mxu0 %v1945
    %3614 = vmatprep.subr.bf16.mxu0 0
    %3615 = vmatpush1.bf16.msra.mxu0 %v1944
    %3616 = vmatprep.subr.bf16.mxu0 0
    %3617 = vmatpush1.bf16.msra.mxu0 %v1943
    %3618 = vmatprep.subr.bf16.mxu0 0
    %3619 = vmatpush1.bf16.msra.mxu0 %v1942
    %3620 = vmatprep.subr.bf16.mxu0 0
    %3621 = vmatpush1.bf16.msra.mxu0 %v1941
    %3622 = vmatprep.subr.bf16.mxu0 0
    %3623 = vmatpush1.bf16.msra.mxu0 %v1940
    %3624 = vmatprep.subr.bf16.mxu0 0
    %3625 = vmatpush2.bf16.msra.mxu0 %v1955
    %3626 = vmatprep.subr.bf16.mxu0 0
    %3627 = vmatpush2.bf16.msra.mxu0 %v1954
    %3628 = vmatprep.subr.bf16.mxu0 0
    %3629 = vmatpush2.bf16.msra.mxu0 %v1953
    %3630 = vmatprep.subr.bf16.mxu0 0
    %3631 = vmatpush2.bf16.msra.mxu0 %v1952
    %3632 = vmatprep.subr.bf16.mxu0 0
    %3633 = vmatpush2.bf16.msra.mxu0 %v1951
    %3634 = vmatprep.subr.bf16.mxu0 0
    %3635 = vmatpush2.bf16.msra.mxu0 %v1950
    %3636 = vmatprep.subr.bf16.mxu0 0
    %3637 = vmatpush2.bf16.msra.mxu0 %v1949
    %3638 = vmatprep.subr.bf16.mxu0 0
    %3639 = vmatpush2.bf16.msra.mxu0 %v1948
    %3640 = vmatprep.mubr.bf16.mxu0 %v3547
    %3641 = vmatmul.mubr.bf16.gmra.mxu0 %v3546
    %v3642 = vpop.f32.mrf.mxu0
    %v3643 = vadd.f32 %v3595, %v3642
    %v3644 = vpop.f32.mrf.mxu0
    %v3645 = vpop.f32.mrf.mxu0
    %v3646 = vadd.f32 %v3598, %v3645
    %v3647 = vpop.f32.mrf.mxu0
    %3648 = vmatprep.mubr.bf16.mxu0 %v3555
    %3649 = vmatmul.mubr.bf16.gmra.mxu0 %v3554
    %v3650 = vpop.f32.mrf.mxu0
    %v3651 = vadd.f32 %v3603, %v3650
    %v3652 = vpop.f32.mrf.mxu0
    %v3653 = vpop.f32.mrf.mxu0
    %v3654 = vpop.f32.mrf.mxu0
    %3655 = vdwg.mxu0
    %3656 = vmatprep.subr.bf16.mxu0 0
    %3657 = vmatpush1.bf16.msra.mxu0 %v1963
    %3658 = vmatprep.subr.bf16.mxu0 0
    %3659 = vmatpush1.bf16.msra.mxu0 %v1962
    %3660 = vmatprep.subr.bf16.mxu0 0
    %3661 = vmatpush1.bf16.msra.mxu0 %v1961
    %3662 = vmatprep.subr.bf16.mxu0 0
    %3663 = vmatpush1.bf16.msra.mxu0 %v1960
    %3664 = vmatprep.subr.bf16.mxu0 0
    %3665 = vmatpush1.bf16.msra.mxu0 %v1959
    %3666 = vmatprep.subr.bf16.mxu0 0
    %3667 = vmatpush1.bf16.msra.mxu0 %v1958
    %3668 = vmatprep.subr.bf16.mxu0 0
    %3669 = vmatpush1.bf16.msra.mxu0 %v1957
    %3670 = vmatprep.subr.bf16.mxu0 0
    %3671 = vmatpush1.bf16.msra.mxu0 %v1956
    %3672 = vmatprep.subr.bf16.mxu0 0
    %3673 = vmatpush2.bf16.msra.mxu0 %v1971
    %3674 = vmatprep.subr.bf16.mxu0 0
    %3675 = vmatpush2.bf16.msra.mxu0 %v1970
    %3676 = vmatprep.subr.bf16.mxu0 0
    %3677 = vmatpush2.bf16.msra.mxu0 %v1969
    %3678 = vmatprep.subr.bf16.mxu0 0
    %3679 = vmatpush2.bf16.msra.mxu0 %v1968
    %3680 = vmatprep.subr.bf16.mxu0 0
    %3681 = vmatpush2.bf16.msra.mxu0 %v1967
    %3682 = vmatprep.subr.bf16.mxu0 0
    %3683 = vmatpush2.bf16.msra.mxu0 %v1966
    %3684 = vmatprep.subr.bf16.mxu0 0
    %3685 = vmatpush2.bf16.msra.mxu0 %v1965
    %3686 = vmatprep.subr.bf16.mxu0 0
    %3687 = vmatpush2.bf16.msra.mxu0 %v1964
    %3688 = vmatprep.mubr.bf16.mxu0 %v3549
    %3689 = vmatmul.mubr.bf16.gmra.mxu0 %v3548
    %v3690 = vpop.f32.mrf.mxu0
    %v3691 = vadd.f32 %v3643, %v3690
    %v3692 = vpop.f32.mrf.mxu0
    %v3693 = vpop.f32.mrf.mxu0
    %v3694 = vadd.f32 %v3646, %v3693
    %v3695 = vpop.f32.mrf.mxu0
    %3696 = vmatprep.mubr.bf16.mxu0 %v3557
    %3697 = vmatmul.mubr.bf16.gmra.mxu0 %v3556
    %v3698 = vpop.f32.mrf.mxu0
    %v3699 = vadd.f32 %v3651, %v3698
    %v3700 = vpop.f32.mrf.mxu0
    %v3701 = vpop.f32.mrf.mxu0
    %v3702 = vpop.f32.mrf.mxu0
    %3703 = vdwg.mxu0
    %3704 = vmatprep.subr.bf16.mxu0 0
    %3705 = vmatpush1.bf16.msra.mxu0 %v1979
    %3706 = vmatprep.subr.bf16.mxu0 0
    %3707 = vmatpush1.bf16.msra.mxu0 %v1978
    %3708 = vmatprep.subr.bf16.mxu0 0
    %3709 = vmatpush1.bf16.msra.mxu0 %v1977
    %3710 = vmatprep.subr.bf16.mxu0 0
    %3711 = vmatpush1.bf16.msra.mxu0 %v1976
    %3712 = vmatprep.subr.bf16.mxu0 0
    %3713 = vmatpush1.bf16.msra.mxu0 %v1975
    %3714 = vmatprep.subr.bf16.mxu0 0
    %3715 = vmatpush1.bf16.msra.mxu0 %v1974
    %3716 = vmatprep.subr.bf16.mxu0 0
    %3717 = vmatpush1.bf16.msra.mxu0 %v1973
    %3718 = vmatprep.subr.bf16.mxu0 0
    %3719 = vmatpush1.bf16.msra.mxu0 %v1972
    %3720 = vmatprep.subr.bf16.mxu0 0
    %3721 = vmatpush2.bf16.msra.mxu0 %v1987
    %3722 = vmatprep.subr.bf16.mxu0 0
    %3723 = vmatpush2.bf16.msra.mxu0 %v1986
    %3724 = vmatprep.subr.bf16.mxu0 0
    %3725 = vmatpush2.bf16.msra.mxu0 %v1985
    %3726 = vmatprep.subr.bf16.mxu0 0
    %3727 = vmatpush2.bf16.msra.mxu0 %v1984
    %3728 = vmatprep.subr.bf16.mxu0 0
    %3729 = vmatpush2.bf16.msra.mxu0 %v1983
    %3730 = vmatprep.subr.bf16.mxu0 0
    %3731 = vmatpush2.bf16.msra.mxu0 %v1982
    %3732 = vmatprep.subr.bf16.mxu0 0
    %3733 = vmatpush2.bf16.msra.mxu0 %v1981
    %3734 = vmatprep.subr.bf16.mxu0 0
    %3735 = vmatpush2.bf16.msra.mxu0 %v1980
    %3736 = vmatprep.mubr.bf16.mxu0 %v3551
    %3737 = vmatmul.mubr.bf16.gmra.mxu0 %v3550
    %v3738 = vpop.f32.mrf.mxu0
    %v3739 = vadd.f32 %v3691, %v3738
    %v3740 = vpop.f32.mrf.mxu0
    %v3741 = vpop.f32.mrf.mxu0
    %v3742 = vadd.f32 %v3694, %v3741
    %v3743 = vpop.f32.mrf.mxu0
    %3744 = vmatprep.mubr.bf16.mxu0 %v3559
    %3745 = vmatmul.mubr.bf16.gmra.mxu0 %v3558
    %v3746 = vpop.f32.mrf.mxu0
    %v3747 = vadd.f32 %v3699, %v3746
    %v3748 = vpop.f32.mrf.mxu0
    %v3749 = vpop.f32.mrf.mxu0
    %v3750 = vpop.f32.mrf.mxu0
    %3751 = vdwg.mxu0
    %v3752 = vpack.c.bf16 %v3742, %v3739
    %v3753 = vpack.c.bf16 %v3747, %v3747
    %v3755 = vsel %vm512, %v3753, 0
    %3757 = vmatprep.subr.bf16.mxu0 0
    %3758 = vmatpush1.bf16.msra.mxu0 0
    %3759 = vmatprep.subr.bf16.mxu0 0
    %3760 = vmatpush1.bf16.msra.mxu0 0
    %3761 = vmatprep.subr.bf16.mxu0 0
    %3762 = vmatpush1.bf16.msra.mxu0 0
    %3763 = vmatprep.subr.bf16.mxu0 0
    %3764 = vmatpush1.bf16.msra.mxu0 0
    %3765 = vmatprep.subr.bf16.mxu0 0
    %3766 = vmatpush1.bf16.msra.mxu0 0
    %3767 = vmatprep.subr.bf16.mxu0 0
    %3768 = vmatpush1.bf16.msra.mxu0 0
    %3769 = vmatprep.subr.bf16.mxu0 0
    %3770 = vmatpush1.bf16.msra.mxu0 %v3755
    %3771 = vmatprep.subr.bf16.mxu0 0
    %3772 = vmatpush1.bf16.msra.mxu0 %v3752
    %3773 = vmatprep.subr.bf16.mxu0 0
    %3774 = vmatpush2.bf16.msra.mxu0 0
    %3775 = vmatprep.subr.bf16.mxu0 0
    %3776 = vmatpush2.bf16.msra.mxu0 0
    %3777 = vmatprep.subr.bf16.mxu0 0
    %3778 = vmatpush2.bf16.msra.mxu0 0
    %3779 = vmatprep.subr.bf16.mxu0 0
    %3780 = vmatpush2.bf16.msra.mxu0 0
    %3781 = vmatprep.subr.bf16.mxu0 0
    %3782 = vmatpush2.bf16.msra.mxu0 0
    %3783 = vmatprep.subr.bf16.mxu0 0
    %3784 = vmatpush2.bf16.msra.mxu0 0
    %3785 = vmatprep.subr.bf16.mxu0 0
    %3786 = vmatpush2.bf16.msra.mxu0 0
    %3787 = vmatprep.subr.bf16.mxu0 0
    %3788 = vmatpush2.bf16.msra.mxu0 0
    %3789 = vmatprep.mubr.bf16.mxu0 0
    %3790 = vmatmul.mubr.bf16.gmra.mxu0 %v2248
    %v3791 = vpop.f32.mrf.mxu0
    %v3792 = vadd.f32 0.0, %v3791
    %v3793 = vpop.f32.mrf.mxu0
    %v3794 = vpop.f32.mrf.mxu0
    %v3795 = vadd.f32 0.0, %v3794
    %v3796 = vpop.f32.mrf.mxu0
    %3797 = vdwg.mxu0
    %v3798 = vpack.c.bf16 %v3795, %v3792
    %v3800 = vsel %vm1417, %v3798, 0
    %3802 = vmatprep.subr.bf16.mxu0 0
    %3803 = vmatpush1.bf16.msra.mxu0 0
    %3804 = vmatprep.subr.bf16.mxu0 0
    %3805 = vmatpush1.bf16.msra.mxu0 0
    %3806 = vmatprep.subr.bf16.mxu0 0
    %3807 = vmatpush1.bf16.msra.mxu0 0
    %3808 = vmatprep.subr.bf16.mxu0 0
    %3809 = vmatpush1.bf16.msra.mxu0 0
    %3810 = vmatprep.subr.bf16.mxu0 0
    %3811 = vmatpush1.bf16.msra.mxu0 0
    %3812 = vmatprep.subr.bf16.mxu0 0
    %3813 = vmatpush1.bf16.msra.mxu0 0
    %3814 = vmatprep.subr.bf16.mxu0 %v1394
    %3815 = vmatpush1.bf16.msra.mxu0 %v1393
    %3816 = vmatprep.subr.bf16.mxu0 %v1386
    %3817 = vmatpush1.bf16.msra.mxu0 %v1385
    %3818 = vmatprep.subr.bf16.mxu0 0
    %3819 = vmatpush2.bf16.msra.mxu0 0
    %3820 = vmatprep.subr.bf16.mxu0 0
    %3821 = vmatpush2.bf16.msra.mxu0 0
    %3822 = vmatprep.subr.bf16.mxu0 0
    %3823 = vmatpush2.bf16.msra.mxu0 0
    %3824 = vmatprep.subr.bf16.mxu0 0
    %3825 = vmatpush2.bf16.msra.mxu0 0
    %3826 = vmatprep.subr.bf16.mxu0 0
    %3827 = vmatpush2.bf16.msra.mxu0 0
    %3828 = vmatprep.subr.bf16.mxu0 0
    %3829 = vmatpush2.bf16.msra.mxu0 0
    %3830 = vmatprep.subr.bf16.mxu0 0
    %3831 = vmatpush2.bf16.msra.mxu0 0
    %3832 = vmatprep.subr.bf16.mxu0 0
    %3833 = vmatpush2.bf16.msra.mxu0 0
    %3834 = vmatprep.mubr.bf16.mxu0 0
    %3835 = vmatmul.mubr.bf16.gmra.mxu0 %v3800
    %v3836 = vpop.f32.mrf.mxu0
    %v3837 = vadd.f32 0.0, %v3836
    %v3838 = vpop.f32.mrf.mxu0
    %v3839 = vadd.f32 0.0, %v3838
    %v3840 = vpop.f32.mrf.mxu0
    %v3841 = vadd.f32 0.0, %v3840
    %v3842 = vpop.f32.mrf.mxu0
    %v3843 = vadd.f32 0.0, %v3842
    %3844 = vdwg.mxu0
    %3845 = vmatprep.subr.bf16.mxu0 0
    %3846 = vmatpush1.bf16.msra.mxu0 0
    %3847 = vmatprep.subr.bf16.mxu0 0
    %3848 = vmatpush1.bf16.msra.mxu0 0
    %3849 = vmatprep.subr.bf16.mxu0 0
    %3850 = vmatpush1.bf16.msra.mxu0 0
    %3851 = vmatprep.subr.bf16.mxu0 0
    %3852 = vmatpush1.bf16.msra.mxu0 0
    %3853 = vmatprep.subr.bf16.mxu0 0
    %3854 = vmatpush1.bf16.msra.mxu0 0
    %3855 = vmatprep.subr.bf16.mxu0 0
    %3856 = vmatpush1.bf16.msra.mxu0 0
    %3857 = vmatprep.subr.bf16.mxu0 %v1396
    %3858 = vmatpush1.bf16.msra.mxu0 %v1395
    %3859 = vmatprep.subr.bf16.mxu0 %v1388
    %3860 = vmatpush1.bf16.msra.mxu0 %v1387
    %3861 = vmatprep.subr.bf16.mxu0 0
    %3862 = vmatpush2.bf16.msra.mxu0 0
    %3863 = vmatprep.subr.bf16.mxu0 0
    %3864 = vmatpush2.bf16.msra.mxu0 0
    %3865 = vmatprep.subr.bf16.mxu0 0
    %3866 = vmatpush2.bf16.msra.mxu0 0
    %3867 = vmatprep.subr.bf16.mxu0 0
    %3868 = vmatpush2.bf16.msra.mxu0 0
    %3869 = vmatprep.subr.bf16.mxu0 0
    %3870 = vmatpush2.bf16.msra.mxu0 0
    %3871 = vmatprep.subr.bf16.mxu0 0
    %3872 = vmatpush2.bf16.msra.mxu0 0
    %3873 = vmatprep.subr.bf16.mxu0 0
    %3874 = vmatpush2.bf16.msra.mxu0 0
    %3875 = vmatprep.subr.bf16.mxu0 0
    %3876 = vmatpush2.bf16.msra.mxu0 0
    %3877 = vmatprep.mubr.bf16.mxu0 0
    %3878 = vmatmul.mubr.bf16.gmra.mxu0 %v3800
    %v3879 = vpop.f32.mrf.mxu0
    %v3880 = vadd.f32 0.0, %v3879
    %v3881 = vpop.f32.mrf.mxu0
    %v3882 = vadd.f32 0.0, %v3881
    %v3883 = vpop.f32.mrf.mxu0
    %v3884 = vadd.f32 0.0, %v3883
    %v3885 = vpop.f32.mrf.mxu0
    %v3886 = vadd.f32 0.0, %v3885
    %3887 = vdwg.mxu0
    %3888 = vmatprep.subr.bf16.mxu0 0
    %3889 = vmatpush1.bf16.msra.mxu0 0
    %3890 = vmatprep.subr.bf16.mxu0 0
    %3891 = vmatpush1.bf16.msra.mxu0 0
    %3892 = vmatprep.subr.bf16.mxu0 0
    %3893 = vmatpush1.bf16.msra.mxu0 0
    %3894 = vmatprep.subr.bf16.mxu0 0
    %3895 = vmatpush1.bf16.msra.mxu0 0
    %3896 = vmatprep.subr.bf16.mxu0 0
    %3897 = vmatpush1.bf16.msra.mxu0 0
    %3898 = vmatprep.subr.bf16.mxu0 0
    %3899 = vmatpush1.bf16.msra.mxu0 0
    %3900 = vmatprep.subr.bf16.mxu0 %v1398
    %3901 = vmatpush1.bf16.msra.mxu0 %v1397
    %3902 = vmatprep.subr.bf16.mxu0 %v1390
    %3903 = vmatpush1.bf16.msra.mxu0 %v1389
    %3904 = vmatprep.subr.bf16.mxu0 0
    %3905 = vmatpush2.bf16.msra.mxu0 0
    %3906 = vmatprep.subr.bf16.mxu0 0
    %3907 = vmatpush2.bf16.msra.mxu0 0
    %3908 = vmatprep.subr.bf16.mxu0 0
    %3909 = vmatpush2.bf16.msra.mxu0 0
    %3910 = vmatprep.subr.bf16.mxu0 0
    %3911 = vmatpush2.bf16.msra.mxu0 0
    %3912 = vmatprep.subr.bf16.mxu0 0
    %3913 = vmatpush2.bf16.msra.mxu0 0
    %3914 = vmatprep.subr.bf16.mxu0 0
    %3915 = vmatpush2.bf16.msra.mxu0 0
    %3916 = vmatprep.subr.bf16.mxu0 0
    %3917 = vmatpush2.bf16.msra.mxu0 0
    %3918 = vmatprep.subr.bf16.mxu0 0
    %3919 = vmatpush2.bf16.msra.mxu0 0
    %3920 = vmatprep.mubr.bf16.mxu0 0
    %3921 = vmatmul.mubr.bf16.gmra.mxu0 %v3800
    %v3922 = vpop.f32.mrf.mxu0
    %v3923 = vadd.f32 0.0, %v3922
    %v3924 = vpop.f32.mrf.mxu0
    %v3925 = vadd.f32 0.0, %v3924
    %v3926 = vpop.f32.mrf.mxu0
    %v3927 = vadd.f32 0.0, %v3926
    %v3928 = vpop.f32.mrf.mxu0
    %v3929 = vadd.f32 0.0, %v3928
    %3930 = vdwg.mxu0
    %3931 = vmatprep.subr.bf16.mxu0 0
    %3932 = vmatpush1.bf16.msra.mxu0 0
    %3933 = vmatprep.subr.bf16.mxu0 0
    %3934 = vmatpush1.bf16.msra.mxu0 0
    %3935 = vmatprep.subr.bf16.mxu0 0
    %3936 = vmatpush1.bf16.msra.mxu0 0
    %3937 = vmatprep.subr.bf16.mxu0 0
    %3938 = vmatpush1.bf16.msra.mxu0 0
    %3939 = vmatprep.subr.bf16.mxu0 0
    %3940 = vmatpush1.bf16.msra.mxu0 0
    %3941 = vmatprep.subr.bf16.mxu0 0
    %3942 = vmatpush1.bf16.msra.mxu0 0
    %3943 = vmatprep.subr.bf16.mxu0 %v1400
    %3944 = vmatpush1.bf16.msra.mxu0 %v1399
    %3945 = vmatprep.subr.bf16.mxu0 %v1392
    %3946 = vmatpush1.bf16.msra.mxu0 %v1391
    %3947 = vmatprep.subr.bf16.mxu0 0
    %3948 = vmatpush2.bf16.msra.mxu0 0
    %3949 = vmatprep.subr.bf16.mxu0 0
    %3950 = vmatpush2.bf16.msra.mxu0 0
    %3951 = vmatprep.subr.bf16.mxu0 0
    %3952 = vmatpush2.bf16.msra.mxu0 0
    %3953 = vmatprep.subr.bf16.mxu0 0
    %3954 = vmatpush2.bf16.msra.mxu0 0
    %3955 = vmatprep.subr.bf16.mxu0 0
    %3956 = vmatpush2.bf16.msra.mxu0 0
    %3957 = vmatprep.subr.bf16.mxu0 0
    %3958 = vmatpush2.bf16.msra.mxu0 0
    %3959 = vmatprep.subr.bf16.mxu0 0
    %3960 = vmatpush2.bf16.msra.mxu0 0
    %3961 = vmatprep.subr.bf16.mxu0 0
    %3962 = vmatpush2.bf16.msra.mxu0 0
    %3963 = vmatprep.mubr.bf16.mxu0 0
    %3964 = vmatmul.mubr.bf16.gmra.mxu0 %v3800
    %v3965 = vpop.f32.mrf.mxu0
    %v3966 = vadd.f32 0.0, %v3965
    %v3967 = vpop.f32.mrf.mxu0
    %v3968 = vadd.f32 0.0, %v3967
    %v3969 = vpop.f32.mrf.mxu0
    %v3970 = vadd.f32 0.0, %v3969
    %v3971 = vpop.f32.mrf.mxu0
    %v3972 = vadd.f32 0.0, %v3971
    %3973 = vdwg.mxu0
    %v3974 = vmul.f32 %v866, %v3837
    %v3975 = vmul.f32 %v868, %v3839
    %v3976 = vmul.f32 %v909, %v3880
    %v3977 = vmul.f32 %v911, %v3882
    %v3978 = vmul.f32 %v952, %v3923
    %v3979 = vmul.f32 %v954, %v3925
    %v3980 = vmul.f32 %v995, %v3966
    %v3981 = vmul.f32 %v997, %v3968
    %v3982 = vmul.f32 %v870, %v3841
    %v3983 = vmul.f32 %v872, %v3843
    %v3984 = vmul.f32 %v913, %v3884
    %v3985 = vmul.f32 %v915, %v3886
    %v3986 = vmul.f32 %v956, %v3927
    %v3987 = vmul.f32 %v958, %v3929
    %v3988 = vmul.f32 %v999, %v3970
    %v3989 = vmul.f32 %v1001, %v3972
    %v3990 = vpack.c.bf16 %v3982, %v3974
    %v3991 = vpack.c.bf16 %v3983, %v3975
    %v3992 = vpack.c.bf16 %v3984, %v3976
    %v3993 = vpack.c.bf16 %v3985, %v3977
    %v3994 = vpack.c.bf16 %v3986, %v3978
    %v3995 = vpack.c.bf16 %v3987, %v3979
    %v3996 = vpack.c.bf16 %v3988, %v3980
    %v3997 = vpack.c.bf16 %v3989, %v3981
    %3998 = vmatprep.subr.bf16.mxu0 0
    %3999 = vmatpush1.bf16.msra.mxu0 %v1931
    %4000 = vmatprep.subr.bf16.mxu0 0
    %4001 = vmatpush1.bf16.msra.mxu0 %v1930
    %4002 = vmatprep.subr.bf16.mxu0 0
    %4003 = vmatpush1.bf16.msra.mxu0 %v1929
    %4004 = vmatprep.subr.bf16.mxu0 0
    %4005 = vmatpush1.bf16.msra.mxu0 %v1928
    %4006 = vmatprep.subr.bf16.mxu0 0
    %4007 = vmatpush1.bf16.msra.mxu0 %v1927
    %4008 = vmatprep.subr.bf16.mxu0 0
    %4009 = vmatpush1.bf16.msra.mxu0 %v1926
    %4010 = vmatprep.subr.bf16.mxu0 0
    %4011 = vmatpush1.bf16.msra.mxu0 %v1925
    %4012 = vmatprep.subr.bf16.mxu0 0
    %4013 = vmatpush1.bf16.msra.mxu0 %v1924
    %4014 = vmatprep.subr.bf16.mxu0 0
    %4015 = vmatpush2.bf16.msra.mxu0 %v1939
    %4016 = vmatprep.subr.bf16.mxu0 0
    %4017 = vmatpush2.bf16.msra.mxu0 %v1938
    %4018 = vmatprep.subr.bf16.mxu0 0
    %4019 = vmatpush2.bf16.msra.mxu0 %v1937
    %4020 = vmatprep.subr.bf16.mxu0 0
    %4021 = vmatpush2.bf16.msra.mxu0 %v1936
    %4022 = vmatprep.subr.bf16.mxu0 0
    %4023 = vmatpush2.bf16.msra.mxu0 %v1935
    %4024 = vmatprep.subr.bf16.mxu0 0
    %4025 = vmatpush2.bf16.msra.mxu0 %v1934
    %4026 = vmatprep.subr.bf16.mxu0 0
    %4027 = vmatpush2.bf16.msra.mxu0 %v1933
    %4028 = vmatprep.subr.bf16.mxu0 0
    %4029 = vmatpush2.bf16.msra.mxu0 %v1932
    %4030 = vmatprep.mubr.bf16.mxu0 %v3991
    %4031 = vmatmul.mubr.bf16.gmra.mxu0 %v3990
    %v4032 = vpop.f32.mrf.mxu0
    %v4033 = vadd.f32 0.0, %v4032
    %v4034 = vpop.f32.mrf.mxu0
    %v4035 = vpop.f32.mrf.mxu0
    %v4036 = vadd.f32 0.0, %v4035
    %v4037 = vpop.f32.mrf.mxu0
    %4038 = vdwg.mxu0
    %4039 = vmatprep.subr.bf16.mxu0 0
    %4040 = vmatpush1.bf16.msra.mxu0 %v1947
    %4041 = vmatprep.subr.bf16.mxu0 0
    %4042 = vmatpush1.bf16.msra.mxu0 %v1946
    %4043 = vmatprep.subr.bf16.mxu0 0
    %4044 = vmatpush1.bf16.msra.mxu0 %v1945
    %4045 = vmatprep.subr.bf16.mxu0 0
    %4046 = vmatpush1.bf16.msra.mxu0 %v1944
    %4047 = vmatprep.subr.bf16.mxu0 0
    %4048 = vmatpush1.bf16.msra.mxu0 %v1943
    %4049 = vmatprep.subr.bf16.mxu0 0
    %4050 = vmatpush1.bf16.msra.mxu0 %v1942
    %4051 = vmatprep.subr.bf16.mxu0 0
    %4052 = vmatpush1.bf16.msra.mxu0 %v1941
    %4053 = vmatprep.subr.bf16.mxu0 0
    %4054 = vmatpush1.bf16.msra.mxu0 %v1940
    %4055 = vmatprep.subr.bf16.mxu0 0
    %4056 = vmatpush2.bf16.msra.mxu0 %v1955
    %4057 = vmatprep.subr.bf16.mxu0 0
    %4058 = vmatpush2.bf16.msra.mxu0 %v1954
    %4059 = vmatprep.subr.bf16.mxu0 0
    %4060 = vmatpush2.bf16.msra.mxu0 %v1953
    %4061 = vmatprep.subr.bf16.mxu0 0
    %4062 = vmatpush2.bf16.msra.mxu0 %v1952
    %4063 = vmatprep.subr.bf16.mxu0 0
    %4064 = vmatpush2.bf16.msra.mxu0 %v1951
    %4065 = vmatprep.subr.bf16.mxu0 0
    %4066 = vmatpush2.bf16.msra.mxu0 %v1950
    %4067 = vmatprep.subr.bf16.mxu0 0
    %4068 = vmatpush2.bf16.msra.mxu0 %v1949
    %4069 = vmatprep.subr.bf16.mxu0 0
    %4070 = vmatpush2.bf16.msra.mxu0 %v1948
    %4071 = vmatprep.mubr.bf16.mxu0 %v3993
    %4072 = vmatmul.mubr.bf16.gmra.mxu0 %v3992
    %v4073 = vpop.f32.mrf.mxu0
    %v4074 = vadd.f32 %v4033, %v4073
    %v4075 = vpop.f32.mrf.mxu0
    %v4076 = vpop.f32.mrf.mxu0
    %v4077 = vadd.f32 %v4036, %v4076
    %v4078 = vpop.f32.mrf.mxu0
    %4079 = vdwg.mxu0
    %4080 = vmatprep.subr.bf16.mxu0 0
    %4081 = vmatpush1.bf16.msra.mxu0 %v1963
    %4082 = vmatprep.subr.bf16.mxu0 0
    %4083 = vmatpush1.bf16.msra.mxu0 %v1962
    %4084 = vmatprep.subr.bf16.mxu0 0
    %4085 = vmatpush1.bf16.msra.mxu0 %v1961
    %4086 = vmatprep.subr.bf16.mxu0 0
    %4087 = vmatpush1.bf16.msra.mxu0 %v1960
    %4088 = vmatprep.subr.bf16.mxu0 0
    %4089 = vmatpush1.bf16.msra.mxu0 %v1959
    %4090 = vmatprep.subr.bf16.mxu0 0
    %4091 = vmatpush1.bf16.msra.mxu0 %v1958
    %4092 = vmatprep.subr.bf16.mxu0 0
    %4093 = vmatpush1.bf16.msra.mxu0 %v1957
    %4094 = vmatprep.subr.bf16.mxu0 0
    %4095 = vmatpush1.bf16.msra.mxu0 %v1956
    %4096 = vmatprep.subr.bf16.mxu0 0
    %4097 = vmatpush2.bf16.msra.mxu0 %v1971
    %4098 = vmatprep.subr.bf16.mxu0 0
    %4099 = vmatpush2.bf16.msra.mxu0 %v1970
    %4100 = vmatprep.subr.bf16.mxu0 0
    %4101 = vmatpush2.bf16.msra.mxu0 %v1969
    %4102 = vmatprep.subr.bf16.mxu0 0
    %4103 = vmatpush2.bf16.msra.mxu0 %v1968
    %4104 = vmatprep.subr.bf16.mxu0 0
    %4105 = vmatpush2.bf16.msra.mxu0 %v1967
    %4106 = vmatprep.subr.bf16.mxu0 0
    %4107 = vmatpush2.bf16.msra.mxu0 %v1966
    %4108 = vmatprep.subr.bf16.mxu0 0
    %4109 = vmatpush2.bf16.msra.mxu0 %v1965
    %4110 = vmatprep.subr.bf16.mxu0 0
    %4111 = vmatpush2.bf16.msra.mxu0 %v1964
    %4112 = vmatprep.mubr.bf16.mxu0 %v3995
    %4113 = vmatmul.mubr.bf16.gmra.mxu0 %v3994
    %v4114 = vpop.f32.mrf.mxu0
    %v4115 = vadd.f32 %v4074, %v4114
    %v4116 = vpop.f32.mrf.mxu0
    %v4117 = vpop.f32.mrf.mxu0
    %v4118 = vadd.f32 %v4077, %v4117
    %v4119 = vpop.f32.mrf.mxu0
    %4120 = vdwg.mxu0
    %4121 = vmatprep.subr.bf16.mxu0 0
    %4122 = vmatpush1.bf16.msra.mxu0 %v1979
    %4123 = vmatprep.subr.bf16.mxu0 0
    %4124 = vmatpush1.bf16.msra.mxu0 %v1978
    %4125 = vmatprep.subr.bf16.mxu0 0
    %4126 = vmatpush1.bf16.msra.mxu0 %v1977
    %4127 = vmatprep.subr.bf16.mxu0 0
    %4128 = vmatpush1.bf16.msra.mxu0 %v1976
    %4129 = vmatprep.subr.bf16.mxu0 0
    %4130 = vmatpush1.bf16.msra.mxu0 %v1975
    %4131 = vmatprep.subr.bf16.mxu0 0
    %4132 = vmatpush1.bf16.msra.mxu0 %v1974
    %4133 = vmatprep.subr.bf16.mxu0 0
    %4134 = vmatpush1.bf16.msra.mxu0 %v1973
    %4135 = vmatprep.subr.bf16.mxu0 0
    %4136 = vmatpush1.bf16.msra.mxu0 %v1972
    %4137 = vmatprep.subr.bf16.mxu0 0
    %4138 = vmatpush2.bf16.msra.mxu0 %v1987
    %4139 = vmatprep.subr.bf16.mxu0 0
    %4140 = vmatpush2.bf16.msra.mxu0 %v1986
    %4141 = vmatprep.subr.bf16.mxu0 0
    %4142 = vmatpush2.bf16.msra.mxu0 %v1985
    %4143 = vmatprep.subr.bf16.mxu0 0
    %4144 = vmatpush2.bf16.msra.mxu0 %v1984
    %4145 = vmatprep.subr.bf16.mxu0 0
    %4146 = vmatpush2.bf16.msra.mxu0 %v1983
    %4147 = vmatprep.subr.bf16.mxu0 0
    %4148 = vmatpush2.bf16.msra.mxu0 %v1982
    %4149 = vmatprep.subr.bf16.mxu0 0
    %4150 = vmatpush2.bf16.msra.mxu0 %v1981
    %4151 = vmatprep.subr.bf16.mxu0 0
    %4152 = vmatpush2.bf16.msra.mxu0 %v1980
    %4153 = vmatprep.mubr.bf16.mxu0 %v3997
    %4154 = vmatmul.mubr.bf16.gmra.mxu0 %v3996
    %v4155 = vpop.f32.mrf.mxu0
    %v4156 = vadd.f32 %v4115, %v4155
    %v4157 = vpop.f32.mrf.mxu0
    %v4158 = vpop.f32.mrf.mxu0
    %v4159 = vadd.f32 %v4118, %v4158
    %v4160 = vpop.f32.mrf.mxu0
    %4161 = vdwg.mxu0
    %v4162 = vpack.c.bf16 %v4159, %v4156
    %4163 = vmatprep.subr.bf16.mxu0 0
    %4164 = vmatpush1.bf16.msra.mxu0 0
    %4165 = vmatprep.subr.bf16.mxu0 0
    %4166 = vmatpush1.bf16.msra.mxu0 0
    %4167 = vmatprep.subr.bf16.mxu0 0
    %4168 = vmatpush1.bf16.msra.mxu0 0
    %4169 = vmatprep.subr.bf16.mxu0 0
    %4170 = vmatpush1.bf16.msra.mxu0 0
    %4171 = vmatprep.subr.bf16.mxu0 0
    %4172 = vmatpush1.bf16.msra.mxu0 0
    %4173 = vmatprep.subr.bf16.mxu0 0
    %4174 = vmatpush1.bf16.msra.mxu0 0
    %4175 = vmatprep.subr.bf16.mxu0 0
    %4176 = vmatpush1.bf16.msra.mxu0 0
    %4177 = vmatprep.subr.bf16.mxu0 0
    %4178 = vmatpush1.bf16.msra.mxu0 %v4162
    %4179 = vmatprep.subr.bf16.mxu0 0
    %4180 = vmatpush2.bf16.msra.mxu0 0
    %4181 = vmatprep.subr.bf16.mxu0 0
    %4182 = vmatpush2.bf16.msra.mxu0 0
    %4183 = vmatprep.subr.bf16.mxu0 0
    %4184 = vmatpush2.bf16.msra.mxu0 0
    %4185 = vmatprep.subr.bf16.mxu0 0
    %4186 = vmatpush2.bf16.msra.mxu0 0
    %4187 = vmatprep.subr.bf16.mxu0 0
    %4188 = vmatpush2.bf16.msra.mxu0 0
    %4189 = vmatprep.subr.bf16.mxu0 0
    %4190 = vmatpush2.bf16.msra.mxu0 0
    %4191 = vmatprep.subr.bf16.mxu0 0
    %4192 = vmatpush2.bf16.msra.mxu0 0
    %4193 = vmatprep.subr.bf16.mxu0 0
    %4194 = vmatpush2.bf16.msra.mxu0 0
    %4195 = vmatprep.mubr.bf16.mxu0 0
    %4196 = vmatmul.mubr.bf16.gmra.mxu0 %v2660
    %v4197 = vpop.f32.mrf.mxu0
    %v4198 = vadd.f32 0.0, %v4197
    %v4199 = vpop.f32.mrf.mxu0
    %v4200 = vpop.f32.mrf.mxu0
    %v4201 = vpop.f32.mrf.mxu0
    %4202 = vdwg.mxu0
    %v4203 = vpack.c.bf16 %v4198, %v4198
    %v4205 = vsel %vm1417, %v4203, 0
    %4207 = vmatprep.subr.bf16.mxu0 0
    %4208 = vmatpush1.bf16.msra.mxu0 0
    %4209 = vmatprep.subr.bf16.mxu0 0
    %4210 = vmatpush1.bf16.msra.mxu0 0
    %4211 = vmatprep.subr.bf16.mxu0 0
    %4212 = vmatpush1.bf16.msra.mxu0 0
    %4213 = vmatprep.subr.bf16.mxu0 0
    %4214 = vmatpush1.bf16.msra.mxu0 0
    %4215 = vmatprep.subr.bf16.mxu0 0
    %4216 = vmatpush1.bf16.msra.mxu0 0
    %4217 = vmatprep.subr.bf16.mxu0 0
    %4218 = vmatpush1.bf16.msra.mxu0 0
    %4219 = vmatprep.subr.bf16.mxu0 %v1394
    %4220 = vmatpush1.bf16.msra.mxu0 %v1393
    %4221 = vmatprep.subr.bf16.mxu0 %v1386
    %4222 = vmatpush1.bf16.msra.mxu0 %v1385
    %4223 = vmatprep.subr.bf16.mxu0 0
    %4224 = vmatpush2.bf16.msra.mxu0 0
    %4225 = vmatprep.subr.bf16.mxu0 0
    %4226 = vmatpush2.bf16.msra.mxu0 0
    %4227 = vmatprep.subr.bf16.mxu0 0
    %4228 = vmatpush2.bf16.msra.mxu0 0
    %4229 = vmatprep.subr.bf16.mxu0 0
    %4230 = vmatpush2.bf16.msra.mxu0 0
    %4231 = vmatprep.subr.bf16.mxu0 0
    %4232 = vmatpush2.bf16.msra.mxu0 0
    %4233 = vmatprep.subr.bf16.mxu0 0
    %4234 = vmatpush2.bf16.msra.mxu0 0
    %4235 = vmatprep.subr.bf16.mxu0 0
    %4236 = vmatpush2.bf16.msra.mxu0 0
    %4237 = vmatprep.subr.bf16.mxu0 0
    %4238 = vmatpush2.bf16.msra.mxu0 0
    %4239 = vmatprep.mubr.bf16.mxu0 0
    %4240 = vmatmul.mubr.bf16.gmra.mxu0 %v4205
    %v4241 = vpop.f32.mrf.mxu0
    %v4242 = vadd.f32 0.0, %v4241
    %v4243 = vpop.f32.mrf.mxu0
    %v4244 = vadd.f32 0.0, %v4243
    %v4245 = vpop.f32.mrf.mxu0
    %v4246 = vpop.f32.mrf.mxu0
    %4247 = vdwg.mxu0
    %4248 = vmatprep.subr.bf16.mxu0 0
    %4249 = vmatpush1.bf16.msra.mxu0 0
    %4250 = vmatprep.subr.bf16.mxu0 0
    %4251 = vmatpush1.bf16.msra.mxu0 0
    %4252 = vmatprep.subr.bf16.mxu0 0
    %4253 = vmatpush1.bf16.msra.mxu0 0
    %4254 = vmatprep.subr.bf16.mxu0 0
    %4255 = vmatpush1.bf16.msra.mxu0 0
    %4256 = vmatprep.subr.bf16.mxu0 0
    %4257 = vmatpush1.bf16.msra.mxu0 0
    %4258 = vmatprep.subr.bf16.mxu0 0
    %4259 = vmatpush1.bf16.msra.mxu0 0
    %4260 = vmatprep.subr.bf16.mxu0 %v1396
    %4261 = vmatpush1.bf16.msra.mxu0 %v1395
    %4262 = vmatprep.subr.bf16.mxu0 %v1388
    %4263 = vmatpush1.bf16.msra.mxu0 %v1387
    %4264 = vmatprep.subr.bf16.mxu0 0
    %4265 = vmatpush2.bf16.msra.mxu0 0
    %4266 = vmatprep.subr.bf16.mxu0 0
    %4267 = vmatpush2.bf16.msra.mxu0 0
    %4268 = vmatprep.subr.bf16.mxu0 0
    %4269 = vmatpush2.bf16.msra.mxu0 0
    %4270 = vmatprep.subr.bf16.mxu0 0
    %4271 = vmatpush2.bf16.msra.mxu0 0
    %4272 = vmatprep.subr.bf16.mxu0 0
    %4273 = vmatpush2.bf16.msra.mxu0 0
    %4274 = vmatprep.subr.bf16.mxu0 0
    %4275 = vmatpush2.bf16.msra.mxu0 0
    %4276 = vmatprep.subr.bf16.mxu0 0
    %4277 = vmatpush2.bf16.msra.mxu0 0
    %4278 = vmatprep.subr.bf16.mxu0 0
    %4279 = vmatpush2.bf16.msra.mxu0 0
    %4280 = vmatprep.mubr.bf16.mxu0 0
    %4281 = vmatmul.mubr.bf16.gmra.mxu0 %v4205
    %v4282 = vpop.f32.mrf.mxu0
    %v4283 = vadd.f32 0.0, %v4282
    %v4284 = vpop.f32.mrf.mxu0
    %v4285 = vadd.f32 0.0, %v4284
    %v4286 = vpop.f32.mrf.mxu0
    %v4287 = vpop.f32.mrf.mxu0
    %4288 = vdwg.mxu0
    %4289 = vmatprep.subr.bf16.mxu0 0
    %4290 = vmatpush1.bf16.msra.mxu0 0
    %4291 = vmatprep.subr.bf16.mxu0 0
    %4292 = vmatpush1.bf16.msra.mxu0 0
    %4293 = vmatprep.subr.bf16.mxu0 0
    %4294 = vmatpush1.bf16.msra.mxu0 0
    %4295 = vmatprep.subr.bf16.mxu0 0
    %4296 = vmatpush1.bf16.msra.mxu0 0
    %4297 = vmatprep.subr.bf16.mxu0 0
    %4298 = vmatpush1.bf16.msra.mxu0 0
    %4299 = vmatprep.subr.bf16.mxu0 0
    %4300 = vmatpush1.bf16.msra.mxu0 0
    %4301 = vmatprep.subr.bf16.mxu0 %v1398
    %4302 = vmatpush1.bf16.msra.mxu0 %v1397
    %4303 = vmatprep.subr.bf16.mxu0 %v1390
    %4304 = vmatpush1.bf16.msra.mxu0 %v1389
    %4305 = vmatprep.subr.bf16.mxu0 0
    %4306 = vmatpush2.bf16.msra.mxu0 0
    %4307 = vmatprep.subr.bf16.mxu0 0
    %4308 = vmatpush2.bf16.msra.mxu0 0
    %4309 = vmatprep.subr.bf16.mxu0 0
    %4310 = vmatpush2.bf16.msra.mxu0 0
    %4311 = vmatprep.subr.bf16.mxu0 0
    %4312 = vmatpush2.bf16.msra.mxu0 0
    %4313 = vmatprep.subr.bf16.mxu0 0
    %4314 = vmatpush2.bf16.msra.mxu0 0
    %4315 = vmatprep.subr.bf16.mxu0 0
    %4316 = vmatpush2.bf16.msra.mxu0 0
    %4317 = vmatprep.subr.bf16.mxu0 0
    %4318 = vmatpush2.bf16.msra.mxu0 0
    %4319 = vmatprep.subr.bf16.mxu0 0
    %4320 = vmatpush2.bf16.msra.mxu0 0
    %4321 = vmatprep.mubr.bf16.mxu0 0
    %4322 = vmatmul.mubr.bf16.gmra.mxu0 %v4205
    %v4323 = vpop.f32.mrf.mxu0
    %v4324 = vadd.f32 0.0, %v4323
    %v4325 = vpop.f32.mrf.mxu0
    %v4326 = vadd.f32 0.0, %v4325
    %v4327 = vpop.f32.mrf.mxu0
    %v4328 = vpop.f32.mrf.mxu0
    %4329 = vdwg.mxu0
    %4330 = vmatprep.subr.bf16.mxu0 0
    %4331 = vmatpush1.bf16.msra.mxu0 0
    %4332 = vmatprep.subr.bf16.mxu0 0
    %4333 = vmatpush1.bf16.msra.mxu0 0
    %4334 = vmatprep.subr.bf16.mxu0 0
    %4335 = vmatpush1.bf16.msra.mxu0 0
    %4336 = vmatprep.subr.bf16.mxu0 0
    %4337 = vmatpush1.bf16.msra.mxu0 0
    %4338 = vmatprep.subr.bf16.mxu0 0
    %4339 = vmatpush1.bf16.msra.mxu0 0
    %4340 = vmatprep.subr.bf16.mxu0 0
    %4341 = vmatpush1.bf16.msra.mxu0 0
    %4342 = vmatprep.subr.bf16.mxu0 %v1400
    %4343 = vmatpush1.bf16.msra.mxu0 %v1399
    %4344 = vmatprep.subr.bf16.mxu0 %v1392
    %4345 = vmatpush1.bf16.msra.mxu0 %v1391
    %4346 = vmatprep.subr.bf16.mxu0 0
    %4347 = vmatpush2.bf16.msra.mxu0 0
    %4348 = vmatprep.subr.bf16.mxu0 0
    %4349 = vmatpush2.bf16.msra.mxu0 0
    %4350 = vmatprep.subr.bf16.mxu0 0
    %4351 = vmatpush2.bf16.msra.mxu0 0
    %4352 = vmatprep.subr.bf16.mxu0 0
    %4353 = vmatpush2.bf16.msra.mxu0 0
    %4354 = vmatprep.subr.bf16.mxu0 0
    %4355 = vmatpush2.bf16.msra.mxu0 0
    %4356 = vmatprep.subr.bf16.mxu0 0
    %4357 = vmatpush2.bf16.msra.mxu0 0
    %4358 = vmatprep.subr.bf16.mxu0 0
    %4359 = vmatpush2.bf16.msra.mxu0 0
    %4360 = vmatprep.subr.bf16.mxu0 0
    %4361 = vmatpush2.bf16.msra.mxu0 0
    %4362 = vmatprep.mubr.bf16.mxu0 0
    %4363 = vmatmul.mubr.bf16.gmra.mxu0 %v4205
    %v4364 = vpop.f32.mrf.mxu0
    %v4365 = vadd.f32 0.0, %v4364
    %v4366 = vpop.f32.mrf.mxu0
    %v4367 = vadd.f32 0.0, %v4366
    %v4368 = vpop.f32.mrf.mxu0
    %v4369 = vpop.f32.mrf.mxu0
    %4370 = vdwg.mxu0
    %v4371 = vmul.f32 %v1135, %v4242
    %v4372 = vmul.f32 %v1137, %v4244
    %v4373 = vmul.f32 %v1176, %v4283
    %v4374 = vmul.f32 %v1178, %v4285
    %v4375 = vmul.f32 %v1217, %v4324
    %v4376 = vmul.f32 %v1219, %v4326
    %v4377 = vmul.f32 %v1258, %v4365
    %v4378 = vmul.f32 %v1260, %v4367
    %v4379 = vpack.c.bf16 %v4371, %v4371
    %v4380 = vpack.c.bf16 %v4372, %v4372
    %v4381 = vpack.c.bf16 %v4373, %v4373
    %v4382 = vpack.c.bf16 %v4374, %v4374
    %v4383 = vpack.c.bf16 %v4375, %v4375
    %v4384 = vpack.c.bf16 %v4376, %v4376
    %v4385 = vpack.c.bf16 %v4377, %v4377
    %v4386 = vpack.c.bf16 %v4378, %v4378
    %4387 = vmatprep.subr.bf16.mxu0 0
    %4388 = vmatpush1.bf16.msra.mxu0 %v1931
    %4389 = vmatprep.subr.bf16.mxu0 0
    %4390 = vmatpush1.bf16.msra.mxu0 %v1930
    %4391 = vmatprep.subr.bf16.mxu0 0
    %4392 = vmatpush1.bf16.msra.mxu0 %v1929
    %4393 = vmatprep.subr.bf16.mxu0 0
    %4394 = vmatpush1.bf16.msra.mxu0 %v1928
    %4395 = vmatprep.subr.bf16.mxu0 0
    %4396 = vmatpush1.bf16.msra.mxu0 %v1927
    %4397 = vmatprep.subr.bf16.mxu0 0
    %4398 = vmatpush1.bf16.msra.mxu0 %v1926
    %4399 = vmatprep.subr.bf16.mxu0 0
    %4400 = vmatpush1.bf16.msra.mxu0 %v1925
    %4401 = vmatprep.subr.bf16.mxu0 0
    %4402 = vmatpush1.bf16.msra.mxu0 %v1924
    %4403 = vmatprep.subr.bf16.mxu0 0
    %4404 = vmatpush2.bf16.msra.mxu0 %v1939
    %4405 = vmatprep.subr.bf16.mxu0 0
    %4406 = vmatpush2.bf16.msra.mxu0 %v1938
    %4407 = vmatprep.subr.bf16.mxu0 0
    %4408 = vmatpush2.bf16.msra.mxu0 %v1937
    %4409 = vmatprep.subr.bf16.mxu0 0
    %4410 = vmatpush2.bf16.msra.mxu0 %v1936
    %4411 = vmatprep.subr.bf16.mxu0 0
    %4412 = vmatpush2.bf16.msra.mxu0 %v1935
    %4413 = vmatprep.subr.bf16.mxu0 0
    %4414 = vmatpush2.bf16.msra.mxu0 %v1934
    %4415 = vmatprep.subr.bf16.mxu0 0
    %4416 = vmatpush2.bf16.msra.mxu0 %v1933
    %4417 = vmatprep.subr.bf16.mxu0 0
    %4418 = vmatpush2.bf16.msra.mxu0 %v1932
    %4419 = vmatprep.mubr.bf16.mxu0 %v4380
    %4420 = vmatmul.mubr.bf16.gmra.mxu0 %v4379
    %v4421 = vpop.f32.mrf.mxu0
    %v4422 = vadd.f32 0.0, %v4421
    %v4423 = vpop.f32.mrf.mxu0
    %v4424 = vpop.f32.mrf.mxu0
    %v4425 = vpop.f32.mrf.mxu0
    %4426 = vdwg.mxu0
    %4427 = vmatprep.subr.bf16.mxu0 0
    %4428 = vmatpush1.bf16.msra.mxu0 %v1947
    %4429 = vmatprep.subr.bf16.mxu0 0
    %4430 = vmatpush1.bf16.msra.mxu0 %v1946
    %4431 = vmatprep.subr.bf16.mxu0 0
    %4432 = vmatpush1.bf16.msra.mxu0 %v1945
    %4433 = vmatprep.subr.bf16.mxu0 0
    %4434 = vmatpush1.bf16.msra.mxu0 %v1944
    %4435 = vmatprep.subr.bf16.mxu0 0
    %4436 = vmatpush1.bf16.msra.mxu0 %v1943
    %4437 = vmatprep.subr.bf16.mxu0 0
    %4438 = vmatpush1.bf16.msra.mxu0 %v1942
    %4439 = vmatprep.subr.bf16.mxu0 0
    %4440 = vmatpush1.bf16.msra.mxu0 %v1941
    %4441 = vmatprep.subr.bf16.mxu0 0
    %4442 = vmatpush1.bf16.msra.mxu0 %v1940
    %4443 = vmatprep.subr.bf16.mxu0 0
    %4444 = vmatpush2.bf16.msra.mxu0 %v1955
    %4445 = vmatprep.subr.bf16.mxu0 0
    %4446 = vmatpush2.bf16.msra.mxu0 %v1954
    %4447 = vmatprep.subr.bf16.mxu0 0
    %4448 = vmatpush2.bf16.msra.mxu0 %v1953
    %4449 = vmatprep.subr.bf16.mxu0 0
    %4450 = vmatpush2.bf16.msra.mxu0 %v1952
    %4451 = vmatprep.subr.bf16.mxu0 0
    %4452 = vmatpush2.bf16.msra.mxu0 %v1951
    %4453 = vmatprep.subr.bf16.mxu0 0
    %4454 = vmatpush2.bf16.msra.mxu0 %v1950
    %4455 = vmatprep.subr.bf16.mxu0 0
    %4456 = vmatpush2.bf16.msra.mxu0 %v1949
    %4457 = vmatprep.subr.bf16.mxu0 0
    %4458 = vmatpush2.bf16.msra.mxu0 %v1948
    %4459 = vmatprep.mubr.bf16.mxu0 %v4382
    %4460 = vmatmul.mubr.bf16.gmra.mxu0 %v4381
    %v4461 = vpop.f32.mrf.mxu0
    %v4462 = vadd.f32 %v4422, %v4461
    %v4463 = vpop.f32.mrf.mxu0
    %v4464 = vpop.f32.mrf.mxu0
    %v4465 = vpop.f32.mrf.mxu0
    %4466 = vdwg.mxu0
    %4467 = vmatprep.subr.bf16.mxu0 0
    %4468 = vmatpush1.bf16.msra.mxu0 %v1963
    %4469 = vmatprep.subr.bf16.mxu0 0
    %4470 = vmatpush1.bf16.msra.mxu0 %v1962
    %4471 = vmatprep.subr.bf16.mxu0 0
    %4472 = vmatpush1.bf16.msra.mxu0 %v1961
    %4473 = vmatprep.subr.bf16.mxu0 0
    %4474 = vmatpush1.bf16.msra.mxu0 %v1960
    %4475 = vmatprep.subr.bf16.mxu0 0
    %4476 = vmatpush1.bf16.msra.mxu0 %v1959
    %4477 = vmatprep.subr.bf16.mxu0 0
    %4478 = vmatpush1.bf16.msra.mxu0 %v1958
    %4479 = vmatprep.subr.bf16.mxu0 0
    %4480 = vmatpush1.bf16.msra.mxu0 %v1957
    %4481 = vmatprep.subr.bf16.mxu0 0
    %4482 = vmatpush1.bf16.msra.mxu0 %v1956
    %4483 = vmatprep.subr.bf16.mxu0 0
    %4484 = vmatpush2.bf16.msra.mxu0 %v1971
    %4485 = vmatprep.subr.bf16.mxu0 0
    %4486 = vmatpush2.bf16.msra.mxu0 %v1970
    %4487 = vmatprep.subr.bf16.mxu0 0
    %4488 = vmatpush2.bf16.msra.mxu0 %v1969
    %4489 = vmatprep.subr.bf16.mxu0 0
    %4490 = vmatpush2.bf16.msra.mxu0 %v1968
    %4491 = vmatprep.subr.bf16.mxu0 0
    %4492 = vmatpush2.bf16.msra.mxu0 %v1967
    %4493 = vmatprep.subr.bf16.mxu0 0
    %4494 = vmatpush2.bf16.msra.mxu0 %v1966
    %4495 = vmatprep.subr.bf16.mxu0 0
    %4496 = vmatpush2.bf16.msra.mxu0 %v1965
    %4497 = vmatprep.subr.bf16.mxu0 0
    %4498 = vmatpush2.bf16.msra.mxu0 %v1964
    %4499 = vmatprep.mubr.bf16.mxu0 %v4384
    %4500 = vmatmul.mubr.bf16.gmra.mxu0 %v4383
    %v4501 = vpop.f32.mrf.mxu0
    %v4502 = vadd.f32 %v4462, %v4501
    %v4503 = vpop.f32.mrf.mxu0
    %v4504 = vpop.f32.mrf.mxu0
    %v4505 = vpop.f32.mrf.mxu0
    %4506 = vdwg.mxu0
    %4507 = vmatprep.subr.bf16.mxu0 0
    %4508 = vmatpush1.bf16.msra.mxu0 %v1979
    %4509 = vmatprep.subr.bf16.mxu0 0
    %4510 = vmatpush1.bf16.msra.mxu0 %v1978
    %4511 = vmatprep.subr.bf16.mxu0 0
    %4512 = vmatpush1.bf16.msra.mxu0 %v1977
    %4513 = vmatprep.subr.bf16.mxu0 0
    %4514 = vmatpush1.bf16.msra.mxu0 %v1976
    %4515 = vmatprep.subr.bf16.mxu0 0
    %4516 = vmatpush1.bf16.msra.mxu0 %v1975
    %4517 = vmatprep.subr.bf16.mxu0 0
    %4518 = vmatpush1.bf16.msra.mxu0 %v1974
    %4519 = vmatprep.subr.bf16.mxu0 0
    %4520 = vmatpush1.bf16.msra.mxu0 %v1973
    %4521 = vmatprep.subr.bf16.mxu0 0
    %4522 = vmatpush1.bf16.msra.mxu0 %v1972
    %4523 = vmatprep.subr.bf16.mxu0 0
    %4524 = vmatpush2.bf16.msra.mxu0 %v1987
    %4525 = vmatprep.subr.bf16.mxu0 0
    %4526 = vmatpush2.bf16.msra.mxu0 %v1986
    %4527 = vmatprep.subr.bf16.mxu0 0
    %4528 = vmatpush2.bf16.msra.mxu0 %v1985
    %4529 = vmatprep.subr.bf16.mxu0 0
    %4530 = vmatpush2.bf16.msra.mxu0 %v1984
    %4531 = vmatprep.subr.bf16.mxu0 0
    %4532 = vmatpush2.bf16.msra.mxu0 %v1983
    %4533 = vmatprep.subr.bf16.mxu0 0
    %4534 = vmatpush2.bf16.msra.mxu0 %v1982
    %4535 = vmatprep.subr.bf16.mxu0 0
    %4536 = vmatpush2.bf16.msra.mxu0 %v1981
    %4537 = vmatprep.subr.bf16.mxu0 0
    %4538 = vmatpush2.bf16.msra.mxu0 %v1980
    %4539 = vmatprep.mubr.bf16.mxu0 %v4386
    %4540 = vmatmul.mubr.bf16.gmra.mxu0 %v4385
    %v4541 = vpop.f32.mrf.mxu0
    %v4542 = vadd.f32 %v4502, %v4541
    %v4543 = vpop.f32.mrf.mxu0
    %v4544 = vpop.f32.mrf.mxu0
    %v4545 = vpop.f32.mrf.mxu0
    %4546 = vdwg.mxu0
    %v4547 = vpack.c.bf16 %v4542, %v4542
    %v4549 = vsel %vm512, %v4547, 0
    %4551 = vmatprep.subr.bf16.mxu0 0
    %4552 = vmatpush1.bf16.msra.mxu0 0
    %4553 = vmatprep.subr.bf16.mxu0 0
    %4554 = vmatpush1.bf16.msra.mxu0 0
    %4555 = vmatprep.subr.bf16.mxu0 0
    %4556 = vmatpush1.bf16.msra.mxu0 0
    %4557 = vmatprep.subr.bf16.mxu0 0
    %4558 = vmatpush1.bf16.msra.mxu0 0
    %4559 = vmatprep.subr.bf16.mxu0 0
    %4560 = vmatpush1.bf16.msra.mxu0 0
    %4561 = vmatprep.subr.bf16.mxu0 0
    %4562 = vmatpush1.bf16.msra.mxu0 0
    %4563 = vmatprep.subr.bf16.mxu0 0
    %4564 = vmatpush1.bf16.msra.mxu0 0
    %4565 = vmatprep.subr.bf16.mxu0 0
    %4566 = vmatpush1.bf16.msra.mxu0 %v4549
    %4567 = vmatprep.subr.bf16.mxu0 0
    %4568 = vmatpush2.bf16.msra.mxu0 0
    %4569 = vmatprep.subr.bf16.mxu0 0
    %4570 = vmatpush2.bf16.msra.mxu0 0
    %4571 = vmatprep.subr.bf16.mxu0 0
    %4572 = vmatpush2.bf16.msra.mxu0 0
    %4573 = vmatprep.subr.bf16.mxu0 0
    %4574 = vmatpush2.bf16.msra.mxu0 0
    %4575 = vmatprep.subr.bf16.mxu0 0
    %4576 = vmatpush2.bf16.msra.mxu0 0
    %4577 = vmatprep.subr.bf16.mxu0 0
    %4578 = vmatpush2.bf16.msra.mxu0 0
    %4579 = vmatprep.subr.bf16.mxu0 0
    %4580 = vmatpush2.bf16.msra.mxu0 0
    %4581 = vmatprep.subr.bf16.mxu0 0
    %4582 = vmatpush2.bf16.msra.mxu0 0
    %4583 = vmatprep.mubr.bf16.mxu0 0
    %4584 = vmatmul.mubr.bf16.gmra.mxu0 %v3048
    %v4585 = vpop.f32.mrf.mxu0
    %v4586 = vadd.f32 0.0, %v4585
    %v4587 = vpop.f32.mrf.mxu0
    %v4588 = vpop.f32.mrf.mxu0
    %v4589 = vadd.f32 0.0, %v4588
    %v4590 = vpop.f32.mrf.mxu0
    %4591 = vdwg.mxu0
    %v4592 = vpack.c.bf16 %v4589, %v4586
    %v4594 = vsel %vm1417, %v4592, 0
    %4596 = vmatprep.subr.bf16.mxu0 0
    %4597 = vmatpush1.bf16.msra.mxu0 0
    %4598 = vmatprep.subr.bf16.mxu0 0
    %4599 = vmatpush1.bf16.msra.mxu0 0
    %4600 = vmatprep.subr.bf16.mxu0 0
    %4601 = vmatpush1.bf16.msra.mxu0 0
    %4602 = vmatprep.subr.bf16.mxu0 0
    %4603 = vmatpush1.bf16.msra.mxu0 0
    %4604 = vmatprep.subr.bf16.mxu0 0
    %4605 = vmatpush1.bf16.msra.mxu0 0
    %4606 = vmatprep.subr.bf16.mxu0 0
    %4607 = vmatpush1.bf16.msra.mxu0 0
    %4608 = vmatprep.subr.bf16.mxu0 0
    %4609 = vmatpush1.bf16.msra.mxu0 %v1269
    %4610 = vmatprep.subr.bf16.mxu0 0
    %4611 = vmatpush1.bf16.msra.mxu0 %v1268
    %4612 = vmatprep.subr.bf16.mxu0 0
    %4613 = vmatpush2.bf16.msra.mxu0 0
    %4614 = vmatprep.subr.bf16.mxu0 0
    %4615 = vmatpush2.bf16.msra.mxu0 0
    %4616 = vmatprep.subr.bf16.mxu0 0
    %4617 = vmatpush2.bf16.msra.mxu0 0
    %4618 = vmatprep.subr.bf16.mxu0 0
    %4619 = vmatpush2.bf16.msra.mxu0 0
    %4620 = vmatprep.subr.bf16.mxu0 0
    %4621 = vmatpush2.bf16.msra.mxu0 0
    %4622 = vmatprep.subr.bf16.mxu0 0
    %4623 = vmatpush2.bf16.msra.mxu0 0
    %4624 = vmatprep.subr.bf16.mxu0 0
    %4625 = vmatpush2.bf16.msra.mxu0 0
    %4626 = vmatprep.subr.bf16.mxu0 0
    %4627 = vmatpush2.bf16.msra.mxu0 0
    %4628 = vmatprep.mubr.bf16.mxu0 0
    %4629 = vmatmul.mubr.bf16.gmra.mxu0 %v4594
    %v4630 = vpop.f32.mrf.mxu0
    %v4631 = vadd.f32 %v3099, %v4630
    %v4632 = vpop.f32.mrf.mxu0
    %v4633 = vpop.f32.mrf.mxu0
    %v4634 = vadd.f32 %v3099, %v4633
    %v4635 = vpop.f32.mrf.mxu0
    %4636 = vdwg.mxu0
    %v4638 = vsel %vm1417, %v3258, 0
    %4640 = vmatprep.subr.bf16.mxu0 0
    %4641 = vmatpush1.bf16.msra.mxu0 0
    %4642 = vmatprep.subr.bf16.mxu0 0
    %4643 = vmatpush1.bf16.msra.mxu0 0
    %4644 = vmatprep.subr.bf16.mxu0 0
    %4645 = vmatpush1.bf16.msra.mxu0 0
    %4646 = vmatprep.subr.bf16.mxu0 0
    %4647 = vmatpush1.bf16.msra.mxu0 0
    %4648 = vmatprep.subr.bf16.mxu0 0
    %4649 = vmatpush1.bf16.msra.mxu0 0
    %4650 = vmatprep.subr.bf16.mxu0 0
    %4651 = vmatpush1.bf16.msra.mxu0 0
    %4652 = vmatprep.subr.bf16.mxu0 0
    %4653 = vmatpush1.bf16.msra.mxu0 %v1275
    %4654 = vmatprep.subr.bf16.mxu0 0
    %4655 = vmatpush1.bf16.msra.mxu0 %v1274
    %4656 = vmatprep.subr.bf16.mxu0 0
    %4657 = vmatpush2.bf16.msra.mxu0 0
    %4658 = vmatprep.subr.bf16.mxu0 0
    %4659 = vmatpush2.bf16.msra.mxu0 0
    %4660 = vmatprep.subr.bf16.mxu0 0
    %4661 = vmatpush2.bf16.msra.mxu0 0
    %4662 = vmatprep.subr.bf16.mxu0 0
    %4663 = vmatpush2.bf16.msra.mxu0 0
    %4664 = vmatprep.subr.bf16.mxu0 0
    %4665 = vmatpush2.bf16.msra.mxu0 0
    %4666 = vmatprep.subr.bf16.mxu0 0
    %4667 = vmatpush2.bf16.msra.mxu0 0
    %4668 = vmatprep.subr.bf16.mxu0 0
    %4669 = vmatpush2.bf16.msra.mxu0 0
    %4670 = vmatprep.subr.bf16.mxu0 0
    %4671 = vmatpush2.bf16.msra.mxu0 0
    %4672 = vmatprep.mubr.bf16.mxu0 0
    %4673 = vmatmul.mubr.bf16.gmra.mxu0 %v4638
    %v4674 = vpop.f32.mrf.mxu0
    %v4675 = vadd.f32 %v3149, %v4674
    %v4676 = vpop.f32.mrf.mxu0
    %v4677 = vpop.f32.mrf.mxu0
    %v4678 = vadd.f32 %v3149, %v4677
    %v4679 = vpop.f32.mrf.mxu0
    %4680 = vdwg.mxu0
    %v4681 = vadd.f32 %v4631, %v4675
    %v4682 = vadd.f32 %v4634, %v4678
    %v4683 = vxor.u32 %v4681, 2147483648
    %v4684 = vxor.u32 %v4682, 2147483648
    %v4685 = vmul.f32 %v4683, 1.442695
    %v4686 = vpow.pop %v4685
    %v4687 = vmul.f32 %v4684, 1.442695
    %v4688 = vpow.pop %v4687
    %v4689 = vadd.f32 %v4686, 1.0
    %v4690 = vadd.f32 %v4688, 1.0
    %v4691 = vrcp.pop %v4689
    %v4692 = vmul.f32 1.0, %v4691
    %v4693 = vrcp.pop %v4690
    %v4694 = vmul.f32 1.0, %v4693
    %4697 = vrot.lane.b32.xlu0 %v4675, 64
    %v4698 = vpop.permute.xlu0 %4697
    %4699 = vrot.lane.b32.xlu0 %v4678, 64
    %v4700 = vpop.permute.xlu0 %4699
    %v4703 = vmul.f32 %v4692, %v4698
    %v4704 = vmul.f32 %v4694, %v4700
    %4707 = vrot.lane.b32.xlu0 %v4703, 64
    %v4708 = vpop.permute.xlu0 %4707
    %4709 = vrot.lane.b32.xlu0 %v4704, 64
    %v4710 = vpop.permute.xlu0 %4709
    %v4713 = vadd.f32 %v4631, %v4708
    %v4714 = vadd.f32 %v4634, %v4710
    %v4715 = vtanh.pop %v4713
    %v4716 = vtanh.pop %v4714
    %v4717 = vsub.f32 1.0, %v4692
    %v4718 = vsub.f32 1.0, %v4694
    %4721 = vrot.lane.b32.xlu0 %v4715, 96
    %v4722 = vpop.permute.xlu0 %4721
    %4723 = vrot.lane.b32.xlu0 %v4716, 96
    %v4724 = vpop.permute.xlu0 %4723
    %v4727 = vmul.f32 %v4717, %v4722
    %v4728 = vmul.f32 %v4718, %v4724
    %v4729 = vmul.f32 %v4692, %v3253
    %v4730 = vmul.f32 %v4694, %v3254
    %v4731 = vadd.f32 %v4727, %v4729
    %v4732 = vadd.f32 %v4728, %v4730
    %v4733 = vpack.c.bf16 %v4732, %v4731
    %4735 = vrot.lane.b32.xlu0 %v4733, 96
    %v4736 = vpop.permute.xlu0 %4735
    %4738 = vmatprep.subr.bf16.mxu0 0
    %4739 = vmatpush1.bf16.msra.mxu0 0
    %4740 = vmatprep.subr.bf16.mxu0 0
    %4741 = vmatpush1.bf16.msra.mxu0 0
    %4742 = vmatprep.subr.bf16.mxu0 0
    %4743 = vmatpush1.bf16.msra.mxu0 0
    %4744 = vmatprep.subr.bf16.mxu0 0
    %4745 = vmatpush1.bf16.msra.mxu0 0
    %4746 = vmatprep.subr.bf16.mxu0 0
    %4747 = vmatpush1.bf16.msra.mxu0 0
    %4748 = vmatprep.subr.bf16.mxu0 0
    %4749 = vmatpush1.bf16.msra.mxu0 0
    %4750 = vmatprep.subr.bf16.mxu0 0
    %4751 = vmatpush1.bf16.msra.mxu0 0
    %4752 = vmatprep.subr.bf16.mxu0 0
    %4753 = vmatpush1.bf16.msra.mxu0 %v4736
    %4754 = vmatprep.subr.bf16.mxu0 0
    %4755 = vmatpush2.bf16.msra.mxu0 0
    %4756 = vmatprep.subr.bf16.mxu0 0
    %4757 = vmatpush2.bf16.msra.mxu0 0
    %4758 = vmatprep.subr.bf16.mxu0 0
    %4759 = vmatpush2.bf16.msra.mxu0 0
    %4760 = vmatprep.subr.bf16.mxu0 0
    %4761 = vmatpush2.bf16.msra.mxu0 0
    %4762 = vmatprep.subr.bf16.mxu0 0
    %4763 = vmatpush2.bf16.msra.mxu0 0
    %4764 = vmatprep.subr.bf16.mxu0 0
    %4765 = vmatpush2.bf16.msra.mxu0 0
    %4766 = vmatprep.subr.bf16.mxu0 0
    %4767 = vmatpush2.bf16.msra.mxu0 0
    %4768 = vmatprep.subr.bf16.mxu0 0
    %4769 = vmatpush2.bf16.msra.mxu0 0
    %4770 = vmatprep.mubr.bf16.mxu0 0
    %4771 = vmatmul.mubr.bf16.gmra.mxu0 %v1282
    %v4772 = vpop.f32.mrf.mxu0
    %v4773 = vadd.f32 0.0, %v4772
    %v4774 = vpop.f32.mrf.mxu0
    %v4775 = vpop.f32.mrf.mxu0
    %v4776 = vadd.f32 0.0, %v4775
    %v4777 = vpop.f32.mrf.mxu0
    %4778 = vmatprep.mubr.bf16.mxu0 0
    %4779 = vmatmul.mubr.bf16.gmra.mxu0 %v1285
    %v4780 = vpop.f32.mrf.mxu0
    %v4781 = vadd.f32 0.0, %v4780
    %v4782 = vpop.f32.mrf.mxu0
    %v4783 = vpop.f32.mrf.mxu0
    %v4784 = vpop.f32.mrf.mxu0
    %4785 = vdwg.mxu0
    %v4786 = vpack.c.bf16 %v4776, %v4773
    %v4787 = vpack.c.bf16 %v4781, %v4781
    %v4789 = vsel %vm1417, %v4786, 0
    %v4792 = vsel %vm1417, %v4787, 0
    %4794 = vmatprep.subr.bf16.mxu0 0
    %4795 = vmatpush1.bf16.msra.mxu0 0
    %4796 = vmatprep.subr.bf16.mxu0 0
    %4797 = vmatpush1.bf16.msra.mxu0 0
    %4798 = vmatprep.subr.bf16.mxu0 0
    %4799 = vmatpush1.bf16.msra.mxu0 0
    %4800 = vmatprep.subr.bf16.mxu0 0
    %4801 = vmatpush1.bf16.msra.mxu0 0
    %4802 = vmatprep.subr.bf16.mxu0 0
    %4803 = vmatpush1.bf16.msra.mxu0 0
    %4804 = vmatprep.subr.bf16.mxu0 0
    %4805 = vmatpush1.bf16.msra.mxu0 0
    %4806 = vmatprep.subr.bf16.mxu0 %v1394
    %4807 = vmatpush1.bf16.msra.mxu0 %v1393
    %4808 = vmatprep.subr.bf16.mxu0 %v1386
    %4809 = vmatpush1.bf16.msra.mxu0 %v1385
    %4810 = vmatprep.subr.bf16.mxu0 0
    %4811 = vmatpush2.bf16.msra.mxu0 0
    %4812 = vmatprep.subr.bf16.mxu0 0
    %4813 = vmatpush2.bf16.msra.mxu0 0
    %4814 = vmatprep.subr.bf16.mxu0 0
    %4815 = vmatpush2.bf16.msra.mxu0 0
    %4816 = vmatprep.subr.bf16.mxu0 0
    %4817 = vmatpush2.bf16.msra.mxu0 0
    %4818 = vmatprep.subr.bf16.mxu0 0
    %4819 = vmatpush2.bf16.msra.mxu0 0
    %4820 = vmatprep.subr.bf16.mxu0 0
    %4821 = vmatpush2.bf16.msra.mxu0 0
    %4822 = vmatprep.subr.bf16.mxu0 0
    %4823 = vmatpush2.bf16.msra.mxu0 0
    %4824 = vmatprep.subr.bf16.mxu0 0
    %4825 = vmatpush2.bf16.msra.mxu0 0
    %4826 = vmatprep.mubr.bf16.mxu0 0
    %4827 = vmatmul.mubr.bf16.gmra.mxu0 %v4789
    %v4828 = vpop.f32.mrf.mxu0
    %v4829 = vadd.f32 0.0, %v4828
    %v4830 = vpop.f32.mrf.mxu0
    %v4831 = vadd.f32 0.0, %v4830
    %v4832 = vpop.f32.mrf.mxu0
    %v4833 = vadd.f32 0.0, %v4832
    %v4834 = vpop.f32.mrf.mxu0
    %v4835 = vadd.f32 0.0, %v4834
    %4836 = vmatprep.mubr.bf16.mxu0 0
    %4837 = vmatmul.mubr.bf16.gmra.mxu0 %v4792
    %v4838 = vpop.f32.mrf.mxu0
    %v4839 = vadd.f32 0.0, %v4838
    %v4840 = vpop.f32.mrf.mxu0
    %v4841 = vadd.f32 0.0, %v4840
    %v4842 = vpop.f32.mrf.mxu0
    %v4843 = vpop.f32.mrf.mxu0
    %4844 = vdwg.mxu0
    %4845 = vmatprep.subr.bf16.mxu0 0
    %4846 = vmatpush1.bf16.msra.mxu0 0
    %4847 = vmatprep.subr.bf16.mxu0 0
    %4848 = vmatpush1.bf16.msra.mxu0 0
    %4849 = vmatprep.subr.bf16.mxu0 0
    %4850 = vmatpush1.bf16.msra.mxu0 0
    %4851 = vmatprep.subr.bf16.mxu0 0
    %4852 = vmatpush1.bf16.msra.mxu0 0
    %4853 = vmatprep.subr.bf16.mxu0 0
    %4854 = vmatpush1.bf16.msra.mxu0 0
    %4855 = vmatprep.subr.bf16.mxu0 0
    %4856 = vmatpush1.bf16.msra.mxu0 0
    %4857 = vmatprep.subr.bf16.mxu0 %v1396
    %4858 = vmatpush1.bf16.msra.mxu0 %v1395
    %4859 = vmatprep.subr.bf16.mxu0 %v1388
    %4860 = vmatpush1.bf16.msra.mxu0 %v1387
    %4861 = vmatprep.subr.bf16.mxu0 0
    %4862 = vmatpush2.bf16.msra.mxu0 0
    %4863 = vmatprep.subr.bf16.mxu0 0
    %4864 = vmatpush2.bf16.msra.mxu0 0
    %4865 = vmatprep.subr.bf16.mxu0 0
    %4866 = vmatpush2.bf16.msra.mxu0 0
    %4867 = vmatprep.subr.bf16.mxu0 0
    %4868 = vmatpush2.bf16.msra.mxu0 0
    %4869 = vmatprep.subr.bf16.mxu0 0
    %4870 = vmatpush2.bf16.msra.mxu0 0
    %4871 = vmatprep.subr.bf16.mxu0 0
    %4872 = vmatpush2.bf16.msra.mxu0 0
    %4873 = vmatprep.subr.bf16.mxu0 0
    %4874 = vmatpush2.bf16.msra.mxu0 0
    %4875 = vmatprep.subr.bf16.mxu0 0
    %4876 = vmatpush2.bf16.msra.mxu0 0
    %4877 = vmatprep.mubr.bf16.mxu0 0
    %4878 = vmatmul.mubr.bf16.gmra.mxu0 %v4789
    %v4879 = vpop.f32.mrf.mxu0
    %v4880 = vadd.f32 0.0, %v4879
    %v4881 = vpop.f32.mrf.mxu0
    %v4882 = vadd.f32 0.0, %v4881
    %v4883 = vpop.f32.mrf.mxu0
    %v4884 = vadd.f32 0.0, %v4883
    %v4885 = vpop.f32.mrf.mxu0
    %v4886 = vadd.f32 0.0, %v4885
    %4887 = vmatprep.mubr.bf16.mxu0 0
    %4888 = vmatmul.mubr.bf16.gmra.mxu0 %v4792
    %v4889 = vpop.f32.mrf.mxu0
    %v4890 = vadd.f32 0.0, %v4889
    %v4891 = vpop.f32.mrf.mxu0
    %v4892 = vadd.f32 0.0, %v4891
    %v4893 = vpop.f32.mrf.mxu0
    %v4894 = vpop.f32.mrf.mxu0
    %4895 = vdwg.mxu0
    %4896 = vmatprep.subr.bf16.mxu0 0
    %4897 = vmatpush1.bf16.msra.mxu0 0
    %4898 = vmatprep.subr.bf16.mxu0 0
    %4899 = vmatpush1.bf16.msra.mxu0 0
    %4900 = vmatprep.subr.bf16.mxu0 0
    %4901 = vmatpush1.bf16.msra.mxu0 0
    %4902 = vmatprep.subr.bf16.mxu0 0
    %4903 = vmatpush1.bf16.msra.mxu0 0
    %4904 = vmatprep.subr.bf16.mxu0 0
    %4905 = vmatpush1.bf16.msra.mxu0 0
    %4906 = vmatprep.subr.bf16.mxu0 0
    %4907 = vmatpush1.bf16.msra.mxu0 0
    %4908 = vmatprep.subr.bf16.mxu0 %v1398
    %4909 = vmatpush1.bf16.msra.mxu0 %v1397
    %4910 = vmatprep.subr.bf16.mxu0 %v1390
    %4911 = vmatpush1.bf16.msra.mxu0 %v1389
    %4912 = vmatprep.subr.bf16.mxu0 0
    %4913 = vmatpush2.bf16.msra.mxu0 0
    %4914 = vmatprep.subr.bf16.mxu0 0
    %4915 = vmatpush2.bf16.msra.mxu0 0
    %4916 = vmatprep.subr.bf16.mxu0 0
    %4917 = vmatpush2.bf16.msra.mxu0 0
    %4918 = vmatprep.subr.bf16.mxu0 0
    %4919 = vmatpush2.bf16.msra.mxu0 0
    %4920 = vmatprep.subr.bf16.mxu0 0
    %4921 = vmatpush2.bf16.msra.mxu0 0
    %4922 = vmatprep.subr.bf16.mxu0 0
    %4923 = vmatpush2.bf16.msra.mxu0 0
    %4924 = vmatprep.subr.bf16.mxu0 0
    %4925 = vmatpush2.bf16.msra.mxu0 0
    %4926 = vmatprep.subr.bf16.mxu0 0
    %4927 = vmatpush2.bf16.msra.mxu0 0
    %4928 = vmatprep.mubr.bf16.mxu0 0
    %4929 = vmatmul.mubr.bf16.gmra.mxu0 %v4789
    %v4930 = vpop.f32.mrf.mxu0
    %v4931 = vadd.f32 0.0, %v4930
    %v4932 = vpop.f32.mrf.mxu0
    %v4933 = vadd.f32 0.0, %v4932
    %v4934 = vpop.f32.mrf.mxu0
    %v4935 = vadd.f32 0.0, %v4934
    %v4936 = vpop.f32.mrf.mxu0
    %v4937 = vadd.f32 0.0, %v4936
    %4938 = vmatprep.mubr.bf16.mxu0 0
    %4939 = vmatmul.mubr.bf16.gmra.mxu0 %v4792
    %v4940 = vpop.f32.mrf.mxu0
    %v4941 = vadd.f32 0.0, %v4940
    %v4942 = vpop.f32.mrf.mxu0
    %v4943 = vadd.f32 0.0, %v4942
    %v4944 = vpop.f32.mrf.mxu0
    %v4945 = vpop.f32.mrf.mxu0
    %4946 = vdwg.mxu0
    %4947 = vmatprep.subr.bf16.mxu0 0
    %4948 = vmatpush1.bf16.msra.mxu0 0
    %4949 = vmatprep.subr.bf16.mxu0 0
    %4950 = vmatpush1.bf16.msra.mxu0 0
    %4951 = vmatprep.subr.bf16.mxu0 0
    %4952 = vmatpush1.bf16.msra.mxu0 0
    %4953 = vmatprep.subr.bf16.mxu0 0
    %4954 = vmatpush1.bf16.msra.mxu0 0
    %4955 = vmatprep.subr.bf16.mxu0 0
    %4956 = vmatpush1.bf16.msra.mxu0 0
    %4957 = vmatprep.subr.bf16.mxu0 0
    %4958 = vmatpush1.bf16.msra.mxu0 0
    %4959 = vmatprep.subr.bf16.mxu0 %v1400
    %4960 = vmatpush1.bf16.msra.mxu0 %v1399
    %4961 = vmatprep.subr.bf16.mxu0 %v1392
    %4962 = vmatpush1.bf16.msra.mxu0 %v1391
    %4963 = vmatprep.subr.bf16.mxu0 0
    %4964 = vmatpush2.bf16.msra.mxu0 0
    %4965 = vmatprep.subr.bf16.mxu0 0
    %4966 = vmatpush2.bf16.msra.mxu0 0
    %4967 = vmatprep.subr.bf16.mxu0 0
    %4968 = vmatpush2.bf16.msra.mxu0 0
    %4969 = vmatprep.subr.bf16.mxu0 0
    %4970 = vmatpush2.bf16.msra.mxu0 0
    %4971 = vmatprep.subr.bf16.mxu0 0
    %4972 = vmatpush2.bf16.msra.mxu0 0
    %4973 = vmatprep.subr.bf16.mxu0 0
    %4974 = vmatpush2.bf16.msra.mxu0 0
    %4975 = vmatprep.subr.bf16.mxu0 0
    %4976 = vmatpush2.bf16.msra.mxu0 0
    %4977 = vmatprep.subr.bf16.mxu0 0
    %4978 = vmatpush2.bf16.msra.mxu0 0
    %4979 = vmatprep.mubr.bf16.mxu0 0
    %4980 = vmatmul.mubr.bf16.gmra.mxu0 %v4789
    %v4981 = vpop.f32.mrf.mxu0
    %v4982 = vadd.f32 0.0, %v4981
    %v4983 = vpop.f32.mrf.mxu0
    %v4984 = vadd.f32 0.0, %v4983
    %v4985 = vpop.f32.mrf.mxu0
    %v4986 = vadd.f32 0.0, %v4985
    %v4987 = vpop.f32.mrf.mxu0
    %v4988 = vadd.f32 0.0, %v4987
    %4989 = vmatprep.mubr.bf16.mxu0 0
    %4990 = vmatmul.mubr.bf16.gmra.mxu0 %v4792
    %v4991 = vpop.f32.mrf.mxu0
    %v4992 = vadd.f32 0.0, %v4991
    %v4993 = vpop.f32.mrf.mxu0
    %v4994 = vadd.f32 0.0, %v4993
    %v4995 = vpop.f32.mrf.mxu0
    %v4996 = vpop.f32.mrf.mxu0
    %4997 = vdwg.mxu0
    %v4998 = vmul.f32 %v572, %v4829
    %v4999 = vmul.f32 %v574, %v4831
    %v5000 = vmul.f32 %v623, %v4880
    %v5001 = vmul.f32 %v625, %v4882
    %v5002 = vmul.f32 %v674, %v4931
    %v5003 = vmul.f32 %v676, %v4933
    %v5004 = vmul.f32 %v725, %v4982
    %v5005 = vmul.f32 %v727, %v4984
    %v5006 = vmul.f32 %v576, %v4833
    %v5007 = vmul.f32 %v578, %v4835
    %v5008 = vmul.f32 %v627, %v4884
    %v5009 = vmul.f32 %v629, %v4886
    %v5010 = vmul.f32 %v678, %v4935
    %v5011 = vmul.f32 %v680, %v4937
    %v5012 = vmul.f32 %v729, %v4986
    %v5013 = vmul.f32 %v731, %v4988
    %v5014 = vmul.f32 %v582, %v4839
    %v5015 = vmul.f32 %v584, %v4841
    %v5016 = vmul.f32 %v633, %v4890
    %v5017 = vmul.f32 %v635, %v4892
    %v5018 = vmul.f32 %v684, %v4941
    %v5019 = vmul.f32 %v686, %v4943
    %v5020 = vmul.f32 %v735, %v4992
    %v5021 = vmul.f32 %v737, %v4994
    %v5022 = vpack.c.bf16 %v5006, %v4998
    %v5023 = vpack.c.bf16 %v5007, %v4999
    %v5024 = vpack.c.bf16 %v5008, %v5000
    %v5025 = vpack.c.bf16 %v5009, %v5001
    %v5026 = vpack.c.bf16 %v5010, %v5002
    %v5027 = vpack.c.bf16 %v5011, %v5003
    %v5028 = vpack.c.bf16 %v5012, %v5004
    %v5029 = vpack.c.bf16 %v5013, %v5005
    %v5030 = vpack.c.bf16 %v5014, %v5014
    %v5031 = vpack.c.bf16 %v5015, %v5015
    %v5032 = vpack.c.bf16 %v5016, %v5016
    %v5033 = vpack.c.bf16 %v5017, %v5017
    %v5034 = vpack.c.bf16 %v5018, %v5018
    %v5035 = vpack.c.bf16 %v5019, %v5019
    %v5036 = vpack.c.bf16 %v5020, %v5020
    %v5037 = vpack.c.bf16 %v5021, %v5021
    %5038 = vmatprep.subr.bf16.mxu0 0
    %5039 = vmatpush1.bf16.msra.mxu0 %v1931
    %5040 = vmatprep.subr.bf16.mxu0 0
    %5041 = vmatpush1.bf16.msra.mxu0 %v1930
    %5042 = vmatprep.subr.bf16.mxu0 0
    %5043 = vmatpush1.bf16.msra.mxu0 %v1929
    %5044 = vmatprep.subr.bf16.mxu0 0
    %5045 = vmatpush1.bf16.msra.mxu0 %v1928
    %5046 = vmatprep.subr.bf16.mxu0 0
    %5047 = vmatpush1.bf16.msra.mxu0 %v1927
    %5048 = vmatprep.subr.bf16.mxu0 0
    %5049 = vmatpush1.bf16.msra.mxu0 %v1926
    %5050 = vmatprep.subr.bf16.mxu0 0
    %5051 = vmatpush1.bf16.msra.mxu0 %v1925
    %5052 = vmatprep.subr.bf16.mxu0 0
    %5053 = vmatpush1.bf16.msra.mxu0 %v1924
    %5054 = vmatprep.subr.bf16.mxu0 0
    %5055 = vmatpush2.bf16.msra.mxu0 %v1939
    %5056 = vmatprep.subr.bf16.mxu0 0
    %5057 = vmatpush2.bf16.msra.mxu0 %v1938
    %5058 = vmatprep.subr.bf16.mxu0 0
    %5059 = vmatpush2.bf16.msra.mxu0 %v1937
    %5060 = vmatprep.subr.bf16.mxu0 0
    %5061 = vmatpush2.bf16.msra.mxu0 %v1936
    %5062 = vmatprep.subr.bf16.mxu0 0
    %5063 = vmatpush2.bf16.msra.mxu0 %v1935
    %5064 = vmatprep.subr.bf16.mxu0 0
    %5065 = vmatpush2.bf16.msra.mxu0 %v1934
    %5066 = vmatprep.subr.bf16.mxu0 0
    %5067 = vmatpush2.bf16.msra.mxu0 %v1933
    %5068 = vmatprep.subr.bf16.mxu0 0
    %5069 = vmatpush2.bf16.msra.mxu0 %v1932
    %5070 = vmatprep.mubr.bf16.mxu0 %v5023
    %5071 = vmatmul.mubr.bf16.gmra.mxu0 %v5022
    %v5072 = vpop.f32.mrf.mxu0
    %v5073 = vadd.f32 0.0, %v5072
    %v5074 = vpop.f32.mrf.mxu0
    %v5075 = vpop.f32.mrf.mxu0
    %v5076 = vadd.f32 0.0, %v5075
    %v5077 = vpop.f32.mrf.mxu0
    %5078 = vmatprep.mubr.bf16.mxu0 %v5031
    %5079 = vmatmul.mubr.bf16.gmra.mxu0 %v5030
    %v5080 = vpop.f32.mrf.mxu0
    %v5081 = vadd.f32 0.0, %v5080
    %v5082 = vpop.f32.mrf.mxu0
    %v5083 = vpop.f32.mrf.mxu0
    %v5084 = vpop.f32.mrf.mxu0
    %5085 = vdwg.mxu0
    %5086 = vmatprep.subr.bf16.mxu0 0
    %5087 = vmatpush1.bf16.msra.mxu0 %v1947
    %5088 = vmatprep.subr.bf16.mxu0 0
    %5089 = vmatpush1.bf16.msra.mxu0 %v1946
    %5090 = vmatprep.subr.bf16.mxu0 0
    %5091 = vmatpush1.bf16.msra.mxu0 %v1945
    %5092 = vmatprep.subr.bf16.mxu0 0
    %5093 = vmatpush1.bf16.msra.mxu0 %v1944
    %5094 = vmatprep.subr.bf16.mxu0 0
    %5095 = vmatpush1.bf16.msra.mxu0 %v1943
    %5096 = vmatprep.subr.bf16.mxu0 0
    %5097 = vmatpush1.bf16.msra.mxu0 %v1942
    %5098 = vmatprep.subr.bf16.mxu0 0
    %5099 = vmatpush1.bf16.msra.mxu0 %v1941
    %5100 = vmatprep.subr.bf16.mxu0 0
    %5101 = vmatpush1.bf16.msra.mxu0 %v1940
    %5102 = vmatprep.subr.bf16.mxu0 0
    %5103 = vmatpush2.bf16.msra.mxu0 %v1955
    %5104 = vmatprep.subr.bf16.mxu0 0
    %5105 = vmatpush2.bf16.msra.mxu0 %v1954
    %5106 = vmatprep.subr.bf16.mxu0 0
    %5107 = vmatpush2.bf16.msra.mxu0 %v1953
    %5108 = vmatprep.subr.bf16.mxu0 0
    %5109 = vmatpush2.bf16.msra.mxu0 %v1952
    %5110 = vmatprep.subr.bf16.mxu0 0
    %5111 = vmatpush2.bf16.msra.mxu0 %v1951
    %5112 = vmatprep.subr.bf16.mxu0 0
    %5113 = vmatpush2.bf16.msra.mxu0 %v1950
    %5114 = vmatprep.subr.bf16.mxu0 0
    %5115 = vmatpush2.bf16.msra.mxu0 %v1949
    %5116 = vmatprep.subr.bf16.mxu0 0
    %5117 = vmatpush2.bf16.msra.mxu0 %v1948
    %5118 = vmatprep.mubr.bf16.mxu0 %v5025
    %5119 = vmatmul.mubr.bf16.gmra.mxu0 %v5024
    %v5120 = vpop.f32.mrf.mxu0
    %v5121 = vadd.f32 %v5073, %v5120
    %v5122 = vpop.f32.mrf.mxu0
    %v5123 = vpop.f32.mrf.mxu0
    %v5124 = vadd.f32 %v5076, %v5123
    %v5125 = vpop.f32.mrf.mxu0
    %5126 = vmatprep.mubr.bf16.mxu0 %v5033
    %5127 = vmatmul.mubr.bf16.gmra.mxu0 %v5032
    %v5128 = vpop.f32.mrf.mxu0
    %v5129 = vadd.f32 %v5081, %v5128
    %v5130 = vpop.f32.mrf.mxu0
    %v5131 = vpop.f32.mrf.mxu0
    %v5132 = vpop.f32.mrf.mxu0
    %5133 = vdwg.mxu0
    %5134 = vmatprep.subr.bf16.mxu0 0
    %5135 = vmatpush1.bf16.msra.mxu0 %v1963
    %5136 = vmatprep.subr.bf16.mxu0 0
    %5137 = vmatpush1.bf16.msra.mxu0 %v1962
    %5138 = vmatprep.subr.bf16.mxu0 0
    %5139 = vmatpush1.bf16.msra.mxu0 %v1961
    %5140 = vmatprep.subr.bf16.mxu0 0
    %5141 = vmatpush1.bf16.msra.mxu0 %v1960
    %5142 = vmatprep.subr.bf16.mxu0 0
    %5143 = vmatpush1.bf16.msra.mxu0 %v1959
    %5144 = vmatprep.subr.bf16.mxu0 0
    %5145 = vmatpush1.bf16.msra.mxu0 %v1958
    %5146 = vmatprep.subr.bf16.mxu0 0
    %5147 = vmatpush1.bf16.msra.mxu0 %v1957
    %5148 = vmatprep.subr.bf16.mxu0 0
    %5149 = vmatpush1.bf16.msra.mxu0 %v1956
    %5150 = vmatprep.subr.bf16.mxu0 0
    %5151 = vmatpush2.bf16.msra.mxu0 %v1971
    %5152 = vmatprep.subr.bf16.mxu0 0
    %5153 = vmatpush2.bf16.msra.mxu0 %v1970
    %5154 = vmatprep.subr.bf16.mxu0 0
    %5155 = vmatpush2.bf16.msra.mxu0 %v1969
    %5156 = vmatprep.subr.bf16.mxu0 0
    %5157 = vmatpush2.bf16.msra.mxu0 %v1968
    %5158 = vmatprep.subr.bf16.mxu0 0
    %5159 = vmatpush2.bf16.msra.mxu0 %v1967
    %5160 = vmatprep.subr.bf16.mxu0 0
    %5161 = vmatpush2.bf16.msra.mxu0 %v1966
    %5162 = vmatprep.subr.bf16.mxu0 0
    %5163 = vmatpush2.bf16.msra.mxu0 %v1965
    %5164 = vmatprep.subr.bf16.mxu0 0
    %5165 = vmatpush2.bf16.msra.mxu0 %v1964
    %5166 = vmatprep.mubr.bf16.mxu0 %v5027
    %5167 = vmatmul.mubr.bf16.gmra.mxu0 %v5026
    %v5168 = vpop.f32.mrf.mxu0
    %v5169 = vadd.f32 %v5121, %v5168
    %v5170 = vpop.f32.mrf.mxu0
    %v5171 = vpop.f32.mrf.mxu0
    %v5172 = vadd.f32 %v5124, %v5171
    %v5173 = vpop.f32.mrf.mxu0
    %5174 = vmatprep.mubr.bf16.mxu0 %v5035
    %5175 = vmatmul.mubr.bf16.gmra.mxu0 %v5034
    %v5176 = vpop.f32.mrf.mxu0
    %v5177 = vadd.f32 %v5129, %v5176
    %v5178 = vpop.f32.mrf.mxu0
    %v5179 = vpop.f32.mrf.mxu0
    %v5180 = vpop.f32.mrf.mxu0
    %5181 = vdwg.mxu0
    %5182 = vmatprep.subr.bf16.mxu0 0
    %5183 = vmatpush1.bf16.msra.mxu0 %v1979
    %5184 = vmatprep.subr.bf16.mxu0 0
    %5185 = vmatpush1.bf16.msra.mxu0 %v1978
    %5186 = vmatprep.subr.bf16.mxu0 0
    %5187 = vmatpush1.bf16.msra.mxu0 %v1977
    %5188 = vmatprep.subr.bf16.mxu0 0
    %5189 = vmatpush1.bf16.msra.mxu0 %v1976
    %5190 = vmatprep.subr.bf16.mxu0 0
    %5191 = vmatpush1.bf16.msra.mxu0 %v1975
    %5192 = vmatprep.subr.bf16.mxu0 0
    %5193 = vmatpush1.bf16.msra.mxu0 %v1974
    %5194 = vmatprep.subr.bf16.mxu0 0
    %5195 = vmatpush1.bf16.msra.mxu0 %v1973
    %5196 = vmatprep.subr.bf16.mxu0 0
    %5197 = vmatpush1.bf16.msra.mxu0 %v1972
    %5198 = vmatprep.subr.bf16.mxu0 0
    %5199 = vmatpush2.bf16.msra.mxu0 %v1987
    %5200 = vmatprep.subr.bf16.mxu0 0
    %5201 = vmatpush2.bf16.msra.mxu0 %v1986
    %5202 = vmatprep.subr.bf16.mxu0 0
    %5203 = vmatpush2.bf16.msra.mxu0 %v1985
    %5204 = vmatprep.subr.bf16.mxu0 0
    %5205 = vmatpush2.bf16.msra.mxu0 %v1984
    %5206 = vmatprep.subr.bf16.mxu0 0
    %5207 = vmatpush2.bf16.msra.mxu0 %v1983
    %5208 = vmatprep.subr.bf16.mxu0 0
    %5209 = vmatpush2.bf16.msra.mxu0 %v1982
    %5210 = vmatprep.subr.bf16.mxu0 0
    %5211 = vmatpush2.bf16.msra.mxu0 %v1981
    %5212 = vmatprep.subr.bf16.mxu0 0
    %5213 = vmatpush2.bf16.msra.mxu0 %v1980
    %5214 = vmatprep.mubr.bf16.mxu0 %v5029
    %5215 = vmatmul.mubr.bf16.gmra.mxu0 %v5028
    %v5216 = vpop.f32.mrf.mxu0
    %v5217 = vadd.f32 %v5169, %v5216
    %v5218 = vpop.f32.mrf.mxu0
    %v5219 = vpop.f32.mrf.mxu0
    %v5220 = vadd.f32 %v5172, %v5219
    %v5221 = vpop.f32.mrf.mxu0
    %5222 = vmatprep.mubr.bf16.mxu0 %v5037
    %5223 = vmatmul.mubr.bf16.gmra.mxu0 %v5036
    %v5224 = vpop.f32.mrf.mxu0
    %v5225 = vadd.f32 %v5177, %v5224
    %v5226 = vpop.f32.mrf.mxu0
    %v5227 = vpop.f32.mrf.mxu0
    %v5228 = vpop.f32.mrf.mxu0
    %5229 = vdwg.mxu0
    %v5230 = vpack.c.bf16 %v5220, %v5217
    %v5231 = vpack.c.bf16 %v5225, %v5225
    %v5233 = vsel %vm512, %v5231, 0
    %5235 = vmatprep.subr.bf16.mxu0 0
    %5236 = vmatpush1.bf16.msra.mxu0 0
    %5237 = vmatprep.subr.bf16.mxu0 0
    %5238 = vmatpush1.bf16.msra.mxu0 0
    %5239 = vmatprep.subr.bf16.mxu0 0
    %5240 = vmatpush1.bf16.msra.mxu0 0
    %5241 = vmatprep.subr.bf16.mxu0 0
    %5242 = vmatpush1.bf16.msra.mxu0 0
    %5243 = vmatprep.subr.bf16.mxu0 0
    %5244 = vmatpush1.bf16.msra.mxu0 0
    %5245 = vmatprep.subr.bf16.mxu0 0
    %5246 = vmatpush1.bf16.msra.mxu0 0
    %5247 = vmatprep.subr.bf16.mxu0 0
    %5248 = vmatpush1.bf16.msra.mxu0 %v5233
    %5249 = vmatprep.subr.bf16.mxu0 0
    %5250 = vmatpush1.bf16.msra.mxu0 %v5230
    %5251 = vmatprep.subr.bf16.mxu0 0
    %5252 = vmatpush2.bf16.msra.mxu0 0
    %5253 = vmatprep.subr.bf16.mxu0 0
    %5254 = vmatpush2.bf16.msra.mxu0 0
    %5255 = vmatprep.subr.bf16.mxu0 0
    %5256 = vmatpush2.bf16.msra.mxu0 0
    %5257 = vmatprep.subr.bf16.mxu0 0
    %5258 = vmatpush2.bf16.msra.mxu0 0
    %5259 = vmatprep.subr.bf16.mxu0 0
    %5260 = vmatpush2.bf16.msra.mxu0 0
    %5261 = vmatprep.subr.bf16.mxu0 0
    %5262 = vmatpush2.bf16.msra.mxu0 0
    %5263 = vmatprep.subr.bf16.mxu0 0
    %5264 = vmatpush2.bf16.msra.mxu0 0
    %5265 = vmatprep.subr.bf16.mxu0 0
    %5266 = vmatpush2.bf16.msra.mxu0 0
    %5267 = vmatprep.mubr.bf16.mxu0 0
    %5268 = vmatmul.mubr.bf16.gmra.mxu0 %v2248
    %v5269 = vpop.f32.mrf.mxu0
    %v5270 = vadd.f32 0.0, %v5269
    %v5271 = vpop.f32.mrf.mxu0
    %v5272 = vpop.f32.mrf.mxu0
    %v5273 = vadd.f32 0.0, %v5272
    %v5274 = vpop.f32.mrf.mxu0
    %5275 = vdwg.mxu0
    %v5276 = vpack.c.bf16 %v5273, %v5270
    %v5278 = vsel %vm1417, %v5276, 0
    %5280 = vmatprep.subr.bf16.mxu0 0
    %5281 = vmatpush1.bf16.msra.mxu0 0
    %5282 = vmatprep.subr.bf16.mxu0 0
    %5283 = vmatpush1.bf16.msra.mxu0 0
    %5284 = vmatprep.subr.bf16.mxu0 0
    %5285 = vmatpush1.bf16.msra.mxu0 0
    %5286 = vmatprep.subr.bf16.mxu0 0
    %5287 = vmatpush1.bf16.msra.mxu0 0
    %5288 = vmatprep.subr.bf16.mxu0 0
    %5289 = vmatpush1.bf16.msra.mxu0 0
    %5290 = vmatprep.subr.bf16.mxu0 0
    %5291 = vmatpush1.bf16.msra.mxu0 0
    %5292 = vmatprep.subr.bf16.mxu0 %v1394
    %5293 = vmatpush1.bf16.msra.mxu0 %v1393
    %5294 = vmatprep.subr.bf16.mxu0 %v1386
    %5295 = vmatpush1.bf16.msra.mxu0 %v1385
    %5296 = vmatprep.subr.bf16.mxu0 0
    %5297 = vmatpush2.bf16.msra.mxu0 0
    %5298 = vmatprep.subr.bf16.mxu0 0
    %5299 = vmatpush2.bf16.msra.mxu0 0
    %5300 = vmatprep.subr.bf16.mxu0 0
    %5301 = vmatpush2.bf16.msra.mxu0 0
    %5302 = vmatprep.subr.bf16.mxu0 0
    %5303 = vmatpush2.bf16.msra.mxu0 0
    %5304 = vmatprep.subr.bf16.mxu0 0
    %5305 = vmatpush2.bf16.msra.mxu0 0
    %5306 = vmatprep.subr.bf16.mxu0 0
    %5307 = vmatpush2.bf16.msra.mxu0 0
    %5308 = vmatprep.subr.bf16.mxu0 0
    %5309 = vmatpush2.bf16.msra.mxu0 0
    %5310 = vmatprep.subr.bf16.mxu0 0
    %5311 = vmatpush2.bf16.msra.mxu0 0
    %5312 = vmatprep.mubr.bf16.mxu0 0
    %5313 = vmatmul.mubr.bf16.gmra.mxu0 %v5278
    %v5314 = vpop.f32.mrf.mxu0
    %v5315 = vadd.f32 0.0, %v5314
    %v5316 = vpop.f32.mrf.mxu0
    %v5317 = vadd.f32 0.0, %v5316
    %v5318 = vpop.f32.mrf.mxu0
    %v5319 = vadd.f32 0.0, %v5318
    %v5320 = vpop.f32.mrf.mxu0
    %v5321 = vadd.f32 0.0, %v5320
    %5322 = vdwg.mxu0
    %5323 = vmatprep.subr.bf16.mxu0 0
    %5324 = vmatpush1.bf16.msra.mxu0 0
    %5325 = vmatprep.subr.bf16.mxu0 0
    %5326 = vmatpush1.bf16.msra.mxu0 0
    %5327 = vmatprep.subr.bf16.mxu0 0
    %5328 = vmatpush1.bf16.msra.mxu0 0
    %5329 = vmatprep.subr.bf16.mxu0 0
    %5330 = vmatpush1.bf16.msra.mxu0 0
    %5331 = vmatprep.subr.bf16.mxu0 0
    %5332 = vmatpush1.bf16.msra.mxu0 0
    %5333 = vmatprep.subr.bf16.mxu0 0
    %5334 = vmatpush1.bf16.msra.mxu0 0
    %5335 = vmatprep.subr.bf16.mxu0 %v1396
    %5336 = vmatpush1.bf16.msra.mxu0 %v1395
    %5337 = vmatprep.subr.bf16.mxu0 %v1388
    %5338 = vmatpush1.bf16.msra.mxu0 %v1387
    %5339 = vmatprep.subr.bf16.mxu0 0
    %5340 = vmatpush2.bf16.msra.mxu0 0
    %5341 = vmatprep.subr.bf16.mxu0 0
    %5342 = vmatpush2.bf16.msra.mxu0 0
    %5343 = vmatprep.subr.bf16.mxu0 0
    %5344 = vmatpush2.bf16.msra.mxu0 0
    %5345 = vmatprep.subr.bf16.mxu0 0
    %5346 = vmatpush2.bf16.msra.mxu0 0
    %5347 = vmatprep.subr.bf16.mxu0 0
    %5348 = vmatpush2.bf16.msra.mxu0 0
    %5349 = vmatprep.subr.bf16.mxu0 0
    %5350 = vmatpush2.bf16.msra.mxu0 0
    %5351 = vmatprep.subr.bf16.mxu0 0
    %5352 = vmatpush2.bf16.msra.mxu0 0
    %5353 = vmatprep.subr.bf16.mxu0 0
    %5354 = vmatpush2.bf16.msra.mxu0 0
    %5355 = vmatprep.mubr.bf16.mxu0 0
    %5356 = vmatmul.mubr.bf16.gmra.mxu0 %v5278
    %v5357 = vpop.f32.mrf.mxu0
    %v5358 = vadd.f32 0.0, %v5357
    %v5359 = vpop.f32.mrf.mxu0
    %v5360 = vadd.f32 0.0, %v5359
    %v5361 = vpop.f32.mrf.mxu0
    %v5362 = vadd.f32 0.0, %v5361
    %v5363 = vpop.f32.mrf.mxu0
    %v5364 = vadd.f32 0.0, %v5363
    %5365 = vdwg.mxu0
    %5366 = vmatprep.subr.bf16.mxu0 0
    %5367 = vmatpush1.bf16.msra.mxu0 0
    %5368 = vmatprep.subr.bf16.mxu0 0
    %5369 = vmatpush1.bf16.msra.mxu0 0
    %5370 = vmatprep.subr.bf16.mxu0 0
    %5371 = vmatpush1.bf16.msra.mxu0 0
    %5372 = vmatprep.subr.bf16.mxu0 0
    %5373 = vmatpush1.bf16.msra.mxu0 0
    %5374 = vmatprep.subr.bf16.mxu0 0
    %5375 = vmatpush1.bf16.msra.mxu0 0
    %5376 = vmatprep.subr.bf16.mxu0 0
    %5377 = vmatpush1.bf16.msra.mxu0 0
    %5378 = vmatprep.subr.bf16.mxu0 %v1398
    %5379 = vmatpush1.bf16.msra.mxu0 %v1397
    %5380 = vmatprep.subr.bf16.mxu0 %v1390
    %5381 = vmatpush1.bf16.msra.mxu0 %v1389
    %5382 = vmatprep.subr.bf16.mxu0 0
    %5383 = vmatpush2.bf16.msra.mxu0 0
    %5384 = vmatprep.subr.bf16.mxu0 0
    %5385 = vmatpush2.bf16.msra.mxu0 0
    %5386 = vmatprep.subr.bf16.mxu0 0
    %5387 = vmatpush2.bf16.msra.mxu0 0
    %5388 = vmatprep.subr.bf16.mxu0 0
    %5389 = vmatpush2.bf16.msra.mxu0 0
    %5390 = vmatprep.subr.bf16.mxu0 0
    %5391 = vmatpush2.bf16.msra.mxu0 0
    %5392 = vmatprep.subr.bf16.mxu0 0
    %5393 = vmatpush2.bf16.msra.mxu0 0
    %5394 = vmatprep.subr.bf16.mxu0 0
    %5395 = vmatpush2.bf16.msra.mxu0 0
    %5396 = vmatprep.subr.bf16.mxu0 0
    %5397 = vmatpush2.bf16.msra.mxu0 0
    %5398 = vmatprep.mubr.bf16.mxu0 0
    %5399 = vmatmul.mubr.bf16.gmra.mxu0 %v5278
    %v5400 = vpop.f32.mrf.mxu0
    %v5401 = vadd.f32 0.0, %v5400
    %v5402 = vpop.f32.mrf.mxu0
    %v5403 = vadd.f32 0.0, %v5402
    %v5404 = vpop.f32.mrf.mxu0
    %v5405 = vadd.f32 0.0, %v5404
    %v5406 = vpop.f32.mrf.mxu0
    %v5407 = vadd.f32 0.0, %v5406
    %5408 = vdwg.mxu0
    %5409 = vmatprep.subr.bf16.mxu0 0
    %5410 = vmatpush1.bf16.msra.mxu0 0
    %5411 = vmatprep.subr.bf16.mxu0 0
    %5412 = vmatpush1.bf16.msra.mxu0 0
    %5413 = vmatprep.subr.bf16.mxu0 0
    %5414 = vmatpush1.bf16.msra.mxu0 0
    %5415 = vmatprep.subr.bf16.mxu0 0
    %5416 = vmatpush1.bf16.msra.mxu0 0
    %5417 = vmatprep.subr.bf16.mxu0 0
    %5418 = vmatpush1.bf16.msra.mxu0 0
    %5419 = vmatprep.subr.bf16.mxu0 0
    %5420 = vmatpush1.bf16.msra.mxu0 0
    %5421 = vmatprep.subr.bf16.mxu0 %v1400
    %5422 = vmatpush1.bf16.msra.mxu0 %v1399
    %5423 = vmatprep.subr.bf16.mxu0 %v1392
    %5424 = vmatpush1.bf16.msra.mxu0 %v1391
    %5425 = vmatprep.subr.bf16.mxu0 0
    %5426 = vmatpush2.bf16.msra.mxu0 0
    %5427 = vmatprep.subr.bf16.mxu0 0
    %5428 = vmatpush2.bf16.msra.mxu0 0
    %5429 = vmatprep.subr.bf16.mxu0 0
    %5430 = vmatpush2.bf16.msra.mxu0 0
    %5431 = vmatprep.subr.bf16.mxu0 0
    %5432 = vmatpush2.bf16.msra.mxu0 0
    %5433 = vmatprep.subr.bf16.mxu0 0
    %5434 = vmatpush2.bf16.msra.mxu0 0
    %5435 = vmatprep.subr.bf16.mxu0 0
    %5436 = vmatpush2.bf16.msra.mxu0 0
    %5437 = vmatprep.subr.bf16.mxu0 0
    %5438 = vmatpush2.bf16.msra.mxu0 0
    %5439 = vmatprep.subr.bf16.mxu0 0
    %5440 = vmatpush2.bf16.msra.mxu0 0
    %5441 = vmatprep.mubr.bf16.mxu0 0
    %5442 = vmatmul.mubr.bf16.gmra.mxu0 %v5278
    %v5443 = vpop.f32.mrf.mxu0
    %v5444 = vadd.f32 0.0, %v5443
    %v5445 = vpop.f32.mrf.mxu0
    %v5446 = vadd.f32 0.0, %v5445
    %v5447 = vpop.f32.mrf.mxu0
    %v5448 = vadd.f32 0.0, %v5447
    %v5449 = vpop.f32.mrf.mxu0
    %v5450 = vadd.f32 0.0, %v5449
    %5451 = vdwg.mxu0
    %v5452 = vmul.f32 %v866, %v5315
    %v5453 = vmul.f32 %v868, %v5317
    %v5454 = vmul.f32 %v909, %v5358
    %v5455 = vmul.f32 %v911, %v5360
    %v5456 = vmul.f32 %v952, %v5401
    %v5457 = vmul.f32 %v954, %v5403
    %v5458 = vmul.f32 %v995, %v5444
    %v5459 = vmul.f32 %v997, %v5446
    %v5460 = vmul.f32 %v870, %v5319
    %v5461 = vmul.f32 %v872, %v5321
    %v5462 = vmul.f32 %v913, %v5362
    %v5463 = vmul.f32 %v915, %v5364
    %v5464 = vmul.f32 %v956, %v5405
    %v5465 = vmul.f32 %v958, %v5407
    %v5466 = vmul.f32 %v999, %v5448
    %v5467 = vmul.f32 %v1001, %v5450
    %v5468 = vpack.c.bf16 %v5460, %v5452
    %v5469 = vpack.c.bf16 %v5461, %v5453
    %v5470 = vpack.c.bf16 %v5462, %v5454
    %v5471 = vpack.c.bf16 %v5463, %v5455
    %v5472 = vpack.c.bf16 %v5464, %v5456
    %v5473 = vpack.c.bf16 %v5465, %v5457
    %v5474 = vpack.c.bf16 %v5466, %v5458
    %v5475 = vpack.c.bf16 %v5467, %v5459
    %5476 = vmatprep.subr.bf16.mxu0 0
    %5477 = vmatpush1.bf16.msra.mxu0 %v1931
    %5478 = vmatprep.subr.bf16.mxu0 0
    %5479 = vmatpush1.bf16.msra.mxu0 %v1930
    %5480 = vmatprep.subr.bf16.mxu0 0
    %5481 = vmatpush1.bf16.msra.mxu0 %v1929
    %5482 = vmatprep.subr.bf16.mxu0 0
    %5483 = vmatpush1.bf16.msra.mxu0 %v1928
    %5484 = vmatprep.subr.bf16.mxu0 0
    %5485 = vmatpush1.bf16.msra.mxu0 %v1927
    %5486 = vmatprep.subr.bf16.mxu0 0
    %5487 = vmatpush1.bf16.msra.mxu0 %v1926
    %5488 = vmatprep.subr.bf16.mxu0 0
    %5489 = vmatpush1.bf16.msra.mxu0 %v1925
    %5490 = vmatprep.subr.bf16.mxu0 0
    %5491 = vmatpush1.bf16.msra.mxu0 %v1924
    %5492 = vmatprep.subr.bf16.mxu0 0
    %5493 = vmatpush2.bf16.msra.mxu0 %v1939
    %5494 = vmatprep.subr.bf16.mxu0 0
    %5495 = vmatpush2.bf16.msra.mxu0 %v1938
    %5496 = vmatprep.subr.bf16.mxu0 0
    %5497 = vmatpush2.bf16.msra.mxu0 %v1937
    %5498 = vmatprep.subr.bf16.mxu0 0
    %5499 = vmatpush2.bf16.msra.mxu0 %v1936
    %5500 = vmatprep.subr.bf16.mxu0 0
    %5501 = vmatpush2.bf16.msra.mxu0 %v1935
    %5502 = vmatprep.subr.bf16.mxu0 0
    %5503 = vmatpush2.bf16.msra.mxu0 %v1934
    %5504 = vmatprep.subr.bf16.mxu0 0
    %5505 = vmatpush2.bf16.msra.mxu0 %v1933
    %5506 = vmatprep.subr.bf16.mxu0 0
    %5507 = vmatpush2.bf16.msra.mxu0 %v1932
    %5508 = vmatprep.mubr.bf16.mxu0 %v5469
    %5509 = vmatmul.mubr.bf16.gmra.mxu0 %v5468
    %v5510 = vpop.f32.mrf.mxu0
    %v5511 = vadd.f32 0.0, %v5510
    %v5512 = vpop.f32.mrf.mxu0
    %v5513 = vpop.f32.mrf.mxu0
    %v5514 = vadd.f32 0.0, %v5513
    %v5515 = vpop.f32.mrf.mxu0
    %5516 = vdwg.mxu0
    %5517 = vmatprep.subr.bf16.mxu0 0
    %5518 = vmatpush1.bf16.msra.mxu0 %v1947
    %5519 = vmatprep.subr.bf16.mxu0 0
    %5520 = vmatpush1.bf16.msra.mxu0 %v1946
    %5521 = vmatprep.subr.bf16.mxu0 0
    %5522 = vmatpush1.bf16.msra.mxu0 %v1945
    %5523 = vmatprep.subr.bf16.mxu0 0
    %5524 = vmatpush1.bf16.msra.mxu0 %v1944
    %5525 = vmatprep.subr.bf16.mxu0 0
    %5526 = vmatpush1.bf16.msra.mxu0 %v1943
    %5527 = vmatprep.subr.bf16.mxu0 0
    %5528 = vmatpush1.bf16.msra.mxu0 %v1942
    %5529 = vmatprep.subr.bf16.mxu0 0
    %5530 = vmatpush1.bf16.msra.mxu0 %v1941
    %5531 = vmatprep.subr.bf16.mxu0 0
    %5532 = vmatpush1.bf16.msra.mxu0 %v1940
    %5533 = vmatprep.subr.bf16.mxu0 0
    %5534 = vmatpush2.bf16.msra.mxu0 %v1955
    %5535 = vmatprep.subr.bf16.mxu0 0
    %5536 = vmatpush2.bf16.msra.mxu0 %v1954
    %5537 = vmatprep.subr.bf16.mxu0 0
    %5538 = vmatpush2.bf16.msra.mxu0 %v1953
    %5539 = vmatprep.subr.bf16.mxu0 0
    %5540 = vmatpush2.bf16.msra.mxu0 %v1952
    %5541 = vmatprep.subr.bf16.mxu0 0
    %5542 = vmatpush2.bf16.msra.mxu0 %v1951
    %5543 = vmatprep.subr.bf16.mxu0 0
    %5544 = vmatpush2.bf16.msra.mxu0 %v1950
    %5545 = vmatprep.subr.bf16.mxu0 0
    %5546 = vmatpush2.bf16.msra.mxu0 %v1949
    %5547 = vmatprep.subr.bf16.mxu0 0
    %5548 = vmatpush2.bf16.msra.mxu0 %v1948
    %5549 = vmatprep.mubr.bf16.mxu0 %v5471
    %5550 = vmatmul.mubr.bf16.gmra.mxu0 %v5470
    %v5551 = vpop.f32.mrf.mxu0
    %v5552 = vadd.f32 %v5511, %v5551
    %v5553 = vpop.f32.mrf.mxu0
    %v5554 = vpop.f32.mrf.mxu0
    %v5555 = vadd.f32 %v5514, %v5554
    %v5556 = vpop.f32.mrf.mxu0
    %5557 = vdwg.mxu0
    %5558 = vmatprep.subr.bf16.mxu0 0
    %5559 = vmatpush1.bf16.msra.mxu0 %v1963
    %5560 = vmatprep.subr.bf16.mxu0 0
    %5561 = vmatpush1.bf16.msra.mxu0 %v1962
    %5562 = vmatprep.subr.bf16.mxu0 0
    %5563 = vmatpush1.bf16.msra.mxu0 %v1961
    %5564 = vmatprep.subr.bf16.mxu0 0
    %5565 = vmatpush1.bf16.msra.mxu0 %v1960
    %5566 = vmatprep.subr.bf16.mxu0 0
    %5567 = vmatpush1.bf16.msra.mxu0 %v1959
    %5568 = vmatprep.subr.bf16.mxu0 0
    %5569 = vmatpush1.bf16.msra.mxu0 %v1958
    %5570 = vmatprep.subr.bf16.mxu0 0
    %5571 = vmatpush1.bf16.msra.mxu0 %v1957
    %5572 = vmatprep.subr.bf16.mxu0 0
    %5573 = vmatpush1.bf16.msra.mxu0 %v1956
    %5574 = vmatprep.subr.bf16.mxu0 0
    %5575 = vmatpush2.bf16.msra.mxu0 %v1971
    %5576 = vmatprep.subr.bf16.mxu0 0
    %5577 = vmatpush2.bf16.msra.mxu0 %v1970
    %5578 = vmatprep.subr.bf16.mxu0 0
    %5579 = vmatpush2.bf16.msra.mxu0 %v1969
    %5580 = vmatprep.subr.bf16.mxu0 0
    %5581 = vmatpush2.bf16.msra.mxu0 %v1968
    %5582 = vmatprep.subr.bf16.mxu0 0
    %5583 = vmatpush2.bf16.msra.mxu0 %v1967
    %5584 = vmatprep.subr.bf16.mxu0 0
    %5585 = vmatpush2.bf16.msra.mxu0 %v1966
    %5586 = vmatprep.subr.bf16.mxu0 0
    %5587 = vmatpush2.bf16.msra.mxu0 %v1965
    %5588 = vmatprep.subr.bf16.mxu0 0
    %5589 = vmatpush2.bf16.msra.mxu0 %v1964
    %5590 = vmatprep.mubr.bf16.mxu0 %v5473
    %5591 = vmatmul.mubr.bf16.gmra.mxu0 %v5472
    %v5592 = vpop.f32.mrf.mxu0
    %v5593 = vadd.f32 %v5552, %v5592
    %v5594 = vpop.f32.mrf.mxu0
    %v5595 = vpop.f32.mrf.mxu0
    %v5596 = vadd.f32 %v5555, %v5595
    %v5597 = vpop.f32.mrf.mxu0
    %5598 = vdwg.mxu0
    %5599 = vmatprep.subr.bf16.mxu0 0
    %5600 = vmatpush1.bf16.msra.mxu0 %v1979
    %5601 = vmatprep.subr.bf16.mxu0 0
    %5602 = vmatpush1.bf16.msra.mxu0 %v1978
    %5603 = vmatprep.subr.bf16.mxu0 0
    %5604 = vmatpush1.bf16.msra.mxu0 %v1977
    %5605 = vmatprep.subr.bf16.mxu0 0
    %5606 = vmatpush1.bf16.msra.mxu0 %v1976
    %5607 = vmatprep.subr.bf16.mxu0 0
    %5608 = vmatpush1.bf16.msra.mxu0 %v1975
    %5609 = vmatprep.subr.bf16.mxu0 0
    %5610 = vmatpush1.bf16.msra.mxu0 %v1974
    %5611 = vmatprep.subr.bf16.mxu0 0
    %5612 = vmatpush1.bf16.msra.mxu0 %v1973
    %5613 = vmatprep.subr.bf16.mxu0 0
    %5614 = vmatpush1.bf16.msra.mxu0 %v1972
    %5615 = vmatprep.subr.bf16.mxu0 0
    %5616 = vmatpush2.bf16.msra.mxu0 %v1987
    %5617 = vmatprep.subr.bf16.mxu0 0
    %5618 = vmatpush2.bf16.msra.mxu0 %v1986
    %5619 = vmatprep.subr.bf16.mxu0 0
    %5620 = vmatpush2.bf16.msra.mxu0 %v1985
    %5621 = vmatprep.subr.bf16.mxu0 0
    %5622 = vmatpush2.bf16.msra.mxu0 %v1984
    %5623 = vmatprep.subr.bf16.mxu0 0
    %5624 = vmatpush2.bf16.msra.mxu0 %v1983
    %5625 = vmatprep.subr.bf16.mxu0 0
    %5626 = vmatpush2.bf16.msra.mxu0 %v1982
    %5627 = vmatprep.subr.bf16.mxu0 0
    %5628 = vmatpush2.bf16.msra.mxu0 %v1981
    %5629 = vmatprep.subr.bf16.mxu0 0
    %5630 = vmatpush2.bf16.msra.mxu0 %v1980
    %5631 = vmatprep.mubr.bf16.mxu0 %v5475
    %5632 = vmatmul.mubr.bf16.gmra.mxu0 %v5474
    %v5633 = vpop.f32.mrf.mxu0
    %v5634 = vadd.f32 %v5593, %v5633
    %v5635 = vpop.f32.mrf.mxu0
    %v5636 = vpop.f32.mrf.mxu0
    %v5637 = vadd.f32 %v5596, %v5636
    %v5638 = vpop.f32.mrf.mxu0
    %5639 = vdwg.mxu0
    %v5640 = vpack.c.bf16 %v5637, %v5634
    %5641 = vmatprep.subr.bf16.mxu0 0
    %5642 = vmatpush1.bf16.msra.mxu0 0
    %5643 = vmatprep.subr.bf16.mxu0 0
    %5644 = vmatpush1.bf16.msra.mxu0 0
    %5645 = vmatprep.subr.bf16.mxu0 0
    %5646 = vmatpush1.bf16.msra.mxu0 0
    %5647 = vmatprep.subr.bf16.mxu0 0
    %5648 = vmatpush1.bf16.msra.mxu0 0
    %5649 = vmatprep.subr.bf16.mxu0 0
    %5650 = vmatpush1.bf16.msra.mxu0 0
    %5651 = vmatprep.subr.bf16.mxu0 0
    %5652 = vmatpush1.bf16.msra.mxu0 0
    %5653 = vmatprep.subr.bf16.mxu0 0
    %5654 = vmatpush1.bf16.msra.mxu0 0
    %5655 = vmatprep.subr.bf16.mxu0 0
    %5656 = vmatpush1.bf16.msra.mxu0 %v5640
    %5657 = vmatprep.subr.bf16.mxu0 0
    %5658 = vmatpush2.bf16.msra.mxu0 0
    %5659 = vmatprep.subr.bf16.mxu0 0
    %5660 = vmatpush2.bf16.msra.mxu0 0
    %5661 = vmatprep.subr.bf16.mxu0 0
    %5662 = vmatpush2.bf16.msra.mxu0 0
    %5663 = vmatprep.subr.bf16.mxu0 0
    %5664 = vmatpush2.bf16.msra.mxu0 0
    %5665 = vmatprep.subr.bf16.mxu0 0
    %5666 = vmatpush2.bf16.msra.mxu0 0
    %5667 = vmatprep.subr.bf16.mxu0 0
    %5668 = vmatpush2.bf16.msra.mxu0 0
    %5669 = vmatprep.subr.bf16.mxu0 0
    %5670 = vmatpush2.bf16.msra.mxu0 0
    %5671 = vmatprep.subr.bf16.mxu0 0
    %5672 = vmatpush2.bf16.msra.mxu0 0
    %5673 = vmatprep.mubr.bf16.mxu0 0
    %5674 = vmatmul.mubr.bf16.gmra.mxu0 %v2660
    %v5675 = vpop.f32.mrf.mxu0
    %v5676 = vadd.f32 0.0, %v5675
    %v5677 = vpop.f32.mrf.mxu0
    %v5678 = vpop.f32.mrf.mxu0
    %v5679 = vpop.f32.mrf.mxu0
    %5680 = vdwg.mxu0
    %v5681 = vpack.c.bf16 %v5676, %v5676
    %v5683 = vsel %vm1417, %v5681, 0
    %5685 = vmatprep.subr.bf16.mxu0 0
    %5686 = vmatpush1.bf16.msra.mxu0 0
    %5687 = vmatprep.subr.bf16.mxu0 0
    %5688 = vmatpush1.bf16.msra.mxu0 0
    %5689 = vmatprep.subr.bf16.mxu0 0
    %5690 = vmatpush1.bf16.msra.mxu0 0
    %5691 = vmatprep.subr.bf16.mxu0 0
    %5692 = vmatpush1.bf16.msra.mxu0 0
    %5693 = vmatprep.subr.bf16.mxu0 0
    %5694 = vmatpush1.bf16.msra.mxu0 0
    %5695 = vmatprep.subr.bf16.mxu0 0
    %5696 = vmatpush1.bf16.msra.mxu0 0
    %5697 = vmatprep.subr.bf16.mxu0 %v1394
    %5698 = vmatpush1.bf16.msra.mxu0 %v1393
    %5699 = vmatprep.subr.bf16.mxu0 %v1386
    %5700 = vmatpush1.bf16.msra.mxu0 %v1385
    %5701 = vmatprep.subr.bf16.mxu0 0
    %5702 = vmatpush2.bf16.msra.mxu0 0
    %5703 = vmatprep.subr.bf16.mxu0 0
    %5704 = vmatpush2.bf16.msra.mxu0 0
    %5705 = vmatprep.subr.bf16.mxu0 0
    %5706 = vmatpush2.bf16.msra.mxu0 0
    %5707 = vmatprep.subr.bf16.mxu0 0
    %5708 = vmatpush2.bf16.msra.mxu0 0
    %5709 = vmatprep.subr.bf16.mxu0 0
    %5710 = vmatpush2.bf16.msra.mxu0 0
    %5711 = vmatprep.subr.bf16.mxu0 0
    %5712 = vmatpush2.bf16.msra.mxu0 0
    %5713 = vmatprep.subr.bf16.mxu0 0
    %5714 = vmatpush2.bf16.msra.mxu0 0
    %5715 = vmatprep.subr.bf16.mxu0 0
    %5716 = vmatpush2.bf16.msra.mxu0 0
    %5717 = vmatprep.mubr.bf16.mxu0 0
    %5718 = vmatmul.mubr.bf16.gmra.mxu0 %v5683
    %v5719 = vpop.f32.mrf.mxu0
    %v5720 = vadd.f32 0.0, %v5719
    %v5721 = vpop.f32.mrf.mxu0
    %v5722 = vadd.f32 0.0, %v5721
    %v5723 = vpop.f32.mrf.mxu0
    %v5724 = vpop.f32.mrf.mxu0
    %5725 = vdwg.mxu0
    %5726 = vmatprep.subr.bf16.mxu0 0
    %5727 = vmatpush1.bf16.msra.mxu0 0
    %5728 = vmatprep.subr.bf16.mxu0 0
    %5729 = vmatpush1.bf16.msra.mxu0 0
    %5730 = vmatprep.subr.bf16.mxu0 0
    %5731 = vmatpush1.bf16.msra.mxu0 0
    %5732 = vmatprep.subr.bf16.mxu0 0
    %5733 = vmatpush1.bf16.msra.mxu0 0
    %5734 = vmatprep.subr.bf16.mxu0 0
    %5735 = vmatpush1.bf16.msra.mxu0 0
    %5736 = vmatprep.subr.bf16.mxu0 0
    %5737 = vmatpush1.bf16.msra.mxu0 0
    %5738 = vmatprep.subr.bf16.mxu0 %v1396
    %5739 = vmatpush1.bf16.msra.mxu0 %v1395
    %5740 = vmatprep.subr.bf16.mxu0 %v1388
    %5741 = vmatpush1.bf16.msra.mxu0 %v1387
    %5742 = vmatprep.subr.bf16.mxu0 0
    %5743 = vmatpush2.bf16.msra.mxu0 0
    %5744 = vmatprep.subr.bf16.mxu0 0
    %5745 = vmatpush2.bf16.msra.mxu0 0
    %5746 = vmatprep.subr.bf16.mxu0 0
    %5747 = vmatpush2.bf16.msra.mxu0 0
    %5748 = vmatprep.subr.bf16.mxu0 0
    %5749 = vmatpush2.bf16.msra.mxu0 0
    %5750 = vmatprep.subr.bf16.mxu0 0
    %5751 = vmatpush2.bf16.msra.mxu0 0
    %5752 = vmatprep.subr.bf16.mxu0 0
    %5753 = vmatpush2.bf16.msra.mxu0 0
    %5754 = vmatprep.subr.bf16.mxu0 0
    %5755 = vmatpush2.bf16.msra.mxu0 0
    %5756 = vmatprep.subr.bf16.mxu0 0
    %5757 = vmatpush2.bf16.msra.mxu0 0
    %5758 = vmatprep.mubr.bf16.mxu0 0
    %5759 = vmatmul.mubr.bf16.gmra.mxu0 %v5683
    %v5760 = vpop.f32.mrf.mxu0
    %v5761 = vadd.f32 0.0, %v5760
    %v5762 = vpop.f32.mrf.mxu0
    %v5763 = vadd.f32 0.0, %v5762
    %v5764 = vpop.f32.mrf.mxu0
    %v5765 = vpop.f32.mrf.mxu0
    %5766 = vdwg.mxu0
    %5767 = vmatprep.subr.bf16.mxu0 0
    %5768 = vmatpush1.bf16.msra.mxu0 0
    %5769 = vmatprep.subr.bf16.mxu0 0
    %5770 = vmatpush1.bf16.msra.mxu0 0
    %5771 = vmatprep.subr.bf16.mxu0 0
    %5772 = vmatpush1.bf16.msra.mxu0 0
    %5773 = vmatprep.subr.bf16.mxu0 0
    %5774 = vmatpush1.bf16.msra.mxu0 0
    %5775 = vmatprep.subr.bf16.mxu0 0
    %5776 = vmatpush1.bf16.msra.mxu0 0
    %5777 = vmatprep.subr.bf16.mxu0 0
    %5778 = vmatpush1.bf16.msra.mxu0 0
    %5779 = vmatprep.subr.bf16.mxu0 %v1398
    %5780 = vmatpush1.bf16.msra.mxu0 %v1397
    %5781 = vmatprep.subr.bf16.mxu0 %v1390
    %5782 = vmatpush1.bf16.msra.mxu0 %v1389
    %5783 = vmatprep.subr.bf16.mxu0 0
    %5784 = vmatpush2.bf16.msra.mxu0 0
    %5785 = vmatprep.subr.bf16.mxu0 0
    %5786 = vmatpush2.bf16.msra.mxu0 0
    %5787 = vmatprep.subr.bf16.mxu0 0
    %5788 = vmatpush2.bf16.msra.mxu0 0
    %5789 = vmatprep.subr.bf16.mxu0 0
    %5790 = vmatpush2.bf16.msra.mxu0 0
    %5791 = vmatprep.subr.bf16.mxu0 0
    %5792 = vmatpush2.bf16.msra.mxu0 0
    %5793 = vmatprep.subr.bf16.mxu0 0
    %5794 = vmatpush2.bf16.msra.mxu0 0
    %5795 = vmatprep.subr.bf16.mxu0 0
    %5796 = vmatpush2.bf16.msra.mxu0 0
    %5797 = vmatprep.subr.bf16.mxu0 0
    %5798 = vmatpush2.bf16.msra.mxu0 0
    %5799 = vmatprep.mubr.bf16.mxu0 0
    %5800 = vmatmul.mubr.bf16.gmra.mxu0 %v5683
    %v5801 = vpop.f32.mrf.mxu0
    %v5802 = vadd.f32 0.0, %v5801
    %v5803 = vpop.f32.mrf.mxu0
    %v5804 = vadd.f32 0.0, %v5803
    %v5805 = vpop.f32.mrf.mxu0
    %v5806 = vpop.f32.mrf.mxu0
    %5807 = vdwg.mxu0
    %5808 = vmatprep.subr.bf16.mxu0 0
    %5809 = vmatpush1.bf16.msra.mxu0 0
    %5810 = vmatprep.subr.bf16.mxu0 0
    %5811 = vmatpush1.bf16.msra.mxu0 0
    %5812 = vmatprep.subr.bf16.mxu0 0
    %5813 = vmatpush1.bf16.msra.mxu0 0
    %5814 = vmatprep.subr.bf16.mxu0 0
    %5815 = vmatpush1.bf16.msra.mxu0 0
    %5816 = vmatprep.subr.bf16.mxu0 0
    %5817 = vmatpush1.bf16.msra.mxu0 0
    %5818 = vmatprep.subr.bf16.mxu0 0
    %5819 = vmatpush1.bf16.msra.mxu0 0
    %5820 = vmatprep.subr.bf16.mxu0 %v1400
    %5821 = vmatpush1.bf16.msra.mxu0 %v1399
    %5822 = vmatprep.subr.bf16.mxu0 %v1392
    %5823 = vmatpush1.bf16.msra.mxu0 %v1391
    %5824 = vmatprep.subr.bf16.mxu0 0
    %5825 = vmatpush2.bf16.msra.mxu0 0
    %5826 = vmatprep.subr.bf16.mxu0 0
    %5827 = vmatpush2.bf16.msra.mxu0 0
    %5828 = vmatprep.subr.bf16.mxu0 0
    %5829 = vmatpush2.bf16.msra.mxu0 0
    %5830 = vmatprep.subr.bf16.mxu0 0
    %5831 = vmatpush2.bf16.msra.mxu0 0
    %5832 = vmatprep.subr.bf16.mxu0 0
    %5833 = vmatpush2.bf16.msra.mxu0 0
    %5834 = vmatprep.subr.bf16.mxu0 0
    %5835 = vmatpush2.bf16.msra.mxu0 0
    %5836 = vmatprep.subr.bf16.mxu0 0
    %5837 = vmatpush2.bf16.msra.mxu0 0
    %5838 = vmatprep.subr.bf16.mxu0 0
    %5839 = vmatpush2.bf16.msra.mxu0 0
    %5840 = vmatprep.mubr.bf16.mxu0 0
    %5841 = vmatmul.mubr.bf16.gmra.mxu0 %v5683
    %v5842 = vpop.f32.mrf.mxu0
    %v5843 = vadd.f32 0.0, %v5842
    %v5844 = vpop.f32.mrf.mxu0
    %v5845 = vadd.f32 0.0, %v5844
    %v5846 = vpop.f32.mrf.mxu0
    %v5847 = vpop.f32.mrf.mxu0
    %5848 = vdwg.mxu0
    %v5849 = vmul.f32 %v1135, %v5720
    %v5850 = vmul.f32 %v1137, %v5722
    %v5851 = vmul.f32 %v1176, %v5761
    %v5852 = vmul.f32 %v1178, %v5763
    %v5853 = vmul.f32 %v1217, %v5802
    %v5854 = vmul.f32 %v1219, %v5804
    %v5855 = vmul.f32 %v1258, %v5843
    %v5856 = vmul.f32 %v1260, %v5845
    %v5857 = vpack.c.bf16 %v5849, %v5849
    %v5858 = vpack.c.bf16 %v5850, %v5850
    %v5859 = vpack.c.bf16 %v5851, %v5851
    %v5860 = vpack.c.bf16 %v5852, %v5852
    %v5861 = vpack.c.bf16 %v5853, %v5853
    %v5862 = vpack.c.bf16 %v5854, %v5854
    %v5863 = vpack.c.bf16 %v5855, %v5855
    %v5864 = vpack.c.bf16 %v5856, %v5856
    %5865 = vmatprep.subr.bf16.mxu0 0
    %5866 = vmatpush1.bf16.msra.mxu0 %v1931
    %5867 = vmatprep.subr.bf16.mxu0 0
    %5868 = vmatpush1.bf16.msra.mxu0 %v1930
    %5869 = vmatprep.subr.bf16.mxu0 0
    %5870 = vmatpush1.bf16.msra.mxu0 %v1929
    %5871 = vmatprep.subr.bf16.mxu0 0
    %5872 = vmatpush1.bf16.msra.mxu0 %v1928
    %5873 = vmatprep.subr.bf16.mxu0 0
    %5874 = vmatpush1.bf16.msra.mxu0 %v1927
    %5875 = vmatprep.subr.bf16.mxu0 0
    %5876 = vmatpush1.bf16.msra.mxu0 %v1926
    %5877 = vmatprep.subr.bf16.mxu0 0
    %5878 = vmatpush1.bf16.msra.mxu0 %v1925
    %5879 = vmatprep.subr.bf16.mxu0 0
    %5880 = vmatpush1.bf16.msra.mxu0 %v1924
    %5881 = vmatprep.subr.bf16.mxu0 0
    %5882 = vmatpush2.bf16.msra.mxu0 %v1939
    %5883 = vmatprep.subr.bf16.mxu0 0
    %5884 = vmatpush2.bf16.msra.mxu0 %v1938
    %5885 = vmatprep.subr.bf16.mxu0 0
    %5886 = vmatpush2.bf16.msra.mxu0 %v1937
    %5887 = vmatprep.subr.bf16.mxu0 0
    %5888 = vmatpush2.bf16.msra.mxu0 %v1936
    %5889 = vmatprep.subr.bf16.mxu0 0
    %5890 = vmatpush2.bf16.msra.mxu0 %v1935
    %5891 = vmatprep.subr.bf16.mxu0 0
    %5892 = vmatpush2.bf16.msra.mxu0 %v1934
    %5893 = vmatprep.subr.bf16.mxu0 0
    %5894 = vmatpush2.bf16.msra.mxu0 %v1933
    %5895 = vmatprep.subr.bf16.mxu0 0
    %5896 = vmatpush2.bf16.msra.mxu0 %v1932
    %5897 = vmatprep.mubr.bf16.mxu0 %v5858
    %5898 = vmatmul.mubr.bf16.gmra.mxu0 %v5857
    %v5899 = vpop.f32.mrf.mxu0
    %v5900 = vadd.f32 0.0, %v5899
    %v5901 = vpop.f32.mrf.mxu0
    %v5902 = vpop.f32.mrf.mxu0
    %v5903 = vpop.f32.mrf.mxu0
    %5904 = vdwg.mxu0
    %5905 = vmatprep.subr.bf16.mxu0 0
    %5906 = vmatpush1.bf16.msra.mxu0 %v1947
    %5907 = vmatprep.subr.bf16.mxu0 0
    %5908 = vmatpush1.bf16.msra.mxu0 %v1946
    %5909 = vmatprep.subr.bf16.mxu0 0
    %5910 = vmatpush1.bf16.msra.mxu0 %v1945
    %5911 = vmatprep.subr.bf16.mxu0 0
    %5912 = vmatpush1.bf16.msra.mxu0 %v1944
    %5913 = vmatprep.subr.bf16.mxu0 0
    %5914 = vmatpush1.bf16.msra.mxu0 %v1943
    %5915 = vmatprep.subr.bf16.mxu0 0
    %5916 = vmatpush1.bf16.msra.mxu0 %v1942
    %5917 = vmatprep.subr.bf16.mxu0 0
    %5918 = vmatpush1.bf16.msra.mxu0 %v1941
    %5919 = vmatprep.subr.bf16.mxu0 0
    %5920 = vmatpush1.bf16.msra.mxu0 %v1940
    %5921 = vmatprep.subr.bf16.mxu0 0
    %5922 = vmatpush2.bf16.msra.mxu0 %v1955
    %5923 = vmatprep.subr.bf16.mxu0 0
    %5924 = vmatpush2.bf16.msra.mxu0 %v1954
    %5925 = vmatprep.subr.bf16.mxu0 0
    %5926 = vmatpush2.bf16.msra.mxu0 %v1953
    %5927 = vmatprep.subr.bf16.mxu0 0
    %5928 = vmatpush2.bf16.msra.mxu0 %v1952
    %5929 = vmatprep.subr.bf16.mxu0 0
    %5930 = vmatpush2.bf16.msra.mxu0 %v1951
    %5931 = vmatprep.subr.bf16.mxu0 0
    %5932 = vmatpush2.bf16.msra.mxu0 %v1950
    %5933 = vmatprep.subr.bf16.mxu0 0
    %5934 = vmatpush2.bf16.msra.mxu0 %v1949
    %5935 = vmatprep.subr.bf16.mxu0 0
    %5936 = vmatpush2.bf16.msra.mxu0 %v1948
    %5937 = vmatprep.mubr.bf16.mxu0 %v5860
    %5938 = vmatmul.mubr.bf16.gmra.mxu0 %v5859
    %v5939 = vpop.f32.mrf.mxu0
    %v5940 = vadd.f32 %v5900, %v5939
    %v5941 = vpop.f32.mrf.mxu0
    %v5942 = vpop.f32.mrf.mxu0
    %v5943 = vpop.f32.mrf.mxu0
    %5944 = vdwg.mxu0
    %5945 = vmatprep.subr.bf16.mxu0 0
    %5946 = vmatpush1.bf16.msra.mxu0 %v1963
    %5947 = vmatprep.subr.bf16.mxu0 0
    %5948 = vmatpush1.bf16.msra.mxu0 %v1962
    %5949 = vmatprep.subr.bf16.mxu0 0
    %5950 = vmatpush1.bf16.msra.mxu0 %v1961
    %5951 = vmatprep.subr.bf16.mxu0 0
    %5952 = vmatpush1.bf16.msra.mxu0 %v1960
    %5953 = vmatprep.subr.bf16.mxu0 0
    %5954 = vmatpush1.bf16.msra.mxu0 %v1959
    %5955 = vmatprep.subr.bf16.mxu0 0
    %5956 = vmatpush1.bf16.msra.mxu0 %v1958
    %5957 = vmatprep.subr.bf16.mxu0 0
    %5958 = vmatpush1.bf16.msra.mxu0 %v1957
    %5959 = vmatprep.subr.bf16.mxu0 0
    %5960 = vmatpush1.bf16.msra.mxu0 %v1956
    %5961 = vmatprep.subr.bf16.mxu0 0
    %5962 = vmatpush2.bf16.msra.mxu0 %v1971
    %5963 = vmatprep.subr.bf16.mxu0 0
    %5964 = vmatpush2.bf16.msra.mxu0 %v1970
    %5965 = vmatprep.subr.bf16.mxu0 0
    %5966 = vmatpush2.bf16.msra.mxu0 %v1969
    %5967 = vmatprep.subr.bf16.mxu0 0
    %5968 = vmatpush2.bf16.msra.mxu0 %v1968
    %5969 = vmatprep.subr.bf16.mxu0 0
    %5970 = vmatpush2.bf16.msra.mxu0 %v1967
    %5971 = vmatprep.subr.bf16.mxu0 0
    %5972 = vmatpush2.bf16.msra.mxu0 %v1966
    %5973 = vmatprep.subr.bf16.mxu0 0
    %5974 = vmatpush2.bf16.msra.mxu0 %v1965
    %5975 = vmatprep.subr.bf16.mxu0 0
    %5976 = vmatpush2.bf16.msra.mxu0 %v1964
    %5977 = vmatprep.mubr.bf16.mxu0 %v5862
    %5978 = vmatmul.mubr.bf16.gmra.mxu0 %v5861
    %v5979 = vpop.f32.mrf.mxu0
    %v5980 = vadd.f32 %v5940, %v5979
    %v5981 = vpop.f32.mrf.mxu0
    %v5982 = vpop.f32.mrf.mxu0
    %v5983 = vpop.f32.mrf.mxu0
    %5984 = vdwg.mxu0
    %5985 = vmatprep.subr.bf16.mxu0 0
    %5986 = vmatpush1.bf16.msra.mxu0 %v1979
    %5987 = vmatprep.subr.bf16.mxu0 0
    %5988 = vmatpush1.bf16.msra.mxu0 %v1978
    %5989 = vmatprep.subr.bf16.mxu0 0
    %5990 = vmatpush1.bf16.msra.mxu0 %v1977
    %5991 = vmatprep.subr.bf16.mxu0 0
    %5992 = vmatpush1.bf16.msra.mxu0 %v1976
    %5993 = vmatprep.subr.bf16.mxu0 0
    %5994 = vmatpush1.bf16.msra.mxu0 %v1975
    %5995 = vmatprep.subr.bf16.mxu0 0
    %5996 = vmatpush1.bf16.msra.mxu0 %v1974
    %5997 = vmatprep.subr.bf16.mxu0 0
    %5998 = vmatpush1.bf16.msra.mxu0 %v1973
    %5999 = vmatprep.subr.bf16.mxu0 0
    %6000 = vmatpush1.bf16.msra.mxu0 %v1972
    %6001 = vmatprep.subr.bf16.mxu0 0
    %6002 = vmatpush2.bf16.msra.mxu0 %v1987
    %6003 = vmatprep.subr.bf16.mxu0 0
    %6004 = vmatpush2.bf16.msra.mxu0 %v1986
    %6005 = vmatprep.subr.bf16.mxu0 0
    %6006 = vmatpush2.bf16.msra.mxu0 %v1985
    %6007 = vmatprep.subr.bf16.mxu0 0
    %6008 = vmatpush2.bf16.msra.mxu0 %v1984
    %6009 = vmatprep.subr.bf16.mxu0 0
    %6010 = vmatpush2.bf16.msra.mxu0 %v1983
    %6011 = vmatprep.subr.bf16.mxu0 0
    %6012 = vmatpush2.bf16.msra.mxu0 %v1982
    %6013 = vmatprep.subr.bf16.mxu0 0
    %6014 = vmatpush2.bf16.msra.mxu0 %v1981
    %6015 = vmatprep.subr.bf16.mxu0 0
    %6016 = vmatpush2.bf16.msra.mxu0 %v1980
    %6017 = vmatprep.mubr.bf16.mxu0 %v5864
    %6018 = vmatmul.mubr.bf16.gmra.mxu0 %v5863
    %v6019 = vpop.f32.mrf.mxu0
    %v6020 = vadd.f32 %v5980, %v6019
    %v6021 = vpop.f32.mrf.mxu0
    %v6022 = vpop.f32.mrf.mxu0
    %v6023 = vpop.f32.mrf.mxu0
    %6024 = vdwg.mxu0
    %v6025 = vpack.c.bf16 %v6020, %v6020
    %v6027 = vsel %vm512, %v6025, 0
    %6029 = vmatprep.subr.bf16.mxu0 0
    %6030 = vmatpush1.bf16.msra.mxu0 0
    %6031 = vmatprep.subr.bf16.mxu0 0
    %6032 = vmatpush1.bf16.msra.mxu0 0
    %6033 = vmatprep.subr.bf16.mxu0 0
    %6034 = vmatpush1.bf16.msra.mxu0 0
    %6035 = vmatprep.subr.bf16.mxu0 0
    %6036 = vmatpush1.bf16.msra.mxu0 0
    %6037 = vmatprep.subr.bf16.mxu0 0
    %6038 = vmatpush1.bf16.msra.mxu0 0
    %6039 = vmatprep.subr.bf16.mxu0 0
    %6040 = vmatpush1.bf16.msra.mxu0 0
    %6041 = vmatprep.subr.bf16.mxu0 0
    %6042 = vmatpush1.bf16.msra.mxu0 0
    %6043 = vmatprep.subr.bf16.mxu0 0
    %6044 = vmatpush1.bf16.msra.mxu0 %v6027
    %6045 = vmatprep.subr.bf16.mxu0 0
    %6046 = vmatpush2.bf16.msra.mxu0 0
    %6047 = vmatprep.subr.bf16.mxu0 0
    %6048 = vmatpush2.bf16.msra.mxu0 0
    %6049 = vmatprep.subr.bf16.mxu0 0
    %6050 = vmatpush2.bf16.msra.mxu0 0
    %6051 = vmatprep.subr.bf16.mxu0 0
    %6052 = vmatpush2.bf16.msra.mxu0 0
    %6053 = vmatprep.subr.bf16.mxu0 0
    %6054 = vmatpush2.bf16.msra.mxu0 0
    %6055 = vmatprep.subr.bf16.mxu0 0
    %6056 = vmatpush2.bf16.msra.mxu0 0
    %6057 = vmatprep.subr.bf16.mxu0 0
    %6058 = vmatpush2.bf16.msra.mxu0 0
    %6059 = vmatprep.subr.bf16.mxu0 0
    %6060 = vmatpush2.bf16.msra.mxu0 0
    %6061 = vmatprep.mubr.bf16.mxu0 0
    %6062 = vmatmul.mubr.bf16.gmra.mxu0 %v3048
    %v6063 = vpop.f32.mrf.mxu0
    %v6064 = vadd.f32 0.0, %v6063
    %v6065 = vpop.f32.mrf.mxu0
    %v6066 = vpop.f32.mrf.mxu0
    %v6067 = vadd.f32 0.0, %v6066
    %v6068 = vpop.f32.mrf.mxu0
    %6069 = vdwg.mxu0
    %v6070 = vpack.c.bf16 %v6067, %v6064
    %v6072 = vsel %vm1417, %v6070, 0
    %6074 = vmatprep.subr.bf16.mxu0 0
    %6075 = vmatpush1.bf16.msra.mxu0 0
    %6076 = vmatprep.subr.bf16.mxu0 0
    %6077 = vmatpush1.bf16.msra.mxu0 0
    %6078 = vmatprep.subr.bf16.mxu0 0
    %6079 = vmatpush1.bf16.msra.mxu0 0
    %6080 = vmatprep.subr.bf16.mxu0 0
    %6081 = vmatpush1.bf16.msra.mxu0 0
    %6082 = vmatprep.subr.bf16.mxu0 0
    %6083 = vmatpush1.bf16.msra.mxu0 0
    %6084 = vmatprep.subr.bf16.mxu0 0
    %6085 = vmatpush1.bf16.msra.mxu0 0
    %6086 = vmatprep.subr.bf16.mxu0 0
    %6087 = vmatpush1.bf16.msra.mxu0 %v1269
    %6088 = vmatprep.subr.bf16.mxu0 0
    %6089 = vmatpush1.bf16.msra.mxu0 %v1268
    %6090 = vmatprep.subr.bf16.mxu0 0
    %6091 = vmatpush2.bf16.msra.mxu0 0
    %6092 = vmatprep.subr.bf16.mxu0 0
    %6093 = vmatpush2.bf16.msra.mxu0 0
    %6094 = vmatprep.subr.bf16.mxu0 0
    %6095 = vmatpush2.bf16.msra.mxu0 0
    %6096 = vmatprep.subr.bf16.mxu0 0
    %6097 = vmatpush2.bf16.msra.mxu0 0
    %6098 = vmatprep.subr.bf16.mxu0 0
    %6099 = vmatpush2.bf16.msra.mxu0 0
    %6100 = vmatprep.subr.bf16.mxu0 0
    %6101 = vmatpush2.bf16.msra.mxu0 0
    %6102 = vmatprep.subr.bf16.mxu0 0
    %6103 = vmatpush2.bf16.msra.mxu0 0
    %6104 = vmatprep.subr.bf16.mxu0 0
    %6105 = vmatpush2.bf16.msra.mxu0 0
    %6106 = vmatprep.mubr.bf16.mxu0 0
    %6107 = vmatmul.mubr.bf16.gmra.mxu0 %v6072
    %v6108 = vpop.f32.mrf.mxu0
    %v6109 = vadd.f32 %v3099, %v6108
    %v6110 = vpop.f32.mrf.mxu0
    %v6111 = vpop.f32.mrf.mxu0
    %v6112 = vadd.f32 %v3099, %v6111
    %v6113 = vpop.f32.mrf.mxu0
    %6114 = vdwg.mxu0
    %v6116 = vsel %vm1417, %v4736, 0
    %6118 = vmatprep.subr.bf16.mxu0 0
    %6119 = vmatpush1.bf16.msra.mxu0 0
    %6120 = vmatprep.subr.bf16.mxu0 0
    %6121 = vmatpush1.bf16.msra.mxu0 0
    %6122 = vmatprep.subr.bf16.mxu0 0
    %6123 = vmatpush1.bf16.msra.mxu0 0
    %6124 = vmatprep.subr.bf16.mxu0 0
    %6125 = vmatpush1.bf16.msra.mxu0 0
    %6126 = vmatprep.subr.bf16.mxu0 0
    %6127 = vmatpush1.bf16.msra.mxu0 0
    %6128 = vmatprep.subr.bf16.mxu0 0
    %6129 = vmatpush1.bf16.msra.mxu0 0
    %6130 = vmatprep.subr.bf16.mxu0 0
    %6131 = vmatpush1.bf16.msra.mxu0 %v1275
    %6132 = vmatprep.subr.bf16.mxu0 0
    %6133 = vmatpush1.bf16.msra.mxu0 %v1274
    %6134 = vmatprep.subr.bf16.mxu0 0
    %6135 = vmatpush2.bf16.msra.mxu0 0
    %6136 = vmatprep.subr.bf16.mxu0 0
    %6137 = vmatpush2.bf16.msra.mxu0 0
    %6138 = vmatprep.subr.bf16.mxu0 0
    %6139 = vmatpush2.bf16.msra.mxu0 0
    %6140 = vmatprep.subr.bf16.mxu0 0
    %6141 = vmatpush2.bf16.msra.mxu0 0
    %6142 = vmatprep.subr.bf16.mxu0 0
    %6143 = vmatpush2.bf16.msra.mxu0 0
    %6144 = vmatprep.subr.bf16.mxu0 0
    %6145 = vmatpush2.bf16.msra.mxu0 0
    %6146 = vmatprep.subr.bf16.mxu0 0
    %6147 = vmatpush2.bf16.msra.mxu0 0
    %6148 = vmatprep.subr.bf16.mxu0 0
    %6149 = vmatpush2.bf16.msra.mxu0 0
    %6150 = vmatprep.mubr.bf16.mxu0 0
    %6151 = vmatmul.mubr.bf16.gmra.mxu0 %v6116
    %v6152 = vpop.f32.mrf.mxu0
    %v6153 = vadd.f32 %v3149, %v6152
    %v6154 = vpop.f32.mrf.mxu0
    %v6155 = vpop.f32.mrf.mxu0
    %v6156 = vadd.f32 %v3149, %v6155
    %v6157 = vpop.f32.mrf.mxu0
    %6158 = vdwg.mxu0
    %v6159 = vadd.f32 %v6109, %v6153
    %v6160 = vadd.f32 %v6112, %v6156
    %v6161 = vxor.u32 %v6159, 2147483648
    %v6162 = vxor.u32 %v6160, 2147483648
    %v6163 = vmul.f32 %v6161, 1.442695
    %v6164 = vpow.pop %v6163
    %v6165 = vmul.f32 %v6162, 1.442695
    %v6166 = vpow.pop %v6165
    %v6167 = vadd.f32 %v6164, 1.0
    %v6168 = vadd.f32 %v6166, 1.0
    %v6169 = vrcp.pop %v6167
    %v6170 = vmul.f32 1.0, %v6169
    %v6171 = vrcp.pop %v6168
    %v6172 = vmul.f32 1.0, %v6171
    %6175 = vrot.lane.b32.xlu0 %v6153, 64
    %v6176 = vpop.permute.xlu0 %6175
    %6177 = vrot.lane.b32.xlu0 %v6156, 64
    %v6178 = vpop.permute.xlu0 %6177
    %v6181 = vmul.f32 %v6170, %v6176
    %v6182 = vmul.f32 %v6172, %v6178
    %6185 = vrot.lane.b32.xlu0 %v6181, 64
    %v6186 = vpop.permute.xlu0 %6185
    %6187 = vrot.lane.b32.xlu0 %v6182, 64
    %v6188 = vpop.permute.xlu0 %6187
    %v6191 = vadd.f32 %v6109, %v6186
    %v6192 = vadd.f32 %v6112, %v6188
    %v6193 = vtanh.pop %v6191
    %v6194 = vtanh.pop %v6192
    %v6195 = vsub.f32 1.0, %v6170
    %v6196 = vsub.f32 1.0, %v6172
    %6199 = vrot.lane.b32.xlu0 %v6193, 96
    %v6200 = vpop.permute.xlu0 %6199
    %6201 = vrot.lane.b32.xlu0 %v6194, 96
    %v6202 = vpop.permute.xlu0 %6201
    %v6205 = vmul.f32 %v6195, %v6200
    %v6206 = vmul.f32 %v6196, %v6202
    %v6207 = vmul.f32 %v6170, %v4731
    %v6208 = vmul.f32 %v6172, %v4732
    %v6209 = vadd.f32 %v6205, %v6207
    %v6210 = vadd.f32 %v6206, %v6208
    %v6211 = vpack.c.bf16 %v6210, %v6209
    %6213 = vrot.lane.b32.xlu0 %v6211, 96
    %v6214 = vpop.permute.xlu0 %6213
    %6216 = vmatprep.subr.bf16.mxu0 0
    %6217 = vmatpush1.bf16.msra.mxu0 0
    %6218 = vmatprep.subr.bf16.mxu0 0
    %6219 = vmatpush1.bf16.msra.mxu0 0
    %6220 = vmatprep.subr.bf16.mxu0 0
    %6221 = vmatpush1.bf16.msra.mxu0 0
    %6222 = vmatprep.subr.bf16.mxu0 0
    %6223 = vmatpush1.bf16.msra.mxu0 0
    %6224 = vmatprep.subr.bf16.mxu0 0
    %6225 = vmatpush1.bf16.msra.mxu0 0
    %6226 = vmatprep.subr.bf16.mxu0 0
    %6227 = vmatpush1.bf16.msra.mxu0 0
    %6228 = vmatprep.subr.bf16.mxu0 0
    %6229 = vmatpush1.bf16.msra.mxu0 0
    %6230 = vmatprep.subr.bf16.mxu0 0
    %6231 = vmatpush1.bf16.msra.mxu0 %v6214
    %6232 = vmatprep.subr.bf16.mxu0 0
    %6233 = vmatpush2.bf16.msra.mxu0 0
    %6234 = vmatprep.subr.bf16.mxu0 0
    %6235 = vmatpush2.bf16.msra.mxu0 0
    %6236 = vmatprep.subr.bf16.mxu0 0
    %6237 = vmatpush2.bf16.msra.mxu0 0
    %6238 = vmatprep.subr.bf16.mxu0 0
    %6239 = vmatpush2.bf16.msra.mxu0 0
    %6240 = vmatprep.subr.bf16.mxu0 0
    %6241 = vmatpush2.bf16.msra.mxu0 0
    %6242 = vmatprep.subr.bf16.mxu0 0
    %6243 = vmatpush2.bf16.msra.mxu0 0
    %6244 = vmatprep.subr.bf16.mxu0 0
    %6245 = vmatpush2.bf16.msra.mxu0 0
    %6246 = vmatprep.subr.bf16.mxu0 0
    %6247 = vmatpush2.bf16.msra.mxu0 0
    %6248 = vmatprep.mubr.bf16.mxu0 0
    %6249 = vmatmul.mubr.bf16.gmra.mxu0 %v1282
    %v6250 = vpop.f32.mrf.mxu0
    %v6251 = vadd.f32 0.0, %v6250
    %v6252 = vpop.f32.mrf.mxu0
    %v6253 = vpop.f32.mrf.mxu0
    %v6254 = vadd.f32 0.0, %v6253
    %v6255 = vpop.f32.mrf.mxu0
    %6256 = vmatprep.mubr.bf16.mxu0 0
    %6257 = vmatmul.mubr.bf16.gmra.mxu0 %v1285
    %v6258 = vpop.f32.mrf.mxu0
    %v6259 = vadd.f32 0.0, %v6258
    %v6260 = vpop.f32.mrf.mxu0
    %v6261 = vpop.f32.mrf.mxu0
    %v6262 = vpop.f32.mrf.mxu0
    %6263 = vdwg.mxu0
    %v6264 = vpack.c.bf16 %v6254, %v6251
    %v6265 = vpack.c.bf16 %v6259, %v6259
    %v6267 = vsel %vm1417, %v6264, 0
    %v6270 = vsel %vm1417, %v6265, 0
    %6272 = vmatprep.subr.bf16.mxu0 0
    %6273 = vmatpush1.bf16.msra.mxu0 0
    %6274 = vmatprep.subr.bf16.mxu0 0
    %6275 = vmatpush1.bf16.msra.mxu0 0
    %6276 = vmatprep.subr.bf16.mxu0 0
    %6277 = vmatpush1.bf16.msra.mxu0 0
    %6278 = vmatprep.subr.bf16.mxu0 0
    %6279 = vmatpush1.bf16.msra.mxu0 0
    %6280 = vmatprep.subr.bf16.mxu0 0
    %6281 = vmatpush1.bf16.msra.mxu0 0
    %6282 = vmatprep.subr.bf16.mxu0 0
    %6283 = vmatpush1.bf16.msra.mxu0 0
    %6284 = vmatprep.subr.bf16.mxu0 %v1394
    %6285 = vmatpush1.bf16.msra.mxu0 %v1393
    %6286 = vmatprep.subr.bf16.mxu0 %v1386
    %6287 = vmatpush1.bf16.msra.mxu0 %v1385
    %6288 = vmatprep.subr.bf16.mxu0 0
    %6289 = vmatpush2.bf16.msra.mxu0 0
    %6290 = vmatprep.subr.bf16.mxu0 0
    %6291 = vmatpush2.bf16.msra.mxu0 0
    %6292 = vmatprep.subr.bf16.mxu0 0
    %6293 = vmatpush2.bf16.msra.mxu0 0
    %6294 = vmatprep.subr.bf16.mxu0 0
    %6295 = vmatpush2.bf16.msra.mxu0 0
    %6296 = vmatprep.subr.bf16.mxu0 0
    %6297 = vmatpush2.bf16.msra.mxu0 0
    %6298 = vmatprep.subr.bf16.mxu0 0
    %6299 = vmatpush2.bf16.msra.mxu0 0
    %6300 = vmatprep.subr.bf16.mxu0 0
    %6301 = vmatpush2.bf16.msra.mxu0 0
    %6302 = vmatprep.subr.bf16.mxu0 0
    %6303 = vmatpush2.bf16.msra.mxu0 0
    %6304 = vmatprep.mubr.bf16.mxu0 0
    %6305 = vmatmul.mubr.bf16.gmra.mxu0 %v6267
    %v6306 = vpop.f32.mrf.mxu0
    %v6307 = vadd.f32 0.0, %v6306
    %v6308 = vpop.f32.mrf.mxu0
    %v6309 = vadd.f32 0.0, %v6308
    %v6310 = vpop.f32.mrf.mxu0
    %v6311 = vadd.f32 0.0, %v6310
    %v6312 = vpop.f32.mrf.mxu0
    %v6313 = vadd.f32 0.0, %v6312
    %6314 = vmatprep.mubr.bf16.mxu0 0
    %6315 = vmatmul.mubr.bf16.gmra.mxu0 %v6270
    %v6316 = vpop.f32.mrf.mxu0
    %v6317 = vadd.f32 0.0, %v6316
    %v6318 = vpop.f32.mrf.mxu0
    %v6319 = vadd.f32 0.0, %v6318
    %v6320 = vpop.f32.mrf.mxu0
    %v6321 = vpop.f32.mrf.mxu0
    %6322 = vdwg.mxu0
    %6323 = vmatprep.subr.bf16.mxu0 0
    %6324 = vmatpush1.bf16.msra.mxu0 0
    %6325 = vmatprep.subr.bf16.mxu0 0
    %6326 = vmatpush1.bf16.msra.mxu0 0
    %6327 = vmatprep.subr.bf16.mxu0 0
    %6328 = vmatpush1.bf16.msra.mxu0 0
    %6329 = vmatprep.subr.bf16.mxu0 0
    %6330 = vmatpush1.bf16.msra.mxu0 0
    %6331 = vmatprep.subr.bf16.mxu0 0
    %6332 = vmatpush1.bf16.msra.mxu0 0
    %6333 = vmatprep.subr.bf16.mxu0 0
    %6334 = vmatpush1.bf16.msra.mxu0 0
    %6335 = vmatprep.subr.bf16.mxu0 %v1396
    %6336 = vmatpush1.bf16.msra.mxu0 %v1395
    %6337 = vmatprep.subr.bf16.mxu0 %v1388
    %6338 = vmatpush1.bf16.msra.mxu0 %v1387
    %6339 = vmatprep.subr.bf16.mxu0 0
    %6340 = vmatpush2.bf16.msra.mxu0 0
    %6341 = vmatprep.subr.bf16.mxu0 0
    %6342 = vmatpush2.bf16.msra.mxu0 0
    %6343 = vmatprep.subr.bf16.mxu0 0
    %6344 = vmatpush2.bf16.msra.mxu0 0
    %6345 = vmatprep.subr.bf16.mxu0 0
    %6346 = vmatpush2.bf16.msra.mxu0 0
    %6347 = vmatprep.subr.bf16.mxu0 0
    %6348 = vmatpush2.bf16.msra.mxu0 0
    %6349 = vmatprep.subr.bf16.mxu0 0
    %6350 = vmatpush2.bf16.msra.mxu0 0
    %6351 = vmatprep.subr.bf16.mxu0 0
    %6352 = vmatpush2.bf16.msra.mxu0 0
    %6353 = vmatprep.subr.bf16.mxu0 0
    %6354 = vmatpush2.bf16.msra.mxu0 0
    %6355 = vmatprep.mubr.bf16.mxu0 0
    %6356 = vmatmul.mubr.bf16.gmra.mxu0 %v6267
    %v6357 = vpop.f32.mrf.mxu0
    %v6358 = vadd.f32 0.0, %v6357
    %v6359 = vpop.f32.mrf.mxu0
    %v6360 = vadd.f32 0.0, %v6359
    %v6361 = vpop.f32.mrf.mxu0
    %v6362 = vadd.f32 0.0, %v6361
    %v6363 = vpop.f32.mrf.mxu0
    %v6364 = vadd.f32 0.0, %v6363
    %6365 = vmatprep.mubr.bf16.mxu0 0
    %6366 = vmatmul.mubr.bf16.gmra.mxu0 %v6270
    %v6367 = vpop.f32.mrf.mxu0
    %v6368 = vadd.f32 0.0, %v6367
    %v6369 = vpop.f32.mrf.mxu0
    %v6370 = vadd.f32 0.0, %v6369
    %v6371 = vpop.f32.mrf.mxu0
    %v6372 = vpop.f32.mrf.mxu0
    %6373 = vdwg.mxu0
    %6374 = vmatprep.subr.bf16.mxu0 0
    %6375 = vmatpush1.bf16.msra.mxu0 0
    %6376 = vmatprep.subr.bf16.mxu0 0
    %6377 = vmatpush1.bf16.msra.mxu0 0
    %6378 = vmatprep.subr.bf16.mxu0 0
    %6379 = vmatpush1.bf16.msra.mxu0 0
    %6380 = vmatprep.subr.bf16.mxu0 0
    %6381 = vmatpush1.bf16.msra.mxu0 0
    %6382 = vmatprep.subr.bf16.mxu0 0
    %6383 = vmatpush1.bf16.msra.mxu0 0
    %6384 = vmatprep.subr.bf16.mxu0 0
    %6385 = vmatpush1.bf16.msra.mxu0 0
    %6386 = vmatprep.subr.bf16.mxu0 %v1398
    %6387 = vmatpush1.bf16.msra.mxu0 %v1397
    %6388 = vmatprep.subr.bf16.mxu0 %v1390
    %6389 = vmatpush1.bf16.msra.mxu0 %v1389
    %6390 = vmatprep.subr.bf16.mxu0 0
    %6391 = vmatpush2.bf16.msra.mxu0 0
    %6392 = vmatprep.subr.bf16.mxu0 0
    %6393 = vmatpush2.bf16.msra.mxu0 0
    %6394 = vmatprep.subr.bf16.mxu0 0
    %6395 = vmatpush2.bf16.msra.mxu0 0
    %6396 = vmatprep.subr.bf16.mxu0 0
    %6397 = vmatpush2.bf16.msra.mxu0 0
    %6398 = vmatprep.subr.bf16.mxu0 0
    %6399 = vmatpush2.bf16.msra.mxu0 0
    %6400 = vmatprep.subr.bf16.mxu0 0
    %6401 = vmatpush2.bf16.msra.mxu0 0
    %6402 = vmatprep.subr.bf16.mxu0 0
    %6403 = vmatpush2.bf16.msra.mxu0 0
    %6404 = vmatprep.subr.bf16.mxu0 0
    %6405 = vmatpush2.bf16.msra.mxu0 0
    %6406 = vmatprep.mubr.bf16.mxu0 0
    %6407 = vmatmul.mubr.bf16.gmra.mxu0 %v6267
    %v6408 = vpop.f32.mrf.mxu0
    %v6409 = vadd.f32 0.0, %v6408
    %v6410 = vpop.f32.mrf.mxu0
    %v6411 = vadd.f32 0.0, %v6410
    %v6412 = vpop.f32.mrf.mxu0
    %v6413 = vadd.f32 0.0, %v6412
    %v6414 = vpop.f32.mrf.mxu0
    %v6415 = vadd.f32 0.0, %v6414
    %6416 = vmatprep.mubr.bf16.mxu0 0
    %6417 = vmatmul.mubr.bf16.gmra.mxu0 %v6270
    %v6418 = vpop.f32.mrf.mxu0
    %v6419 = vadd.f32 0.0, %v6418
    %v6420 = vpop.f32.mrf.mxu0
    %v6421 = vadd.f32 0.0, %v6420
    %v6422 = vpop.f32.mrf.mxu0
    %v6423 = vpop.f32.mrf.mxu0
    %6424 = vdwg.mxu0
    %6425 = vmatprep.subr.bf16.mxu0 0
    %6426 = vmatpush1.bf16.msra.mxu0 0
    %6427 = vmatprep.subr.bf16.mxu0 0
    %6428 = vmatpush1.bf16.msra.mxu0 0
    %6429 = vmatprep.subr.bf16.mxu0 0
    %6430 = vmatpush1.bf16.msra.mxu0 0
    %6431 = vmatprep.subr.bf16.mxu0 0
    %6432 = vmatpush1.bf16.msra.mxu0 0
    %6433 = vmatprep.subr.bf16.mxu0 0
    %6434 = vmatpush1.bf16.msra.mxu0 0
    %6435 = vmatprep.subr.bf16.mxu0 0
    %6436 = vmatpush1.bf16.msra.mxu0 0
    %6437 = vmatprep.subr.bf16.mxu0 %v1400
    %6438 = vmatpush1.bf16.msra.mxu0 %v1399
    %6439 = vmatprep.subr.bf16.mxu0 %v1392
    %6440 = vmatpush1.bf16.msra.mxu0 %v1391
    %6441 = vmatprep.subr.bf16.mxu0 0
    %6442 = vmatpush2.bf16.msra.mxu0 0
    %6443 = vmatprep.subr.bf16.mxu0 0
    %6444 = vmatpush2.bf16.msra.mxu0 0
    %6445 = vmatprep.subr.bf16.mxu0 0
    %6446 = vmatpush2.bf16.msra.mxu0 0
    %6447 = vmatprep.subr.bf16.mxu0 0
    %6448 = vmatpush2.bf16.msra.mxu0 0
    %6449 = vmatprep.subr.bf16.mxu0 0
    %6450 = vmatpush2.bf16.msra.mxu0 0
    %6451 = vmatprep.subr.bf16.mxu0 0
    %6452 = vmatpush2.bf16.msra.mxu0 0
    %6453 = vmatprep.subr.bf16.mxu0 0
    %6454 = vmatpush2.bf16.msra.mxu0 0
    %6455 = vmatprep.subr.bf16.mxu0 0
    %6456 = vmatpush2.bf16.msra.mxu0 0
    %6457 = vmatprep.mubr.bf16.mxu0 0
    %6458 = vmatmul.mubr.bf16.gmra.mxu0 %v6267
    %v6459 = vpop.f32.mrf.mxu0
    %v6460 = vadd.f32 0.0, %v6459
    %v6461 = vpop.f32.mrf.mxu0
    %v6462 = vadd.f32 0.0, %v6461
    %v6463 = vpop.f32.mrf.mxu0
    %v6464 = vadd.f32 0.0, %v6463
    %v6465 = vpop.f32.mrf.mxu0
    %v6466 = vadd.f32 0.0, %v6465
    %6467 = vmatprep.mubr.bf16.mxu0 0
    %6468 = vmatmul.mubr.bf16.gmra.mxu0 %v6270
    %v6469 = vpop.f32.mrf.mxu0
    %v6470 = vadd.f32 0.0, %v6469
    %v6471 = vpop.f32.mrf.mxu0
    %v6472 = vadd.f32 0.0, %v6471
    %v6473 = vpop.f32.mrf.mxu0
    %v6474 = vpop.f32.mrf.mxu0
    %6475 = vdwg.mxu0
    %v6476 = vmul.f32 %v572, %v6307
    %v6477 = vmul.f32 %v574, %v6309
    %v6478 = vmul.f32 %v623, %v6358
    %v6479 = vmul.f32 %v625, %v6360
    %v6480 = vmul.f32 %v674, %v6409
    %v6481 = vmul.f32 %v676, %v6411
    %v6482 = vmul.f32 %v725, %v6460
    %v6483 = vmul.f32 %v727, %v6462
    %v6484 = vmul.f32 %v576, %v6311
    %v6485 = vmul.f32 %v578, %v6313
    %v6486 = vmul.f32 %v627, %v6362
    %v6487 = vmul.f32 %v629, %v6364
    %v6488 = vmul.f32 %v678, %v6413
    %v6489 = vmul.f32 %v680, %v6415
    %v6490 = vmul.f32 %v729, %v6464
    %v6491 = vmul.f32 %v731, %v6466
    %v6492 = vmul.f32 %v582, %v6317
    %v6493 = vmul.f32 %v584, %v6319
    %v6494 = vmul.f32 %v633, %v6368
    %v6495 = vmul.f32 %v635, %v6370
    %v6496 = vmul.f32 %v684, %v6419
    %v6497 = vmul.f32 %v686, %v6421
    %v6498 = vmul.f32 %v735, %v6470
    %v6499 = vmul.f32 %v737, %v6472
    %v6500 = vpack.c.bf16 %v6484, %v6476
    %v6501 = vpack.c.bf16 %v6485, %v6477
    %v6502 = vpack.c.bf16 %v6486, %v6478
    %v6503 = vpack.c.bf16 %v6487, %v6479
    %v6504 = vpack.c.bf16 %v6488, %v6480
    %v6505 = vpack.c.bf16 %v6489, %v6481
    %v6506 = vpack.c.bf16 %v6490, %v6482
    %v6507 = vpack.c.bf16 %v6491, %v6483
    %v6508 = vpack.c.bf16 %v6492, %v6492
    %v6509 = vpack.c.bf16 %v6493, %v6493
    %v6510 = vpack.c.bf16 %v6494, %v6494
    %v6511 = vpack.c.bf16 %v6495, %v6495
    %v6512 = vpack.c.bf16 %v6496, %v6496
    %v6513 = vpack.c.bf16 %v6497, %v6497
    %v6514 = vpack.c.bf16 %v6498, %v6498
    %v6515 = vpack.c.bf16 %v6499, %v6499
    %6516 = vmatprep.subr.bf16.mxu0 0
    %6517 = vmatpush1.bf16.msra.mxu0 %v1931
    %6518 = vmatprep.subr.bf16.mxu0 0
    %6519 = vmatpush1.bf16.msra.mxu0 %v1930
    %6520 = vmatprep.subr.bf16.mxu0 0
    %6521 = vmatpush1.bf16.msra.mxu0 %v1929
    %6522 = vmatprep.subr.bf16.mxu0 0
    %6523 = vmatpush1.bf16.msra.mxu0 %v1928
    %6524 = vmatprep.subr.bf16.mxu0 0
    %6525 = vmatpush1.bf16.msra.mxu0 %v1927
    %6526 = vmatprep.subr.bf16.mxu0 0
    %6527 = vmatpush1.bf16.msra.mxu0 %v1926
    %6528 = vmatprep.subr.bf16.mxu0 0
    %6529 = vmatpush1.bf16.msra.mxu0 %v1925
    %6530 = vmatprep.subr.bf16.mxu0 0
    %6531 = vmatpush1.bf16.msra.mxu0 %v1924
    %6532 = vmatprep.subr.bf16.mxu0 0
    %6533 = vmatpush2.bf16.msra.mxu0 %v1939
    %6534 = vmatprep.subr.bf16.mxu0 0
    %6535 = vmatpush2.bf16.msra.mxu0 %v1938
    %6536 = vmatprep.subr.bf16.mxu0 0
    %6537 = vmatpush2.bf16.msra.mxu0 %v1937
    %6538 = vmatprep.subr.bf16.mxu0 0
    %6539 = vmatpush2.bf16.msra.mxu0 %v1936
    %6540 = vmatprep.subr.bf16.mxu0 0
    %6541 = vmatpush2.bf16.msra.mxu0 %v1935
    %6542 = vmatprep.subr.bf16.mxu0 0
    %6543 = vmatpush2.bf16.msra.mxu0 %v1934
    %6544 = vmatprep.subr.bf16.mxu0 0
    %6545 = vmatpush2.bf16.msra.mxu0 %v1933
    %6546 = vmatprep.subr.bf16.mxu0 0
    %6547 = vmatpush2.bf16.msra.mxu0 %v1932
    %6548 = vmatprep.mubr.bf16.mxu0 %v6501
    %6549 = vmatmul.mubr.bf16.gmra.mxu0 %v6500
    %v6550 = vpop.f32.mrf.mxu0
    %v6551 = vadd.f32 0.0, %v6550
    %v6552 = vpop.f32.mrf.mxu0
    %v6553 = vpop.f32.mrf.mxu0
    %v6554 = vadd.f32 0.0, %v6553
    %v6555 = vpop.f32.mrf.mxu0
    %6556 = vmatprep.mubr.bf16.mxu0 %v6509
    %6557 = vmatmul.mubr.bf16.gmra.mxu0 %v6508
    %v6558 = vpop.f32.mrf.mxu0
    %v6559 = vadd.f32 0.0, %v6558
    %v6560 = vpop.f32.mrf.mxu0
    %v6561 = vpop.f32.mrf.mxu0
    %v6562 = vpop.f32.mrf.mxu0
    %6563 = vdwg.mxu0
    %6564 = vmatprep.subr.bf16.mxu0 0
    %6565 = vmatpush1.bf16.msra.mxu0 %v1947
    %6566 = vmatprep.subr.bf16.mxu0 0
    %6567 = vmatpush1.bf16.msra.mxu0 %v1946
    %6568 = vmatprep.subr.bf16.mxu0 0
    %6569 = vmatpush1.bf16.msra.mxu0 %v1945
    %6570 = vmatprep.subr.bf16.mxu0 0
    %6571 = vmatpush1.bf16.msra.mxu0 %v1944
    %6572 = vmatprep.subr.bf16.mxu0 0
    %6573 = vmatpush1.bf16.msra.mxu0 %v1943
    %6574 = vmatprep.subr.bf16.mxu0 0
    %6575 = vmatpush1.bf16.msra.mxu0 %v1942
    %6576 = vmatprep.subr.bf16.mxu0 0
    %6577 = vmatpush1.bf16.msra.mxu0 %v1941
    %6578 = vmatprep.subr.bf16.mxu0 0
    %6579 = vmatpush1.bf16.msra.mxu0 %v1940
    %6580 = vmatprep.subr.bf16.mxu0 0
    %6581 = vmatpush2.bf16.msra.mxu0 %v1955
    %6582 = vmatprep.subr.bf16.mxu0 0
    %6583 = vmatpush2.bf16.msra.mxu0 %v1954
    %6584 = vmatprep.subr.bf16.mxu0 0
    %6585 = vmatpush2.bf16.msra.mxu0 %v1953
    %6586 = vmatprep.subr.bf16.mxu0 0
    %6587 = vmatpush2.bf16.msra.mxu0 %v1952
    %6588 = vmatprep.subr.bf16.mxu0 0
    %6589 = vmatpush2.bf16.msra.mxu0 %v1951
    %6590 = vmatprep.subr.bf16.mxu0 0
    %6591 = vmatpush2.bf16.msra.mxu0 %v1950
    %6592 = vmatprep.subr.bf16.mxu0 0
    %6593 = vmatpush2.bf16.msra.mxu0 %v1949
    %6594 = vmatprep.subr.bf16.mxu0 0
    %6595 = vmatpush2.bf16.msra.mxu0 %v1948
    %6596 = vmatprep.mubr.bf16.mxu0 %v6503
    %6597 = vmatmul.mubr.bf16.gmra.mxu0 %v6502
    %v6598 = vpop.f32.mrf.mxu0
    %v6599 = vadd.f32 %v6551, %v6598
    %v6600 = vpop.f32.mrf.mxu0
    %v6601 = vpop.f32.mrf.mxu0
    %v6602 = vadd.f32 %v6554, %v6601
    %v6603 = vpop.f32.mrf.mxu0
    %6604 = vmatprep.mubr.bf16.mxu0 %v6511
    %6605 = vmatmul.mubr.bf16.gmra.mxu0 %v6510
    %v6606 = vpop.f32.mrf.mxu0
    %v6607 = vadd.f32 %v6559, %v6606
    %v6608 = vpop.f32.mrf.mxu0
    %v6609 = vpop.f32.mrf.mxu0
    %v6610 = vpop.f32.mrf.mxu0
    %6611 = vdwg.mxu0
    %6612 = vmatprep.subr.bf16.mxu0 0
    %6613 = vmatpush1.bf16.msra.mxu0 %v1963
    %6614 = vmatprep.subr.bf16.mxu0 0
    %6615 = vmatpush1.bf16.msra.mxu0 %v1962
    %6616 = vmatprep.subr.bf16.mxu0 0
    %6617 = vmatpush1.bf16.msra.mxu0 %v1961
    %6618 = vmatprep.subr.bf16.mxu0 0
    %6619 = vmatpush1.bf16.msra.mxu0 %v1960
    %6620 = vmatprep.subr.bf16.mxu0 0
    %6621 = vmatpush1.bf16.msra.mxu0 %v1959
    %6622 = vmatprep.subr.bf16.mxu0 0
    %6623 = vmatpush1.bf16.msra.mxu0 %v1958
    %6624 = vmatprep.subr.bf16.mxu0 0
    %6625 = vmatpush1.bf16.msra.mxu0 %v1957
    %6626 = vmatprep.subr.bf16.mxu0 0
    %6627 = vmatpush1.bf16.msra.mxu0 %v1956
    %6628 = vmatprep.subr.bf16.mxu0 0
    %6629 = vmatpush2.bf16.msra.mxu0 %v1971
    %6630 = vmatprep.subr.bf16.mxu0 0
    %6631 = vmatpush2.bf16.msra.mxu0 %v1970
    %6632 = vmatprep.subr.bf16.mxu0 0
    %6633 = vmatpush2.bf16.msra.mxu0 %v1969
    %6634 = vmatprep.subr.bf16.mxu0 0
    %6635 = vmatpush2.bf16.msra.mxu0 %v1968
    %6636 = vmatprep.subr.bf16.mxu0 0
    %6637 = vmatpush2.bf16.msra.mxu0 %v1967
    %6638 = vmatprep.subr.bf16.mxu0 0
    %6639 = vmatpush2.bf16.msra.mxu0 %v1966
    %6640 = vmatprep.subr.bf16.mxu0 0
    %6641 = vmatpush2.bf16.msra.mxu0 %v1965
    %6642 = vmatprep.subr.bf16.mxu0 0
    %6643 = vmatpush2.bf16.msra.mxu0 %v1964
    %6644 = vmatprep.mubr.bf16.mxu0 %v6505
    %6645 = vmatmul.mubr.bf16.gmra.mxu0 %v6504
    %v6646 = vpop.f32.mrf.mxu0
    %v6647 = vadd.f32 %v6599, %v6646
    %v6648 = vpop.f32.mrf.mxu0
    %v6649 = vpop.f32.mrf.mxu0
    %v6650 = vadd.f32 %v6602, %v6649
    %v6651 = vpop.f32.mrf.mxu0
    %6652 = vmatprep.mubr.bf16.mxu0 %v6513
    %6653 = vmatmul.mubr.bf16.gmra.mxu0 %v6512
    %v6654 = vpop.f32.mrf.mxu0
    %v6655 = vadd.f32 %v6607, %v6654
    %v6656 = vpop.f32.mrf.mxu0
    %v6657 = vpop.f32.mrf.mxu0
    %v6658 = vpop.f32.mrf.mxu0
    %6659 = vdwg.mxu0
    %6660 = vmatprep.subr.bf16.mxu0 0
    %6661 = vmatpush1.bf16.msra.mxu0 %v1979
    %6662 = vmatprep.subr.bf16.mxu0 0
    %6663 = vmatpush1.bf16.msra.mxu0 %v1978
    %6664 = vmatprep.subr.bf16.mxu0 0
    %6665 = vmatpush1.bf16.msra.mxu0 %v1977
    %6666 = vmatprep.subr.bf16.mxu0 0
    %6667 = vmatpush1.bf16.msra.mxu0 %v1976
    %6668 = vmatprep.subr.bf16.mxu0 0
    %6669 = vmatpush1.bf16.msra.mxu0 %v1975
    %6670 = vmatprep.subr.bf16.mxu0 0
    %6671 = vmatpush1.bf16.msra.mxu0 %v1974
    %6672 = vmatprep.subr.bf16.mxu0 0
    %6673 = vmatpush1.bf16.msra.mxu0 %v1973
    %6674 = vmatprep.subr.bf16.mxu0 0
    %6675 = vmatpush1.bf16.msra.mxu0 %v1972
    %6676 = vmatprep.subr.bf16.mxu0 0
    %6677 = vmatpush2.bf16.msra.mxu0 %v1987
    %6678 = vmatprep.subr.bf16.mxu0 0
    %6679 = vmatpush2.bf16.msra.mxu0 %v1986
    %6680 = vmatprep.subr.bf16.mxu0 0
    %6681 = vmatpush2.bf16.msra.mxu0 %v1985
    %6682 = vmatprep.subr.bf16.mxu0 0
    %6683 = vmatpush2.bf16.msra.mxu0 %v1984
    %6684 = vmatprep.subr.bf16.mxu0 0
    %6685 = vmatpush2.bf16.msra.mxu0 %v1983
    %6686 = vmatprep.subr.bf16.mxu0 0
    %6687 = vmatpush2.bf16.msra.mxu0 %v1982
    %6688 = vmatprep.subr.bf16.mxu0 0
    %6689 = vmatpush2.bf16.msra.mxu0 %v1981
    %6690 = vmatprep.subr.bf16.mxu0 0
    %6691 = vmatpush2.bf16.msra.mxu0 %v1980
    %6692 = vmatprep.mubr.bf16.mxu0 %v6507
    %6693 = vmatmul.mubr.bf16.gmra.mxu0 %v6506
    %v6694 = vpop.f32.mrf.mxu0
    %v6695 = vadd.f32 %v6647, %v6694
    %v6696 = vpop.f32.mrf.mxu0
    %v6697 = vpop.f32.mrf.mxu0
    %v6698 = vadd.f32 %v6650, %v6697
    %v6699 = vpop.f32.mrf.mxu0
    %6700 = vmatprep.mubr.bf16.mxu0 %v6515
    %6701 = vmatmul.mubr.bf16.gmra.mxu0 %v6514
    %v6702 = vpop.f32.mrf.mxu0
    %v6703 = vadd.f32 %v6655, %v6702
    %v6704 = vpop.f32.mrf.mxu0
    %v6705 = vpop.f32.mrf.mxu0
    %v6706 = vpop.f32.mrf.mxu0
    %6707 = vdwg.mxu0
    %v6708 = vpack.c.bf16 %v6698, %v6695
    %v6709 = vpack.c.bf16 %v6703, %v6703
    %v6711 = vsel %vm512, %v6709, 0
    %6713 = vmatprep.subr.bf16.mxu0 0
    %6714 = vmatpush1.bf16.msra.mxu0 0
    %6715 = vmatprep.subr.bf16.mxu0 0
    %6716 = vmatpush1.bf16.msra.mxu0 0
    %6717 = vmatprep.subr.bf16.mxu0 0
    %6718 = vmatpush1.bf16.msra.mxu0 0
    %6719 = vmatprep.subr.bf16.mxu0 0
    %6720 = vmatpush1.bf16.msra.mxu0 0
    %6721 = vmatprep.subr.bf16.mxu0 0
    %6722 = vmatpush1.bf16.msra.mxu0 0
    %6723 = vmatprep.subr.bf16.mxu0 0
    %6724 = vmatpush1.bf16.msra.mxu0 0
    %6725 = vmatprep.subr.bf16.mxu0 0
    %6726 = vmatpush1.bf16.msra.mxu0 %v6711
    %6727 = vmatprep.subr.bf16.mxu0 0
    %6728 = vmatpush1.bf16.msra.mxu0 %v6708
    %6729 = vmatprep.subr.bf16.mxu0 0
    %6730 = vmatpush2.bf16.msra.mxu0 0
    %6731 = vmatprep.subr.bf16.mxu0 0
    %6732 = vmatpush2.bf16.msra.mxu0 0
    %6733 = vmatprep.subr.bf16.mxu0 0
    %6734 = vmatpush2.bf16.msra.mxu0 0
    %6735 = vmatprep.subr.bf16.mxu0 0
    %6736 = vmatpush2.bf16.msra.mxu0 0
    %6737 = vmatprep.subr.bf16.mxu0 0
    %6738 = vmatpush2.bf16.msra.mxu0 0
    %6739 = vmatprep.subr.bf16.mxu0 0
    %6740 = vmatpush2.bf16.msra.mxu0 0
    %6741 = vmatprep.subr.bf16.mxu0 0
    %6742 = vmatpush2.bf16.msra.mxu0 0
    %6743 = vmatprep.subr.bf16.mxu0 0
    %6744 = vmatpush2.bf16.msra.mxu0 0
    %6745 = vmatprep.mubr.bf16.mxu0 0
    %6746 = vmatmul.mubr.bf16.gmra.mxu0 %v2248
    %v6747 = vpop.f32.mrf.mxu0
    %v6748 = vadd.f32 0.0, %v6747
    %v6749 = vpop.f32.mrf.mxu0
    %v6750 = vpop.f32.mrf.mxu0
    %v6751 = vadd.f32 0.0, %v6750
    %v6752 = vpop.f32.mrf.mxu0
    %6753 = vdwg.mxu0
    %v6754 = vpack.c.bf16 %v6751, %v6748
    %v6756 = vsel %vm1417, %v6754, 0
    %6758 = vmatprep.subr.bf16.mxu0 0
    %6759 = vmatpush1.bf16.msra.mxu0 0
    %6760 = vmatprep.subr.bf16.mxu0 0
    %6761 = vmatpush1.bf16.msra.mxu0 0
    %6762 = vmatprep.subr.bf16.mxu0 0
    %6763 = vmatpush1.bf16.msra.mxu0 0
    %6764 = vmatprep.subr.bf16.mxu0 0
    %6765 = vmatpush1.bf16.msra.mxu0 0
    %6766 = vmatprep.subr.bf16.mxu0 0
    %6767 = vmatpush1.bf16.msra.mxu0 0
    %6768 = vmatprep.subr.bf16.mxu0 0
    %6769 = vmatpush1.bf16.msra.mxu0 0
    %6770 = vmatprep.subr.bf16.mxu0 %v1394
    %6771 = vmatpush1.bf16.msra.mxu0 %v1393
    %6772 = vmatprep.subr.bf16.mxu0 %v1386
    %6773 = vmatpush1.bf16.msra.mxu0 %v1385
    %6774 = vmatprep.subr.bf16.mxu0 0
    %6775 = vmatpush2.bf16.msra.mxu0 0
    %6776 = vmatprep.subr.bf16.mxu0 0
    %6777 = vmatpush2.bf16.msra.mxu0 0
    %6778 = vmatprep.subr.bf16.mxu0 0
    %6779 = vmatpush2.bf16.msra.mxu0 0
    %6780 = vmatprep.subr.bf16.mxu0 0
    %6781 = vmatpush2.bf16.msra.mxu0 0
    %6782 = vmatprep.subr.bf16.mxu0 0
    %6783 = vmatpush2.bf16.msra.mxu0 0
    %6784 = vmatprep.subr.bf16.mxu0 0
    %6785 = vmatpush2.bf16.msra.mxu0 0
    %6786 = vmatprep.subr.bf16.mxu0 0
    %6787 = vmatpush2.bf16.msra.mxu0 0
    %6788 = vmatprep.subr.bf16.mxu0 0
    %6789 = vmatpush2.bf16.msra.mxu0 0
    %6790 = vmatprep.mubr.bf16.mxu0 0
    %6791 = vmatmul.mubr.bf16.gmra.mxu0 %v6756
    %v6792 = vpop.f32.mrf.mxu0
    %v6793 = vadd.f32 0.0, %v6792
    %v6794 = vpop.f32.mrf.mxu0
    %v6795 = vadd.f32 0.0, %v6794
    %v6796 = vpop.f32.mrf.mxu0
    %v6797 = vadd.f32 0.0, %v6796
    %v6798 = vpop.f32.mrf.mxu0
    %v6799 = vadd.f32 0.0, %v6798
    %6800 = vdwg.mxu0
    %6801 = vmatprep.subr.bf16.mxu0 0
    %6802 = vmatpush1.bf16.msra.mxu0 0
    %6803 = vmatprep.subr.bf16.mxu0 0
    %6804 = vmatpush1.bf16.msra.mxu0 0
    %6805 = vmatprep.subr.bf16.mxu0 0
    %6806 = vmatpush1.bf16.msra.mxu0 0
    %6807 = vmatprep.subr.bf16.mxu0 0
    %6808 = vmatpush1.bf16.msra.mxu0 0
    %6809 = vmatprep.subr.bf16.mxu0 0
    %6810 = vmatpush1.bf16.msra.mxu0 0
    %6811 = vmatprep.subr.bf16.mxu0 0
    %6812 = vmatpush1.bf16.msra.mxu0 0
    %6813 = vmatprep.subr.bf16.mxu0 %v1396
    %6814 = vmatpush1.bf16.msra.mxu0 %v1395
    %6815 = vmatprep.subr.bf16.mxu0 %v1388
    %6816 = vmatpush1.bf16.msra.mxu0 %v1387
    %6817 = vmatprep.subr.bf16.mxu0 0
    %6818 = vmatpush2.bf16.msra.mxu0 0
    %6819 = vmatprep.subr.bf16.mxu0 0
    %6820 = vmatpush2.bf16.msra.mxu0 0
    %6821 = vmatprep.subr.bf16.mxu0 0
    %6822 = vmatpush2.bf16.msra.mxu0 0
    %6823 = vmatprep.subr.bf16.mxu0 0
    %6824 = vmatpush2.bf16.msra.mxu0 0
    %6825 = vmatprep.subr.bf16.mxu0 0
    %6826 = vmatpush2.bf16.msra.mxu0 0
    %6827 = vmatprep.subr.bf16.mxu0 0
    %6828 = vmatpush2.bf16.msra.mxu0 0
    %6829 = vmatprep.subr.bf16.mxu0 0
    %6830 = vmatpush2.bf16.msra.mxu0 0
    %6831 = vmatprep.subr.bf16.mxu0 0
    %6832 = vmatpush2.bf16.msra.mxu0 0
    %6833 = vmatprep.mubr.bf16.mxu0 0
    %6834 = vmatmul.mubr.bf16.gmra.mxu0 %v6756
    %v6835 = vpop.f32.mrf.mxu0
    %v6836 = vadd.f32 0.0, %v6835
    %v6837 = vpop.f32.mrf.mxu0
    %v6838 = vadd.f32 0.0, %v6837
    %v6839 = vpop.f32.mrf.mxu0
    %v6840 = vadd.f32 0.0, %v6839
    %v6841 = vpop.f32.mrf.mxu0
    %v6842 = vadd.f32 0.0, %v6841
    %6843 = vdwg.mxu0
    %6844 = vmatprep.subr.bf16.mxu0 0
    %6845 = vmatpush1.bf16.msra.mxu0 0
    %6846 = vmatprep.subr.bf16.mxu0 0
    %6847 = vmatpush1.bf16.msra.mxu0 0
    %6848 = vmatprep.subr.bf16.mxu0 0
    %6849 = vmatpush1.bf16.msra.mxu0 0
    %6850 = vmatprep.subr.bf16.mxu0 0
    %6851 = vmatpush1.bf16.msra.mxu0 0
    %6852 = vmatprep.subr.bf16.mxu0 0
    %6853 = vmatpush1.bf16.msra.mxu0 0
    %6854 = vmatprep.subr.bf16.mxu0 0
    %6855 = vmatpush1.bf16.msra.mxu0 0
    %6856 = vmatprep.subr.bf16.mxu0 %v1398
    %6857 = vmatpush1.bf16.msra.mxu0 %v1397
    %6858 = vmatprep.subr.bf16.mxu0 %v1390
    %6859 = vmatpush1.bf16.msra.mxu0 %v1389
    %6860 = vmatprep.subr.bf16.mxu0 0
    %6861 = vmatpush2.bf16.msra.mxu0 0
    %6862 = vmatprep.subr.bf16.mxu0 0
    %6863 = vmatpush2.bf16.msra.mxu0 0
    %6864 = vmatprep.subr.bf16.mxu0 0
    %6865 = vmatpush2.bf16.msra.mxu0 0
    %6866 = vmatprep.subr.bf16.mxu0 0
    %6867 = vmatpush2.bf16.msra.mxu0 0
    %6868 = vmatprep.subr.bf16.mxu0 0
    %6869 = vmatpush2.bf16.msra.mxu0 0
    %6870 = vmatprep.subr.bf16.mxu0 0
    %6871 = vmatpush2.bf16.msra.mxu0 0
    %6872 = vmatprep.subr.bf16.mxu0 0
    %6873 = vmatpush2.bf16.msra.mxu0 0
    %6874 = vmatprep.subr.bf16.mxu0 0
    %6875 = vmatpush2.bf16.msra.mxu0 0
    %6876 = vmatprep.mubr.bf16.mxu0 0
    %6877 = vmatmul.mubr.bf16.gmra.mxu0 %v6756
    %v6878 = vpop.f32.mrf.mxu0
    %v6879 = vadd.f32 0.0, %v6878
    %v6880 = vpop.f32.mrf.mxu0
    %v6881 = vadd.f32 0.0, %v6880
    %v6882 = vpop.f32.mrf.mxu0
    %v6883 = vadd.f32 0.0, %v6882
    %v6884 = vpop.f32.mrf.mxu0
    %v6885 = vadd.f32 0.0, %v6884
    %6886 = vdwg.mxu0
    %6887 = vmatprep.subr.bf16.mxu0 0
    %6888 = vmatpush1.bf16.msra.mxu0 0
    %6889 = vmatprep.subr.bf16.mxu0 0
    %6890 = vmatpush1.bf16.msra.mxu0 0
    %6891 = vmatprep.subr.bf16.mxu0 0
    %6892 = vmatpush1.bf16.msra.mxu0 0
    %6893 = vmatprep.subr.bf16.mxu0 0
    %6894 = vmatpush1.bf16.msra.mxu0 0
    %6895 = vmatprep.subr.bf16.mxu0 0
    %6896 = vmatpush1.bf16.msra.mxu0 0
    %6897 = vmatprep.subr.bf16.mxu0 0
    %6898 = vmatpush1.bf16.msra.mxu0 0
    %6899 = vmatprep.subr.bf16.mxu0 %v1400
    %6900 = vmatpush1.bf16.msra.mxu0 %v1399
    %6901 = vmatprep.subr.bf16.mxu0 %v1392
    %6902 = vmatpush1.bf16.msra.mxu0 %v1391
    %6903 = vmatprep.subr.bf16.mxu0 0
    %6904 = vmatpush2.bf16.msra.mxu0 0
    %6905 = vmatprep.subr.bf16.mxu0 0
    %6906 = vmatpush2.bf16.msra.mxu0 0
    %6907 = vmatprep.subr.bf16.mxu0 0
    %6908 = vmatpush2.bf16.msra.mxu0 0
    %6909 = vmatprep.subr.bf16.mxu0 0
    %6910 = vmatpush2.bf16.msra.mxu0 0
    %6911 = vmatprep.subr.bf16.mxu0 0
    %6912 = vmatpush2.bf16.msra.mxu0 0
    %6913 = vmatprep.subr.bf16.mxu0 0
    %6914 = vmatpush2.bf16.msra.mxu0 0
    %6915 = vmatprep.subr.bf16.mxu0 0
    %6916 = vmatpush2.bf16.msra.mxu0 0
    %6917 = vmatprep.subr.bf16.mxu0 0
    %6918 = vmatpush2.bf16.msra.mxu0 0
    %6919 = vmatprep.mubr.bf16.mxu0 0
    %6920 = vmatmul.mubr.bf16.gmra.mxu0 %v6756
    %v6921 = vpop.f32.mrf.mxu0
    %v6922 = vadd.f32 0.0, %v6921
    %v6923 = vpop.f32.mrf.mxu0
    %v6924 = vadd.f32 0.0, %v6923
    %v6925 = vpop.f32.mrf.mxu0
    %v6926 = vadd.f32 0.0, %v6925
    %v6927 = vpop.f32.mrf.mxu0
    %v6928 = vadd.f32 0.0, %v6927
    %6929 = vdwg.mxu0
    %v6930 = vmul.f32 %v866, %v6793
    %v6931 = vmul.f32 %v868, %v6795
    %v6932 = vmul.f32 %v909, %v6836
    %v6933 = vmul.f32 %v911, %v6838
    %v6934 = vmul.f32 %v952, %v6879
    %v6935 = vmul.f32 %v954, %v6881
    %v6936 = vmul.f32 %v995, %v6922
    %v6937 = vmul.f32 %v997, %v6924
    %v6938 = vmul.f32 %v870, %v6797
    %v6939 = vmul.f32 %v872, %v6799
    %v6940 = vmul.f32 %v913, %v6840
    %v6941 = vmul.f32 %v915, %v6842
    %v6942 = vmul.f32 %v956, %v6883
    %v6943 = vmul.f32 %v958, %v6885
    %v6944 = vmul.f32 %v999, %v6926
    %v6945 = vmul.f32 %v1001, %v6928
    %v6946 = vpack.c.bf16 %v6938, %v6930
    %v6947 = vpack.c.bf16 %v6939, %v6931
    %v6948 = vpack.c.bf16 %v6940, %v6932
    %v6949 = vpack.c.bf16 %v6941, %v6933
    %v6950 = vpack.c.bf16 %v6942, %v6934
    %v6951 = vpack.c.bf16 %v6943, %v6935
    %v6952 = vpack.c.bf16 %v6944, %v6936
    %v6953 = vpack.c.bf16 %v6945, %v6937
    %6954 = vmatprep.subr.bf16.mxu0 0
    %6955 = vmatpush1.bf16.msra.mxu0 %v1931
    %6956 = vmatprep.subr.bf16.mxu0 0
    %6957 = vmatpush1.bf16.msra.mxu0 %v1930
    %6958 = vmatprep.subr.bf16.mxu0 0
    %6959 = vmatpush1.bf16.msra.mxu0 %v1929
    %6960 = vmatprep.subr.bf16.mxu0 0
    %6961 = vmatpush1.bf16.msra.mxu0 %v1928
    %6962 = vmatprep.subr.bf16.mxu0 0
    %6963 = vmatpush1.bf16.msra.mxu0 %v1927
    %6964 = vmatprep.subr.bf16.mxu0 0
    %6965 = vmatpush1.bf16.msra.mxu0 %v1926
    %6966 = vmatprep.subr.bf16.mxu0 0
    %6967 = vmatpush1.bf16.msra.mxu0 %v1925
    %6968 = vmatprep.subr.bf16.mxu0 0
    %6969 = vmatpush1.bf16.msra.mxu0 %v1924
    %6970 = vmatprep.subr.bf16.mxu0 0
    %6971 = vmatpush2.bf16.msra.mxu0 %v1939
    %6972 = vmatprep.subr.bf16.mxu0 0
    %6973 = vmatpush2.bf16.msra.mxu0 %v1938
    %6974 = vmatprep.subr.bf16.mxu0 0
    %6975 = vmatpush2.bf16.msra.mxu0 %v1937
    %6976 = vmatprep.subr.bf16.mxu0 0
    %6977 = vmatpush2.bf16.msra.mxu0 %v1936
    %6978 = vmatprep.subr.bf16.mxu0 0
    %6979 = vmatpush2.bf16.msra.mxu0 %v1935
    %6980 = vmatprep.subr.bf16.mxu0 0
    %6981 = vmatpush2.bf16.msra.mxu0 %v1934
    %6982 = vmatprep.subr.bf16.mxu0 0
    %6983 = vmatpush2.bf16.msra.mxu0 %v1933
    %6984 = vmatprep.subr.bf16.mxu0 0
    %6985 = vmatpush2.bf16.msra.mxu0 %v1932
    %6986 = vmatprep.mubr.bf16.mxu0 %v6947
    %6987 = vmatmul.mubr.bf16.gmra.mxu0 %v6946
    %v6988 = vpop.f32.mrf.mxu0
    %v6989 = vadd.f32 0.0, %v6988
    %v6990 = vpop.f32.mrf.mxu0
    %v6991 = vpop.f32.mrf.mxu0
    %v6992 = vadd.f32 0.0, %v6991
    %v6993 = vpop.f32.mrf.mxu0
    %6994 = vdwg.mxu0
    %6995 = vmatprep.subr.bf16.mxu0 0
    %6996 = vmatpush1.bf16.msra.mxu0 %v1947
    %6997 = vmatprep.subr.bf16.mxu0 0
    %6998 = vmatpush1.bf16.msra.mxu0 %v1946
    %6999 = vmatprep.subr.bf16.mxu0 0
    %7000 = vmatpush1.bf16.msra.mxu0 %v1945
    %7001 = vmatprep.subr.bf16.mxu0 0
    %7002 = vmatpush1.bf16.msra.mxu0 %v1944
    %7003 = vmatprep.subr.bf16.mxu0 0
    %7004 = vmatpush1.bf16.msra.mxu0 %v1943
    %7005 = vmatprep.subr.bf16.mxu0 0
    %7006 = vmatpush1.bf16.msra.mxu0 %v1942
    %7007 = vmatprep.subr.bf16.mxu0 0
    %7008 = vmatpush1.bf16.msra.mxu0 %v1941
    %7009 = vmatprep.subr.bf16.mxu0 0
    %7010 = vmatpush1.bf16.msra.mxu0 %v1940
    %7011 = vmatprep.subr.bf16.mxu0 0
    %7012 = vmatpush2.bf16.msra.mxu0 %v1955
    %7013 = vmatprep.subr.bf16.mxu0 0
    %7014 = vmatpush2.bf16.msra.mxu0 %v1954
    %7015 = vmatprep.subr.bf16.mxu0 0
    %7016 = vmatpush2.bf16.msra.mxu0 %v1953
    %7017 = vmatprep.subr.bf16.mxu0 0
    %7018 = vmatpush2.bf16.msra.mxu0 %v1952
    %7019 = vmatprep.subr.bf16.mxu0 0
    %7020 = vmatpush2.bf16.msra.mxu0 %v1951
    %7021 = vmatprep.subr.bf16.mxu0 0
    %7022 = vmatpush2.bf16.msra.mxu0 %v1950
    %7023 = vmatprep.subr.bf16.mxu0 0
    %7024 = vmatpush2.bf16.msra.mxu0 %v1949
    %7025 = vmatprep.subr.bf16.mxu0 0
    %7026 = vmatpush2.bf16.msra.mxu0 %v1948
    %7027 = vmatprep.mubr.bf16.mxu0 %v6949
    %7028 = vmatmul.mubr.bf16.gmra.mxu0 %v6948
    %v7029 = vpop.f32.mrf.mxu0
    %v7030 = vadd.f32 %v6989, %v7029
    %v7031 = vpop.f32.mrf.mxu0
    %v7032 = vpop.f32.mrf.mxu0
    %v7033 = vadd.f32 %v6992, %v7032
    %v7034 = vpop.f32.mrf.mxu0
    %7035 = vdwg.mxu0
    %7036 = vmatprep.subr.bf16.mxu0 0
    %7037 = vmatpush1.bf16.msra.mxu0 %v1963
    %7038 = vmatprep.subr.bf16.mxu0 0
    %7039 = vmatpush1.bf16.msra.mxu0 %v1962
    %7040 = vmatprep.subr.bf16.mxu0 0
    %7041 = vmatpush1.bf16.msra.mxu0 %v1961
    %7042 = vmatprep.subr.bf16.mxu0 0
    %7043 = vmatpush1.bf16.msra.mxu0 %v1960
    %7044 = vmatprep.subr.bf16.mxu0 0
    %7045 = vmatpush1.bf16.msra.mxu0 %v1959
    %7046 = vmatprep.subr.bf16.mxu0 0
    %7047 = vmatpush1.bf16.msra.mxu0 %v1958
    %7048 = vmatprep.subr.bf16.mxu0 0
    %7049 = vmatpush1.bf16.msra.mxu0 %v1957
    %7050 = vmatprep.subr.bf16.mxu0 0
    %7051 = vmatpush1.bf16.msra.mxu0 %v1956
    %7052 = vmatprep.subr.bf16.mxu0 0
    %7053 = vmatpush2.bf16.msra.mxu0 %v1971
    %7054 = vmatprep.subr.bf16.mxu0 0
    %7055 = vmatpush2.bf16.msra.mxu0 %v1970
    %7056 = vmatprep.subr.bf16.mxu0 0
    %7057 = vmatpush2.bf16.msra.mxu0 %v1969
    %7058 = vmatprep.subr.bf16.mxu0 0
    %7059 = vmatpush2.bf16.msra.mxu0 %v1968
    %7060 = vmatprep.subr.bf16.mxu0 0
    %7061 = vmatpush2.bf16.msra.mxu0 %v1967
    %7062 = vmatprep.subr.bf16.mxu0 0
    %7063 = vmatpush2.bf16.msra.mxu0 %v1966
    %7064 = vmatprep.subr.bf16.mxu0 0
    %7065 = vmatpush2.bf16.msra.mxu0 %v1965
    %7066 = vmatprep.subr.bf16.mxu0 0
    %7067 = vmatpush2.bf16.msra.mxu0 %v1964
    %7068 = vmatprep.mubr.bf16.mxu0 %v6951
    %7069 = vmatmul.mubr.bf16.gmra.mxu0 %v6950
    %v7070 = vpop.f32.mrf.mxu0
    %v7071 = vadd.f32 %v7030, %v7070
    %v7072 = vpop.f32.mrf.mxu0
    %v7073 = vpop.f32.mrf.mxu0
    %v7074 = vadd.f32 %v7033, %v7073
    %v7075 = vpop.f32.mrf.mxu0
    %7076 = vdwg.mxu0
    %7077 = vmatprep.subr.bf16.mxu0 0
    %7078 = vmatpush1.bf16.msra.mxu0 %v1979
    %7079 = vmatprep.subr.bf16.mxu0 0
    %7080 = vmatpush1.bf16.msra.mxu0 %v1978
    %7081 = vmatprep.subr.bf16.mxu0 0
    %7082 = vmatpush1.bf16.msra.mxu0 %v1977
    %7083 = vmatprep.subr.bf16.mxu0 0
    %7084 = vmatpush1.bf16.msra.mxu0 %v1976
    %7085 = vmatprep.subr.bf16.mxu0 0
    %7086 = vmatpush1.bf16.msra.mxu0 %v1975
    %7087 = vmatprep.subr.bf16.mxu0 0
    %7088 = vmatpush1.bf16.msra.mxu0 %v1974
    %7089 = vmatprep.subr.bf16.mxu0 0
    %7090 = vmatpush1.bf16.msra.mxu0 %v1973
    %7091 = vmatprep.subr.bf16.mxu0 0
    %7092 = vmatpush1.bf16.msra.mxu0 %v1972
    %7093 = vmatprep.subr.bf16.mxu0 0
    %7094 = vmatpush2.bf16.msra.mxu0 %v1987
    %7095 = vmatprep.subr.bf16.mxu0 0
    %7096 = vmatpush2.bf16.msra.mxu0 %v1986
    %7097 = vmatprep.subr.bf16.mxu0 0
    %7098 = vmatpush2.bf16.msra.mxu0 %v1985
    %7099 = vmatprep.subr.bf16.mxu0 0
    %7100 = vmatpush2.bf16.msra.mxu0 %v1984
    %7101 = vmatprep.subr.bf16.mxu0 0
    %7102 = vmatpush2.bf16.msra.mxu0 %v1983
    %7103 = vmatprep.subr.bf16.mxu0 0
    %7104 = vmatpush2.bf16.msra.mxu0 %v1982
    %7105 = vmatprep.subr.bf16.mxu0 0
    %7106 = vmatpush2.bf16.msra.mxu0 %v1981
    %7107 = vmatprep.subr.bf16.mxu0 0
    %7108 = vmatpush2.bf16.msra.mxu0 %v1980
    %7109 = vmatprep.mubr.bf16.mxu0 %v6953
    %7110 = vmatmul.mubr.bf16.gmra.mxu0 %v6952
    %v7111 = vpop.f32.mrf.mxu0
    %v7112 = vadd.f32 %v7071, %v7111
    %v7113 = vpop.f32.mrf.mxu0
    %v7114 = vpop.f32.mrf.mxu0
    %v7115 = vadd.f32 %v7074, %v7114
    %v7116 = vpop.f32.mrf.mxu0
    %7117 = vdwg.mxu0
    %v7118 = vpack.c.bf16 %v7115, %v7112
    %7119 = vmatprep.subr.bf16.mxu0 0
    %7120 = vmatpush1.bf16.msra.mxu0 0
    %7121 = vmatprep.subr.bf16.mxu0 0
    %7122 = vmatpush1.bf16.msra.mxu0 0
    %7123 = vmatprep.subr.bf16.mxu0 0
    %7124 = vmatpush1.bf16.msra.mxu0 0
    %7125 = vmatprep.subr.bf16.mxu0 0
    %7126 = vmatpush1.bf16.msra.mxu0 0
    %7127 = vmatprep.subr.bf16.mxu0 0
    %7128 = vmatpush1.bf16.msra.mxu0 0
    %7129 = vmatprep.subr.bf16.mxu0 0
    %7130 = vmatpush1.bf16.msra.mxu0 0
    %7131 = vmatprep.subr.bf16.mxu0 0
    %7132 = vmatpush1.bf16.msra.mxu0 0
    %7133 = vmatprep.subr.bf16.mxu0 0
    %7134 = vmatpush1.bf16.msra.mxu0 %v7118
    %7135 = vmatprep.subr.bf16.mxu0 0
    %7136 = vmatpush2.bf16.msra.mxu0 0
    %7137 = vmatprep.subr.bf16.mxu0 0
    %7138 = vmatpush2.bf16.msra.mxu0 0
    %7139 = vmatprep.subr.bf16.mxu0 0
    %7140 = vmatpush2.bf16.msra.mxu0 0
    %7141 = vmatprep.subr.bf16.mxu0 0
    %7142 = vmatpush2.bf16.msra.mxu0 0
    %7143 = vmatprep.subr.bf16.mxu0 0
    %7144 = vmatpush2.bf16.msra.mxu0 0
    %7145 = vmatprep.subr.bf16.mxu0 0
    %7146 = vmatpush2.bf16.msra.mxu0 0
    %7147 = vmatprep.subr.bf16.mxu0 0
    %7148 = vmatpush2.bf16.msra.mxu0 0
    %7149 = vmatprep.subr.bf16.mxu0 0
    %7150 = vmatpush2.bf16.msra.mxu0 0
    %7151 = vmatprep.mubr.bf16.mxu0 0
    %7152 = vmatmul.mubr.bf16.gmra.mxu0 %v2660
    %v7153 = vpop.f32.mrf.mxu0
    %v7154 = vadd.f32 0.0, %v7153
    %v7155 = vpop.f32.mrf.mxu0
    %v7156 = vpop.f32.mrf.mxu0
    %v7157 = vpop.f32.mrf.mxu0
    %7158 = vdwg.mxu0
    %v7159 = vpack.c.bf16 %v7154, %v7154
    %v7161 = vsel %vm1417, %v7159, 0
    %7163 = vmatprep.subr.bf16.mxu0 0
    %7164 = vmatpush1.bf16.msra.mxu0 0
    %7165 = vmatprep.subr.bf16.mxu0 0
    %7166 = vmatpush1.bf16.msra.mxu0 0
    %7167 = vmatprep.subr.bf16.mxu0 0
    %7168 = vmatpush1.bf16.msra.mxu0 0
    %7169 = vmatprep.subr.bf16.mxu0 0
    %7170 = vmatpush1.bf16.msra.mxu0 0
    %7171 = vmatprep.subr.bf16.mxu0 0
    %7172 = vmatpush1.bf16.msra.mxu0 0
    %7173 = vmatprep.subr.bf16.mxu0 0
    %7174 = vmatpush1.bf16.msra.mxu0 0
    %7175 = vmatprep.subr.bf16.mxu0 %v1394
    %7176 = vmatpush1.bf16.msra.mxu0 %v1393
    %7177 = vmatprep.subr.bf16.mxu0 %v1386
    %7178 = vmatpush1.bf16.msra.mxu0 %v1385
    %7179 = vmatprep.subr.bf16.mxu0 0
    %7180 = vmatpush2.bf16.msra.mxu0 0
    %7181 = vmatprep.subr.bf16.mxu0 0
    %7182 = vmatpush2.bf16.msra.mxu0 0
    %7183 = vmatprep.subr.bf16.mxu0 0
    %7184 = vmatpush2.bf16.msra.mxu0 0
    %7185 = vmatprep.subr.bf16.mxu0 0
    %7186 = vmatpush2.bf16.msra.mxu0 0
    %7187 = vmatprep.subr.bf16.mxu0 0
    %7188 = vmatpush2.bf16.msra.mxu0 0
    %7189 = vmatprep.subr.bf16.mxu0 0
    %7190 = vmatpush2.bf16.msra.mxu0 0
    %7191 = vmatprep.subr.bf16.mxu0 0
    %7192 = vmatpush2.bf16.msra.mxu0 0
    %7193 = vmatprep.subr.bf16.mxu0 0
    %7194 = vmatpush2.bf16.msra.mxu0 0
    %7195 = vmatprep.mubr.bf16.mxu0 0
    %7196 = vmatmul.mubr.bf16.gmra.mxu0 %v7161
    %v7197 = vpop.f32.mrf.mxu0
    %v7198 = vadd.f32 0.0, %v7197
    %v7199 = vpop.f32.mrf.mxu0
    %v7200 = vadd.f32 0.0, %v7199
    %v7201 = vpop.f32.mrf.mxu0
    %v7202 = vpop.f32.mrf.mxu0
    %7203 = vdwg.mxu0
    %7204 = vmatprep.subr.bf16.mxu0 0
    %7205 = vmatpush1.bf16.msra.mxu0 0
    %7206 = vmatprep.subr.bf16.mxu0 0
    %7207 = vmatpush1.bf16.msra.mxu0 0
    %7208 = vmatprep.subr.bf16.mxu0 0
    %7209 = vmatpush1.bf16.msra.mxu0 0
    %7210 = vmatprep.subr.bf16.mxu0 0
    %7211 = vmatpush1.bf16.msra.mxu0 0
    %7212 = vmatprep.subr.bf16.mxu0 0
    %7213 = vmatpush1.bf16.msra.mxu0 0
    %7214 = vmatprep.subr.bf16.mxu0 0
    %7215 = vmatpush1.bf16.msra.mxu0 0
    %7216 = vmatprep.subr.bf16.mxu0 %v1396
    %7217 = vmatpush1.bf16.msra.mxu0 %v1395
    %7218 = vmatprep.subr.bf16.mxu0 %v1388
    %7219 = vmatpush1.bf16.msra.mxu0 %v1387
    %7220 = vmatprep.subr.bf16.mxu0 0
    %7221 = vmatpush2.bf16.msra.mxu0 0
    %7222 = vmatprep.subr.bf16.mxu0 0
    %7223 = vmatpush2.bf16.msra.mxu0 0
    %7224 = vmatprep.subr.bf16.mxu0 0
    %7225 = vmatpush2.bf16.msra.mxu0 0
    %7226 = vmatprep.subr.bf16.mxu0 0
    %7227 = vmatpush2.bf16.msra.mxu0 0
    %7228 = vmatprep.subr.bf16.mxu0 0
    %7229 = vmatpush2.bf16.msra.mxu0 0
    %7230 = vmatprep.subr.bf16.mxu0 0
    %7231 = vmatpush2.bf16.msra.mxu0 0
    %7232 = vmatprep.subr.bf16.mxu0 0
    %7233 = vmatpush2.bf16.msra.mxu0 0
    %7234 = vmatprep.subr.bf16.mxu0 0
    %7235 = vmatpush2.bf16.msra.mxu0 0
    %7236 = vmatprep.mubr.bf16.mxu0 0
    %7237 = vmatmul.mubr.bf16.gmra.mxu0 %v7161
    %v7238 = vpop.f32.mrf.mxu0
    %v7239 = vadd.f32 0.0, %v7238
    %v7240 = vpop.f32.mrf.mxu0
    %v7241 = vadd.f32 0.0, %v7240
    %v7242 = vpop.f32.mrf.mxu0
    %v7243 = vpop.f32.mrf.mxu0
    %7244 = vdwg.mxu0
    %7245 = vmatprep.subr.bf16.mxu0 0
    %7246 = vmatpush1.bf16.msra.mxu0 0
    %7247 = vmatprep.subr.bf16.mxu0 0
    %7248 = vmatpush1.bf16.msra.mxu0 0
    %7249 = vmatprep.subr.bf16.mxu0 0
    %7250 = vmatpush1.bf16.msra.mxu0 0
    %7251 = vmatprep.subr.bf16.mxu0 0
    %7252 = vmatpush1.bf16.msra.mxu0 0
    %7253 = vmatprep.subr.bf16.mxu0 0
    %7254 = vmatpush1.bf16.msra.mxu0 0
    %7255 = vmatprep.subr.bf16.mxu0 0
    %7256 = vmatpush1.bf16.msra.mxu0 0
    %7257 = vmatprep.subr.bf16.mxu0 %v1398
    %7258 = vmatpush1.bf16.msra.mxu0 %v1397
    %7259 = vmatprep.subr.bf16.mxu0 %v1390
    %7260 = vmatpush1.bf16.msra.mxu0 %v1389
    %7261 = vmatprep.subr.bf16.mxu0 0
    %7262 = vmatpush2.bf16.msra.mxu0 0
    %7263 = vmatprep.subr.bf16.mxu0 0
    %7264 = vmatpush2.bf16.msra.mxu0 0
    %7265 = vmatprep.subr.bf16.mxu0 0
    %7266 = vmatpush2.bf16.msra.mxu0 0
    %7267 = vmatprep.subr.bf16.mxu0 0
    %7268 = vmatpush2.bf16.msra.mxu0 0
    %7269 = vmatprep.subr.bf16.mxu0 0
    %7270 = vmatpush2.bf16.msra.mxu0 0
    %7271 = vmatprep.subr.bf16.mxu0 0
    %7272 = vmatpush2.bf16.msra.mxu0 0
    %7273 = vmatprep.subr.bf16.mxu0 0
    %7274 = vmatpush2.bf16.msra.mxu0 0
    %7275 = vmatprep.subr.bf16.mxu0 0
    %7276 = vmatpush2.bf16.msra.mxu0 0
    %7277 = vmatprep.mubr.bf16.mxu0 0
    %7278 = vmatmul.mubr.bf16.gmra.mxu0 %v7161
    %v7279 = vpop.f32.mrf.mxu0
    %v7280 = vadd.f32 0.0, %v7279
    %v7281 = vpop.f32.mrf.mxu0
    %v7282 = vadd.f32 0.0, %v7281
    %v7283 = vpop.f32.mrf.mxu0
    %v7284 = vpop.f32.mrf.mxu0
    %7285 = vdwg.mxu0
    %7286 = vmatprep.subr.bf16.mxu0 0
    %7287 = vmatpush1.bf16.msra.mxu0 0
    %7288 = vmatprep.subr.bf16.mxu0 0
    %7289 = vmatpush1.bf16.msra.mxu0 0
    %7290 = vmatprep.subr.bf16.mxu0 0
    %7291 = vmatpush1.bf16.msra.mxu0 0
    %7292 = vmatprep.subr.bf16.mxu0 0
    %7293 = vmatpush1.bf16.msra.mxu0 0
    %7294 = vmatprep.subr.bf16.mxu0 0
    %7295 = vmatpush1.bf16.msra.mxu0 0
    %7296 = vmatprep.subr.bf16.mxu0 0
    %7297 = vmatpush1.bf16.msra.mxu0 0
    %7298 = vmatprep.subr.bf16.mxu0 %v1400
    %7299 = vmatpush1.bf16.msra.mxu0 %v1399
    %7300 = vmatprep.subr.bf16.mxu0 %v1392
    %7301 = vmatpush1.bf16.msra.mxu0 %v1391
    %7302 = vmatprep.subr.bf16.mxu0 0
    %7303 = vmatpush2.bf16.msra.mxu0 0
    %7304 = vmatprep.subr.bf16.mxu0 0
    %7305 = vmatpush2.bf16.msra.mxu0 0
    %7306 = vmatprep.subr.bf16.mxu0 0
    %7307 = vmatpush2.bf16.msra.mxu0 0
    %7308 = vmatprep.subr.bf16.mxu0 0
    %7309 = vmatpush2.bf16.msra.mxu0 0
    %7310 = vmatprep.subr.bf16.mxu0 0
    %7311 = vmatpush2.bf16.msra.mxu0 0
    %7312 = vmatprep.subr.bf16.mxu0 0
    %7313 = vmatpush2.bf16.msra.mxu0 0
    %7314 = vmatprep.subr.bf16.mxu0 0
    %7315 = vmatpush2.bf16.msra.mxu0 0
    %7316 = vmatprep.subr.bf16.mxu0 0
    %7317 = vmatpush2.bf16.msra.mxu0 0
    %7318 = vmatprep.mubr.bf16.mxu0 0
    %7319 = vmatmul.mubr.bf16.gmra.mxu0 %v7161
    %v7320 = vpop.f32.mrf.mxu0
    %v7321 = vadd.f32 0.0, %v7320
    %v7322 = vpop.f32.mrf.mxu0
    %v7323 = vadd.f32 0.0, %v7322
    %v7324 = vpop.f32.mrf.mxu0
    %v7325 = vpop.f32.mrf.mxu0
    %7326 = vdwg.mxu0
    %v7327 = vmul.f32 %v1135, %v7198
    %v7328 = vmul.f32 %v1137, %v7200
    %v7329 = vmul.f32 %v1176, %v7239
    %v7330 = vmul.f32 %v1178, %v7241
    %v7331 = vmul.f32 %v1217, %v7280
    %v7332 = vmul.f32 %v1219, %v7282
    %v7333 = vmul.f32 %v1258, %v7321
    %v7334 = vmul.f32 %v1260, %v7323
    %v7335 = vpack.c.bf16 %v7327, %v7327
    %v7336 = vpack.c.bf16 %v7328, %v7328
    %v7337 = vpack.c.bf16 %v7329, %v7329
    %v7338 = vpack.c.bf16 %v7330, %v7330
    %v7339 = vpack.c.bf16 %v7331, %v7331
    %v7340 = vpack.c.bf16 %v7332, %v7332
    %v7341 = vpack.c.bf16 %v7333, %v7333
    %v7342 = vpack.c.bf16 %v7334, %v7334
    %7343 = vmatprep.subr.bf16.mxu0 0
    %7344 = vmatpush1.bf16.msra.mxu0 %v1931
    %7345 = vmatprep.subr.bf16.mxu0 0
    %7346 = vmatpush1.bf16.msra.mxu0 %v1930
    %7347 = vmatprep.subr.bf16.mxu0 0
    %7348 = vmatpush1.bf16.msra.mxu0 %v1929
    %7349 = vmatprep.subr.bf16.mxu0 0
    %7350 = vmatpush1.bf16.msra.mxu0 %v1928
    %7351 = vmatprep.subr.bf16.mxu0 0
    %7352 = vmatpush1.bf16.msra.mxu0 %v1927
    %7353 = vmatprep.subr.bf16.mxu0 0
    %7354 = vmatpush1.bf16.msra.mxu0 %v1926
    %7355 = vmatprep.subr.bf16.mxu0 0
    %7356 = vmatpush1.bf16.msra.mxu0 %v1925
    %7357 = vmatprep.subr.bf16.mxu0 0
    %7358 = vmatpush1.bf16.msra.mxu0 %v1924
    %7359 = vmatprep.subr.bf16.mxu0 0
    %7360 = vmatpush2.bf16.msra.mxu0 %v1939
    %7361 = vmatprep.subr.bf16.mxu0 0
    %7362 = vmatpush2.bf16.msra.mxu0 %v1938
    %7363 = vmatprep.subr.bf16.mxu0 0
    %7364 = vmatpush2.bf16.msra.mxu0 %v1937
    %7365 = vmatprep.subr.bf16.mxu0 0
    %7366 = vmatpush2.bf16.msra.mxu0 %v1936
    %7367 = vmatprep.subr.bf16.mxu0 0
    %7368 = vmatpush2.bf16.msra.mxu0 %v1935
    %7369 = vmatprep.subr.bf16.mxu0 0
    %7370 = vmatpush2.bf16.msra.mxu0 %v1934
    %7371 = vmatprep.subr.bf16.mxu0 0
    %7372 = vmatpush2.bf16.msra.mxu0 %v1933
    %7373 = vmatprep.subr.bf16.mxu0 0
    %7374 = vmatpush2.bf16.msra.mxu0 %v1932
    %7375 = vmatprep.mubr.bf16.mxu0 %v7336
    %7376 = vmatmul.mubr.bf16.gmra.mxu0 %v7335
    %v7377 = vpop.f32.mrf.mxu0
    %v7378 = vadd.f32 0.0, %v7377
    %v7379 = vpop.f32.mrf.mxu0
    %v7380 = vpop.f32.mrf.mxu0
    %v7381 = vpop.f32.mrf.mxu0
    %7382 = vdwg.mxu0
    %7383 = vmatprep.subr.bf16.mxu0 0
    %7384 = vmatpush1.bf16.msra.mxu0 %v1947
    %7385 = vmatprep.subr.bf16.mxu0 0
    %7386 = vmatpush1.bf16.msra.mxu0 %v1946
    %7387 = vmatprep.subr.bf16.mxu0 0
    %7388 = vmatpush1.bf16.msra.mxu0 %v1945
    %7389 = vmatprep.subr.bf16.mxu0 0
    %7390 = vmatpush1.bf16.msra.mxu0 %v1944
    %7391 = vmatprep.subr.bf16.mxu0 0
    %7392 = vmatpush1.bf16.msra.mxu0 %v1943
    %7393 = vmatprep.subr.bf16.mxu0 0
    %7394 = vmatpush1.bf16.msra.mxu0 %v1942
    %7395 = vmatprep.subr.bf16.mxu0 0
    %7396 = vmatpush1.bf16.msra.mxu0 %v1941
    %7397 = vmatprep.subr.bf16.mxu0 0
    %7398 = vmatpush1.bf16.msra.mxu0 %v1940
    %7399 = vmatprep.subr.bf16.mxu0 0
    %7400 = vmatpush2.bf16.msra.mxu0 %v1955
    %7401 = vmatprep.subr.bf16.mxu0 0
    %7402 = vmatpush2.bf16.msra.mxu0 %v1954
    %7403 = vmatprep.subr.bf16.mxu0 0
    %7404 = vmatpush2.bf16.msra.mxu0 %v1953
    %7405 = vmatprep.subr.bf16.mxu0 0
    %7406 = vmatpush2.bf16.msra.mxu0 %v1952
    %7407 = vmatprep.subr.bf16.mxu0 0
    %7408 = vmatpush2.bf16.msra.mxu0 %v1951
    %7409 = vmatprep.subr.bf16.mxu0 0
    %7410 = vmatpush2.bf16.msra.mxu0 %v1950
    %7411 = vmatprep.subr.bf16.mxu0 0
    %7412 = vmatpush2.bf16.msra.mxu0 %v1949
    %7413 = vmatprep.subr.bf16.mxu0 0
    %7414 = vmatpush2.bf16.msra.mxu0 %v1948
    %7415 = vmatprep.mubr.bf16.mxu0 %v7338
    %7416 = vmatmul.mubr.bf16.gmra.mxu0 %v7337
    %v7417 = vpop.f32.mrf.mxu0
    %v7418 = vadd.f32 %v7378, %v7417
    %v7419 = vpop.f32.mrf.mxu0
    %v7420 = vpop.f32.mrf.mxu0
    %v7421 = vpop.f32.mrf.mxu0
    %7422 = vdwg.mxu0
    %7423 = vmatprep.subr.bf16.mxu0 0
    %7424 = vmatpush1.bf16.msra.mxu0 %v1963
    %7425 = vmatprep.subr.bf16.mxu0 0
    %7426 = vmatpush1.bf16.msra.mxu0 %v1962
    %7427 = vmatprep.subr.bf16.mxu0 0
    %7428 = vmatpush1.bf16.msra.mxu0 %v1961
    %7429 = vmatprep.subr.bf16.mxu0 0
    %7430 = vmatpush1.bf16.msra.mxu0 %v1960
    %7431 = vmatprep.subr.bf16.mxu0 0
    %7432 = vmatpush1.bf16.msra.mxu0 %v1959
    %7433 = vmatprep.subr.bf16.mxu0 0
    %7434 = vmatpush1.bf16.msra.mxu0 %v1958
    %7435 = vmatprep.subr.bf16.mxu0 0
    %7436 = vmatpush1.bf16.msra.mxu0 %v1957
    %7437 = vmatprep.subr.bf16.mxu0 0
    %7438 = vmatpush1.bf16.msra.mxu0 %v1956
    %7439 = vmatprep.subr.bf16.mxu0 0
    %7440 = vmatpush2.bf16.msra.mxu0 %v1971
    %7441 = vmatprep.subr.bf16.mxu0 0
    %7442 = vmatpush2.bf16.msra.mxu0 %v1970
    %7443 = vmatprep.subr.bf16.mxu0 0
    %7444 = vmatpush2.bf16.msra.mxu0 %v1969
    %7445 = vmatprep.subr.bf16.mxu0 0
    %7446 = vmatpush2.bf16.msra.mxu0 %v1968
    %7447 = vmatprep.subr.bf16.mxu0 0
    %7448 = vmatpush2.bf16.msra.mxu0 %v1967
    %7449 = vmatprep.subr.bf16.mxu0 0
    %7450 = vmatpush2.bf16.msra.mxu0 %v1966
    %7451 = vmatprep.subr.bf16.mxu0 0
    %7452 = vmatpush2.bf16.msra.mxu0 %v1965
    %7453 = vmatprep.subr.bf16.mxu0 0
    %7454 = vmatpush2.bf16.msra.mxu0 %v1964
    %7455 = vmatprep.mubr.bf16.mxu0 %v7340
    %7456 = vmatmul.mubr.bf16.gmra.mxu0 %v7339
    %v7457 = vpop.f32.mrf.mxu0
    %v7458 = vadd.f32 %v7418, %v7457
    %v7459 = vpop.f32.mrf.mxu0
    %v7460 = vpop.f32.mrf.mxu0
    %v7461 = vpop.f32.mrf.mxu0
    %7462 = vdwg.mxu0
    %7463 = vmatprep.subr.bf16.mxu0 0
    %7464 = vmatpush1.bf16.msra.mxu0 %v1979
    %7465 = vmatprep.subr.bf16.mxu0 0
    %7466 = vmatpush1.bf16.msra.mxu0 %v1978
    %7467 = vmatprep.subr.bf16.mxu0 0
    %7468 = vmatpush1.bf16.msra.mxu0 %v1977
    %7469 = vmatprep.subr.bf16.mxu0 0
    %7470 = vmatpush1.bf16.msra.mxu0 %v1976
    %7471 = vmatprep.subr.bf16.mxu0 0
    %7472 = vmatpush1.bf16.msra.mxu0 %v1975
    %7473 = vmatprep.subr.bf16.mxu0 0
    %7474 = vmatpush1.bf16.msra.mxu0 %v1974
    %7475 = vmatprep.subr.bf16.mxu0 0
    %7476 = vmatpush1.bf16.msra.mxu0 %v1973
    %7477 = vmatprep.subr.bf16.mxu0 0
    %7478 = vmatpush1.bf16.msra.mxu0 %v1972
    %7479 = vmatprep.subr.bf16.mxu0 0
    %7480 = vmatpush2.bf16.msra.mxu0 %v1987
    %7481 = vmatprep.subr.bf16.mxu0 0
    %7482 = vmatpush2.bf16.msra.mxu0 %v1986
    %7483 = vmatprep.subr.bf16.mxu0 0
    %7484 = vmatpush2.bf16.msra.mxu0 %v1985
    %7485 = vmatprep.subr.bf16.mxu0 0
    %7486 = vmatpush2.bf16.msra.mxu0 %v1984
    %7487 = vmatprep.subr.bf16.mxu0 0
    %7488 = vmatpush2.bf16.msra.mxu0 %v1983
    %7489 = vmatprep.subr.bf16.mxu0 0
    %7490 = vmatpush2.bf16.msra.mxu0 %v1982
    %7491 = vmatprep.subr.bf16.mxu0 0
    %7492 = vmatpush2.bf16.msra.mxu0 %v1981
    %7493 = vmatprep.subr.bf16.mxu0 0
    %7494 = vmatpush2.bf16.msra.mxu0 %v1980
    %7495 = vmatprep.mubr.bf16.mxu0 %v7342
    %7496 = vmatmul.mubr.bf16.gmra.mxu0 %v7341
    %v7497 = vpop.f32.mrf.mxu0
    %v7498 = vadd.f32 %v7458, %v7497
    %v7499 = vpop.f32.mrf.mxu0
    %v7500 = vpop.f32.mrf.mxu0
    %v7501 = vpop.f32.mrf.mxu0
    %7502 = vdwg.mxu0
    %v7503 = vpack.c.bf16 %v7498, %v7498
    %v7505 = vsel %vm512, %v7503, 0
    %7507 = vmatprep.subr.bf16.mxu0 0
    %7508 = vmatpush1.bf16.msra.mxu0 0
    %7509 = vmatprep.subr.bf16.mxu0 0
    %7510 = vmatpush1.bf16.msra.mxu0 0
    %7511 = vmatprep.subr.bf16.mxu0 0
    %7512 = vmatpush1.bf16.msra.mxu0 0
    %7513 = vmatprep.subr.bf16.mxu0 0
    %7514 = vmatpush1.bf16.msra.mxu0 0
    %7515 = vmatprep.subr.bf16.mxu0 0
    %7516 = vmatpush1.bf16.msra.mxu0 0
    %7517 = vmatprep.subr.bf16.mxu0 0
    %7518 = vmatpush1.bf16.msra.mxu0 0
    %7519 = vmatprep.subr.bf16.mxu0 0
    %7520 = vmatpush1.bf16.msra.mxu0 0
    %7521 = vmatprep.subr.bf16.mxu0 0
    %7522 = vmatpush1.bf16.msra.mxu0 %v7505
    %7523 = vmatprep.subr.bf16.mxu0 0
    %7524 = vmatpush2.bf16.msra.mxu0 0
    %7525 = vmatprep.subr.bf16.mxu0 0
    %7526 = vmatpush2.bf16.msra.mxu0 0
    %7527 = vmatprep.subr.bf16.mxu0 0
    %7528 = vmatpush2.bf16.msra.mxu0 0
    %7529 = vmatprep.subr.bf16.mxu0 0
    %7530 = vmatpush2.bf16.msra.mxu0 0
    %7531 = vmatprep.subr.bf16.mxu0 0
    %7532 = vmatpush2.bf16.msra.mxu0 0
    %7533 = vmatprep.subr.bf16.mxu0 0
    %7534 = vmatpush2.bf16.msra.mxu0 0
    %7535 = vmatprep.subr.bf16.mxu0 0
    %7536 = vmatpush2.bf16.msra.mxu0 0
    %7537 = vmatprep.subr.bf16.mxu0 0
    %7538 = vmatpush2.bf16.msra.mxu0 0
    %7539 = vmatprep.mubr.bf16.mxu0 0
    %7540 = vmatmul.mubr.bf16.gmra.mxu0 %v3048
    %v7541 = vpop.f32.mrf.mxu0
    %v7542 = vadd.f32 0.0, %v7541
    %v7543 = vpop.f32.mrf.mxu0
    %v7544 = vpop.f32.mrf.mxu0
    %v7545 = vadd.f32 0.0, %v7544
    %v7546 = vpop.f32.mrf.mxu0
    %7547 = vdwg.mxu0
    %v7548 = vpack.c.bf16 %v7545, %v7542
    %v7550 = vsel %vm1417, %v7548, 0
    %7552 = vmatprep.subr.bf16.mxu0 0
    %7553 = vmatpush1.bf16.msra.mxu0 0
    %7554 = vmatprep.subr.bf16.mxu0 0
    %7555 = vmatpush1.bf16.msra.mxu0 0
    %7556 = vmatprep.subr.bf16.mxu0 0
    %7557 = vmatpush1.bf16.msra.mxu0 0
    %7558 = vmatprep.subr.bf16.mxu0 0
    %7559 = vmatpush1.bf16.msra.mxu0 0
    %7560 = vmatprep.subr.bf16.mxu0 0
    %7561 = vmatpush1.bf16.msra.mxu0 0
    %7562 = vmatprep.subr.bf16.mxu0 0
    %7563 = vmatpush1.bf16.msra.mxu0 0
    %7564 = vmatprep.subr.bf16.mxu0 0
    %7565 = vmatpush1.bf16.msra.mxu0 %v1269
    %7566 = vmatprep.subr.bf16.mxu0 0
    %7567 = vmatpush1.bf16.msra.mxu0 %v1268
    %7568 = vmatprep.subr.bf16.mxu0 0
    %7569 = vmatpush2.bf16.msra.mxu0 0
    %7570 = vmatprep.subr.bf16.mxu0 0
    %7571 = vmatpush2.bf16.msra.mxu0 0
    %7572 = vmatprep.subr.bf16.mxu0 0
    %7573 = vmatpush2.bf16.msra.mxu0 0
    %7574 = vmatprep.subr.bf16.mxu0 0
    %7575 = vmatpush2.bf16.msra.mxu0 0
    %7576 = vmatprep.subr.bf16.mxu0 0
    %7577 = vmatpush2.bf16.msra.mxu0 0
    %7578 = vmatprep.subr.bf16.mxu0 0
    %7579 = vmatpush2.bf16.msra.mxu0 0
    %7580 = vmatprep.subr.bf16.mxu0 0
    %7581 = vmatpush2.bf16.msra.mxu0 0
    %7582 = vmatprep.subr.bf16.mxu0 0
    %7583 = vmatpush2.bf16.msra.mxu0 0
    %7584 = vmatprep.mubr.bf16.mxu0 0
    %7585 = vmatmul.mubr.bf16.gmra.mxu0 %v7550
    %v7586 = vpop.f32.mrf.mxu0
    %v7587 = vadd.f32 %v3099, %v7586
    %v7588 = vpop.f32.mrf.mxu0
    %v7589 = vpop.f32.mrf.mxu0
    %v7590 = vadd.f32 %v3099, %v7589
    %v7591 = vpop.f32.mrf.mxu0
    %7592 = vdwg.mxu0
    %v7594 = vsel %vm1417, %v6214, 0
    %7596 = vmatprep.subr.bf16.mxu0 0
    %7597 = vmatpush1.bf16.msra.mxu0 0
    %7598 = vmatprep.subr.bf16.mxu0 0
    %7599 = vmatpush1.bf16.msra.mxu0 0
    %7600 = vmatprep.subr.bf16.mxu0 0
    %7601 = vmatpush1.bf16.msra.mxu0 0
    %7602 = vmatprep.subr.bf16.mxu0 0
    %7603 = vmatpush1.bf16.msra.mxu0 0
    %7604 = vmatprep.subr.bf16.mxu0 0
    %7605 = vmatpush1.bf16.msra.mxu0 0
    %7606 = vmatprep.subr.bf16.mxu0 0
    %7607 = vmatpush1.bf16.msra.mxu0 0
    %7608 = vmatprep.subr.bf16.mxu0 0
    %7609 = vmatpush1.bf16.msra.mxu0 %v1275
    %7610 = vmatprep.subr.bf16.mxu0 0
    %7611 = vmatpush1.bf16.msra.mxu0 %v1274
    %7612 = vmatprep.subr.bf16.mxu0 0
    %7613 = vmatpush2.bf16.msra.mxu0 0
    %7614 = vmatprep.subr.bf16.mxu0 0
    %7615 = vmatpush2.bf16.msra.mxu0 0
    %7616 = vmatprep.subr.bf16.mxu0 0
    %7617 = vmatpush2.bf16.msra.mxu0 0
    %7618 = vmatprep.subr.bf16.mxu0 0
    %7619 = vmatpush2.bf16.msra.mxu0 0
    %7620 = vmatprep.subr.bf16.mxu0 0
    %7621 = vmatpush2.bf16.msra.mxu0 0
    %7622 = vmatprep.subr.bf16.mxu0 0
    %7623 = vmatpush2.bf16.msra.mxu0 0
    %7624 = vmatprep.subr.bf16.mxu0 0
    %7625 = vmatpush2.bf16.msra.mxu0 0
    %7626 = vmatprep.subr.bf16.mxu0 0
    %7627 = vmatpush2.bf16.msra.mxu0 0
    %7628 = vmatprep.mubr.bf16.mxu0 0
    %7629 = vmatmul.mubr.bf16.gmra.mxu0 %v7594
    %v7630 = vpop.f32.mrf.mxu0
    %v7631 = vadd.f32 %v3149, %v7630
    %v7632 = vpop.f32.mrf.mxu0
    %v7633 = vpop.f32.mrf.mxu0
    %v7634 = vadd.f32 %v3149, %v7633
    %v7635 = vpop.f32.mrf.mxu0
    %7636 = vdwg.mxu0
    %v7637 = vadd.f32 %v7587, %v7631
    %v7638 = vadd.f32 %v7590, %v7634
    %v7639 = vxor.u32 %v7637, 2147483648
    %v7640 = vxor.u32 %v7638, 2147483648
    %v7641 = vmul.f32 %v7639, 1.442695
    %v7642 = vpow.pop %v7641
    %v7643 = vmul.f32 %v7640, 1.442695
    %v7644 = vpow.pop %v7643
    %v7645 = vadd.f32 %v7642, 1.0
    %v7646 = vadd.f32 %v7644, 1.0
    %v7647 = vrcp.pop %v7645
    %v7648 = vmul.f32 1.0, %v7647
    %v7649 = vrcp.pop %v7646
    %v7650 = vmul.f32 1.0, %v7649
    %7653 = vrot.lane.b32.xlu0 %v7631, 64
    %v7654 = vpop.permute.xlu0 %7653
    %7655 = vrot.lane.b32.xlu0 %v7634, 64
    %v7656 = vpop.permute.xlu0 %7655
    %v7659 = vmul.f32 %v7648, %v7654
    %v7660 = vmul.f32 %v7650, %v7656
    %7663 = vrot.lane.b32.xlu0 %v7659, 64
    %v7664 = vpop.permute.xlu0 %7663
    %7665 = vrot.lane.b32.xlu0 %v7660, 64
    %v7666 = vpop.permute.xlu0 %7665
    %v7669 = vadd.f32 %v7587, %v7664
    %v7670 = vadd.f32 %v7590, %v7666
    %v7671 = vtanh.pop %v7669
    %v7672 = vtanh.pop %v7670
    %v7673 = vsub.f32 1.0, %v7648
    %v7674 = vsub.f32 1.0, %v7650
    %7677 = vrot.lane.b32.xlu0 %v7671, 96
    %v7678 = vpop.permute.xlu0 %7677
    %7679 = vrot.lane.b32.xlu0 %v7672, 96
    %v7680 = vpop.permute.xlu0 %7679
    %v7683 = vmul.f32 %v7673, %v7678
    %v7684 = vmul.f32 %v7674, %v7680
    %v7685 = vmul.f32 %v7648, %v6209
    %v7686 = vmul.f32 %v7650, %v6210
    %v7687 = vadd.f32 %v7683, %v7685
    %v7688 = vadd.f32 %v7684, %v7686
    %7691 = vrot.lane.b32.xlu0 %v7687, 96
    %v7692 = vpop.permute.xlu0 %7691
    %7693 = vrot.lane.b32.xlu0 %v7688, 96
    %v7694 = vpop.permute.xlu0 %7693
    %7697 = vst.msk [vmem:[#allocation11] sm:$0xff] %vm1417, %v7692
    %7698 = vst.msk [vmem:[#allocation11 + $0x8] sm:$0xff] %vm1417, %v7694
    // Predicated region
    $region110: #{mpnn_forward.1} parent=1 // pred_check
      _
    $region111: #{mpnn_forward.1} parent=1 // pred_check_branch
      %7700 = sbr.rel (0) target = $region113
    $region112: #{mpnn_forward.1} parent=1 // pred_region
      %s7702 = ssub.s32 256, 256
      %7703 = vsyncadd [#allocation4], %s7702
      %s7704 = sshll.u32 [#allocation11], 4
      %s7705 = int_to_ptr.vmem [resolvable:$true] %s7704
      %7710 = dma.vmem_to_hbm [thread:$0]  %s7705, 256, %s22, [#allocation4], 128, 128, 8
    $region113: #{mpnn_forward.1} parent=1 // pred_fallthru
      _
    // Predicated region
    $region114: #{mpnn_forward.1} parent=1 // pred_check
      _
    $region115: #{mpnn_forward.1} parent=1 // pred_check_branch
      %7712 = sbr.rel (0) target = $region117
    $region116: #{mpnn_forward.1} parent=1 // pred_region
      %7713 = dma.done [#allocation4], 256
    $region117: #{mpnn_forward.1} parent=1 // pred_fallthru
      _
    %7714 = vsyncpa [#allocation3], 1
    %7715 = vsyncpa [#allocation6], 1
    %7716 = vsyncpa [#allocation9], 1
    %7717 = vsyncpa [#allocation4], 1

</llo_original>
